<compile_context>
chip_gen: v7x
topology: tpu7x:2x2x1
jax: 0.10.0
libtpu: 0.0.40
codegen_flags: <defaults>
</compile_context>

<pallas_src>
import functools

import numpy as np
import jax
import jax.numpy as jnp
from jax import lax
from jax.experimental import pallas as pl
from jax.experimental.pallas import tpu as pltpu


def _round_up(x: int, m: int) -> int:
    return (x + m - 1) // m * m


def _disc_kernel(lbl_ref, x_ref, tab_ref, w1_ref, b1_ref, w2_ref, b2_ref,
                 o_ref, acc_ref, *, num_classes):
    k = pl.program_id(1)

    @pl.when(k == 0)
    def _():
        acc_ref[...] = jnp.zeros_like(acc_ref)

    # Embedding gather as a tiny one-hot matmul on the MXU (exact row select):
    #   emb[r, :] = table[labels[r], :]
    lbl = lbl_ref[...]                                            # (TM, 1) i32
    cls = lax.broadcasted_iota(jnp.int32, (lbl.shape[0], num_classes), 1)
    one_hot = (lbl == cls).astype(jnp.bfloat16)                   # (TM, NC)
    emb = jnp.dot(one_hot, tab_ref[...],
                  preferred_element_type=jnp.float32)             # (TM, TK) f32

    # d_in = flat_imgs * emb — multiply in f32 (v5e has no bf16 VALU), then
    # bf16 operands into the MXU with f32 accumulation.
    d_in = (x_ref[...].astype(jnp.float32) * emb).astype(jnp.bfloat16)
    acc_ref[...] += jnp.dot(d_in, w1_ref[...],
                            preferred_element_type=jnp.float32)

    @pl.when(k == pl.num_programs(1) - 1)
    def _():
        h = acc_ref[...] + b1_ref[...]
        h = jnp.where(h > 0.0, h, 0.2 * h)                        # LeakyReLU(0.2)
        # second Linear (H -> 1): broadcast-multiply + lane reduce (VPU/XLU)
        out = jnp.sum(h * w2_ref[...], axis=-1, keepdims=True) + b2_ref[...]
        o_ref[...] = out.astype(o_ref.dtype)


def discriminator_forward(imgs, labels, params, *, tm=128,
                          w1_resident_bytes=8 * 1024 * 1024):
    """imgs: (B, C, H, W) f32, labels: (B,) int -> (B, 1) f32."""
    emb_table, w1, b1, w2, b2 = (
        params["emb"], params["w1"], params["b1"], params["w2"], params["b2"]
    )
    B = imgs.shape[0]
    D = int(np.prod(imgs.shape[1:]))
    NC = emb_table.shape[0]
    H = w1.shape[1]
    Hp = _round_up(H, 128)

    # bf16 HBM streams for the big operands (MXU consumes bf16 anyway).
    flat = imgs.reshape(B, D).astype(jnp.bfloat16)
    tab = emb_table.astype(jnp.bfloat16)
    w1b = w1.astype(jnp.bfloat16)
    lbl = labels.astype(jnp.int32).reshape(B, 1)

    TM = min(tm, _round_up(B, 8))          # batch tile (multiple of 8 sublanes)
    Bp = _round_up(B, TM)

    # Prefer a single K tile covering the full D: no padding along D, W1 and
    # the emb table stay VMEM-resident and are streamed exactly once.  Only
    # tile K (and minimally pad) when W1 would not fit the VMEM budget.
    if 2 * D * Hp <= w1_resident_bytes:
        TK, Dp = D, D
    else:
        TK = 2048
        Dp = _round_up(D, TK)

    if Bp != B:
        flat = jnp.pad(flat, ((0, Bp - B), (0, 0)))
        lbl = jnp.pad(lbl, ((0, Bp - B), (0, 0)))
    if Dp != D:
        flat = jnp.pad(flat, ((0, 0), (0, Dp - D)))
        tab = jnp.pad(tab, ((0, 0), (0, Dp - D)))
        w1b = jnp.pad(w1b, ((0, Dp - D), (0, 0)))
    if Hp != H:
        w1b = jnp.pad(w1b, ((0, 0), (0, Hp - H)))
        b1 = jnp.pad(b1, (0, Hp - H))
        w2 = jnp.pad(w2.reshape(-1), (0, Hp - H))

    b1p = b1.reshape(1, Hp).astype(jnp.float32)
    w2p = w2.reshape(1, Hp).astype(jnp.float32)
    b2p = b2.reshape(1, 1).astype(jnp.float32)

    m_tiles = Bp // TM
    k_tiles = Dp // TK

    cost = pl.CostEstimate(
        flops=2 * Bp * Dp * Hp + 2 * Bp * NC * Dp + 4 * Bp * Hp,
        transcendentals=0,
        bytes_accessed=2 * (Bp * Dp + NC * Dp + Dp * Hp)
        + 4 * (2 * Hp + 2 * Bp + 1),
    )

    kernel = functools.partial(_disc_kernel, num_classes=NC)

    out = pl.pallas_call(
        kernel,
        out_shape=jax.ShapeDtypeStruct((Bp, 1), jnp.float32),
        grid_spec=pltpu.PrefetchScalarGridSpec(
            num_scalar_prefetch=0,
            grid=(m_tiles, k_tiles),
            in_specs=[
                pl.BlockSpec((TM, 1), lambda i, k: (i, 0)),    # labels
                pl.BlockSpec((TM, TK), lambda i, k: (i, k)),   # flat imgs tile
                pl.BlockSpec((NC, TK), lambda i, k: (0, k)),   # emb table (resident)
                pl.BlockSpec((TK, Hp), lambda i, k: (k, 0)),   # W1 (resident when k_tiles==1)
                pl.BlockSpec((1, Hp), lambda i, k: (0, 0)),    # b1 (resident)
                pl.BlockSpec((1, Hp), lambda i, k: (0, 0)),    # W2 row (resident)
                pl.BlockSpec((1, 1), lambda i, k: (0, 0)),     # b2 (resident)
            ],
            out_specs=pl.BlockSpec((TM, 1), lambda i, k: (i, 0)),
            scratch_shapes=[pltpu.VMEM((TM, Hp), jnp.float32)],
        ),
        compiler_params=pltpu.CompilerParams(
            dimension_semantics=("parallel", "arbitrary"),
            vmem_limit_bytes=32 * 1024 * 1024,
        ),
        cost_estimate=cost,
    )(lbl, flat, tab, w1b, b1p, w2p, b2p)

    return out if Bp == B else out[:B]


def init_params(key, num_classes, img_shape, hidden=512):
    D = int(np.prod(img_shape))
    k_emb, k_w1, k_b1, k_w2, k_b2 = jax.random.split(key, 5)
    # deterministic synthetic init (shapes match nn.Embedding / nn.Linear)
    return {
        "emb": jax.random.normal(k_emb, (num_classes, D), jnp.float32),
        "w1": jax.random.normal(k_w1, (D, hidden), jnp.float32) * (1.0 / np.sqrt(D)),
        "b1": jax.random.normal(k_b1, (hidden,), jnp.float32) * 0.01,
        "w2": jax.random.normal(k_w2, (hidden, 1), jnp.float32) * (1.0 / np.sqrt(hidden)),
        "b2": jax.random.normal(k_b2, (1,), jnp.float32) * 0.01,
    }


def reference_forward(imgs, labels, params):
    B = imgs.shape[0]
    flat = imgs.reshape(B, -1)
    emb = jnp.take(params["emb"], labels, axis=0)
    d_in = flat * emb
    h = d_in @ params["w1"] + params["b1"]
    h = jnp.where(h > 0, h, 0.2 * h)
    return h @ params["w2"] + params["b2"]


if __name__ == "__main__":
    # Shapes consistent with the module (downscaled from img_shape=(1,256,65)):
    # img_shape = (1, 32, 65) -> D = 2080 (no padding needed), num_classes = 30,
    # hidden = 512.  B = 256 -> grid = (2 parallel batch tiles, 1 K tile):
    # W1 / emb table stay resident, everything streams exactly once.
    num_classes = 30
    img_shape = (1, 32, 65)
    B = 256

    key = jax.random.PRNGKey(0)
    k_params, k_img, k_lbl = jax.random.split(key, 3)
    params = init_params(k_params, num_classes, img_shape, hidden=512)

    imgs = jax.random.normal(k_img, (B,) + img_shape, jnp.float32)
    labels = jax.random.randint(k_lbl, (B,), 0, num_classes, jnp.int32)

    out = discriminator_forward(imgs, labels, params)
    out = jax.block_until_ready(out)

    ref = reference_forward(imgs, labels, params)
    assert out.shape == (B, 1), out.shape
    # bf16 streams (imgs / emb table / W1) with f32 accumulation -> loose tol
    np.testing.assert_allclose(np.asarray(out), np.asarray(ref), rtol=2e-2, atol=5e-2)

    print("KERNEL_OK")
</pallas_src>

<mosaic_0001>
module attributes {stable_mosaic.version = 11 : i64} {
  func.func @_disc_kernel(%arg0: i32, %arg1: i32, %arg2: memref<128x1xi32, #tpu.memory_space<vmem>>, %arg3: memref<128x2080xbf16, #tpu.memory_space<vmem>>, %arg4: memref<30x2080xbf16, #tpu.memory_space<vmem>>, %arg5: memref<2080x512xbf16, #tpu.memory_space<vmem>>, %arg6: memref<1x512xf32, #tpu.memory_space<vmem>>, %arg7: memref<1x512xf32, #tpu.memory_space<vmem>>, %arg8: memref<1x1xf32, #tpu.memory_space<vmem>>, %arg9: memref<128x1xf32, #tpu.memory_space<vmem>>, %arg10: memref<128x512xf32, #tpu.memory_space<vmem>>) attributes {dimension_semantics = [#tpu.dimension_semantics<parallel>, #tpu.dimension_semantics<arbitrary>], iteration_bounds = array<i64: 2, 1>, scalar_prefetch = 0 : i64, scratch_operands = 1 : i64, tpu.core_type = #tpu.core_type<tc>, window_params = [{transform_indices = @transform_0, window_bounds = array<i64: 128, 1>}, {transform_indices = @transform_1, window_bounds = array<i64: 128, 2080>}, {transform_indices = @transform_2, window_bounds = array<i64: 30, 2080>}, {transform_indices = @transform_3, window_bounds = array<i64: 2080, 512>}, {pipeline_mode = #tpu.pipeline_mode<synchronous>, transform_indices = @transform_4, window_bounds = array<i64: 1, 512>}, {pipeline_mode = #tpu.pipeline_mode<synchronous>, transform_indices = @transform_5, window_bounds = array<i64: 1, 512>}, {pipeline_mode = #tpu.pipeline_mode<synchronous>, transform_indices = @transform_6, window_bounds = array<i64: 1, 1>}, {transform_indices = @transform_7, window_bounds = array<i64: 128, 1>}]} {
    %c0_i32 = arith.constant 0 : i32
    %0 = arith.cmpi eq, %arg1, %c0_i32 : i32
    %1 = arith.extui %0 : i1 to i32
    %c0_i32_0 = arith.constant 0 : i32
    %2 = arith.cmpi ne, %1, %c0_i32_0 : i32
    scf.if %2 {
      %cst_15 = arith.constant 0.000000e+00 : f32
      %24 = vector.broadcast %cst_15 : f32 to vector<128x512xf32>
      %c0_16 = arith.constant 0 : index
      %c0_17 = arith.constant 0 : index
      %25 = vector.load %arg10[%c0_16, %c0_17] : memref<128x512xf32, #tpu.memory_space<vmem>>, vector<128x512xf32>
      tpu.vector_store %arg10[%c0_16, %c0_17], %24 {strides = array<i32>} : memref<128x512xf32, #tpu.memory_space<vmem>>, vector<128x512xf32>,
    } else {
    }
    %c0 = arith.constant 0 : index
    %c0_1 = arith.constant 0 : index
    %3 = vector.load %arg2[%c0, %c0_1] : memref<128x1xi32, #tpu.memory_space<vmem>>, vector<128x1xi32>
    %4 = tpu.iota {dimensions = array<i32: 1>} : vector<128x30xi32>
    %5 = vector.broadcast %3 : vector<128x1xi32> to vector<128x30xi32>
    %6 = arith.cmpi eq, %5, %4 : vector<128x30xi32>
    %7 = arith.extui %6 : vector<128x30xi1> to vector<128x30xi32>
    %8 = arith.sitofp %7 : vector<128x30xi32> to vector<128x30xf32>
    %9 = arith.truncf %8 : vector<128x30xf32> to vector<128x30xbf16>
    %c0_2 = arith.constant 0 : index
    %c0_3 = arith.constant 0 : index
    %10 = vector.load %arg4[%c0_2, %c0_3] : memref<30x2080xbf16, #tpu.memory_space<vmem>>, vector<30x2080xbf16>
    %cst = arith.constant dense<0.000000e+00> : vector<128x2080xf32>
    %11 = tpu.matmul %9, %10, %cst {dimension_numbers = #tpu.dot_dimension_numbers<[1], [0], [0], [1], [0, 0, 1, 1], [], []>} : vector<128x30xbf16>, vector<30x2080xbf16>, vector<128x2080xf32> -> vector<128x2080xf32>
    %c0_4 = arith.constant 0 : index
    %c0_5 = arith.constant 0 : index
    %12 = vector.load %arg3[%c0_4, %c0_5] : memref<128x2080xbf16, #tpu.memory_space<vmem>>, vector<128x2080xbf16>
    %13 = arith.extf %12 : vector<128x2080xbf16> to vector<128x2080xf32>
    %14 = arith.mulf %13, %11 : vector<128x2080xf32>
    %15 = arith.truncf %14 : vector<128x2080xf32> to vector<128x2080xbf16>
    %c0_6 = arith.constant 0 : index
    %c0_7 = arith.constant 0 : index
    %16 = vector.load %arg10[%c0_6, %c0_7] : memref<128x512xf32, #tpu.memory_space<vmem>>, vector<128x512xf32>
    %c0_8 = arith.constant 0 : index
    %c0_9 = arith.constant 0 : index
    %17 = vector.load %arg5[%c0_8, %c0_9] : memref<2080x512xbf16, #tpu.memory_space<vmem>>, vector<2080x512xbf16>
    %cst_10 = arith.constant dense<0.000000e+00> : vector<128x512xf32>
    %18 = tpu.matmul %15, %17, %cst_10 {dimension_numbers = #tpu.dot_dimension_numbers<[1], [0], [0], [1], [0, 0, 1, 1], [], []>} : vector<128x2080xbf16>, vector<2080x512xbf16>, vector<128x512xf32> -> vector<128x512xf32>
    %19 = arith.addf %16, %18 : vector<128x512xf32>
    %c0_11 = arith.constant 0 : index
    %c0_12 = arith.constant 0 : index
    %20 = vector.load %arg10[%c0_11, %c0_12] : memref<128x512xf32, #tpu.memory_space<vmem>>, vector<128x512xf32>
    tpu.vector_store %arg10[%c0_11, %c0_12], %19 {strides = array<i32>} : memref<128x512xf32, #tpu.memory_space<vmem>>, vector<128x512xf32>,
    %c0_i32_13 = arith.constant 0 : i32
    %21 = arith.cmpi eq, %arg1, %c0_i32_13 : i32
    %22 = arith.extui %21 : i1 to i32
    %c0_i32_14 = arith.constant 0 : i32
    %23 = arith.cmpi ne, %22, %c0_i32_14 : i32
    scf.if %23 {
      %c0_15 = arith.constant 0 : index
      %c0_16 = arith.constant 0 : index
      %24 = vector.load %arg10[%c0_15, %c0_16] : memref<128x512xf32, #tpu.memory_space<vmem>>, vector<128x512xf32>
      %c0_17 = arith.constant 0 : index
      %c0_18 = arith.constant 0 : index
      %25 = vector.load %arg6[%c0_17, %c0_18] : memref<1x512xf32, #tpu.memory_space<vmem>>, vector<1x512xf32>
      %26 = vector.broadcast %25 : vector<1x512xf32> to vector<128x512xf32>
      %27 = arith.addf %24, %26 : vector<128x512xf32>
      %cst_19 = arith.constant 0.000000e+00 : f32
      %28 = vector.broadcast %cst_19 : f32 to vector<128x512xf32>
      %29 = arith.cmpf ogt, %27, %28 : vector<128x512xf32>
      %cst_20 = arith.constant 2.000000e-01 : f32
      %30 = vector.broadcast %cst_20 : f32 to vector<128x512xf32>
      %31 = arith.mulf %30, %27 : vector<128x512xf32>
      %32 = arith.select %29, %27, %31 : vector<128x512xi1>, vector<128x512xf32>
      %c0_21 = arith.constant 0 : index
      %c0_22 = arith.constant 0 : index
      %33 = vector.load %arg7[%c0_21, %c0_22] : memref<1x512xf32, #tpu.memory_space<vmem>>, vector<1x512xf32>
      %34 = vector.broadcast %33 : vector<1x512xf32> to vector<128x512xf32>
      %35 = arith.mulf %32, %34 : vector<128x512xf32>
      %cst_23 = arith.constant dense<0.000000e+00> : vector<128xf32>
      %36 = vector.multi_reduction <add>, %35, %cst_23 [1] : vector<128x512xf32> to vector<128xf32>
      %37 = vector.shape_cast %36 : vector<128xf32> to vector<128x1xf32>
      %c0_24 = arith.constant 0 : index
      %c0_25 = arith.constant 0 : index
      %38 = vector.load %arg8[%c0_24, %c0_25] : memref<1x1xf32, #tpu.memory_space<vmem>>, vector<1x1xf32>
      %39 = vector.broadcast %38 : vector<1x1xf32> to vector<128x1xf32>
      %40 = arith.addf %37, %39 : vector<128x1xf32>
      %c0_26 = arith.constant 0 : index
      %c0_27 = arith.constant 0 : index
      %41 = vector.load %arg9[%c0_26, %c0_27] : memref<128x1xf32, #tpu.memory_space<vmem>>, vector<128x1xf32>
      tpu.vector_store %arg9[%c0_26, %c0_27], %40 {strides = array<i32>} : memref<128x1xf32, #tpu.memory_space<vmem>>, vector<128x1xf32>,
    } else {
    }
    return
  }
  func.func @transform_0(%arg0: i32, %arg1: i32) -> (i32, i32) {
    %c0_i32 = arith.constant 0 : i32
    %c0_i32_0 = arith.constant 0 : i32
    return %arg0, %c0_i32 : i32, i32
  }
  func.func @transform_1(%arg0: i32, %arg1: i32) -> (i32, i32) {
    %c0_i32 = arith.constant 0 : i32
    return %arg0, %arg1 : i32, i32
  }
  func.func @transform_2(%arg0: i32, %arg1: i32) -> (i32, i32) {
    %c0_i32 = arith.constant 0 : i32
    %c0_i32_0 = arith.constant 0 : i32
    return %c0_i32, %arg1 : i32, i32
  }
  func.func @transform_3(%arg0: i32, %arg1: i32) -> (i32, i32) {
    %c0_i32 = arith.constant 0 : i32
    %c0_i32_0 = arith.constant 0 : i32
    return %arg1, %c0_i32 : i32, i32
  }
  func.func @transform_4(%arg0: i32, %arg1: i32) -> (i32, i32) {
    %c0_i32 = arith.constant 0 : i32
    %c0_i32_0 = arith.constant 0 : i32
    %c0_i32_1 = arith.constant 0 : i32
    return %c0_i32, %c0_i32_0 : i32, i32
  }
  func.func @transform_5(%arg0: i32, %arg1: i32) -> (i32, i32) {
    %c0_i32 = arith.constant 0 : i32
    %c0_i32_0 = arith.constant 0 : i32
    %c0_i32_1 = arith.constant 0 : i32
    return %c0_i32, %c0_i32_0 : i32, i32
  }
  func.func @transform_6(%arg0: i32, %arg1: i32) -> (i32, i32) {
    %c0_i32 = arith.constant 0 : i32
    %c0_i32_0 = arith.constant 0 : i32
    %c0_i32_1 = arith.constant 0 : i32
    return %c0_i32, %c0_i32_0 : i32, i32
  }
  func.func @transform_7(%arg0: i32, %arg1: i32) -> (i32, i32) {
    %c0_i32 = arith.constant 0 : i32
    %c0_i32_0 = arith.constant 0 : i32
    return %arg0, %c0_i32 : i32, i32
  }
}

</mosaic_0001>

<llo_original>
// kernel: tpu_custom_call.1
$region0: #{tpu_custom_call.1}
  #allocation0 [shape = 'u32[]', space=smem, size = 0x4, offset = 0x4, fixed_abs, tag = 'smem constant byte address 0x4 - core index']
  #allocation1 [shape = 'u32[144,128]{1,0:T(1,128)}', space=vmem, size = 0x12000, scoped, tag = 'internal scratch']
  #allocation2 [shape = 'f32[128,512]{1,0:T(8,128)}', space=vmem, size = 0x40000, scoped, tag = 'scratch operand']
  #allocation3 [shape = 'f32[1,1]{1,0:T(1,128)S(1)}', space=vmem, size = 0x200, scoped, tag = 'scoped memory for tpu_custom_call.1']
  %s0 = inlined_call_operand.vmem [shape: s32[256,1], index: 0, kind: input, shape index: {}]
  %s1 = inlined_call_operand.vmem [shape: bf16[256,2080], index: 1, kind: input, shape index: {}]
  %s2 = inlined_call_operand.vmem [shape: bf16[30,2080], index: 2, kind: input, shape index: {}]
  %s3 = inlined_call_operand.vmem [shape: bf16[2080,512], index: 3, kind: input, shape index: {}]
  %s4 = inlined_call_operand.vmem [shape: f32[1,512], index: 4, kind: input, shape index: {}]
  %s5 = inlined_call_operand.vmem [shape: f32[1,512], index: 5, kind: input, shape index: {}]
  %s6 = inlined_call_operand.<no memory space> [shape: f32[1,1], index: 6, kind: input, shape index: {}]
  %s7 = inlined_call_operand.vmem [shape: f32[256,1], index: 7, kind: output, shape index: {}]
  %s8 = sld [smem:[#allocation0]]
  $region69: #{tpu_custom_call.1} parent=0
    _
  %s10 = ssub.s32 1, %s8
  %s11 = scalar_select 0, %s10, %s8
  %v12 = vstv %s6
  %13 = vst [vmem:[#allocation3] sm:$0x1] %v12
  loop: start=0, step=1, limit=4
  $region2: #{tpu_custom_call.1} parent=0 // loop_pre_header
    _
  $region3: #{tpu_custom_call.1} parent=0 // loop_header
    %s15 = sphi 0, %s19
    %p16 = scmp.ge.s32.totalorder %s15, 4
    %s22 = sphi 0, %s34
    %s23 = sphi 0, %s30
    %s24 = sphi 0, %s22
    %s25 = sphi 0, %s23
    %s26 = sphi 0, %s24
    %s27 = sphi 0, %s25
    %s37 = sphi 0, %s39
    %s40 = sphi 0, %s37
    %s41 = sphi 0, %s40
    %s57 = sphi 0, %s41
    %s65 = sphi 0, %s67
    %s68 = sphi 0, %s65
    %s69 = sphi 0, %s68
    %s85 = sphi 0, %s69
    %s91 = sphi 0, %s93
    %s94 = sphi 0, %s91
    %s95 = sphi 0, %s94
    %s111 = sphi 0, %s95
    %s117 = sphi 0, %s119
    %s120 = sphi 0, %s117
    %s121 = sphi 0, %s120
    %s137 = sphi 0, %s121
    %s141 = sphi 0, %s141
    %s143 = sphi 0, %s141
    %s144 = sphi 0, %s143
    %s158 = sphi 0, %s144
    %s162 = sphi 0, %s162
    %s164 = sphi 0, %s162
    %s165 = sphi 0, %s164
    %s179 = sphi 0, %s165
    %s183 = sphi 0, %s183
    %s185 = sphi 0, %s183
    %s186 = sphi 0, %s185
    %s200 = sphi 0, %s186
    %s206 = sphi 0, %s208
    %s209 = sphi 0, %s206
    %s210 = sphi 0, %s209
    %s226 = sphi 0, %s210
  $region4: #{tpu_custom_call.1} parent=0 // loop_header_branch
    %18 = sbr.rel (%p16) target = $region8
  $region5: #{tpu_custom_call.1} parent=0 // loop_body
    %s20 = ssub.s32 %s15, 1
    %s21 = ssub.s32 %s15, 2
    %s28 = sadd.s32 1, %s23
    %p29 = scmp.ge.s32.totalorder %s28, 1
    %s30 = scalar_select %p29, 0, %s28
    %s31 = sadd.s32 1, %s22
    %s32 = scalar_select %p29, %s31, %s22
    %p33 = scmp.ge.s32.totalorder %s32, 2
    %s34 = scalar_select %p33, 0, %s32
    %s35 = ssub.s32 %s22, %s34
    %p36 = scmp.eq.s32.totalorder %s35, 0
    %s38 = sadd.s32 %s37, 1
    %s39 = scalar_select %p36, %s37, %s38
    %p42 = pneg %p36
    %p43 = scmp.eq.s32.totalorder %s15, 1
    %p44 = por %p42, %p43
    %p45 = scmp.ne.s32.totalorder %s37, %s40
    %p46 = scmp.eq.s32.totalorder %s15, 0
    %p47 = por %p45, %p46
    %p48 = scmp.ne.s32.totalorder %s37, %s40
    %p49 = scmp.eq.s32.totalorder %s20, 1
    %p50 = por %p48, %p49
    %p51 = scmp.ne.s32.totalorder %s40, %s41
    %p52 = scmp.eq.s32.totalorder %s20, 0
    %p53 = por %p51, %p52
    %p54 = scmp.ne.s32.totalorder %s40, %s41
    %p55 = scmp.eq.s32.totalorder %s21, 1
    %p56 = por %p54, %p55
    %p58 = scmp.ne.s32.totalorder %s41, %s57
    %p59 = scmp.eq.s32.totalorder %s21, 0
    %p60 = por %p58, %p59
    %s61 = ssub.s32 %s22, %s34
    %s62 = ssub.s32 %s23, %s30
    %s63 = sor.u32 %s61, %s62
    %p64 = scmp.eq.s32.totalorder %s63, 0
    %s66 = sadd.s32 %s65, 1
    %s67 = scalar_select %p64, %s65, %s66
    %p70 = pneg %p64
    %p71 = scmp.eq.s32.totalorder %s15, 1
    %p72 = por %p70, %p71
    %p73 = scmp.ne.s32.totalorder %s65, %s68
    %p74 = scmp.eq.s32.totalorder %s15, 0
    %p75 = por %p73, %p74
    %p76 = scmp.ne.s32.totalorder %s65, %s68
    %p77 = scmp.eq.s32.totalorder %s20, 1
    %p78 = por %p76, %p77
    %p79 = scmp.ne.s32.totalorder %s68, %s69
    %p80 = scmp.eq.s32.totalorder %s20, 0
    %p81 = por %p79, %p80
    %p82 = scmp.ne.s32.totalorder %s68, %s69
    %p83 = scmp.eq.s32.totalorder %s21, 1
    %p84 = por %p82, %p83
    %p86 = scmp.ne.s32.totalorder %s69, %s85
    %p87 = scmp.eq.s32.totalorder %s21, 0
    %p88 = por %p86, %p87
    %s89 = ssub.s32 %s23, %s30
    %p90 = scmp.eq.s32.totalorder %s89, 0
    %s92 = sadd.s32 %s91, 1
    %s93 = scalar_select %p90, %s91, %s92
    %p96 = pneg %p90
    %p97 = scmp.eq.s32.totalorder %s15, 1
    %p98 = por %p96, %p97
    %p99 = scmp.ne.s32.totalorder %s91, %s94
    %p100 = scmp.eq.s32.totalorder %s15, 0
    %p101 = por %p99, %p100
    %p102 = scmp.ne.s32.totalorder %s91, %s94
    %p103 = scmp.eq.s32.totalorder %s20, 1
    %p104 = por %p102, %p103
    %p105 = scmp.ne.s32.totalorder %s94, %s95
    %p106 = scmp.eq.s32.totalorder %s20, 0
    %p107 = por %p105, %p106
    %p108 = scmp.ne.s32.totalorder %s94, %s95
    %p109 = scmp.eq.s32.totalorder %s21, 1
    %p110 = por %p108, %p109
    %p112 = scmp.ne.s32.totalorder %s95, %s111
    %p113 = scmp.eq.s32.totalorder %s21, 0
    %p114 = por %p112, %p113
    %s115 = ssub.s32 %s23, %s30
    %p116 = scmp.eq.s32.totalorder %s115, 0
    %s118 = sadd.s32 %s117, 1
    %s119 = scalar_select %p116, %s117, %s118
    %p122 = pneg %p116
    %p123 = scmp.eq.s32.totalorder %s15, 1
    %p124 = por %p122, %p123
    %p125 = scmp.ne.s32.totalorder %s117, %s120
    %p126 = scmp.eq.s32.totalorder %s15, 0
    %p127 = por %p125, %p126
    %p128 = scmp.ne.s32.totalorder %s117, %s120
    %p129 = scmp.eq.s32.totalorder %s20, 1
    %p130 = por %p128, %p129
    %p131 = scmp.ne.s32.totalorder %s120, %s121
    %p132 = scmp.eq.s32.totalorder %s20, 0
    %p133 = por %p131, %p132
    %p134 = scmp.ne.s32.totalorder %s120, %s121
    %p135 = scmp.eq.s32.totalorder %s21, 1
    %p136 = por %p134, %p135
    %p138 = scmp.ne.s32.totalorder %s121, %s137
    %p139 = scmp.eq.s32.totalorder %s21, 0
    %p140 = por %p138, %p139
    %s142 = sadd.s32 %s141, 1
    %p145 = scmp.eq.s32.totalorder %s15, 1
    %p146 = scmp.ne.s32.totalorder %s141, %s143
    %p147 = scmp.eq.s32.totalorder %s15, 0
    %p148 = por %p146, %p147
    %p149 = scmp.ne.s32.totalorder %s141, %s143
    %p150 = scmp.eq.s32.totalorder %s20, 1
    %p151 = por %p149, %p150
    %p152 = scmp.ne.s32.totalorder %s143, %s144
    %p153 = scmp.eq.s32.totalorder %s20, 0
    %p154 = por %p152, %p153
    %p155 = scmp.ne.s32.totalorder %s143, %s144
    %p156 = scmp.eq.s32.totalorder %s21, 1
    %p157 = por %p155, %p156
    %p159 = scmp.ne.s32.totalorder %s144, %s158
    %p160 = scmp.eq.s32.totalorder %s21, 0
    %p161 = por %p159, %p160
    %s163 = sadd.s32 %s162, 1
    %p166 = scmp.eq.s32.totalorder %s15, 1
    %p167 = scmp.ne.s32.totalorder %s162, %s164
    %p168 = scmp.eq.s32.totalorder %s15, 0
    %p169 = por %p167, %p168
    %p170 = scmp.ne.s32.totalorder %s162, %s164
    %p171 = scmp.eq.s32.totalorder %s20, 1
    %p172 = por %p170, %p171
    %p173 = scmp.ne.s32.totalorder %s164, %s165
    %p174 = scmp.eq.s32.totalorder %s20, 0
    %p175 = por %p173, %p174
    %p176 = scmp.ne.s32.totalorder %s164, %s165
    %p177 = scmp.eq.s32.totalorder %s21, 1
    %p178 = por %p176, %p177
    %p180 = scmp.ne.s32.totalorder %s165, %s179
    %p181 = scmp.eq.s32.totalorder %s21, 0
    %p182 = por %p180, %p181
    %s184 = sadd.s32 %s183, 1
    %p187 = scmp.eq.s32.totalorder %s15, 1
    %p188 = scmp.ne.s32.totalorder %s183, %s185
    %p189 = scmp.eq.s32.totalorder %s15, 0
    %p190 = por %p188, %p189
    %p191 = scmp.ne.s32.totalorder %s183, %s185
    %p192 = scmp.eq.s32.totalorder %s20, 1
    %p193 = por %p191, %p192
    %p194 = scmp.ne.s32.totalorder %s185, %s186
    %p195 = scmp.eq.s32.totalorder %s20, 0
    %p196 = por %p194, %p195
    %p197 = scmp.ne.s32.totalorder %s185, %s186
    %p198 = scmp.eq.s32.totalorder %s21, 1
    %p199 = por %p197, %p198
    %p201 = scmp.ne.s32.totalorder %s186, %s200
    %p202 = scmp.eq.s32.totalorder %s21, 0
    %p203 = por %p201, %p202
    %s204 = ssub.s32 %s22, %s34
    %p205 = scmp.eq.s32.totalorder %s204, 0
    %s207 = sadd.s32 %s206, 1
    %s208 = scalar_select %p205, %s206, %s207
    %p211 = pneg %p205
    %p212 = scmp.eq.s32.totalorder %s15, 1
    %p213 = por %p211, %p212
    %p214 = scmp.ne.s32.totalorder %s206, %s209
    %p215 = scmp.eq.s32.totalorder %s15, 0
    %p216 = por %p214, %p215
    %p217 = scmp.ne.s32.totalorder %s206, %s209
    %p218 = scmp.eq.s32.totalorder %s20, 1
    %p219 = por %p217, %p218
    %p220 = scmp.ne.s32.totalorder %s209, %s210
    %p221 = scmp.eq.s32.totalorder %s20, 0
    %p222 = por %p220, %p221
    %p223 = scmp.ne.s32.totalorder %s209, %s210
    %p224 = scmp.eq.s32.totalorder %s21, 1
    %p225 = por %p223, %p224
    %p227 = scmp.ne.s32.totalorder %s210, %s226
    %p228 = scmp.eq.s32.totalorder %s21, 0
    %p229 = por %p227, %p228
    %p230 = scmp.le.s32.totalorder 1, %s15
    %p231 = scmp.lt.s32.totalorder %s15, 3
    %p232 = pnand %p230, %p231
    %p233 = pneg %p232
    // Predicated region
    $region9: #{tpu_custom_call.1} parent=5 // pred_check
      _
    $region10: #{tpu_custom_call.1} parent=5 // pred_check_branch
      %235 = sbr.rel (%p232) target = $region12
    $region11: #{tpu_custom_call.1} parent=5 // pred_region
      %s236 = ssub.s32 %s15, 1
      // Predicated region
      $region13: #{tpu_custom_call.1} parent=11 // pred_check
        %p237 = pneg %p107
      $region14: #{tpu_custom_call.1} parent=11 // pred_check_branch
        %239 = sbr.rel (%p237) target = $region16
      $region15: #{tpu_custom_call.1} parent=11 // pred_region
        %s240 = smul.u32 17, %s25
        %p241 = scmp.lt.s32.totalorder %s240, 16
        %s242 = scalar_select %p241, %s240, 16
        %s243 = smul.addr %s242, 4
        %s244 = scalar_lea.vmem %s2, %s243
        %s245 = smul.u32 17, %s25
      $region16: #{tpu_custom_call.1} parent=11 // pred_fallthru
        _
      // Predicated region
      $region17: #{tpu_custom_call.1} parent=11 // pred_check
        %p246 = pneg %p133
      $region18: #{tpu_custom_call.1} parent=11 // pred_check_branch
        %248 = sbr.rel (%p246) target = $region20
      $region19: #{tpu_custom_call.1} parent=11 // pred_region
        %s249 = smul.u32 260, %s25
        %p250 = scmp.lt.s32.totalorder %s249, 259
        %s251 = scalar_select %p250, %s249, 259
        %s252 = smul.addr %s251, 4
        %s253 = smul.addr %s252, 4
        %s254 = scalar_lea.vmem %s3, %s253
        %s255 = smul.u32 260, %s25
      $region20: #{tpu_custom_call.1} parent=11 // pred_fallthru
        _
      // Predicated region
      $region21: #{tpu_custom_call.1} parent=11 // pred_check
        %p256 = pneg %p154
      $region22: #{tpu_custom_call.1} parent=11 // pred_check_branch
        %258 = sbr.rel (%p256) target = $region24
      $region23: #{tpu_custom_call.1} parent=11 // pred_region
        _
      $region24: #{tpu_custom_call.1} parent=11 // pred_fallthru
        _
      // Predicated region
      $region25: #{tpu_custom_call.1} parent=11 // pred_check
        %p259 = pneg %p175
      $region26: #{tpu_custom_call.1} parent=11 // pred_check_branch
        %261 = sbr.rel (%p259) target = $region28
      $region27: #{tpu_custom_call.1} parent=11 // pred_region
        _
      $region28: #{tpu_custom_call.1} parent=11 // pred_fallthru
        _
      // Predicated region
      $region29: #{tpu_custom_call.1} parent=11 // pred_check
        %p262 = pneg %p196
      $region30: #{tpu_custom_call.1} parent=11 // pred_check_branch
        %264 = sbr.rel (%p262) target = $region32
      $region31: #{tpu_custom_call.1} parent=11 // pred_region
        _
      $region32: #{tpu_custom_call.1} parent=11 // pred_fallthru
        _
    $region12: #{tpu_custom_call.1} parent=5 // pred_fallthru
      _
    %p265 = scmp.lt.s32.totalorder %s15, 2
    // Predicated region
    $region33: #{tpu_custom_call.1} parent=5 // pred_check
      %p266 = pneg %p265
    $region34: #{tpu_custom_call.1} parent=5 // pred_check_branch
      %268 = sbr.rel (%p266) target = $region36
    $region35: #{tpu_custom_call.1} parent=5 // pred_region
      // Predicated region
      $region37: #{tpu_custom_call.1} parent=35 // pred_check
        %p269 = pneg %p47
      $region38: #{tpu_custom_call.1} parent=35 // pred_check_branch
        %271 = sbr.rel (%p269) target = $region40
      $region39: #{tpu_custom_call.1} parent=35 // pred_region
        %s272 = smul.u32 16, %s22
        %p273 = scmp.lt.s32.totalorder %s272, 31
        %s274 = scalar_select %p273, %s272, 31
        %s275 = smul.addr %s274, 8
        %s276 = scalar_lea.vmem %s0, %s275
        %s277 = smul.u32 16, %s22
      $region40: #{tpu_custom_call.1} parent=35 // pred_fallthru
        _
      // Predicated region
      $region41: #{tpu_custom_call.1} parent=35 // pred_check
        %p278 = pneg %p75
      $region42: #{tpu_custom_call.1} parent=35 // pred_check_branch
        %280 = sbr.rel (%p278) target = $region44
      $region43: #{tpu_custom_call.1} parent=35 // pred_region
        %s281 = smul.u32 16, %s22
        %s282 = smul.u32 17, %s23
        %p283 = scmp.lt.s32.totalorder %s281, 31
        %s284 = scalar_select %p283, %s281, 31
        %p285 = scmp.lt.s32.totalorder %s282, 16
        %s286 = scalar_select %p285, %s282, 16
        %s287 = smul.addr %s284, 17
        %s288 = sadd.s32 %s286, %s287
        %s289 = smul.addr %s288, 4
        %s290 = scalar_lea.vmem %s1, %s289
        %s291 = smul.u32 16, %s22
        %s292 = smul.u32 17, %s23
      $region44: #{tpu_custom_call.1} parent=35 // pred_fallthru
        _
    $region36: #{tpu_custom_call.1} parent=5 // pred_fallthru
      _
    %p293 = scmp.le.s32.totalorder 1, %s15
    %p294 = scmp.lt.s32.totalorder %s15, 3
    %p295 = pnand %p293, %p294
    %p296 = pneg %p295
    // Predicated region
    $region45: #{tpu_custom_call.1} parent=5 // pred_check
      _
    $region46: #{tpu_custom_call.1} parent=5 // pred_check_branch
      %298 = sbr.rel (%p295) target = $region48
    $region47: #{tpu_custom_call.1} parent=5 // pred_region
      %s299 = ssub.s32 %s15, 1
      %s300 = smul.u32 16, %s24
      %p301 = scmp.lt.s32.totalorder %s300, 31
      %s302 = scalar_select %p301, %s300, 31
      %s303 = smul.addr %s302, 8
      %s304 = scalar_lea.vmem %s0, %s303
      %p305 = pneg %p53
      %p306 = pneg %p50
      %s307 = smul.u32 16, %s24
      %s308 = smul.u32 17, %s25
      %p309 = scmp.lt.s32.totalorder %s307, 31
      %s310 = scalar_select %p309, %s307, 31
      %p311 = scmp.lt.s32.totalorder %s308, 16
      %s312 = scalar_select %p311, %s308, 16
      %s313 = smul.addr %s310, 17
      %s314 = sadd.s32 %s312, %s313
      %s315 = smul.addr %s314, 4
      %s316 = scalar_lea.vmem %s1, %s315
      %p317 = pneg %p81
      %p318 = pneg %p78
      %s319 = smul.u32 17, %s25
      %p320 = scmp.lt.s32.totalorder %s319, 16
      %s321 = scalar_select %p320, %s319, 16
      %s322 = smul.addr %s321, 4
      %s323 = scalar_lea.vmem %s2, %s322
      %p324 = pneg %p107
      %p325 = pneg %p104
      %s326 = smul.u32 260, %s25
      %p327 = scmp.lt.s32.totalorder %s326, 259
      %s328 = scalar_select %p327, %s326, 259
      %s329 = smul.addr %s328, 4
      %s330 = smul.addr %s329, 4
      %s331 = scalar_lea.vmem %s3, %s330
      %p332 = pneg %p133
      %p333 = pneg %p130
      %p334 = pneg %p154
      %p335 = pneg %p151
      %p336 = pneg %p175
      %p337 = pneg %p172
      %p338 = pneg %p196
      %p339 = pneg %p193
      %p340 = pneg %p222
      %p341 = pneg %p219
      %s342 = smul.u32 16, %s24
      %p343 = scmp.lt.s32.totalorder %s342, 31
      %s344 = scalar_select %p343, %s342, 31
      %s345 = smul.addr %s344, 8
      %s346 = scalar_lea.vmem %s7, %s345
      %s347 = smul.u32 16, %s24
      %p348 = scmp.lt.s32.totalorder %s347, 31
      %s349 = scalar_select %p348, %s347, 31
      %s350 = smul.addr %s349, 8
      %s351 = scalar_lea.vmem %s0, %s350
      %s352 = smul.u32 16, %s24
      %s353 = smul.u32 16, %s24
      %s354 = smul.u32 17, %s25
      %p355 = scmp.lt.s32.totalorder %s353, 31
      %s356 = scalar_select %p355, %s353, 31
      %p357 = scmp.lt.s32.totalorder %s354, 16
      %s358 = scalar_select %p357, %s354, 16
      %s359 = smul.addr %s356, 17
      %s360 = sadd.s32 %s358, %s359
      %s361 = smul.addr %s360, 4
      %s362 = scalar_lea.vmem %s1, %s361
      %s363 = smul.u32 16, %s24
      %s364 = smul.u32 17, %s25
      %s365 = smul.u32 17, %s25
      %p366 = scmp.lt.s32.totalorder %s365, 16
      %s367 = scalar_select %p366, %s365, 16
      %s368 = smul.addr %s367, 4
      %s369 = scalar_lea.vmem %s2, %s368
      %s370 = smul.u32 17, %s25
      %s371 = smul.u32 260, %s25
      %p372 = scmp.lt.s32.totalorder %s371, 259
      %s373 = scalar_select %p372, %s371, 259
      %s374 = smul.addr %s373, 4
      %s375 = smul.addr %s374, 4
      %s376 = scalar_lea.vmem %s3, %s375
      %s377 = smul.u32 260, %s25
      %s378 = smul.u32 16, %s24
      %p379 = scmp.lt.s32.totalorder %s378, 31
      %s380 = scalar_select %p379, %s378, 31
      %s381 = smul.addr %s380, 8
      %s382 = scalar_lea.vmem %s7, %s381
      %s383 = smul.u32 16, %s24
      %p385 = scmp.eq.s32.totalorder %s25, 0
      // Predicated region
      $region49: #{tpu_custom_call.1} parent=47 // pred_check
        %p386 = pneg %p385
      $region50: #{tpu_custom_call.1} parent=47 // pred_check_branch
        %388 = sbr.rel (%p386) target = $region52
      $region51: #{tpu_custom_call.1} parent=47 // pred_region
        %389 = vst [vmem:[#allocation2] sm:$0xff] 0.0
        %390 = vst [vmem:[#allocation2 + $0x8] sm:$0xff] 0.0
        %391 = vst [vmem:[#allocation2 + $0x10] sm:$0xff] 0.0
        %392 = vst [vmem:[#allocation2 + $0x18] sm:$0xff] 0.0
        %393 = vst [vmem:[#allocation2 + $0x20] sm:$0xff] 0.0
        %394 = vst [vmem:[#allocation2 + $0x28] sm:$0xff] 0.0
        %395 = vst [vmem:[#allocation2 + $0x30] sm:$0xff] 0.0
        %396 = vst [vmem:[#allocation2 + $0x38] sm:$0xff] 0.0
        %397 = vst [vmem:[#allocation2 + $0x40] sm:$0xff] 0.0
        %398 = vst [vmem:[#allocation2 + $0x48] sm:$0xff] 0.0
        %399 = vst [vmem:[#allocation2 + $0x50] sm:$0xff] 0.0
        %400 = vst [vmem:[#allocation2 + $0x58] sm:$0xff] 0.0
        %401 = vst [vmem:[#allocation2 + $0x60] sm:$0xff] 0.0
        %402 = vst [vmem:[#allocation2 + $0x68] sm:$0xff] 0.0
        %403 = vst [vmem:[#allocation2 + $0x70] sm:$0xff] 0.0
        %404 = vst [vmem:[#allocation2 + $0x78] sm:$0xff] 0.0
        %405 = vst [vmem:[#allocation2 + $0x80] sm:$0xff] 0.0
        %406 = vst [vmem:[#allocation2 + $0x88] sm:$0xff] 0.0
        %407 = vst [vmem:[#allocation2 + $0x90] sm:$0xff] 0.0
        %408 = vst [vmem:[#allocation2 + $0x98] sm:$0xff] 0.0
        %409 = vst [vmem:[#allocation2 + $0xa0] sm:$0xff] 0.0
        %410 = vst [vmem:[#allocation2 + $0xa8] sm:$0xff] 0.0
        %411 = vst [vmem:[#allocation2 + $0xb0] sm:$0xff] 0.0
        %412 = vst [vmem:[#allocation2 + $0xb8] sm:$0xff] 0.0
        %413 = vst [vmem:[#allocation2 + $0xc0] sm:$0xff] 0.0
        %414 = vst [vmem:[#allocation2 + $0xc8] sm:$0xff] 0.0
        %415 = vst [vmem:[#allocation2 + $0xd0] sm:$0xff] 0.0
        %416 = vst [vmem:[#allocation2 + $0xd8] sm:$0xff] 0.0
        %417 = vst [vmem:[#allocation2 + $0xe0] sm:$0xff] 0.0
        %418 = vst [vmem:[#allocation2 + $0xe8] sm:$0xff] 0.0
        %419 = vst [vmem:[#allocation2 + $0xf0] sm:$0xff] 0.0
        %420 = vst [vmem:[#allocation2 + $0xf8] sm:$0xff] 0.0
        %421 = vst [vmem:[#allocation2 + $0x100] sm:$0xff] 0.0
        %422 = vst [vmem:[#allocation2 + $0x108] sm:$0xff] 0.0
        %423 = vst [vmem:[#allocation2 + $0x110] sm:$0xff] 0.0
        %424 = vst [vmem:[#allocation2 + $0x118] sm:$0xff] 0.0
        %425 = vst [vmem:[#allocation2 + $0x120] sm:$0xff] 0.0
        %426 = vst [vmem:[#allocation2 + $0x128] sm:$0xff] 0.0
        %427 = vst [vmem:[#allocation2 + $0x130] sm:$0xff] 0.0
        %428 = vst [vmem:[#allocation2 + $0x138] sm:$0xff] 0.0
        %429 = vst [vmem:[#allocation2 + $0x140] sm:$0xff] 0.0
        %430 = vst [vmem:[#allocation2 + $0x148] sm:$0xff] 0.0
        %431 = vst [vmem:[#allocation2 + $0x150] sm:$0xff] 0.0
        %432 = vst [vmem:[#allocation2 + $0x158] sm:$0xff] 0.0
        %433 = vst [vmem:[#allocation2 + $0x160] sm:$0xff] 0.0
        %434 = vst [vmem:[#allocation2 + $0x168] sm:$0xff] 0.0
        %435 = vst [vmem:[#allocation2 + $0x170] sm:$0xff] 0.0
        %436 = vst [vmem:[#allocation2 + $0x178] sm:$0xff] 0.0
        %437 = vst [vmem:[#allocation2 + $0x180] sm:$0xff] 0.0
        %438 = vst [vmem:[#allocation2 + $0x188] sm:$0xff] 0.0
        %439 = vst [vmem:[#allocation2 + $0x190] sm:$0xff] 0.0
        %440 = vst [vmem:[#allocation2 + $0x198] sm:$0xff] 0.0
        %441 = vst [vmem:[#allocation2 + $0x1a0] sm:$0xff] 0.0
        %442 = vst [vmem:[#allocation2 + $0x1a8] sm:$0xff] 0.0
        %443 = vst [vmem:[#allocation2 + $0x1b0] sm:$0xff] 0.0
        %444 = vst [vmem:[#allocation2 + $0x1b8] sm:$0xff] 0.0
        %445 = vst [vmem:[#allocation2 + $0x1c0] sm:$0xff] 0.0
        %446 = vst [vmem:[#allocation2 + $0x1c8] sm:$0xff] 0.0
        %447 = vst [vmem:[#allocation2 + $0x1d0] sm:$0xff] 0.0
        %448 = vst [vmem:[#allocation2 + $0x1d8] sm:$0xff] 0.0
        %449 = vst [vmem:[#allocation2 + $0x1e0] sm:$0xff] 0.0
        %450 = vst [vmem:[#allocation2 + $0x1e8] sm:$0xff] 0.0
        %451 = vst [vmem:[#allocation2 + $0x1f0] sm:$0xff] 0.0
        %452 = vst [vmem:[#allocation2 + $0x1f8] sm:$0xff] 0.0
      $region52: #{tpu_custom_call.1} parent=47 // pred_fallthru
        _
      %v453 = vld [vmem:[%s351] sm:$0xff]
      %v454 = vld [vmem:[%s351 + $0x8] sm:$0xff]
      %v455 = vld [vmem:[%s351 + $0x10] sm:$0xff]
      %v456 = vld [vmem:[%s351 + $0x18] sm:$0xff]
      %v457 = vld [vmem:[%s351 + $0x20] sm:$0xff]
      %v458 = vld [vmem:[%s351 + $0x28] sm:$0xff]
      %v459 = vld [vmem:[%s351 + $0x30] sm:$0xff]
      %v460 = vld [vmem:[%s351 + $0x38] sm:$0xff]
      %v461 = vld [vmem:[%s351 + $0x40] sm:$0xff]
      %v462 = vld [vmem:[%s351 + $0x48] sm:$0xff]
      %v463 = vld [vmem:[%s351 + $0x50] sm:$0xff]
      %v464 = vld [vmem:[%s351 + $0x58] sm:$0xff]
      %v465 = vld [vmem:[%s351 + $0x60] sm:$0xff]
      %v466 = vld [vmem:[%s351 + $0x68] sm:$0xff]
      %v467 = vld [vmem:[%s351 + $0x70] sm:$0xff]
      %v468 = vld [vmem:[%s351 + $0x78] sm:$0xff]
      %v469 = vlaneseq
      %v470 = vand.u32 %v469, 127
      %471 = vset.pattern.permute.xlu0 0
      %472 = vperm.xlu0 %471, %v453
      %v473 = vpop.permute.xlu0 %472
      %474 = vset.pattern.permute.xlu0 0
      %475 = vperm.xlu0 %474, %v454
      %v476 = vpop.permute.xlu0 %475
      %477 = vset.pattern.permute.xlu0 0
      %478 = vperm.xlu0 %477, %v455
      %v479 = vpop.permute.xlu0 %478
      %480 = vset.pattern.permute.xlu0 0
      %481 = vperm.xlu0 %480, %v456
      %v482 = vpop.permute.xlu0 %481
      %483 = vset.pattern.permute.xlu0 0
      %484 = vperm.xlu0 %483, %v457
      %v485 = vpop.permute.xlu0 %484
      %486 = vset.pattern.permute.xlu0 0
      %487 = vperm.xlu0 %486, %v458
      %v488 = vpop.permute.xlu0 %487
      %489 = vset.pattern.permute.xlu0 0
      %490 = vperm.xlu0 %489, %v459
      %v491 = vpop.permute.xlu0 %490
      %492 = vset.pattern.permute.xlu0 0
      %493 = vperm.xlu0 %492, %v460
      %v494 = vpop.permute.xlu0 %493
      %495 = vset.pattern.permute.xlu0 0
      %496 = vperm.xlu0 %495, %v461
      %v497 = vpop.permute.xlu0 %496
      %498 = vset.pattern.permute.xlu0 0
      %499 = vperm.xlu0 %498, %v462
      %v500 = vpop.permute.xlu0 %499
      %501 = vset.pattern.permute.xlu0 0
      %502 = vperm.xlu0 %501, %v463
      %v503 = vpop.permute.xlu0 %502
      %504 = vset.pattern.permute.xlu0 0
      %505 = vperm.xlu0 %504, %v464
      %v506 = vpop.permute.xlu0 %505
      %507 = vset.pattern.permute.xlu0 0
      %508 = vperm.xlu0 %507, %v465
      %v509 = vpop.permute.xlu0 %508
      %510 = vset.pattern.permute.xlu0 0
      %511 = vperm.xlu0 %510, %v466
      %v512 = vpop.permute.xlu0 %511
      %513 = vset.pattern.permute.xlu0 0
      %514 = vperm.xlu0 %513, %v467
      %v515 = vpop.permute.xlu0 %514
      %516 = vset.pattern.permute.xlu0 0
      %517 = vperm.xlu0 %516, %v468
      %v518 = vpop.permute.xlu0 %517
      %vm519 = vcmp.eq.s32.totalorder %v473, %v470
      %vm520 = vcmp.eq.s32.totalorder %v476, %v470
      %vm521 = vcmp.eq.s32.totalorder %v479, %v470
      %vm522 = vcmp.eq.s32.totalorder %v482, %v470
      %vm523 = vcmp.eq.s32.totalorder %v485, %v470
      %vm524 = vcmp.eq.s32.totalorder %v488, %v470
      %vm525 = vcmp.eq.s32.totalorder %v491, %v470
      %vm526 = vcmp.eq.s32.totalorder %v494, %v470
      %vm527 = vcmp.eq.s32.totalorder %v497, %v470
      %vm528 = vcmp.eq.s32.totalorder %v500, %v470
      %vm529 = vcmp.eq.s32.totalorder %v503, %v470
      %vm530 = vcmp.eq.s32.totalorder %v506, %v470
      %vm531 = vcmp.eq.s32.totalorder %v509, %v470
      %vm532 = vcmp.eq.s32.totalorder %v512, %v470
      %vm533 = vcmp.eq.s32.totalorder %v515, %v470
      %vm534 = vcmp.eq.s32.totalorder %v518, %v470
      %v535 = vsel %vm519, 1, 0
      %v536 = vsel %vm520, 1, 0
      %v537 = vsel %vm521, 1, 0
      %v538 = vsel %vm522, 1, 0
      %v539 = vsel %vm523, 1, 0
      %v540 = vsel %vm524, 1, 0
      %v541 = vsel %vm525, 1, 0
      %v542 = vsel %vm526, 1, 0
      %v543 = vsel %vm527, 1, 0
      %v544 = vsel %vm528, 1, 0
      %v545 = vsel %vm529, 1, 0
      %v546 = vsel %vm530, 1, 0
      %v547 = vsel %vm531, 1, 0
      %v548 = vsel %vm532, 1, 0
      %v549 = vsel %vm533, 1, 0
      %v550 = vsel %vm534, 1, 0
      %v551 = vcvt.s32.f32 %v535
      %v552 = vcvt.s32.f32 %v536
      %v553 = vcvt.s32.f32 %v537
      %v554 = vcvt.s32.f32 %v538
      %v555 = vcvt.s32.f32 %v539
      %v556 = vcvt.s32.f32 %v540
      %v557 = vcvt.s32.f32 %v541
      %v558 = vcvt.s32.f32 %v542
      %v559 = vcvt.s32.f32 %v543
      %v560 = vcvt.s32.f32 %v544
      %v561 = vcvt.s32.f32 %v545
      %v562 = vcvt.s32.f32 %v546
      %v563 = vcvt.s32.f32 %v547
      %v564 = vcvt.s32.f32 %v548
      %v565 = vcvt.s32.f32 %v549
      %v566 = vcvt.s32.f32 %v550
      %v567 = vpack.c.bf16 %v552, %v551
      %v568 = vpack.c.bf16 %v554, %v553
      %v569 = vpack.c.bf16 %v556, %v555
      %v570 = vpack.c.bf16 %v558, %v557
      %v571 = vpack.c.bf16 %v560, %v559
      %v572 = vpack.c.bf16 %v562, %v561
      %v573 = vpack.c.bf16 %v564, %v563
      %v574 = vpack.c.bf16 %v566, %v565
      %v575 = vld [vmem:[%s369] sm:$0xff]
      %v576 = vld [vmem:[%s369 + $0x8] sm:$0xff]
      %v577 = vld [vmem:[%s369 + $0x10] sm:$0xff]
      %v578 = vld [vmem:[%s369 + $0x18] sm:$0xff]
      %v579 = vld [vmem:[%s369 + $0x20] sm:$0xff]
      %v580 = vld [vmem:[%s369 + $0x28] sm:$0xff]
      %v581 = vld [vmem:[%s369 + $0x30] sm:$0xff]
      %v582 = vld [vmem:[%s369 + $0x38] sm:$0xff]
      %v583 = vld [vmem:[%s369 + $0x40] sm:$0xf]
      %v584 = vld [vmem:[%s369 + $0x44] sm:$0xff]
      %v585 = vld [vmem:[%s369 + $0x4c] sm:$0xff]
      %v586 = vld [vmem:[%s369 + $0x54] sm:$0xff]
      %v587 = vld [vmem:[%s369 + $0x5c] sm:$0xff]
      %v588 = vld [vmem:[%s369 + $0x64] sm:$0xff]
      %v589 = vld [vmem:[%s369 + $0x6c] sm:$0xff]
      %v590 = vld [vmem:[%s369 + $0x74] sm:$0xff]
      %v591 = vld [vmem:[%s369 + $0x7c] sm:$0xff]
      %v592 = vld [vmem:[%s369 + $0x84] sm:$0xf]
      %v593 = vld [vmem:[%s369 + $0x88] sm:$0xff]
      %v594 = vld [vmem:[%s369 + $0x90] sm:$0xff]
      %v595 = vld [vmem:[%s369 + $0x98] sm:$0xff]
      %v596 = vld [vmem:[%s369 + $0xa0] sm:$0xff]
      %v597 = vld [vmem:[%s369 + $0xa8] sm:$0xff]
      %v598 = vld [vmem:[%s369 + $0xb0] sm:$0xff]
      %v599 = vld [vmem:[%s369 + $0xb8] sm:$0xff]
      %v600 = vld [vmem:[%s369 + $0xc0] sm:$0xff]
      %v601 = vld [vmem:[%s369 + $0xc8] sm:$0xf]
      %v602 = vld [vmem:[%s369 + $0xcc] sm:$0x77]
      %v603 = vld [vmem:[%s369 + $0xd4] sm:$0x77]
      %v604 = vld [vmem:[%s369 + $0xdc] sm:$0x77]
      %v605 = vld [vmem:[%s369 + $0xe4] sm:$0x77]
      %v606 = vld [vmem:[%s369 + $0xec] sm:$0x77]
      %v607 = vld [vmem:[%s369 + $0xf4] sm:$0x77]
      %v608 = vld [vmem:[%s369 + $0xfc] sm:$0x77]
      %v609 = vld [vmem:[%s369 + $0x104] sm:$0x77]
      %v610 = vld [vmem:[%s369 + $0x10c] sm:$0x7]
      %v647 = vunpack.c.l.b16 %v575
      %v648 = vunpack.c.h.b16 %v575
      %v649 = vunpack.c.l.b16 %v576
      %v650 = vunpack.c.h.b16 %v576
      %v651 = vunpack.c.l.b16 %v577
      %v652 = vunpack.c.h.b16 %v577
      %v653 = vunpack.c.l.b16 %v578
      %v654 = vunpack.c.h.b16 %v578
      %v655 = vunpack.c.l.b16 %v579
      %v656 = vunpack.c.h.b16 %v579
      %v657 = vunpack.c.l.b16 %v580
      %v658 = vunpack.c.h.b16 %v580
      %v659 = vunpack.c.l.b16 %v581
      %v660 = vunpack.c.h.b16 %v581
      %v661 = vunpack.c.l.b16 %v582
      %v662 = vunpack.c.h.b16 %v582
      %v663 = vunpack.c.l.b16 %v583
      %v664 = vunpack.c.l.b16 %v584
      %v665 = vunpack.c.h.b16 %v584
      %v666 = vunpack.c.l.b16 %v585
      %v667 = vunpack.c.h.b16 %v585
      %v668 = vunpack.c.l.b16 %v586
      %v669 = vunpack.c.h.b16 %v586
      %v670 = vunpack.c.l.b16 %v587
      %v671 = vunpack.c.h.b16 %v587
      %v672 = vunpack.c.l.b16 %v588
      %v673 = vunpack.c.h.b16 %v588
      %v674 = vunpack.c.l.b16 %v589
      %v675 = vunpack.c.h.b16 %v589
      %v676 = vunpack.c.l.b16 %v590
      %v677 = vunpack.c.h.b16 %v590
      %v678 = vunpack.c.l.b16 %v591
      %v679 = vunpack.c.h.b16 %v591
      %v680 = vunpack.c.l.b16 %v592
      %v681 = vunpack.c.l.b16 %v593
      %v682 = vunpack.c.h.b16 %v593
      %v683 = vunpack.c.l.b16 %v594
      %v684 = vunpack.c.h.b16 %v594
      %v685 = vunpack.c.l.b16 %v595
      %v686 = vunpack.c.h.b16 %v595
      %v687 = vunpack.c.l.b16 %v596
      %v688 = vunpack.c.h.b16 %v596
      %v689 = vunpack.c.l.b16 %v597
      %v690 = vunpack.c.h.b16 %v597
      %v691 = vunpack.c.l.b16 %v598
      %v692 = vunpack.c.h.b16 %v598
      %v693 = vunpack.c.l.b16 %v599
      %v694 = vunpack.c.h.b16 %v599
      %v695 = vunpack.c.l.b16 %v600
      %v696 = vunpack.c.h.b16 %v600
      %v697 = vunpack.c.l.b16 %v601
      %v698 = vunpack.c.l.b16 %v602
      %v699 = vunpack.c.h.b16 %v602
      %v700 = vunpack.c.l.b16 %v603
      %v701 = vunpack.c.h.b16 %v603
      %v702 = vunpack.c.l.b16 %v604
      %v703 = vunpack.c.h.b16 %v604
      %v704 = vunpack.c.l.b16 %v605
      %v705 = vunpack.c.h.b16 %v605
      %v706 = vunpack.c.l.b16 %v606
      %v707 = vunpack.c.h.b16 %v606
      %v708 = vunpack.c.l.b16 %v607
      %v709 = vunpack.c.h.b16 %v607
      %v710 = vunpack.c.l.b16 %v608
      %v711 = vunpack.c.h.b16 %v608
      %v712 = vunpack.c.l.b16 %v609
      %v713 = vunpack.c.h.b16 %v609
      %v714 = vunpack.c.l.b16 %v610
      %v715 = vpack.c.b16 %v664, %v647
      %v716 = vpack.c.b16 %v665, %v648
      %v717 = vpack.c.b16 %v666, %v649
      %v718 = vpack.c.b16 %v667, %v650
      %v719 = vpack.c.b16 %v668, %v651
      %v720 = vpack.c.b16 %v669, %v652
      %v721 = vpack.c.b16 %v670, %v653
      %v722 = vpack.c.b16 %v671, %v654
      %v723 = vpack.c.b16 %v672, %v655
      %v724 = vpack.c.b16 %v673, %v656
      %v725 = vpack.c.b16 %v674, %v657
      %v726 = vpack.c.b16 %v675, %v658
      %v727 = vpack.c.b16 %v676, %v659
      %v728 = vpack.c.b16 %v677, %v660
      %v729 = vpack.c.b16 %v678, %v661
      %v730 = vpack.c.b16 %v679, %v662
      %v731 = vpack.c.b16 %v680, %v663
      %v732 = vpack.c.b16 %v698, %v681
      %v733 = vpack.c.b16 %v699, %v682
      %v734 = vpack.c.b16 %v700, %v683
      %v735 = vpack.c.b16 %v701, %v684
      %v736 = vpack.c.b16 %v702, %v685
      %v737 = vpack.c.b16 %v703, %v686
      %v738 = vpack.c.b16 %v704, %v687
      %v739 = vpack.c.b16 %v705, %v688
      %v740 = vpack.c.b16 %v706, %v689
      %v741 = vpack.c.b16 %v707, %v690
      %v742 = vpack.c.b16 %v708, %v691
      %v743 = vpack.c.b16 %v709, %v692
      %v744 = vpack.c.b16 %v710, %v693
      %v745 = vpack.c.b16 %v711, %v694
      %v746 = vpack.c.b16 %v712, %v695
      %v747 = vpack.c.b16 %v713, %v696
      %v748 = vpack.c.b16 %v714, %v697
      %vm766 = vcmask 244736
      %v768 = vsel %vm766, %v567, 0
      %v771 = vsel %vm766, %v568, 0
      %v774 = vsel %vm766, %v569, 0
      %v777 = vsel %vm766, %v570, 0
      %v780 = vsel %vm766, %v571, 0
      %v783 = vsel %vm766, %v572, 0
      %v786 = vsel %vm766, %v573, 0
      %v789 = vsel %vm766, %v574, 0
      %vm791 = vcmask 1046528
      %v793 = vsel %vm791, %v732, 0
      %v796 = vsel %vm791, %v733, 0
      %v799 = vsel %vm791, %v734, 0
      %v802 = vsel %vm791, %v735, 0
      %v805 = vsel %vm791, %v736, 0
      %v808 = vsel %vm791, %v737, 0
      %v811 = vsel %vm791, %v738, 0
      %v814 = vsel %vm791, %v739, 0
      %v817 = vsel %vm791, %v740, 0
      %v820 = vsel %vm791, %v741, 0
      %v823 = vsel %vm791, %v742, 0
      %v826 = vsel %vm791, %v743, 0
      %v829 = vsel %vm791, %v744, 0
      %v832 = vsel %vm791, %v745, 0
      %v835 = vsel %vm791, %v746, 0
      %v838 = vsel %vm791, %v747, 0
      %v841 = vsel %vm791, %v748, 0
      %843 = vmatprep.subr.bf16.mxu0 %v716
      %844 = vmatpush1.bf16.msra.mxu0 %v715
      %845 = vmatprep.subr.bf16.mxu0 %v796
      %846 = vmatpush1.bf16.msra.mxu0 %v793
      %847 = vmatprep.subr.bf16.mxu0 0
      %848 = vmatpush1.bf16.msra.mxu0 0
      %849 = vmatprep.subr.bf16.mxu0 0
      %850 = vmatpush1.bf16.msra.mxu0 0
      %851 = vmatprep.subr.bf16.mxu0 0
      %852 = vmatpush1.bf16.msra.mxu0 0
      %853 = vmatprep.subr.bf16.mxu0 0
      %854 = vmatpush1.bf16.msra.mxu0 0
      %855 = vmatprep.subr.bf16.mxu0 0
      %856 = vmatpush1.bf16.msra.mxu0 0
      %857 = vmatprep.subr.bf16.mxu0 0
      %858 = vmatpush1.bf16.msra.mxu0 0
      %859 = vmatprep.subr.bf16.mxu0 0
      %860 = vmatpush1.bf16.msra.mxu0 0
      %861 = vmatprep.subr.bf16.mxu0 0
      %862 = vmatpush1.bf16.msra.mxu0 0
      %863 = vmatprep.subr.bf16.mxu0 0
      %864 = vmatpush1.bf16.msra.mxu0 0
      %865 = vmatprep.subr.bf16.mxu0 0
      %866 = vmatpush1.bf16.msra.mxu0 0
      %867 = vmatprep.subr.bf16.mxu0 0
      %868 = vmatpush1.bf16.msra.mxu0 0
      %869 = vmatprep.subr.bf16.mxu0 0
      %870 = vmatpush1.bf16.msra.mxu0 0
      %871 = vmatprep.subr.bf16.mxu0 0
      %872 = vmatpush1.bf16.msra.mxu0 0
      %873 = vmatprep.subr.bf16.mxu0 0
      %874 = vmatpush1.bf16.msra.mxu0 0
      %875 = vmatprep.mubr.bf16.mxu0 0
      %876 = vmatmul.mubr.bf16.gmra.mrb[0].mxu0 %v768
      %v877 = vpop.f32.mrb[0].mxu0
      %v878 = vadd.f32 0.0, %v877
      %v879 = vpop.f32.mrb[0].mxu0
      %v880 = vadd.f32 0.0, %v879
      %v881 = vpop.f32.mrb[0].mxu0
      %v882 = vadd.f32 0.0, %v881
      %v883 = vpop.f32.mrb[0].mxu0
      %v884 = vadd.f32 0.0, %v883
      %885 = vmatprep.mubr.bf16.mxu0 0
      %886 = vmatmul.mubr.bf16.gmra.mrb[0].mxu0 %v771
      %v887 = vpop.f32.mrb[0].mxu0
      %v888 = vadd.f32 0.0, %v887
      %v889 = vpop.f32.mrb[0].mxu0
      %v890 = vadd.f32 0.0, %v889
      %v891 = vpop.f32.mrb[0].mxu0
      %v892 = vadd.f32 0.0, %v891
      %v893 = vpop.f32.mrb[0].mxu0
      %v894 = vadd.f32 0.0, %v893
      %895 = vmatprep.mubr.bf16.mxu0 0
      %896 = vmatmul.mubr.bf16.gmra.mrb[0].mxu0 %v774
      %v897 = vpop.f32.mrb[0].mxu0
      %v898 = vadd.f32 0.0, %v897
      %v899 = vpop.f32.mrb[0].mxu0
      %v900 = vadd.f32 0.0, %v899
      %v901 = vpop.f32.mrb[0].mxu0
      %v902 = vadd.f32 0.0, %v901
      %v903 = vpop.f32.mrb[0].mxu0
      %v904 = vadd.f32 0.0, %v903
      %905 = vmatprep.mubr.bf16.mxu0 0
      %906 = vmatmul.mubr.bf16.gmra.mrb[0].mxu0 %v777
      %v907 = vpop.f32.mrb[0].mxu0
      %v908 = vadd.f32 0.0, %v907
      %v909 = vpop.f32.mrb[0].mxu0
      %v910 = vadd.f32 0.0, %v909
      %v911 = vpop.f32.mrb[0].mxu0
      %v912 = vadd.f32 0.0, %v911
      %v913 = vpop.f32.mrb[0].mxu0
      %v914 = vadd.f32 0.0, %v913
      %915 = vmatprep.mubr.bf16.mxu0 0
      %916 = vmatmul.mubr.bf16.gmra.mrb[0].mxu0 %v780
      %v917 = vpop.f32.mrb[0].mxu0
      %v918 = vadd.f32 0.0, %v917
      %v919 = vpop.f32.mrb[0].mxu0
      %v920 = vadd.f32 0.0, %v919
      %v921 = vpop.f32.mrb[0].mxu0
      %v922 = vadd.f32 0.0, %v921
      %v923 = vpop.f32.mrb[0].mxu0
      %v924 = vadd.f32 0.0, %v923
      %925 = vmatprep.mubr.bf16.mxu0 0
      %926 = vmatmul.mubr.bf16.gmra.mrb[0].mxu0 %v783
      %v927 = vpop.f32.mrb[0].mxu0
      %v928 = vadd.f32 0.0, %v927
      %v929 = vpop.f32.mrb[0].mxu0
      %v930 = vadd.f32 0.0, %v929
      %v931 = vpop.f32.mrb[0].mxu0
      %v932 = vadd.f32 0.0, %v931
      %v933 = vpop.f32.mrb[0].mxu0
      %v934 = vadd.f32 0.0, %v933
      %935 = vmatprep.mubr.bf16.mxu0 0
      %936 = vmatmul.mubr.bf16.gmra.mrb[0].mxu0 %v786
      %v937 = vpop.f32.mrb[0].mxu0
      %v938 = vadd.f32 0.0, %v937
      %v939 = vpop.f32.mrb[0].mxu0
      %v940 = vadd.f32 0.0, %v939
      %v941 = vpop.f32.mrb[0].mxu0
      %v942 = vadd.f32 0.0, %v941
      %v943 = vpop.f32.mrb[0].mxu0
      %v944 = vadd.f32 0.0, %v943
      %945 = vmatprep.mubr.bf16.mxu0 0
      %946 = vmatmul.mubr.bf16.gmra.mrb[0].mxu0 %v789
      %v947 = vpop.f32.mrb[0].mxu0
      %v948 = vadd.f32 0.0, %v947
      %v949 = vpop.f32.mrb[0].mxu0
      %v950 = vadd.f32 0.0, %v949
      %v951 = vpop.f32.mrb[0].mxu0
      %v952 = vadd.f32 0.0, %v951
      %v953 = vpop.f32.mrb[0].mxu0
      %v954 = vadd.f32 0.0, %v953
      %955 = vdwg.mxu0
      %956 = vmatprep.subr.bf16.mxu0 %v718
      %957 = vmatpush1.bf16.msra.mxu0 %v717
      %958 = vmatprep.subr.bf16.mxu0 %v802
      %959 = vmatpush1.bf16.msra.mxu0 %v799
      %960 = vmatprep.subr.bf16.mxu0 0
      %961 = vmatpush1.bf16.msra.mxu0 0
      %962 = vmatprep.subr.bf16.mxu0 0
      %963 = vmatpush1.bf16.msra.mxu0 0
      %964 = vmatprep.subr.bf16.mxu0 0
      %965 = vmatpush1.bf16.msra.mxu0 0
      %966 = vmatprep.subr.bf16.mxu0 0
      %967 = vmatpush1.bf16.msra.mxu0 0
      %968 = vmatprep.subr.bf16.mxu0 0
      %969 = vmatpush1.bf16.msra.mxu0 0
      %970 = vmatprep.subr.bf16.mxu0 0
      %971 = vmatpush1.bf16.msra.mxu0 0
      %972 = vmatprep.subr.bf16.mxu0 0
      %973 = vmatpush1.bf16.msra.mxu0 0
      %974 = vmatprep.subr.bf16.mxu0 0
      %975 = vmatpush1.bf16.msra.mxu0 0
      %976 = vmatprep.subr.bf16.mxu0 0
      %977 = vmatpush1.bf16.msra.mxu0 0
      %978 = vmatprep.subr.bf16.mxu0 0
      %979 = vmatpush1.bf16.msra.mxu0 0
      %980 = vmatprep.subr.bf16.mxu0 0
      %981 = vmatpush1.bf16.msra.mxu0 0
      %982 = vmatprep.subr.bf16.mxu0 0
      %983 = vmatpush1.bf16.msra.mxu0 0
      %984 = vmatprep.subr.bf16.mxu0 0
      %985 = vmatpush1.bf16.msra.mxu0 0
      %986 = vmatprep.subr.bf16.mxu0 0
      %987 = vmatpush1.bf16.msra.mxu0 0
      %988 = vmatprep.mubr.bf16.mxu0 0
      %989 = vmatmul.mubr.bf16.gmra.mrb[0].mxu0 %v768
      %v990 = vpop.f32.mrb[0].mxu0
      %v991 = vadd.f32 0.0, %v990
      %v992 = vpop.f32.mrb[0].mxu0
      %v993 = vadd.f32 0.0, %v992
      %v994 = vpop.f32.mrb[0].mxu0
      %v995 = vadd.f32 0.0, %v994
      %v996 = vpop.f32.mrb[0].mxu0
      %v997 = vadd.f32 0.0, %v996
      %998 = vmatprep.mubr.bf16.mxu0 0
      %999 = vmatmul.mubr.bf16.gmra.mrb[0].mxu0 %v771
      %v1000 = vpop.f32.mrb[0].mxu0
      %v1001 = vadd.f32 0.0, %v1000
      %v1002 = vpop.f32.mrb[0].mxu0
      %v1003 = vadd.f32 0.0, %v1002
      %v1004 = vpop.f32.mrb[0].mxu0
      %v1005 = vadd.f32 0.0, %v1004
      %v1006 = vpop.f32.mrb[0].mxu0
      %v1007 = vadd.f32 0.0, %v1006
      %1008 = vmatprep.mubr.bf16.mxu0 0
      %1009 = vmatmul.mubr.bf16.gmra.mrb[0].mxu0 %v774
      %v1010 = vpop.f32.mrb[0].mxu0
      %v1011 = vadd.f32 0.0, %v1010
      %v1012 = vpop.f32.mrb[0].mxu0
      %v1013 = vadd.f32 0.0, %v1012
      %v1014 = vpop.f32.mrb[0].mxu0
      %v1015 = vadd.f32 0.0, %v1014
      %v1016 = vpop.f32.mrb[0].mxu0
      %v1017 = vadd.f32 0.0, %v1016
      %1018 = vmatprep.mubr.bf16.mxu0 0
      %1019 = vmatmul.mubr.bf16.gmra.mrb[0].mxu0 %v777
      %v1020 = vpop.f32.mrb[0].mxu0
      %v1021 = vadd.f32 0.0, %v1020
      %v1022 = vpop.f32.mrb[0].mxu0
      %v1023 = vadd.f32 0.0, %v1022
      %v1024 = vpop.f32.mrb[0].mxu0
      %v1025 = vadd.f32 0.0, %v1024
      %v1026 = vpop.f32.mrb[0].mxu0
      %v1027 = vadd.f32 0.0, %v1026
      %1028 = vmatprep.mubr.bf16.mxu0 0
      %1029 = vmatmul.mubr.bf16.gmra.mrb[0].mxu0 %v780
      %v1030 = vpop.f32.mrb[0].mxu0
      %v1031 = vadd.f32 0.0, %v1030
      %v1032 = vpop.f32.mrb[0].mxu0
      %v1033 = vadd.f32 0.0, %v1032
      %v1034 = vpop.f32.mrb[0].mxu0
      %v1035 = vadd.f32 0.0, %v1034
      %v1036 = vpop.f32.mrb[0].mxu0
      %v1037 = vadd.f32 0.0, %v1036
      %1038 = vmatprep.mubr.bf16.mxu0 0
      %1039 = vmatmul.mubr.bf16.gmra.mrb[0].mxu0 %v783
      %v1040 = vpop.f32.mrb[0].mxu0
      %v1041 = vadd.f32 0.0, %v1040
      %v1042 = vpop.f32.mrb[0].mxu0
      %v1043 = vadd.f32 0.0, %v1042
      %v1044 = vpop.f32.mrb[0].mxu0
      %v1045 = vadd.f32 0.0, %v1044
      %v1046 = vpop.f32.mrb[0].mxu0
      %v1047 = vadd.f32 0.0, %v1046
      %1048 = vmatprep.mubr.bf16.mxu0 0
      %1049 = vmatmul.mubr.bf16.gmra.mrb[0].mxu0 %v786
      %v1050 = vpop.f32.mrb[0].mxu0
      %v1051 = vadd.f32 0.0, %v1050
      %v1052 = vpop.f32.mrb[0].mxu0
      %v1053 = vadd.f32 0.0, %v1052
      %v1054 = vpop.f32.mrb[0].mxu0
      %v1055 = vadd.f32 0.0, %v1054
      %v1056 = vpop.f32.mrb[0].mxu0
      %v1057 = vadd.f32 0.0, %v1056
      %1058 = vmatprep.mubr.bf16.mxu0 0
      %1059 = vmatmul.mubr.bf16.gmra.mrb[0].mxu0 %v789
      %v1060 = vpop.f32.mrb[0].mxu0
      %v1061 = vadd.f32 0.0, %v1060
      %v1062 = vpop.f32.mrb[0].mxu0
      %v1063 = vadd.f32 0.0, %v1062
      %v1064 = vpop.f32.mrb[0].mxu0
      %v1065 = vadd.f32 0.0, %v1064
      %v1066 = vpop.f32.mrb[0].mxu0
      %v1067 = vadd.f32 0.0, %v1066
      %1068 = vdwg.mxu0
      %1069 = vmatprep.subr.bf16.mxu0 %v720
      %1070 = vmatpush1.bf16.msra.mxu0 %v719
      %1071 = vmatprep.subr.bf16.mxu0 %v808
      %1072 = vmatpush1.bf16.msra.mxu0 %v805
      %1073 = vmatprep.subr.bf16.mxu0 0
      %1074 = vmatpush1.bf16.msra.mxu0 0
      %1075 = vmatprep.subr.bf16.mxu0 0
      %1076 = vmatpush1.bf16.msra.mxu0 0
      %1077 = vmatprep.subr.bf16.mxu0 0
      %1078 = vmatpush1.bf16.msra.mxu0 0
      %1079 = vmatprep.subr.bf16.mxu0 0
      %1080 = vmatpush1.bf16.msra.mxu0 0
      %1081 = vmatprep.subr.bf16.mxu0 0
      %1082 = vmatpush1.bf16.msra.mxu0 0
      %1083 = vmatprep.subr.bf16.mxu0 0
      %1084 = vmatpush1.bf16.msra.mxu0 0
      %1085 = vmatprep.subr.bf16.mxu0 0
      %1086 = vmatpush1.bf16.msra.mxu0 0
      %1087 = vmatprep.subr.bf16.mxu0 0
      %1088 = vmatpush1.bf16.msra.mxu0 0
      %1089 = vmatprep.subr.bf16.mxu0 0
      %1090 = vmatpush1.bf16.msra.mxu0 0
      %1091 = vmatprep.subr.bf16.mxu0 0
      %1092 = vmatpush1.bf16.msra.mxu0 0
      %1093 = vmatprep.subr.bf16.mxu0 0
      %1094 = vmatpush1.bf16.msra.mxu0 0
      %1095 = vmatprep.subr.bf16.mxu0 0
      %1096 = vmatpush1.bf16.msra.mxu0 0
      %1097 = vmatprep.subr.bf16.mxu0 0
      %1098 = vmatpush1.bf16.msra.mxu0 0
      %1099 = vmatprep.subr.bf16.mxu0 0
      %1100 = vmatpush1.bf16.msra.mxu0 0
      %1101 = vmatprep.mubr.bf16.mxu0 0
      %1102 = vmatmul.mubr.bf16.gmra.mrb[0].mxu0 %v768
      %v1103 = vpop.f32.mrb[0].mxu0
      %v1104 = vadd.f32 0.0, %v1103
      %v1105 = vpop.f32.mrb[0].mxu0
      %v1106 = vadd.f32 0.0, %v1105
      %v1107 = vpop.f32.mrb[0].mxu0
      %v1108 = vadd.f32 0.0, %v1107
      %v1109 = vpop.f32.mrb[0].mxu0
      %v1110 = vadd.f32 0.0, %v1109
      %1111 = vmatprep.mubr.bf16.mxu0 0
      %1112 = vmatmul.mubr.bf16.gmra.mrb[0].mxu0 %v771
      %v1113 = vpop.f32.mrb[0].mxu0
      %v1114 = vadd.f32 0.0, %v1113
      %v1115 = vpop.f32.mrb[0].mxu0
      %v1116 = vadd.f32 0.0, %v1115
      %v1117 = vpop.f32.mrb[0].mxu0
      %v1118 = vadd.f32 0.0, %v1117
      %v1119 = vpop.f32.mrb[0].mxu0
      %v1120 = vadd.f32 0.0, %v1119
      %1121 = vmatprep.mubr.bf16.mxu0 0
      %1122 = vmatmul.mubr.bf16.gmra.mrb[0].mxu0 %v774
      %v1123 = vpop.f32.mrb[0].mxu0
      %v1124 = vadd.f32 0.0, %v1123
      %v1125 = vpop.f32.mrb[0].mxu0
      %v1126 = vadd.f32 0.0, %v1125
      %v1127 = vpop.f32.mrb[0].mxu0
      %v1128 = vadd.f32 0.0, %v1127
      %v1129 = vpop.f32.mrb[0].mxu0
      %v1130 = vadd.f32 0.0, %v1129
      %1131 = vmatprep.mubr.bf16.mxu0 0
      %1132 = vmatmul.mubr.bf16.gmra.mrb[0].mxu0 %v777
      %v1133 = vpop.f32.mrb[0].mxu0
      %v1134 = vadd.f32 0.0, %v1133
      %v1135 = vpop.f32.mrb[0].mxu0
      %v1136 = vadd.f32 0.0, %v1135
      %v1137 = vpop.f32.mrb[0].mxu0
      %v1138 = vadd.f32 0.0, %v1137
      %v1139 = vpop.f32.mrb[0].mxu0
      %v1140 = vadd.f32 0.0, %v1139
      %1141 = vmatprep.mubr.bf16.mxu0 0
      %1142 = vmatmul.mubr.bf16.gmra.mrb[0].mxu0 %v780
      %v1143 = vpop.f32.mrb[0].mxu0
      %v1144 = vadd.f32 0.0, %v1143
      %v1145 = vpop.f32.mrb[0].mxu0
      %v1146 = vadd.f32 0.0, %v1145
      %v1147 = vpop.f32.mrb[0].mxu0
      %v1148 = vadd.f32 0.0, %v1147
      %v1149 = vpop.f32.mrb[0].mxu0
      %v1150 = vadd.f32 0.0, %v1149
      %1151 = vmatprep.mubr.bf16.mxu0 0
      %1152 = vmatmul.mubr.bf16.gmra.mrb[0].mxu0 %v783
      %v1153 = vpop.f32.mrb[0].mxu0
      %v1154 = vadd.f32 0.0, %v1153
      %v1155 = vpop.f32.mrb[0].mxu0
      %v1156 = vadd.f32 0.0, %v1155
      %v1157 = vpop.f32.mrb[0].mxu0
      %v1158 = vadd.f32 0.0, %v1157
      %v1159 = vpop.f32.mrb[0].mxu0
      %v1160 = vadd.f32 0.0, %v1159
      %1161 = vmatprep.mubr.bf16.mxu0 0
      %1162 = vmatmul.mubr.bf16.gmra.mrb[0].mxu0 %v786
      %v1163 = vpop.f32.mrb[0].mxu0
      %v1164 = vadd.f32 0.0, %v1163
      %v1165 = vpop.f32.mrb[0].mxu0
      %v1166 = vadd.f32 0.0, %v1165
      %v1167 = vpop.f32.mrb[0].mxu0
      %v1168 = vadd.f32 0.0, %v1167
      %v1169 = vpop.f32.mrb[0].mxu0
      %v1170 = vadd.f32 0.0, %v1169
      %1171 = vmatprep.mubr.bf16.mxu0 0
      %1172 = vmatmul.mubr.bf16.gmra.mrb[0].mxu0 %v789
      %v1173 = vpop.f32.mrb[0].mxu0
      %v1174 = vadd.f32 0.0, %v1173
      %v1175 = vpop.f32.mrb[0].mxu0
      %v1176 = vadd.f32 0.0, %v1175
      %v1177 = vpop.f32.mrb[0].mxu0
      %v1178 = vadd.f32 0.0, %v1177
      %v1179 = vpop.f32.mrb[0].mxu0
      %v1180 = vadd.f32 0.0, %v1179
      %1181 = vdwg.mxu0
      %1182 = vmatprep.subr.bf16.mxu0 %v722
      %1183 = vmatpush1.bf16.msra.mxu0 %v721
      %1184 = vmatprep.subr.bf16.mxu0 %v814
      %1185 = vmatpush1.bf16.msra.mxu0 %v811
      %1186 = vmatprep.subr.bf16.mxu0 0
      %1187 = vmatpush1.bf16.msra.mxu0 0
      %1188 = vmatprep.subr.bf16.mxu0 0
      %1189 = vmatpush1.bf16.msra.mxu0 0
      %1190 = vmatprep.subr.bf16.mxu0 0
      %1191 = vmatpush1.bf16.msra.mxu0 0
      %1192 = vmatprep.subr.bf16.mxu0 0
      %1193 = vmatpush1.bf16.msra.mxu0 0
      %1194 = vmatprep.subr.bf16.mxu0 0
      %1195 = vmatpush1.bf16.msra.mxu0 0
      %1196 = vmatprep.subr.bf16.mxu0 0
      %1197 = vmatpush1.bf16.msra.mxu0 0
      %1198 = vmatprep.subr.bf16.mxu0 0
      %1199 = vmatpush1.bf16.msra.mxu0 0
      %1200 = vmatprep.subr.bf16.mxu0 0
      %1201 = vmatpush1.bf16.msra.mxu0 0
      %1202 = vmatprep.subr.bf16.mxu0 0
      %1203 = vmatpush1.bf16.msra.mxu0 0
      %1204 = vmatprep.subr.bf16.mxu0 0
      %1205 = vmatpush1.bf16.msra.mxu0 0
      %1206 = vmatprep.subr.bf16.mxu0 0
      %1207 = vmatpush1.bf16.msra.mxu0 0
      %1208 = vmatprep.subr.bf16.mxu0 0
      %1209 = vmatpush1.bf16.msra.mxu0 0
      %1210 = vmatprep.subr.bf16.mxu0 0
      %1211 = vmatpush1.bf16.msra.mxu0 0
      %1212 = vmatprep.subr.bf16.mxu0 0
      %1213 = vmatpush1.bf16.msra.mxu0 0
      %1214 = vmatprep.mubr.bf16.mxu0 0
      %1215 = vmatmul.mubr.bf16.gmra.mrb[0].mxu0 %v768
      %v1216 = vpop.f32.mrb[0].mxu0
      %v1217 = vadd.f32 0.0, %v1216
      %v1218 = vpop.f32.mrb[0].mxu0
      %v1219 = vadd.f32 0.0, %v1218
      %v1220 = vpop.f32.mrb[0].mxu0
      %v1221 = vadd.f32 0.0, %v1220
      %v1222 = vpop.f32.mrb[0].mxu0
      %v1223 = vadd.f32 0.0, %v1222
      %1224 = vmatprep.mubr.bf16.mxu0 0
      %1225 = vmatmul.mubr.bf16.gmra.mrb[0].mxu0 %v771
      %v1226 = vpop.f32.mrb[0].mxu0
      %v1227 = vadd.f32 0.0, %v1226
      %v1228 = vpop.f32.mrb[0].mxu0
      %v1229 = vadd.f32 0.0, %v1228
      %v1230 = vpop.f32.mrb[0].mxu0
      %v1231 = vadd.f32 0.0, %v1230
      %v1232 = vpop.f32.mrb[0].mxu0
      %v1233 = vadd.f32 0.0, %v1232
      %1234 = vmatprep.mubr.bf16.mxu0 0
      %1235 = vmatmul.mubr.bf16.gmra.mrb[0].mxu0 %v774
      %v1236 = vpop.f32.mrb[0].mxu0
      %v1237 = vadd.f32 0.0, %v1236
      %v1238 = vpop.f32.mrb[0].mxu0
      %v1239 = vadd.f32 0.0, %v1238
      %v1240 = vpop.f32.mrb[0].mxu0
      %v1241 = vadd.f32 0.0, %v1240
      %v1242 = vpop.f32.mrb[0].mxu0
      %v1243 = vadd.f32 0.0, %v1242
      %1244 = vmatprep.mubr.bf16.mxu0 0
      %1245 = vmatmul.mubr.bf16.gmra.mrb[0].mxu0 %v777
      %v1246 = vpop.f32.mrb[0].mxu0
      %v1247 = vadd.f32 0.0, %v1246
      %v1248 = vpop.f32.mrb[0].mxu0
      %v1249 = vadd.f32 0.0, %v1248
      %v1250 = vpop.f32.mrb[0].mxu0
      %v1251 = vadd.f32 0.0, %v1250
      %v1252 = vpop.f32.mrb[0].mxu0
      %v1253 = vadd.f32 0.0, %v1252
      %1254 = vmatprep.mubr.bf16.mxu0 0
      %1255 = vmatmul.mubr.bf16.gmra.mrb[0].mxu0 %v780
      %v1256 = vpop.f32.mrb[0].mxu0
      %v1257 = vadd.f32 0.0, %v1256
      %v1258 = vpop.f32.mrb[0].mxu0
      %v1259 = vadd.f32 0.0, %v1258
      %v1260 = vpop.f32.mrb[0].mxu0
      %v1261 = vadd.f32 0.0, %v1260
      %v1262 = vpop.f32.mrb[0].mxu0
      %v1263 = vadd.f32 0.0, %v1262
      %1264 = vmatprep.mubr.bf16.mxu0 0
      %1265 = vmatmul.mubr.bf16.gmra.mrb[0].mxu0 %v783
      %v1266 = vpop.f32.mrb[0].mxu0
      %v1267 = vadd.f32 0.0, %v1266
      %v1268 = vpop.f32.mrb[0].mxu0
      %v1269 = vadd.f32 0.0, %v1268
      %v1270 = vpop.f32.mrb[0].mxu0
      %v1271 = vadd.f32 0.0, %v1270
      %v1272 = vpop.f32.mrb[0].mxu0
      %v1273 = vadd.f32 0.0, %v1272
      %1274 = vmatprep.mubr.bf16.mxu0 0
      %1275 = vmatmul.mubr.bf16.gmra.mrb[0].mxu0 %v786
      %v1276 = vpop.f32.mrb[0].mxu0
      %v1277 = vadd.f32 0.0, %v1276
      %v1278 = vpop.f32.mrb[0].mxu0
      %v1279 = vadd.f32 0.0, %v1278
      %v1280 = vpop.f32.mrb[0].mxu0
      %v1281 = vadd.f32 0.0, %v1280
      %v1282 = vpop.f32.mrb[0].mxu0
      %v1283 = vadd.f32 0.0, %v1282
      %1284 = vmatprep.mubr.bf16.mxu0 0
      %1285 = vmatmul.mubr.bf16.gmra.mrb[0].mxu0 %v789
      %v1286 = vpop.f32.mrb[0].mxu0
      %v1287 = vadd.f32 0.0, %v1286
      %v1288 = vpop.f32.mrb[0].mxu0
      %v1289 = vadd.f32 0.0, %v1288
      %v1290 = vpop.f32.mrb[0].mxu0
      %v1291 = vadd.f32 0.0, %v1290
      %v1292 = vpop.f32.mrb[0].mxu0
      %v1293 = vadd.f32 0.0, %v1292
      %1294 = vdwg.mxu0
      %1295 = vmatprep.subr.bf16.mxu0 %v724
      %1296 = vmatpush1.bf16.msra.mxu0 %v723
      %1297 = vmatprep.subr.bf16.mxu0 %v820
      %1298 = vmatpush1.bf16.msra.mxu0 %v817
      %1299 = vmatprep.subr.bf16.mxu0 0
      %1300 = vmatpush1.bf16.msra.mxu0 0
      %1301 = vmatprep.subr.bf16.mxu0 0
      %1302 = vmatpush1.bf16.msra.mxu0 0
      %1303 = vmatprep.subr.bf16.mxu0 0
      %1304 = vmatpush1.bf16.msra.mxu0 0
      %1305 = vmatprep.subr.bf16.mxu0 0
      %1306 = vmatpush1.bf16.msra.mxu0 0
      %1307 = vmatprep.subr.bf16.mxu0 0
      %1308 = vmatpush1.bf16.msra.mxu0 0
      %1309 = vmatprep.subr.bf16.mxu0 0
      %1310 = vmatpush1.bf16.msra.mxu0 0
      %1311 = vmatprep.subr.bf16.mxu0 0
      %1312 = vmatpush1.bf16.msra.mxu0 0
      %1313 = vmatprep.subr.bf16.mxu0 0
      %1314 = vmatpush1.bf16.msra.mxu0 0
      %1315 = vmatprep.subr.bf16.mxu0 0
      %1316 = vmatpush1.bf16.msra.mxu0 0
      %1317 = vmatprep.subr.bf16.mxu0 0
      %1318 = vmatpush1.bf16.msra.mxu0 0
      %1319 = vmatprep.subr.bf16.mxu0 0
      %1320 = vmatpush1.bf16.msra.mxu0 0
      %1321 = vmatprep.subr.bf16.mxu0 0
      %1322 = vmatpush1.bf16.msra.mxu0 0
      %1323 = vmatprep.subr.bf16.mxu0 0
      %1324 = vmatpush1.bf16.msra.mxu0 0
      %1325 = vmatprep.subr.bf16.mxu0 0
      %1326 = vmatpush1.bf16.msra.mxu0 0
      %1327 = vmatprep.mubr.bf16.mxu0 0
      %1328 = vmatmul.mubr.bf16.gmra.mrb[0].mxu0 %v768
      %v1329 = vpop.f32.mrb[0].mxu0
      %v1330 = vadd.f32 0.0, %v1329
      %v1331 = vpop.f32.mrb[0].mxu0
      %v1332 = vadd.f32 0.0, %v1331
      %v1333 = vpop.f32.mrb[0].mxu0
      %v1334 = vadd.f32 0.0, %v1333
      %v1335 = vpop.f32.mrb[0].mxu0
      %v1336 = vadd.f32 0.0, %v1335
      %1337 = vmatprep.mubr.bf16.mxu0 0
      %1338 = vmatmul.mubr.bf16.gmra.mrb[0].mxu0 %v771
      %v1339 = vpop.f32.mrb[0].mxu0
      %v1340 = vadd.f32 0.0, %v1339
      %v1341 = vpop.f32.mrb[0].mxu0
      %v1342 = vadd.f32 0.0, %v1341
      %v1343 = vpop.f32.mrb[0].mxu0
      %v1344 = vadd.f32 0.0, %v1343
      %v1345 = vpop.f32.mrb[0].mxu0
      %v1346 = vadd.f32 0.0, %v1345
      %1347 = vmatprep.mubr.bf16.mxu0 0
      %1348 = vmatmul.mubr.bf16.gmra.mrb[0].mxu0 %v774
      %v1349 = vpop.f32.mrb[0].mxu0
      %v1350 = vadd.f32 0.0, %v1349
      %v1351 = vpop.f32.mrb[0].mxu0
      %v1352 = vadd.f32 0.0, %v1351
      %v1353 = vpop.f32.mrb[0].mxu0
      %v1354 = vadd.f32 0.0, %v1353
      %v1355 = vpop.f32.mrb[0].mxu0
      %v1356 = vadd.f32 0.0, %v1355
      %1357 = vmatprep.mubr.bf16.mxu0 0
      %1358 = vmatmul.mubr.bf16.gmra.mrb[0].mxu0 %v777
      %v1359 = vpop.f32.mrb[0].mxu0
      %v1360 = vadd.f32 0.0, %v1359
      %v1361 = vpop.f32.mrb[0].mxu0
      %v1362 = vadd.f32 0.0, %v1361
      %v1363 = vpop.f32.mrb[0].mxu0
      %v1364 = vadd.f32 0.0, %v1363
      %v1365 = vpop.f32.mrb[0].mxu0
      %v1366 = vadd.f32 0.0, %v1365
      %1367 = vmatprep.mubr.bf16.mxu0 0
      %1368 = vmatmul.mubr.bf16.gmra.mrb[0].mxu0 %v780
      %v1369 = vpop.f32.mrb[0].mxu0
      %v1370 = vadd.f32 0.0, %v1369
      %v1371 = vpop.f32.mrb[0].mxu0
      %v1372 = vadd.f32 0.0, %v1371
      %v1373 = vpop.f32.mrb[0].mxu0
      %v1374 = vadd.f32 0.0, %v1373
      %v1375 = vpop.f32.mrb[0].mxu0
      %v1376 = vadd.f32 0.0, %v1375
      %1377 = vmatprep.mubr.bf16.mxu0 0
      %1378 = vmatmul.mubr.bf16.gmra.mrb[0].mxu0 %v783
      %v1379 = vpop.f32.mrb[0].mxu0
      %v1380 = vadd.f32 0.0, %v1379
      %v1381 = vpop.f32.mrb[0].mxu0
      %v1382 = vadd.f32 0.0, %v1381
      %v1383 = vpop.f32.mrb[0].mxu0
      %v1384 = vadd.f32 0.0, %v1383
      %v1385 = vpop.f32.mrb[0].mxu0
      %v1386 = vadd.f32 0.0, %v1385
      %1387 = vmatprep.mubr.bf16.mxu0 0
      %1388 = vmatmul.mubr.bf16.gmra.mrb[0].mxu0 %v786
      %v1389 = vpop.f32.mrb[0].mxu0
      %v1390 = vadd.f32 0.0, %v1389
      %v1391 = vpop.f32.mrb[0].mxu0
      %v1392 = vadd.f32 0.0, %v1391
      %v1393 = vpop.f32.mrb[0].mxu0
      %v1394 = vadd.f32 0.0, %v1393
      %v1395 = vpop.f32.mrb[0].mxu0
      %v1396 = vadd.f32 0.0, %v1395
      %1397 = vmatprep.mubr.bf16.mxu0 0
      %1398 = vmatmul.mubr.bf16.gmra.mrb[0].mxu0 %v789
      %v1399 = vpop.f32.mrb[0].mxu0
      %v1400 = vadd.f32 0.0, %v1399
      %v1401 = vpop.f32.mrb[0].mxu0
      %v1402 = vadd.f32 0.0, %v1401
      %v1403 = vpop.f32.mrb[0].mxu0
      %v1404 = vadd.f32 0.0, %v1403
      %v1405 = vpop.f32.mrb[0].mxu0
      %v1406 = vadd.f32 0.0, %v1405
      %1407 = vdwg.mxu0
      %1408 = vmatprep.subr.bf16.mxu0 %v726
      %1409 = vmatpush1.bf16.msra.mxu0 %v725
      %1410 = vmatprep.subr.bf16.mxu0 %v826
      %1411 = vmatpush1.bf16.msra.mxu0 %v823
      %1412 = vmatprep.subr.bf16.mxu0 0
      %1413 = vmatpush1.bf16.msra.mxu0 0
      %1414 = vmatprep.subr.bf16.mxu0 0
      %1415 = vmatpush1.bf16.msra.mxu0 0
      %1416 = vmatprep.subr.bf16.mxu0 0
      %1417 = vmatpush1.bf16.msra.mxu0 0
      %1418 = vmatprep.subr.bf16.mxu0 0
      %1419 = vmatpush1.bf16.msra.mxu0 0
      %1420 = vmatprep.subr.bf16.mxu0 0
      %1421 = vmatpush1.bf16.msra.mxu0 0
      %1422 = vmatprep.subr.bf16.mxu0 0
      %1423 = vmatpush1.bf16.msra.mxu0 0
      %1424 = vmatprep.subr.bf16.mxu0 0
      %1425 = vmatpush1.bf16.msra.mxu0 0
      %1426 = vmatprep.subr.bf16.mxu0 0
      %1427 = vmatpush1.bf16.msra.mxu0 0
      %1428 = vmatprep.subr.bf16.mxu0 0
      %1429 = vmatpush1.bf16.msra.mxu0 0
      %1430 = vmatprep.subr.bf16.mxu0 0
      %1431 = vmatpush1.bf16.msra.mxu0 0
      %1432 = vmatprep.subr.bf16.mxu0 0
      %1433 = vmatpush1.bf16.msra.mxu0 0
      %1434 = vmatprep.subr.bf16.mxu0 0
      %1435 = vmatpush1.bf16.msra.mxu0 0
      %1436 = vmatprep.subr.bf16.mxu0 0
      %1437 = vmatpush1.bf16.msra.mxu0 0
      %1438 = vmatprep.subr.bf16.mxu0 0
      %1439 = vmatpush1.bf16.msra.mxu0 0
      %1440 = vmatprep.mubr.bf16.mxu0 0
      %1441 = vmatmul.mubr.bf16.gmra.mrb[0].mxu0 %v768
      %v1442 = vpop.f32.mrb[0].mxu0
      %v1443 = vadd.f32 0.0, %v1442
      %v1444 = vpop.f32.mrb[0].mxu0
      %v1445 = vadd.f32 0.0, %v1444
      %v1446 = vpop.f32.mrb[0].mxu0
      %v1447 = vadd.f32 0.0, %v1446
      %v1448 = vpop.f32.mrb[0].mxu0
      %v1449 = vadd.f32 0.0, %v1448
      %1450 = vmatprep.mubr.bf16.mxu0 0
      %1451 = vmatmul.mubr.bf16.gmra.mrb[0].mxu0 %v771
      %v1452 = vpop.f32.mrb[0].mxu0
      %v1453 = vadd.f32 0.0, %v1452
      %v1454 = vpop.f32.mrb[0].mxu0
      %v1455 = vadd.f32 0.0, %v1454
      %v1456 = vpop.f32.mrb[0].mxu0
      %v1457 = vadd.f32 0.0, %v1456
      %v1458 = vpop.f32.mrb[0].mxu0
      %v1459 = vadd.f32 0.0, %v1458
      %1460 = vmatprep.mubr.bf16.mxu0 0
      %1461 = vmatmul.mubr.bf16.gmra.mrb[0].mxu0 %v774
      %v1462 = vpop.f32.mrb[0].mxu0
      %v1463 = vadd.f32 0.0, %v1462
      %v1464 = vpop.f32.mrb[0].mxu0
      %v1465 = vadd.f32 0.0, %v1464
      %v1466 = vpop.f32.mrb[0].mxu0
      %v1467 = vadd.f32 0.0, %v1466
      %v1468 = vpop.f32.mrb[0].mxu0
      %v1469 = vadd.f32 0.0, %v1468
      %1470 = vmatprep.mubr.bf16.mxu0 0
      %1471 = vmatmul.mubr.bf16.gmra.mrb[0].mxu0 %v777
      %v1472 = vpop.f32.mrb[0].mxu0
      %v1473 = vadd.f32 0.0, %v1472
      %v1474 = vpop.f32.mrb[0].mxu0
      %v1475 = vadd.f32 0.0, %v1474
      %v1476 = vpop.f32.mrb[0].mxu0
      %v1477 = vadd.f32 0.0, %v1476
      %v1478 = vpop.f32.mrb[0].mxu0
      %v1479 = vadd.f32 0.0, %v1478
      %1480 = vmatprep.mubr.bf16.mxu0 0
      %1481 = vmatmul.mubr.bf16.gmra.mrb[0].mxu0 %v780
      %v1482 = vpop.f32.mrb[0].mxu0
      %v1483 = vadd.f32 0.0, %v1482
      %v1484 = vpop.f32.mrb[0].mxu0
      %v1485 = vadd.f32 0.0, %v1484
      %v1486 = vpop.f32.mrb[0].mxu0
      %v1487 = vadd.f32 0.0, %v1486
      %v1488 = vpop.f32.mrb[0].mxu0
      %v1489 = vadd.f32 0.0, %v1488
      %1490 = vmatprep.mubr.bf16.mxu0 0
      %1491 = vmatmul.mubr.bf16.gmra.mrb[0].mxu0 %v783
      %v1492 = vpop.f32.mrb[0].mxu0
      %v1493 = vadd.f32 0.0, %v1492
      %v1494 = vpop.f32.mrb[0].mxu0
      %v1495 = vadd.f32 0.0, %v1494
      %v1496 = vpop.f32.mrb[0].mxu0
      %v1497 = vadd.f32 0.0, %v1496
      %v1498 = vpop.f32.mrb[0].mxu0
      %v1499 = vadd.f32 0.0, %v1498
      %1500 = vmatprep.mubr.bf16.mxu0 0
      %1501 = vmatmul.mubr.bf16.gmra.mrb[0].mxu0 %v786
      %v1502 = vpop.f32.mrb[0].mxu0
      %v1503 = vadd.f32 0.0, %v1502
      %v1504 = vpop.f32.mrb[0].mxu0
      %v1505 = vadd.f32 0.0, %v1504
      %v1506 = vpop.f32.mrb[0].mxu0
      %v1507 = vadd.f32 0.0, %v1506
      %v1508 = vpop.f32.mrb[0].mxu0
      %v1509 = vadd.f32 0.0, %v1508
      %1510 = vmatprep.mubr.bf16.mxu0 0
      %1511 = vmatmul.mubr.bf16.gmra.mrb[0].mxu0 %v789
      %v1512 = vpop.f32.mrb[0].mxu0
      %v1513 = vadd.f32 0.0, %v1512
      %v1514 = vpop.f32.mrb[0].mxu0
      %v1515 = vadd.f32 0.0, %v1514
      %v1516 = vpop.f32.mrb[0].mxu0
      %v1517 = vadd.f32 0.0, %v1516
      %v1518 = vpop.f32.mrb[0].mxu0
      %v1519 = vadd.f32 0.0, %v1518
      %1520 = vdwg.mxu0
      %1521 = vmatprep.subr.bf16.mxu0 %v728
      %1522 = vmatpush1.bf16.msra.mxu0 %v727
      %1523 = vmatprep.subr.bf16.mxu0 %v832
      %1524 = vmatpush1.bf16.msra.mxu0 %v829
      %1525 = vmatprep.subr.bf16.mxu0 0
      %1526 = vmatpush1.bf16.msra.mxu0 0
      %1527 = vmatprep.subr.bf16.mxu0 0
      %1528 = vmatpush1.bf16.msra.mxu0 0
      %1529 = vmatprep.subr.bf16.mxu0 0
      %1530 = vmatpush1.bf16.msra.mxu0 0
      %1531 = vmatprep.subr.bf16.mxu0 0
      %1532 = vmatpush1.bf16.msra.mxu0 0
      %1533 = vmatprep.subr.bf16.mxu0 0
      %1534 = vmatpush1.bf16.msra.mxu0 0
      %1535 = vmatprep.subr.bf16.mxu0 0
      %1536 = vmatpush1.bf16.msra.mxu0 0
      %1537 = vmatprep.subr.bf16.mxu0 0
      %1538 = vmatpush1.bf16.msra.mxu0 0
      %1539 = vmatprep.subr.bf16.mxu0 0
      %1540 = vmatpush1.bf16.msra.mxu0 0
      %1541 = vmatprep.subr.bf16.mxu0 0
      %1542 = vmatpush1.bf16.msra.mxu0 0
      %1543 = vmatprep.subr.bf16.mxu0 0
      %1544 = vmatpush1.bf16.msra.mxu0 0
      %1545 = vmatprep.subr.bf16.mxu0 0
      %1546 = vmatpush1.bf16.msra.mxu0 0
      %1547 = vmatprep.subr.bf16.mxu0 0
      %1548 = vmatpush1.bf16.msra.mxu0 0
      %1549 = vmatprep.subr.bf16.mxu0 0
      %1550 = vmatpush1.bf16.msra.mxu0 0
      %1551 = vmatprep.subr.bf16.mxu0 0
      %1552 = vmatpush1.bf16.msra.mxu0 0
      %1553 = vmatprep.mubr.bf16.mxu0 0
      %1554 = vmatmul.mubr.bf16.gmra.mrb[0].mxu0 %v768
      %v1555 = vpop.f32.mrb[0].mxu0
      %v1556 = vadd.f32 0.0, %v1555
      %v1557 = vpop.f32.mrb[0].mxu0
      %v1558 = vadd.f32 0.0, %v1557
      %v1559 = vpop.f32.mrb[0].mxu0
      %v1560 = vadd.f32 0.0, %v1559
      %v1561 = vpop.f32.mrb[0].mxu0
      %v1562 = vadd.f32 0.0, %v1561
      %1563 = vmatprep.mubr.bf16.mxu0 0
      %1564 = vmatmul.mubr.bf16.gmra.mrb[0].mxu0 %v771
      %v1565 = vpop.f32.mrb[0].mxu0
      %v1566 = vadd.f32 0.0, %v1565
      %v1567 = vpop.f32.mrb[0].mxu0
      %v1568 = vadd.f32 0.0, %v1567
      %v1569 = vpop.f32.mrb[0].mxu0
      %v1570 = vadd.f32 0.0, %v1569
      %v1571 = vpop.f32.mrb[0].mxu0
      %v1572 = vadd.f32 0.0, %v1571
      %1573 = vmatprep.mubr.bf16.mxu0 0
      %1574 = vmatmul.mubr.bf16.gmra.mrb[0].mxu0 %v774
      %v1575 = vpop.f32.mrb[0].mxu0
      %v1576 = vadd.f32 0.0, %v1575
      %v1577 = vpop.f32.mrb[0].mxu0
      %v1578 = vadd.f32 0.0, %v1577
      %v1579 = vpop.f32.mrb[0].mxu0
      %v1580 = vadd.f32 0.0, %v1579
      %v1581 = vpop.f32.mrb[0].mxu0
      %v1582 = vadd.f32 0.0, %v1581
      %1583 = vmatprep.mubr.bf16.mxu0 0
      %1584 = vmatmul.mubr.bf16.gmra.mrb[0].mxu0 %v777
      %v1585 = vpop.f32.mrb[0].mxu0
      %v1586 = vadd.f32 0.0, %v1585
      %v1587 = vpop.f32.mrb[0].mxu0
      %v1588 = vadd.f32 0.0, %v1587
      %v1589 = vpop.f32.mrb[0].mxu0
      %v1590 = vadd.f32 0.0, %v1589
      %v1591 = vpop.f32.mrb[0].mxu0
      %v1592 = vadd.f32 0.0, %v1591
      %1593 = vmatprep.mubr.bf16.mxu0 0
      %1594 = vmatmul.mubr.bf16.gmra.mrb[0].mxu0 %v780
      %v1595 = vpop.f32.mrb[0].mxu0
      %v1596 = vadd.f32 0.0, %v1595
      %v1597 = vpop.f32.mrb[0].mxu0
      %v1598 = vadd.f32 0.0, %v1597
      %v1599 = vpop.f32.mrb[0].mxu0
      %v1600 = vadd.f32 0.0, %v1599
      %v1601 = vpop.f32.mrb[0].mxu0
      %v1602 = vadd.f32 0.0, %v1601
      %1603 = vmatprep.mubr.bf16.mxu0 0
      %1604 = vmatmul.mubr.bf16.gmra.mrb[0].mxu0 %v783
      %v1605 = vpop.f32.mrb[0].mxu0
      %v1606 = vadd.f32 0.0, %v1605
      %v1607 = vpop.f32.mrb[0].mxu0
      %v1608 = vadd.f32 0.0, %v1607
      %v1609 = vpop.f32.mrb[0].mxu0
      %v1610 = vadd.f32 0.0, %v1609
      %v1611 = vpop.f32.mrb[0].mxu0
      %v1612 = vadd.f32 0.0, %v1611
      %1613 = vmatprep.mubr.bf16.mxu0 0
      %1614 = vmatmul.mubr.bf16.gmra.mrb[0].mxu0 %v786
      %v1615 = vpop.f32.mrb[0].mxu0
      %v1616 = vadd.f32 0.0, %v1615
      %v1617 = vpop.f32.mrb[0].mxu0
      %v1618 = vadd.f32 0.0, %v1617
      %v1619 = vpop.f32.mrb[0].mxu0
      %v1620 = vadd.f32 0.0, %v1619
      %v1621 = vpop.f32.mrb[0].mxu0
      %v1622 = vadd.f32 0.0, %v1621
      %1623 = vmatprep.mubr.bf16.mxu0 0
      %1624 = vmatmul.mubr.bf16.gmra.mrb[0].mxu0 %v789
      %v1625 = vpop.f32.mrb[0].mxu0
      %v1626 = vadd.f32 0.0, %v1625
      %v1627 = vpop.f32.mrb[0].mxu0
      %v1628 = vadd.f32 0.0, %v1627
      %v1629 = vpop.f32.mrb[0].mxu0
      %v1630 = vadd.f32 0.0, %v1629
      %v1631 = vpop.f32.mrb[0].mxu0
      %v1632 = vadd.f32 0.0, %v1631
      %1633 = vdwg.mxu0
      %1634 = vmatprep.subr.bf16.mxu0 %v730
      %1635 = vmatpush1.bf16.msra.mxu0 %v729
      %1636 = vmatprep.subr.bf16.mxu0 %v838
      %1637 = vmatpush1.bf16.msra.mxu0 %v835
      %1638 = vmatprep.subr.bf16.mxu0 0
      %1639 = vmatpush1.bf16.msra.mxu0 0
      %1640 = vmatprep.subr.bf16.mxu0 0
      %1641 = vmatpush1.bf16.msra.mxu0 0
      %1642 = vmatprep.subr.bf16.mxu0 0
      %1643 = vmatpush1.bf16.msra.mxu0 0
      %1644 = vmatprep.subr.bf16.mxu0 0
      %1645 = vmatpush1.bf16.msra.mxu0 0
      %1646 = vmatprep.subr.bf16.mxu0 0
      %1647 = vmatpush1.bf16.msra.mxu0 0
      %1648 = vmatprep.subr.bf16.mxu0 0
      %1649 = vmatpush1.bf16.msra.mxu0 0
      %1650 = vmatprep.subr.bf16.mxu0 0
      %1651 = vmatpush1.bf16.msra.mxu0 0
      %1652 = vmatprep.subr.bf16.mxu0 0
      %1653 = vmatpush1.bf16.msra.mxu0 0
      %1654 = vmatprep.subr.bf16.mxu0 0
      %1655 = vmatpush1.bf16.msra.mxu0 0
      %1656 = vmatprep.subr.bf16.mxu0 0
      %1657 = vmatpush1.bf16.msra.mxu0 0
      %1658 = vmatprep.subr.bf16.mxu0 0
      %1659 = vmatpush1.bf16.msra.mxu0 0
      %1660 = vmatprep.subr.bf16.mxu0 0
      %1661 = vmatpush1.bf16.msra.mxu0 0
      %1662 = vmatprep.subr.bf16.mxu0 0
      %1663 = vmatpush1.bf16.msra.mxu0 0
      %1664 = vmatprep.subr.bf16.mxu0 0
      %1665 = vmatpush1.bf16.msra.mxu0 0
      %1666 = vmatprep.mubr.bf16.mxu0 0
      %1667 = vmatmul.mubr.bf16.gmra.mrb[0].mxu0 %v768
      %v1668 = vpop.f32.mrb[0].mxu0
      %v1669 = vadd.f32 0.0, %v1668
      %v1670 = vpop.f32.mrb[0].mxu0
      %v1671 = vadd.f32 0.0, %v1670
      %v1672 = vpop.f32.mrb[0].mxu0
      %v1673 = vadd.f32 0.0, %v1672
      %v1674 = vpop.f32.mrb[0].mxu0
      %v1675 = vadd.f32 0.0, %v1674
      %1676 = vmatprep.mubr.bf16.mxu0 0
      %1677 = vmatmul.mubr.bf16.gmra.mrb[0].mxu0 %v771
      %v1678 = vpop.f32.mrb[0].mxu0
      %v1679 = vadd.f32 0.0, %v1678
      %v1680 = vpop.f32.mrb[0].mxu0
      %v1681 = vadd.f32 0.0, %v1680
      %v1682 = vpop.f32.mrb[0].mxu0
      %v1683 = vadd.f32 0.0, %v1682
      %v1684 = vpop.f32.mrb[0].mxu0
      %v1685 = vadd.f32 0.0, %v1684
      %1686 = vmatprep.mubr.bf16.mxu0 0
      %1687 = vmatmul.mubr.bf16.gmra.mrb[0].mxu0 %v774
      %v1688 = vpop.f32.mrb[0].mxu0
      %v1689 = vadd.f32 0.0, %v1688
      %v1690 = vpop.f32.mrb[0].mxu0
      %v1691 = vadd.f32 0.0, %v1690
      %v1692 = vpop.f32.mrb[0].mxu0
      %v1693 = vadd.f32 0.0, %v1692
      %v1694 = vpop.f32.mrb[0].mxu0
      %v1695 = vadd.f32 0.0, %v1694
      %1696 = vmatprep.mubr.bf16.mxu0 0
      %1697 = vmatmul.mubr.bf16.gmra.mrb[0].mxu0 %v777
      %v1698 = vpop.f32.mrb[0].mxu0
      %v1699 = vadd.f32 0.0, %v1698
      %v1700 = vpop.f32.mrb[0].mxu0
      %v1701 = vadd.f32 0.0, %v1700
      %v1702 = vpop.f32.mrb[0].mxu0
      %v1703 = vadd.f32 0.0, %v1702
      %v1704 = vpop.f32.mrb[0].mxu0
      %v1705 = vadd.f32 0.0, %v1704
      %1706 = vmatprep.mubr.bf16.mxu0 0
      %1707 = vmatmul.mubr.bf16.gmra.mrb[0].mxu0 %v780
      %v1708 = vpop.f32.mrb[0].mxu0
      %v1709 = vadd.f32 0.0, %v1708
      %v1710 = vpop.f32.mrb[0].mxu0
      %v1711 = vadd.f32 0.0, %v1710
      %v1712 = vpop.f32.mrb[0].mxu0
      %v1713 = vadd.f32 0.0, %v1712
      %v1714 = vpop.f32.mrb[0].mxu0
      %v1715 = vadd.f32 0.0, %v1714
      %1716 = vmatprep.mubr.bf16.mxu0 0
      %1717 = vmatmul.mubr.bf16.gmra.mrb[0].mxu0 %v783
      %v1718 = vpop.f32.mrb[0].mxu0
      %v1719 = vadd.f32 0.0, %v1718
      %v1720 = vpop.f32.mrb[0].mxu0
      %v1721 = vadd.f32 0.0, %v1720
      %v1722 = vpop.f32.mrb[0].mxu0
      %v1723 = vadd.f32 0.0, %v1722
      %v1724 = vpop.f32.mrb[0].mxu0
      %v1725 = vadd.f32 0.0, %v1724
      %1726 = vmatprep.mubr.bf16.mxu0 0
      %1727 = vmatmul.mubr.bf16.gmra.mrb[0].mxu0 %v786
      %v1728 = vpop.f32.mrb[0].mxu0
      %v1729 = vadd.f32 0.0, %v1728
      %v1730 = vpop.f32.mrb[0].mxu0
      %v1731 = vadd.f32 0.0, %v1730
      %v1732 = vpop.f32.mrb[0].mxu0
      %v1733 = vadd.f32 0.0, %v1732
      %v1734 = vpop.f32.mrb[0].mxu0
      %v1735 = vadd.f32 0.0, %v1734
      %1736 = vmatprep.mubr.bf16.mxu0 0
      %1737 = vmatmul.mubr.bf16.gmra.mrb[0].mxu0 %v789
      %v1738 = vpop.f32.mrb[0].mxu0
      %v1739 = vadd.f32 0.0, %v1738
      %v1740 = vpop.f32.mrb[0].mxu0
      %v1741 = vadd.f32 0.0, %v1740
      %v1742 = vpop.f32.mrb[0].mxu0
      %v1743 = vadd.f32 0.0, %v1742
      %v1744 = vpop.f32.mrb[0].mxu0
      %v1745 = vadd.f32 0.0, %v1744
      %1746 = vdwg.mxu0
      %1747 = vmatprep.subr.bf16.mxu0 0
      %1748 = vmatpush1.bf16.msra.mxu0 %v731
      %1749 = vmatprep.subr.bf16.mxu0 0
      %1750 = vmatpush1.bf16.msra.mxu0 %v841
      %1751 = vmatprep.subr.bf16.mxu0 0
      %1752 = vmatpush1.bf16.msra.mxu0 0
      %1753 = vmatprep.subr.bf16.mxu0 0
      %1754 = vmatpush1.bf16.msra.mxu0 0
      %1755 = vmatprep.subr.bf16.mxu0 0
      %1756 = vmatpush1.bf16.msra.mxu0 0
      %1757 = vmatprep.subr.bf16.mxu0 0
      %1758 = vmatpush1.bf16.msra.mxu0 0
      %1759 = vmatprep.subr.bf16.mxu0 0
      %1760 = vmatpush1.bf16.msra.mxu0 0
      %1761 = vmatprep.subr.bf16.mxu0 0
      %1762 = vmatpush1.bf16.msra.mxu0 0
      %1763 = vmatprep.subr.bf16.mxu0 0
      %1764 = vmatpush1.bf16.msra.mxu0 0
      %1765 = vmatprep.subr.bf16.mxu0 0
      %1766 = vmatpush1.bf16.msra.mxu0 0
      %1767 = vmatprep.subr.bf16.mxu0 0
      %1768 = vmatpush1.bf16.msra.mxu0 0
      %1769 = vmatprep.subr.bf16.mxu0 0
      %1770 = vmatpush1.bf16.msra.mxu0 0
      %1771 = vmatprep.subr.bf16.mxu0 0
      %1772 = vmatpush1.bf16.msra.mxu0 0
      %1773 = vmatprep.subr.bf16.mxu0 0
      %1774 = vmatpush1.bf16.msra.mxu0 0
      %1775 = vmatprep.subr.bf16.mxu0 0
      %1776 = vmatpush1.bf16.msra.mxu0 0
      %1777 = vmatprep.subr.bf16.mxu0 0
      %1778 = vmatpush1.bf16.msra.mxu0 0
      %1779 = vmatprep.mubr.bf16.mxu0 0
      %1780 = vmatmul.mubr.bf16.gmra.mrb[0].mxu0 %v768
      %v1781 = vpop.f32.mrb[0].mxu0
      %v1782 = vadd.f32 0.0, %v1781
      %v1783 = vpop.f32.mrb[0].mxu0
      %v1784 = vpop.f32.mrb[0].mxu0
      %v1785 = vadd.f32 0.0, %v1784
      %v1786 = vpop.f32.mrb[0].mxu0
      %1787 = vmatprep.mubr.bf16.mxu0 0
      %1788 = vmatmul.mubr.bf16.gmra.mrb[0].mxu0 %v771
      %v1789 = vpop.f32.mrb[0].mxu0
      %v1790 = vadd.f32 0.0, %v1789
      %v1791 = vpop.f32.mrb[0].mxu0
      %v1792 = vpop.f32.mrb[0].mxu0
      %v1793 = vadd.f32 0.0, %v1792
      %v1794 = vpop.f32.mrb[0].mxu0
      %1795 = vmatprep.mubr.bf16.mxu0 0
      %1796 = vmatmul.mubr.bf16.gmra.mrb[0].mxu0 %v774
      %v1797 = vpop.f32.mrb[0].mxu0
      %v1798 = vadd.f32 0.0, %v1797
      %v1799 = vpop.f32.mrb[0].mxu0
      %v1800 = vpop.f32.mrb[0].mxu0
      %v1801 = vadd.f32 0.0, %v1800
      %v1802 = vpop.f32.mrb[0].mxu0
      %1803 = vmatprep.mubr.bf16.mxu0 0
      %1804 = vmatmul.mubr.bf16.gmra.mrb[0].mxu0 %v777
      %v1805 = vpop.f32.mrb[0].mxu0
      %v1806 = vadd.f32 0.0, %v1805
      %v1807 = vpop.f32.mrb[0].mxu0
      %v1808 = vpop.f32.mrb[0].mxu0
      %v1809 = vadd.f32 0.0, %v1808
      %v1810 = vpop.f32.mrb[0].mxu0
      %1811 = vmatprep.mubr.bf16.mxu0 0
      %1812 = vmatmul.mubr.bf16.gmra.mrb[0].mxu0 %v780
      %v1813 = vpop.f32.mrb[0].mxu0
      %v1814 = vadd.f32 0.0, %v1813
      %v1815 = vpop.f32.mrb[0].mxu0
      %v1816 = vpop.f32.mrb[0].mxu0
      %v1817 = vadd.f32 0.0, %v1816
      %v1818 = vpop.f32.mrb[0].mxu0
      %1819 = vmatprep.mubr.bf16.mxu0 0
      %1820 = vmatmul.mubr.bf16.gmra.mrb[0].mxu0 %v783
      %v1821 = vpop.f32.mrb[0].mxu0
      %v1822 = vadd.f32 0.0, %v1821
      %v1823 = vpop.f32.mrb[0].mxu0
      %v1824 = vpop.f32.mrb[0].mxu0
      %v1825 = vadd.f32 0.0, %v1824
      %v1826 = vpop.f32.mrb[0].mxu0
      %1827 = vmatprep.mubr.bf16.mxu0 0
      %1828 = vmatmul.mubr.bf16.gmra.mrb[0].mxu0 %v786
      %v1829 = vpop.f32.mrb[0].mxu0
      %v1830 = vadd.f32 0.0, %v1829
      %v1831 = vpop.f32.mrb[0].mxu0
      %v1832 = vpop.f32.mrb[0].mxu0
      %v1833 = vadd.f32 0.0, %v1832
      %v1834 = vpop.f32.mrb[0].mxu0
      %1835 = vmatprep.mubr.bf16.mxu0 0
      %1836 = vmatmul.mubr.bf16.gmra.mrb[0].mxu0 %v789
      %v1837 = vpop.f32.mrb[0].mxu0
      %v1838 = vadd.f32 0.0, %v1837
      %v1839 = vpop.f32.mrb[0].mxu0
      %v1840 = vpop.f32.mrb[0].mxu0
      %v1841 = vadd.f32 0.0, %v1840
      %v1842 = vpop.f32.mrb[0].mxu0
      %1843 = vdwg.mxu0
      %v1844 = vld [vmem:[%s362] sm:$0xff]
      %v1845 = vld [vmem:[%s362 + $0x8] sm:$0xff]
      %v1846 = vld [vmem:[%s362 + $0x10] sm:$0xff]
      %v1847 = vld [vmem:[%s362 + $0x18] sm:$0xff]
      %v1848 = vld [vmem:[%s362 + $0x20] sm:$0xff]
      %v1849 = vld [vmem:[%s362 + $0x28] sm:$0xff]
      %v1850 = vld [vmem:[%s362 + $0x30] sm:$0xff]
      %v1851 = vld [vmem:[%s362 + $0x38] sm:$0xff]
      %v1852 = vld [vmem:[%s362 + $0x40] sm:$0xf]
      %v1853 = vld [vmem:[%s362 + $0x44] sm:$0xff]
      %v1854 = vld [vmem:[%s362 + $0x4c] sm:$0xff]
      %v1855 = vld [vmem:[%s362 + $0x54] sm:$0xff]
      %v1856 = vld [vmem:[%s362 + $0x5c] sm:$0xff]
      %v1857 = vld [vmem:[%s362 + $0x64] sm:$0xff]
      %v1858 = vld [vmem:[%s362 + $0x6c] sm:$0xff]
      %v1859 = vld [vmem:[%s362 + $0x74] sm:$0xff]
      %v1860 = vld [vmem:[%s362 + $0x7c] sm:$0xff]
      %v1861 = vld [vmem:[%s362 + $0x84] sm:$0xf]
      %v1862 = vld [vmem:[%s362 + $0x88] sm:$0xff]
      %v1863 = vld [vmem:[%s362 + $0x90] sm:$0xff]
      %v1864 = vld [vmem:[%s362 + $0x98] sm:$0xff]
      %v1865 = vld [vmem:[%s362 + $0xa0] sm:$0xff]
      %v1866 = vld [vmem:[%s362 + $0xa8] sm:$0xff]
      %v1867 = vld [vmem:[%s362 + $0xb0] sm:$0xff]
      %v1868 = vld [vmem:[%s362 + $0xb8] sm:$0xff]
      %v1869 = vld [vmem:[%s362 + $0xc0] sm:$0xff]
      %v1870 = vld [vmem:[%s362 + $0xc8] sm:$0xf]
      %v1871 = vld [vmem:[%s362 + $0xcc] sm:$0xff]
      %v1872 = vld [vmem:[%s362 + $0xd4] sm:$0xff]
      %v1873 = vld [vmem:[%s362 + $0xdc] sm:$0xff]
      %v1874 = vld [vmem:[%s362 + $0xe4] sm:$0xff]
      %v1875 = vld [vmem:[%s362 + $0xec] sm:$0xff]
      %v1876 = vld [vmem:[%s362 + $0xf4] sm:$0xff]
      %v1877 = vld [vmem:[%s362 + $0xfc] sm:$0xff]
      %v1878 = vld [vmem:[%s362 + $0x104] sm:$0xff]
      %v1879 = vld [vmem:[%s362 + $0x10c] sm:$0xf]
      %v1880 = vld [vmem:[%s362 + $0x110] sm:$0xff]
      %v1881 = vld [vmem:[%s362 + $0x118] sm:$0xff]
      %v1882 = vld [vmem:[%s362 + $0x120] sm:$0xff]
      %v1883 = vld [vmem:[%s362 + $0x128] sm:$0xff]
      %v1884 = vld [vmem:[%s362 + $0x130] sm:$0xff]
      %v1885 = vld [vmem:[%s362 + $0x138] sm:$0xff]
      %v1886 = vld [vmem:[%s362 + $0x140] sm:$0xff]
      %v1887 = vld [vmem:[%s362 + $0x148] sm:$0xff]
      %v1888 = vld [vmem:[%s362 + $0x150] sm:$0xf]
      %v1889 = vld [vmem:[%s362 + $0x154] sm:$0xff]
      %v1890 = vld [vmem:[%s362 + $0x15c] sm:$0xff]
      %v1891 = vld [vmem:[%s362 + $0x164] sm:$0xff]
      %v1892 = vld [vmem:[%s362 + $0x16c] sm:$0xff]
      %v1893 = vld [vmem:[%s362 + $0x174] sm:$0xff]
      %v1894 = vld [vmem:[%s362 + $0x17c] sm:$0xff]
      %v1895 = vld [vmem:[%s362 + $0x184] sm:$0xff]
      %v1896 = vld [vmem:[%s362 + $0x18c] sm:$0xff]
      %v1897 = vld [vmem:[%s362 + $0x194] sm:$0xf]
      %v1898 = vld [vmem:[%s362 + $0x198] sm:$0xff]
      %v1899 = vld [vmem:[%s362 + $0x1a0] sm:$0xff]
      %v1900 = vld [vmem:[%s362 + $0x1a8] sm:$0xff]
      %v1901 = vld [vmem:[%s362 + $0x1b0] sm:$0xff]
      %v1902 = vld [vmem:[%s362 + $0x1b8] sm:$0xff]
      %v1903 = vld [vmem:[%s362 + $0x1c0] sm:$0xff]
      %v1904 = vld [vmem:[%s362 + $0x1c8] sm:$0xff]
      %v1905 = vld [vmem:[%s362 + $0x1d0] sm:$0xff]
      %v1906 = vld [vmem:[%s362 + $0x1d8] sm:$0xf]
      %v1907 = vld [vmem:[%s362 + $0x1dc] sm:$0xff]
      %v1908 = vld [vmem:[%s362 + $0x1e4] sm:$0xff]
      %v1909 = vld [vmem:[%s362 + $0x1ec] sm:$0xff]
      %v1910 = vld [vmem:[%s362 + $0x1f4] sm:$0xff]
      %v1911 = vld [vmem:[%s362 + $0x1fc] sm:$0xff]
      %v1912 = vld [vmem:[%s362 + $0x204] sm:$0xff]
      %v1913 = vld [vmem:[%s362 + $0x20c] sm:$0xff]
      %v1914 = vld [vmem:[%s362 + $0x214] sm:$0xff]
      %v1915 = vld [vmem:[%s362 + $0x21c] sm:$0xf]
      %v1916 = vld [vmem:[%s362 + $0x220] sm:$0xff]
      %v1917 = vld [vmem:[%s362 + $0x228] sm:$0xff]
      %v1918 = vld [vmem:[%s362 + $0x230] sm:$0xff]
      %v1919 = vld [vmem:[%s362 + $0x238] sm:$0xff]
      %v1920 = vld [vmem:[%s362 + $0x240] sm:$0xff]
      %v1921 = vld [vmem:[%s362 + $0x248] sm:$0xff]
      %v1922 = vld [vmem:[%s362 + $0x250] sm:$0xff]
      %v1923 = vld [vmem:[%s362 + $0x258] sm:$0xff]
      %v1924 = vld [vmem:[%s362 + $0x260] sm:$0xf]
      %v1925 = vld [vmem:[%s362 + $0x264] sm:$0xff]
      %v1926 = vld [vmem:[%s362 + $0x26c] sm:$0xff]
      %v1927 = vld [vmem:[%s362 + $0x274] sm:$0xff]
      %v1928 = vld [vmem:[%s362 + $0x27c] sm:$0xff]
      %v1929 = vld [vmem:[%s362 + $0x284] sm:$0xff]
      %v1930 = vld [vmem:[%s362 + $0x28c] sm:$0xff]
      %v1931 = vld [vmem:[%s362 + $0x294] sm:$0xff]
      %v1932 = vld [vmem:[%s362 + $0x29c] sm:$0xff]
      %v1933 = vld [vmem:[%s362 + $0x2a4] sm:$0xf]
      %v1934 = vld [vmem:[%s362 + $0x2a8] sm:$0xff]
      %v1935 = vld [vmem:[%s362 + $0x2b0] sm:$0xff]
      %v1936 = vld [vmem:[%s362 + $0x2b8] sm:$0xff]
      %v1937 = vld [vmem:[%s362 + $0x2c0] sm:$0xff]
      %v1938 = vld [vmem:[%s362 + $0x2c8] sm:$0xff]
      %v1939 = vld [vmem:[%s362 + $0x2d0] sm:$0xff]
      %v1940 = vld [vmem:[%s362 + $0x2d8] sm:$0xff]
      %v1941 = vld [vmem:[%s362 + $0x2e0] sm:$0xff]
      %v1942 = vld [vmem:[%s362 + $0x2e8] sm:$0xf]
      %v1943 = vld [vmem:[%s362 + $0x2ec] sm:$0xff]
      %v1944 = vld [vmem:[%s362 + $0x2f4] sm:$0xff]
      %v1945 = vld [vmem:[%s362 + $0x2fc] sm:$0xff]
      %v1946 = vld [vmem:[%s362 + $0x304] sm:$0xff]
      %v1947 = vld [vmem:[%s362 + $0x30c] sm:$0xff]
      %v1948 = vld [vmem:[%s362 + $0x314] sm:$0xff]
      %v1949 = vld [vmem:[%s362 + $0x31c] sm:$0xff]
      %v1950 = vld [vmem:[%s362 + $0x324] sm:$0xff]
      %v1951 = vld [vmem:[%s362 + $0x32c] sm:$0xf]
      %v1952 = vld [vmem:[%s362 + $0x330] sm:$0xff]
      %v1953 = vld [vmem:[%s362 + $0x338] sm:$0xff]
      %v1954 = vld [vmem:[%s362 + $0x340] sm:$0xff]
      %v1955 = vld [vmem:[%s362 + $0x348] sm:$0xff]
      %v1956 = vld [vmem:[%s362 + $0x350] sm:$0xff]
      %v1957 = vld [vmem:[%s362 + $0x358] sm:$0xff]
      %v1958 = vld [vmem:[%s362 + $0x360] sm:$0xff]
      %v1959 = vld [vmem:[%s362 + $0x368] sm:$0xff]
      %v1960 = vld [vmem:[%s362 + $0x370] sm:$0xf]
      %v1961 = vld [vmem:[%s362 + $0x374] sm:$0xff]
      %v1962 = vld [vmem:[%s362 + $0x37c] sm:$0xff]
      %v1963 = vld [vmem:[%s362 + $0x384] sm:$0xff]
      %v1964 = vld [vmem:[%s362 + $0x38c] sm:$0xff]
      %v1965 = vld [vmem:[%s362 + $0x394] sm:$0xff]
      %v1966 = vld [vmem:[%s362 + $0x39c] sm:$0xff]
      %v1967 = vld [vmem:[%s362 + $0x3a4] sm:$0xff]
      %v1968 = vld [vmem:[%s362 + $0x3ac] sm:$0xff]
      %v1969 = vld [vmem:[%s362 + $0x3b4] sm:$0xf]
      %v1970 = vld [vmem:[%s362 + $0x3b8] sm:$0xff]
      %v1971 = vld [vmem:[%s362 + $0x3c0] sm:$0xff]
      %v1972 = vld [vmem:[%s362 + $0x3c8] sm:$0xff]
      %v1973 = vld [vmem:[%s362 + $0x3d0] sm:$0xff]
      %v1974 = vld [vmem:[%s362 + $0x3d8] sm:$0xff]
      %v1975 = vld [vmem:[%s362 + $0x3e0] sm:$0xff]
      %v1976 = vld [vmem:[%s362 + $0x3e8] sm:$0xff]
      %v1977 = vld [vmem:[%s362 + $0x3f0] sm:$0xff]
      %v1978 = vld [vmem:[%s362 + $0x3f8] sm:$0xf]
      %v1979 = vld [vmem:[%s362 + $0x3fc] sm:$0xff]
      %v1980 = vld [vmem:[%s362 + $0x404] sm:$0xff]
      %v1981 = vld [vmem:[%s362 + $0x40c] sm:$0xff]
      %v1982 = vld [vmem:[%s362 + $0x414] sm:$0xff]
      %v1983 = vld [vmem:[%s362 + $0x41c] sm:$0xff]
      %v1984 = vld [vmem:[%s362 + $0x424] sm:$0xff]
      %v1985 = vld [vmem:[%s362 + $0x42c] sm:$0xff]
      %v1986 = vld [vmem:[%s362 + $0x434] sm:$0xff]
      %v1987 = vld [vmem:[%s362 + $0x43c] sm:$0xf]
      %v1988 = vunpack.c.l.bf16 %v1844
      %v1989 = vunpack.c.h.bf16 %v1844
      %v1990 = vunpack.c.l.bf16 %v1845
      %v1991 = vunpack.c.h.bf16 %v1845
      %v1992 = vunpack.c.l.bf16 %v1846
      %v1993 = vunpack.c.h.bf16 %v1846
      %v1994 = vunpack.c.l.bf16 %v1847
      %v1995 = vunpack.c.h.bf16 %v1847
      %v1996 = vunpack.c.l.bf16 %v1848
      %v1997 = vunpack.c.h.bf16 %v1848
      %v1998 = vunpack.c.l.bf16 %v1849
      %v1999 = vunpack.c.h.bf16 %v1849
      %v2000 = vunpack.c.l.bf16 %v1850
      %v2001 = vunpack.c.h.bf16 %v1850
      %v2002 = vunpack.c.l.bf16 %v1851
      %v2003 = vunpack.c.h.bf16 %v1851
      %v2004 = vunpack.c.l.bf16 %v1852
      %v2005 = vunpack.c.l.bf16 %v1853
      %v2006 = vunpack.c.h.bf16 %v1853
      %v2007 = vunpack.c.l.bf16 %v1854
      %v2008 = vunpack.c.h.bf16 %v1854
      %v2009 = vunpack.c.l.bf16 %v1855
      %v2010 = vunpack.c.h.bf16 %v1855
      %v2011 = vunpack.c.l.bf16 %v1856
      %v2012 = vunpack.c.h.bf16 %v1856
      %v2013 = vunpack.c.l.bf16 %v1857
      %v2014 = vunpack.c.h.bf16 %v1857
      %v2015 = vunpack.c.l.bf16 %v1858
      %v2016 = vunpack.c.h.bf16 %v1858
      %v2017 = vunpack.c.l.bf16 %v1859
      %v2018 = vunpack.c.h.bf16 %v1859
      %v2019 = vunpack.c.l.bf16 %v1860
      %v2020 = vunpack.c.h.bf16 %v1860
      %v2021 = vunpack.c.l.bf16 %v1861
      %v2022 = vunpack.c.l.bf16 %v1862
      %v2023 = vunpack.c.h.bf16 %v1862
      %v2024 = vunpack.c.l.bf16 %v1863
      %v2025 = vunpack.c.h.bf16 %v1863
      %v2026 = vunpack.c.l.bf16 %v1864
      %v2027 = vunpack.c.h.bf16 %v1864
      %v2028 = vunpack.c.l.bf16 %v1865
      %v2029 = vunpack.c.h.bf16 %v1865
      %v2030 = vunpack.c.l.bf16 %v1866
      %v2031 = vunpack.c.h.bf16 %v1866
      %v2032 = vunpack.c.l.bf16 %v1867
      %v2033 = vunpack.c.h.bf16 %v1867
      %v2034 = vunpack.c.l.bf16 %v1868
      %v2035 = vunpack.c.h.bf16 %v1868
      %v2036 = vunpack.c.l.bf16 %v1869
      %v2037 = vunpack.c.h.bf16 %v1869
      %v2038 = vunpack.c.l.bf16 %v1870
      %v2039 = vunpack.c.l.bf16 %v1871
      %v2040 = vunpack.c.h.bf16 %v1871
      %v2041 = vunpack.c.l.bf16 %v1872
      %v2042 = vunpack.c.h.bf16 %v1872
      %v2043 = vunpack.c.l.bf16 %v1873
      %v2044 = vunpack.c.h.bf16 %v1873
      %v2045 = vunpack.c.l.bf16 %v1874
      %v2046 = vunpack.c.h.bf16 %v1874
      %v2047 = vunpack.c.l.bf16 %v1875
      %v2048 = vunpack.c.h.bf16 %v1875
      %v2049 = vunpack.c.l.bf16 %v1876
      %v2050 = vunpack.c.h.bf16 %v1876
      %v2051 = vunpack.c.l.bf16 %v1877
      %v2052 = vunpack.c.h.bf16 %v1877
      %v2053 = vunpack.c.l.bf16 %v1878
      %v2054 = vunpack.c.h.bf16 %v1878
      %v2055 = vunpack.c.l.bf16 %v1879
      %v2056 = vunpack.c.l.bf16 %v1880
      %v2057 = vunpack.c.h.bf16 %v1880
      %v2058 = vunpack.c.l.bf16 %v1881
      %v2059 = vunpack.c.h.bf16 %v1881
      %v2060 = vunpack.c.l.bf16 %v1882
      %v2061 = vunpack.c.h.bf16 %v1882
      %v2062 = vunpack.c.l.bf16 %v1883
      %v2063 = vunpack.c.h.bf16 %v1883
      %v2064 = vunpack.c.l.bf16 %v1884
      %v2065 = vunpack.c.h.bf16 %v1884
      %v2066 = vunpack.c.l.bf16 %v1885
      %v2067 = vunpack.c.h.bf16 %v1885
      %v2068 = vunpack.c.l.bf16 %v1886
      %v2069 = vunpack.c.h.bf16 %v1886
      %v2070 = vunpack.c.l.bf16 %v1887
      %v2071 = vunpack.c.h.bf16 %v1887
      %v2072 = vunpack.c.l.bf16 %v1888
      %v2073 = vunpack.c.l.bf16 %v1889
      %v2074 = vunpack.c.h.bf16 %v1889
      %v2075 = vunpack.c.l.bf16 %v1890
      %v2076 = vunpack.c.h.bf16 %v1890
      %v2077 = vunpack.c.l.bf16 %v1891
      %v2078 = vunpack.c.h.bf16 %v1891
      %v2079 = vunpack.c.l.bf16 %v1892
      %v2080 = vunpack.c.h.bf16 %v1892
      %v2081 = vunpack.c.l.bf16 %v1893
      %v2082 = vunpack.c.h.bf16 %v1893
      %v2083 = vunpack.c.l.bf16 %v1894
      %v2084 = vunpack.c.h.bf16 %v1894
      %v2085 = vunpack.c.l.bf16 %v1895
      %v2086 = vunpack.c.h.bf16 %v1895
      %v2087 = vunpack.c.l.bf16 %v1896
      %v2088 = vunpack.c.h.bf16 %v1896
      %v2089 = vunpack.c.l.bf16 %v1897
      %v2090 = vunpack.c.l.bf16 %v1898
      %v2091 = vunpack.c.h.bf16 %v1898
      %v2092 = vunpack.c.l.bf16 %v1899
      %v2093 = vunpack.c.h.bf16 %v1899
      %v2094 = vunpack.c.l.bf16 %v1900
      %v2095 = vunpack.c.h.bf16 %v1900
      %v2096 = vunpack.c.l.bf16 %v1901
      %v2097 = vunpack.c.h.bf16 %v1901
      %v2098 = vunpack.c.l.bf16 %v1902
      %v2099 = vunpack.c.h.bf16 %v1902
      %v2100 = vunpack.c.l.bf16 %v1903
      %v2101 = vunpack.c.h.bf16 %v1903
      %v2102 = vunpack.c.l.bf16 %v1904
      %v2103 = vunpack.c.h.bf16 %v1904
      %v2104 = vunpack.c.l.bf16 %v1905
      %v2105 = vunpack.c.h.bf16 %v1905
      %v2106 = vunpack.c.l.bf16 %v1906
      %v2107 = vunpack.c.l.bf16 %v1907
      %v2108 = vunpack.c.h.bf16 %v1907
      %v2109 = vunpack.c.l.bf16 %v1908
      %v2110 = vunpack.c.h.bf16 %v1908
      %v2111 = vunpack.c.l.bf16 %v1909
      %v2112 = vunpack.c.h.bf16 %v1909
      %v2113 = vunpack.c.l.bf16 %v1910
      %v2114 = vunpack.c.h.bf16 %v1910
      %v2115 = vunpack.c.l.bf16 %v1911
      %v2116 = vunpack.c.h.bf16 %v1911
      %v2117 = vunpack.c.l.bf16 %v1912
      %v2118 = vunpack.c.h.bf16 %v1912
      %v2119 = vunpack.c.l.bf16 %v1913
      %v2120 = vunpack.c.h.bf16 %v1913
      %v2121 = vunpack.c.l.bf16 %v1914
      %v2122 = vunpack.c.h.bf16 %v1914
      %v2123 = vunpack.c.l.bf16 %v1915
      %v2124 = vunpack.c.l.bf16 %v1916
      %v2125 = vunpack.c.h.bf16 %v1916
      %v2126 = vunpack.c.l.bf16 %v1917
      %v2127 = vunpack.c.h.bf16 %v1917
      %v2128 = vunpack.c.l.bf16 %v1918
      %v2129 = vunpack.c.h.bf16 %v1918
      %v2130 = vunpack.c.l.bf16 %v1919
      %v2131 = vunpack.c.h.bf16 %v1919
      %v2132 = vunpack.c.l.bf16 %v1920
      %v2133 = vunpack.c.h.bf16 %v1920
      %v2134 = vunpack.c.l.bf16 %v1921
      %v2135 = vunpack.c.h.bf16 %v1921
      %v2136 = vunpack.c.l.bf16 %v1922
      %v2137 = vunpack.c.h.bf16 %v1922
      %v2138 = vunpack.c.l.bf16 %v1923
      %v2139 = vunpack.c.h.bf16 %v1923
      %v2140 = vunpack.c.l.bf16 %v1924
      %v2141 = vunpack.c.l.bf16 %v1925
      %v2142 = vunpack.c.h.bf16 %v1925
      %v2143 = vunpack.c.l.bf16 %v1926
      %v2144 = vunpack.c.h.bf16 %v1926
      %v2145 = vunpack.c.l.bf16 %v1927
      %v2146 = vunpack.c.h.bf16 %v1927
      %v2147 = vunpack.c.l.bf16 %v1928
      %v2148 = vunpack.c.h.bf16 %v1928
      %v2149 = vunpack.c.l.bf16 %v1929
      %v2150 = vunpack.c.h.bf16 %v1929
      %v2151 = vunpack.c.l.bf16 %v1930
      %v2152 = vunpack.c.h.bf16 %v1930
      %v2153 = vunpack.c.l.bf16 %v1931
      %v2154 = vunpack.c.h.bf16 %v1931
      %v2155 = vunpack.c.l.bf16 %v1932
      %v2156 = vunpack.c.h.bf16 %v1932
      %v2157 = vunpack.c.l.bf16 %v1933
      %v2158 = vunpack.c.l.bf16 %v1934
      %v2159 = vunpack.c.h.bf16 %v1934
      %v2160 = vunpack.c.l.bf16 %v1935
      %v2161 = vunpack.c.h.bf16 %v1935
      %v2162 = vunpack.c.l.bf16 %v1936
      %v2163 = vunpack.c.h.bf16 %v1936
      %v2164 = vunpack.c.l.bf16 %v1937
      %v2165 = vunpack.c.h.bf16 %v1937
      %v2166 = vunpack.c.l.bf16 %v1938
      %v2167 = vunpack.c.h.bf16 %v1938
      %v2168 = vunpack.c.l.bf16 %v1939
      %v2169 = vunpack.c.h.bf16 %v1939
      %v2170 = vunpack.c.l.bf16 %v1940
      %v2171 = vunpack.c.h.bf16 %v1940
      %v2172 = vunpack.c.l.bf16 %v1941
      %v2173 = vunpack.c.h.bf16 %v1941
      %v2174 = vunpack.c.l.bf16 %v1942
      %v2175 = vunpack.c.l.bf16 %v1943
      %v2176 = vunpack.c.h.bf16 %v1943
      %v2177 = vunpack.c.l.bf16 %v1944
      %v2178 = vunpack.c.h.bf16 %v1944
      %v2179 = vunpack.c.l.bf16 %v1945
      %v2180 = vunpack.c.h.bf16 %v1945
      %v2181 = vunpack.c.l.bf16 %v1946
      %v2182 = vunpack.c.h.bf16 %v1946
      %v2183 = vunpack.c.l.bf16 %v1947
      %v2184 = vunpack.c.h.bf16 %v1947
      %v2185 = vunpack.c.l.bf16 %v1948
      %v2186 = vunpack.c.h.bf16 %v1948
      %v2187 = vunpack.c.l.bf16 %v1949
      %v2188 = vunpack.c.h.bf16 %v1949
      %v2189 = vunpack.c.l.bf16 %v1950
      %v2190 = vunpack.c.h.bf16 %v1950
      %v2191 = vunpack.c.l.bf16 %v1951
      %v2192 = vunpack.c.l.bf16 %v1952
      %v2193 = vunpack.c.h.bf16 %v1952
      %v2194 = vunpack.c.l.bf16 %v1953
      %v2195 = vunpack.c.h.bf16 %v1953
      %v2196 = vunpack.c.l.bf16 %v1954
      %v2197 = vunpack.c.h.bf16 %v1954
      %v2198 = vunpack.c.l.bf16 %v1955
      %v2199 = vunpack.c.h.bf16 %v1955
      %v2200 = vunpack.c.l.bf16 %v1956
      %v2201 = vunpack.c.h.bf16 %v1956
      %v2202 = vunpack.c.l.bf16 %v1957
      %v2203 = vunpack.c.h.bf16 %v1957
      %v2204 = vunpack.c.l.bf16 %v1958
      %v2205 = vunpack.c.h.bf16 %v1958
      %v2206 = vunpack.c.l.bf16 %v1959
      %v2207 = vunpack.c.h.bf16 %v1959
      %v2208 = vunpack.c.l.bf16 %v1960
      %v2209 = vunpack.c.l.bf16 %v1961
      %v2210 = vunpack.c.h.bf16 %v1961
      %v2211 = vunpack.c.l.bf16 %v1962
      %v2212 = vunpack.c.h.bf16 %v1962
      %v2213 = vunpack.c.l.bf16 %v1963
      %v2214 = vunpack.c.h.bf16 %v1963
      %v2215 = vunpack.c.l.bf16 %v1964
      %v2216 = vunpack.c.h.bf16 %v1964
      %v2217 = vunpack.c.l.bf16 %v1965
      %v2218 = vunpack.c.h.bf16 %v1965
      %v2219 = vunpack.c.l.bf16 %v1966
      %v2220 = vunpack.c.h.bf16 %v1966
      %v2221 = vunpack.c.l.bf16 %v1967
      %v2222 = vunpack.c.h.bf16 %v1967
      %v2223 = vunpack.c.l.bf16 %v1968
      %v2224 = vunpack.c.h.bf16 %v1968
      %v2225 = vunpack.c.l.bf16 %v1969
      %v2226 = vunpack.c.l.bf16 %v1970
      %v2227 = vunpack.c.h.bf16 %v1970
      %v2228 = vunpack.c.l.bf16 %v1971
      %v2229 = vunpack.c.h.bf16 %v1971
      %v2230 = vunpack.c.l.bf16 %v1972
      %v2231 = vunpack.c.h.bf16 %v1972
      %v2232 = vunpack.c.l.bf16 %v1973
      %v2233 = vunpack.c.h.bf16 %v1973
      %v2234 = vunpack.c.l.bf16 %v1974
      %v2235 = vunpack.c.h.bf16 %v1974
      %v2236 = vunpack.c.l.bf16 %v1975
      %v2237 = vunpack.c.h.bf16 %v1975
      %v2238 = vunpack.c.l.bf16 %v1976
      %v2239 = vunpack.c.h.bf16 %v1976
      %v2240 = vunpack.c.l.bf16 %v1977
      %v2241 = vunpack.c.h.bf16 %v1977
      %v2242 = vunpack.c.l.bf16 %v1978
      %v2243 = vunpack.c.l.bf16 %v1979
      %v2244 = vunpack.c.h.bf16 %v1979
      %v2245 = vunpack.c.l.bf16 %v1980
      %v2246 = vunpack.c.h.bf16 %v1980
      %v2247 = vunpack.c.l.bf16 %v1981
      %v2248 = vunpack.c.h.bf16 %v1981
      %v2249 = vunpack.c.l.bf16 %v1982
      %v2250 = vunpack.c.h.bf16 %v1982
      %v2251 = vunpack.c.l.bf16 %v1983
      %v2252 = vunpack.c.h.bf16 %v1983
      %v2253 = vunpack.c.l.bf16 %v1984
      %v2254 = vunpack.c.h.bf16 %v1984
      %v2255 = vunpack.c.l.bf16 %v1985
      %v2256 = vunpack.c.h.bf16 %v1985
      %v2257 = vunpack.c.l.bf16 %v1986
      %v2258 = vunpack.c.h.bf16 %v1986
      %v2259 = vunpack.c.l.bf16 %v1987
      %v2260 = vmul.f32 %v1988, %v878
      %v2261 = vmul.f32 %v1989, %v880
      %v2262 = vmul.f32 %v1990, %v991
      %v2263 = vmul.f32 %v1991, %v993
      %v2264 = vmul.f32 %v1992, %v1104
      %v2265 = vmul.f32 %v1993, %v1106
      %v2266 = vmul.f32 %v1994, %v1217
      %v2267 = vmul.f32 %v1995, %v1219
      %v2268 = vmul.f32 %v1996, %v1330
      %v2269 = vmul.f32 %v1997, %v1332
      %v2270 = vmul.f32 %v1998, %v1443
      %v2271 = vmul.f32 %v1999, %v1445
      %v2272 = vmul.f32 %v2000, %v1556
      %v2273 = vmul.f32 %v2001, %v1558
      %v2274 = vmul.f32 %v2002, %v1669
      %v2275 = vmul.f32 %v2003, %v1671
      %v2276 = vmul.f32 %v2004, %v1782
      %v2277 = vmul.f32 %v2005, %v882
      %v2278 = vmul.f32 %v2006, %v884
      %v2279 = vmul.f32 %v2007, %v995
      %v2280 = vmul.f32 %v2008, %v997
      %v2281 = vmul.f32 %v2009, %v1108
      %v2282 = vmul.f32 %v2010, %v1110
      %v2283 = vmul.f32 %v2011, %v1221
      %v2284 = vmul.f32 %v2012, %v1223
      %v2285 = vmul.f32 %v2013, %v1334
      %v2286 = vmul.f32 %v2014, %v1336
      %v2287 = vmul.f32 %v2015, %v1447
      %v2288 = vmul.f32 %v2016, %v1449
      %v2289 = vmul.f32 %v2017, %v1560
      %v2290 = vmul.f32 %v2018, %v1562
      %v2291 = vmul.f32 %v2019, %v1673
      %v2292 = vmul.f32 %v2020, %v1675
      %v2293 = vmul.f32 %v2021, %v1785
      %v2294 = vmul.f32 %v2022, %v888
      %v2295 = vmul.f32 %v2023, %v890
      %v2296 = vmul.f32 %v2024, %v1001
      %v2297 = vmul.f32 %v2025, %v1003
      %v2298 = vmul.f32 %v2026, %v1114
      %v2299 = vmul.f32 %v2027, %v1116
      %v2300 = vmul.f32 %v2028, %v1227
      %v2301 = vmul.f32 %v2029, %v1229
      %v2302 = vmul.f32 %v2030, %v1340
      %v2303 = vmul.f32 %v2031, %v1342
      %v2304 = vmul.f32 %v2032, %v1453
      %v2305 = vmul.f32 %v2033, %v1455
      %v2306 = vmul.f32 %v2034, %v1566
      %v2307 = vmul.f32 %v2035, %v1568
      %v2308 = vmul.f32 %v2036, %v1679
      %v2309 = vmul.f32 %v2037, %v1681
      %v2310 = vmul.f32 %v2038, %v1790
      %v2311 = vmul.f32 %v2039, %v892
      %v2312 = vmul.f32 %v2040, %v894
      %v2313 = vmul.f32 %v2041, %v1005
      %v2314 = vmul.f32 %v2042, %v1007
      %v2315 = vmul.f32 %v2043, %v1118
      %v2316 = vmul.f32 %v2044, %v1120
      %v2317 = vmul.f32 %v2045, %v1231
      %v2318 = vmul.f32 %v2046, %v1233
      %v2319 = vmul.f32 %v2047, %v1344
      %v2320 = vmul.f32 %v2048, %v1346
      %v2321 = vmul.f32 %v2049, %v1457
      %v2322 = vmul.f32 %v2050, %v1459
      %v2323 = vmul.f32 %v2051, %v1570
      %v2324 = vmul.f32 %v2052, %v1572
      %v2325 = vmul.f32 %v2053, %v1683
      %v2326 = vmul.f32 %v2054, %v1685
      %v2327 = vmul.f32 %v2055, %v1793
      %v2328 = vmul.f32 %v2056, %v898
      %v2329 = vmul.f32 %v2057, %v900
      %v2330 = vmul.f32 %v2058, %v1011
      %v2331 = vmul.f32 %v2059, %v1013
      %v2332 = vmul.f32 %v2060, %v1124
      %v2333 = vmul.f32 %v2061, %v1126
      %v2334 = vmul.f32 %v2062, %v1237
      %v2335 = vmul.f32 %v2063, %v1239
      %v2336 = vmul.f32 %v2064, %v1350
      %v2337 = vmul.f32 %v2065, %v1352
      %v2338 = vmul.f32 %v2066, %v1463
      %v2339 = vmul.f32 %v2067, %v1465
      %v2340 = vmul.f32 %v2068, %v1576
      %v2341 = vmul.f32 %v2069, %v1578
      %v2342 = vmul.f32 %v2070, %v1689
      %v2343 = vmul.f32 %v2071, %v1691
      %v2344 = vmul.f32 %v2072, %v1798
      %v2345 = vmul.f32 %v2073, %v902
      %v2346 = vmul.f32 %v2074, %v904
      %v2347 = vmul.f32 %v2075, %v1015
      %v2348 = vmul.f32 %v2076, %v1017
      %v2349 = vmul.f32 %v2077, %v1128
      %v2350 = vmul.f32 %v2078, %v1130
      %v2351 = vmul.f32 %v2079, %v1241
      %v2352 = vmul.f32 %v2080, %v1243
      %v2353 = vmul.f32 %v2081, %v1354
      %v2354 = vmul.f32 %v2082, %v1356
      %v2355 = vmul.f32 %v2083, %v1467
      %v2356 = vmul.f32 %v2084, %v1469
      %v2357 = vmul.f32 %v2085, %v1580
      %v2358 = vmul.f32 %v2086, %v1582
      %v2359 = vmul.f32 %v2087, %v1693
      %v2360 = vmul.f32 %v2088, %v1695
      %v2361 = vmul.f32 %v2089, %v1801
      %v2362 = vmul.f32 %v2090, %v908
      %v2363 = vmul.f32 %v2091, %v910
      %v2364 = vmul.f32 %v2092, %v1021
      %v2365 = vmul.f32 %v2093, %v1023
      %v2366 = vmul.f32 %v2094, %v1134
      %v2367 = vmul.f32 %v2095, %v1136
      %v2368 = vmul.f32 %v2096, %v1247
      %v2369 = vmul.f32 %v2097, %v1249
      %v2370 = vmul.f32 %v2098, %v1360
      %v2371 = vmul.f32 %v2099, %v1362
      %v2372 = vmul.f32 %v2100, %v1473
      %v2373 = vmul.f32 %v2101, %v1475
      %v2374 = vmul.f32 %v2102, %v1586
      %v2375 = vmul.f32 %v2103, %v1588
      %v2376 = vmul.f32 %v2104, %v1699
      %v2377 = vmul.f32 %v2105, %v1701
      %v2378 = vmul.f32 %v2106, %v1806
      %v2379 = vmul.f32 %v2107, %v912
      %v2380 = vmul.f32 %v2108, %v914
      %v2381 = vmul.f32 %v2109, %v1025
      %v2382 = vmul.f32 %v2110, %v1027
      %v2383 = vmul.f32 %v2111, %v1138
      %v2384 = vmul.f32 %v2112, %v1140
      %v2385 = vmul.f32 %v2113, %v1251
      %v2386 = vmul.f32 %v2114, %v1253
      %v2387 = vmul.f32 %v2115, %v1364
      %v2388 = vmul.f32 %v2116, %v1366
      %v2389 = vmul.f32 %v2117, %v1477
      %v2390 = vmul.f32 %v2118, %v1479
      %v2391 = vmul.f32 %v2119, %v1590
      %v2392 = vmul.f32 %v2120, %v1592
      %v2393 = vmul.f32 %v2121, %v1703
      %v2394 = vmul.f32 %v2122, %v1705
      %v2395 = vmul.f32 %v2123, %v1809
      %v2396 = vmul.f32 %v2124, %v918
      %v2397 = vmul.f32 %v2125, %v920
      %v2398 = vmul.f32 %v2126, %v1031
      %v2399 = vmul.f32 %v2127, %v1033
      %v2400 = vmul.f32 %v2128, %v1144
      %v2401 = vmul.f32 %v2129, %v1146
      %v2402 = vmul.f32 %v2130, %v1257
      %v2403 = vmul.f32 %v2131, %v1259
      %v2404 = vmul.f32 %v2132, %v1370
      %v2405 = vmul.f32 %v2133, %v1372
      %v2406 = vmul.f32 %v2134, %v1483
      %v2407 = vmul.f32 %v2135, %v1485
      %v2408 = vmul.f32 %v2136, %v1596
      %v2409 = vmul.f32 %v2137, %v1598
      %v2410 = vmul.f32 %v2138, %v1709
      %v2411 = vmul.f32 %v2139, %v1711
      %v2412 = vmul.f32 %v2140, %v1814
      %v2413 = vmul.f32 %v2141, %v922
      %v2414 = vmul.f32 %v2142, %v924
      %v2415 = vmul.f32 %v2143, %v1035
      %v2416 = vmul.f32 %v2144, %v1037
      %v2417 = vmul.f32 %v2145, %v1148
      %v2418 = vmul.f32 %v2146, %v1150
      %v2419 = vmul.f32 %v2147, %v1261
      %v2420 = vmul.f32 %v2148, %v1263
      %v2421 = vmul.f32 %v2149, %v1374
      %v2422 = vmul.f32 %v2150, %v1376
      %v2423 = vmul.f32 %v2151, %v1487
      %v2424 = vmul.f32 %v2152, %v1489
      %v2425 = vmul.f32 %v2153, %v1600
      %v2426 = vmul.f32 %v2154, %v1602
      %v2427 = vmul.f32 %v2155, %v1713
      %v2428 = vmul.f32 %v2156, %v1715
      %v2429 = vmul.f32 %v2157, %v1817
      %v2430 = vmul.f32 %v2158, %v928
      %v2431 = vmul.f32 %v2159, %v930
      %v2432 = vmul.f32 %v2160, %v1041
      %v2433 = vmul.f32 %v2161, %v1043
      %v2434 = vmul.f32 %v2162, %v1154
      %v2435 = vmul.f32 %v2163, %v1156
      %v2436 = vmul.f32 %v2164, %v1267
      %v2437 = vmul.f32 %v2165, %v1269
      %v2438 = vmul.f32 %v2166, %v1380
      %v2439 = vmul.f32 %v2167, %v1382
      %v2440 = vmul.f32 %v2168, %v1493
      %v2441 = vmul.f32 %v2169, %v1495
      %v2442 = vmul.f32 %v2170, %v1606
      %v2443 = vmul.f32 %v2171, %v1608
      %v2444 = vmul.f32 %v2172, %v1719
      %v2445 = vmul.f32 %v2173, %v1721
      %v2446 = vmul.f32 %v2174, %v1822
      %v2447 = vmul.f32 %v2175, %v932
      %v2448 = vmul.f32 %v2176, %v934
      %v2449 = vmul.f32 %v2177, %v1045
      %v2450 = vmul.f32 %v2178, %v1047
      %v2451 = vmul.f32 %v2179, %v1158
      %v2452 = vmul.f32 %v2180, %v1160
      %v2453 = vmul.f32 %v2181, %v1271
      %v2454 = vmul.f32 %v2182, %v1273
      %v2455 = vmul.f32 %v2183, %v1384
      %v2456 = vmul.f32 %v2184, %v1386
      %v2457 = vmul.f32 %v2185, %v1497
      %v2458 = vmul.f32 %v2186, %v1499
      %v2459 = vmul.f32 %v2187, %v1610
      %v2460 = vmul.f32 %v2188, %v1612
      %v2461 = vmul.f32 %v2189, %v1723
      %v2462 = vmul.f32 %v2190, %v1725
      %v2463 = vmul.f32 %v2191, %v1825
      %v2464 = vmul.f32 %v2192, %v938
      %v2465 = vmul.f32 %v2193, %v940
      %v2466 = vmul.f32 %v2194, %v1051
      %v2467 = vmul.f32 %v2195, %v1053
      %v2468 = vmul.f32 %v2196, %v1164
      %v2469 = vmul.f32 %v2197, %v1166
      %v2470 = vmul.f32 %v2198, %v1277
      %v2471 = vmul.f32 %v2199, %v1279
      %v2472 = vmul.f32 %v2200, %v1390
      %v2473 = vmul.f32 %v2201, %v1392
      %v2474 = vmul.f32 %v2202, %v1503
      %v2475 = vmul.f32 %v2203, %v1505
      %v2476 = vmul.f32 %v2204, %v1616
      %v2477 = vmul.f32 %v2205, %v1618
      %v2478 = vmul.f32 %v2206, %v1729
      %v2479 = vmul.f32 %v2207, %v1731
      %v2480 = vmul.f32 %v2208, %v1830
      %v2481 = vmul.f32 %v2209, %v942
      %v2482 = vmul.f32 %v2210, %v944
      %v2483 = vmul.f32 %v2211, %v1055
      %v2484 = vmul.f32 %v2212, %v1057
      %v2485 = vmul.f32 %v2213, %v1168
      %v2486 = vmul.f32 %v2214, %v1170
      %v2487 = vmul.f32 %v2215, %v1281
      %v2488 = vmul.f32 %v2216, %v1283
      %v2489 = vmul.f32 %v2217, %v1394
      %v2490 = vmul.f32 %v2218, %v1396
      %v2491 = vmul.f32 %v2219, %v1507
      %v2492 = vmul.f32 %v2220, %v1509
      %v2493 = vmul.f32 %v2221, %v1620
      %v2494 = vmul.f32 %v2222, %v1622
      %v2495 = vmul.f32 %v2223, %v1733
      %v2496 = vmul.f32 %v2224, %v1735
      %v2497 = vmul.f32 %v2225, %v1833
      %v2498 = vmul.f32 %v2226, %v948
      %v2499 = vmul.f32 %v2227, %v950
      %v2500 = vmul.f32 %v2228, %v1061
      %v2501 = vmul.f32 %v2229, %v1063
      %v2502 = vmul.f32 %v2230, %v1174
      %v2503 = vmul.f32 %v2231, %v1176
      %v2504 = vmul.f32 %v2232, %v1287
      %v2505 = vmul.f32 %v2233, %v1289
      %v2506 = vmul.f32 %v2234, %v1400
      %v2507 = vmul.f32 %v2235, %v1402
      %v2508 = vmul.f32 %v2236, %v1513
      %v2509 = vmul.f32 %v2237, %v1515
      %v2510 = vmul.f32 %v2238, %v1626
      %v2511 = vmul.f32 %v2239, %v1628
      %v2512 = vmul.f32 %v2240, %v1739
      %v2513 = vmul.f32 %v2241, %v1741
      %v2514 = vmul.f32 %v2242, %v1838
      %v2515 = vmul.f32 %v2243, %v952
      %v2516 = vmul.f32 %v2244, %v954
      %v2517 = vmul.f32 %v2245, %v1065
      %v2518 = vmul.f32 %v2246, %v1067
      %v2519 = vmul.f32 %v2247, %v1178
      %v2520 = vmul.f32 %v2248, %v1180
      %v2521 = vmul.f32 %v2249, %v1291
      %v2522 = vmul.f32 %v2250, %v1293
      %v2523 = vmul.f32 %v2251, %v1404
      %v2524 = vmul.f32 %v2252, %v1406
      %v2525 = vmul.f32 %v2253, %v1517
      %v2526 = vmul.f32 %v2254, %v1519
      %v2527 = vmul.f32 %v2255, %v1630
      %v2528 = vmul.f32 %v2256, %v1632
      %v2529 = vmul.f32 %v2257, %v1743
      %v2530 = vmul.f32 %v2258, %v1745
      %v2531 = vmul.f32 %v2259, %v1841
      %v2532 = vpack.c.bf16 %v2277, %v2260
      %v2533 = vpack.c.bf16 %v2278, %v2261
      %v2534 = vpack.c.bf16 %v2279, %v2262
      %v2535 = vpack.c.bf16 %v2280, %v2263
      %v2536 = vpack.c.bf16 %v2281, %v2264
      %v2537 = vpack.c.bf16 %v2282, %v2265
      %v2538 = vpack.c.bf16 %v2283, %v2266
      %v2539 = vpack.c.bf16 %v2284, %v2267
      %v2540 = vpack.c.bf16 %v2285, %v2268
      %v2541 = vpack.c.bf16 %v2286, %v2269
      %v2542 = vpack.c.bf16 %v2287, %v2270
      %v2543 = vpack.c.bf16 %v2288, %v2271
      %v2544 = vpack.c.bf16 %v2289, %v2272
      %v2545 = vpack.c.bf16 %v2290, %v2273
      %v2546 = vpack.c.bf16 %v2291, %v2274
      %v2547 = vpack.c.bf16 %v2292, %v2275
      %v2548 = vpack.c.bf16 %v2293, %v2276
      %v2549 = vpack.c.bf16 %v2311, %v2294
      %v2550 = vpack.c.bf16 %v2312, %v2295
      %v2551 = vpack.c.bf16 %v2313, %v2296
      %v2552 = vpack.c.bf16 %v2314, %v2297
      %v2553 = vpack.c.bf16 %v2315, %v2298
      %v2554 = vpack.c.bf16 %v2316, %v2299
      %v2555 = vpack.c.bf16 %v2317, %v2300
      %v2556 = vpack.c.bf16 %v2318, %v2301
      %v2557 = vpack.c.bf16 %v2319, %v2302
      %v2558 = vpack.c.bf16 %v2320, %v2303
      %v2559 = vpack.c.bf16 %v2321, %v2304
      %v2560 = vpack.c.bf16 %v2322, %v2305
      %v2561 = vpack.c.bf16 %v2323, %v2306
      %v2562 = vpack.c.bf16 %v2324, %v2307
      %v2563 = vpack.c.bf16 %v2325, %v2308
      %v2564 = vpack.c.bf16 %v2326, %v2309
      %v2565 = vpack.c.bf16 %v2327, %v2310
      %v2566 = vpack.c.bf16 %v2345, %v2328
      %v2567 = vpack.c.bf16 %v2346, %v2329
      %v2568 = vpack.c.bf16 %v2347, %v2330
      %v2569 = vpack.c.bf16 %v2348, %v2331
      %v2570 = vpack.c.bf16 %v2349, %v2332
      %v2571 = vpack.c.bf16 %v2350, %v2333
      %v2572 = vpack.c.bf16 %v2351, %v2334
      %v2573 = vpack.c.bf16 %v2352, %v2335
      %v2574 = vpack.c.bf16 %v2353, %v2336
      %v2575 = vpack.c.bf16 %v2354, %v2337
      %v2576 = vpack.c.bf16 %v2355, %v2338
      %v2577 = vpack.c.bf16 %v2356, %v2339
      %v2578 = vpack.c.bf16 %v2357, %v2340
      %v2579 = vpack.c.bf16 %v2358, %v2341
      %v2580 = vpack.c.bf16 %v2359, %v2342
      %v2581 = vpack.c.bf16 %v2360, %v2343
      %v2582 = vpack.c.bf16 %v2361, %v2344
      %v2583 = vpack.c.bf16 %v2379, %v2362
      %v2584 = vpack.c.bf16 %v2380, %v2363
      %v2585 = vpack.c.bf16 %v2381, %v2364
      %v2586 = vpack.c.bf16 %v2382, %v2365
      %v2587 = vpack.c.bf16 %v2383, %v2366
      %v2588 = vpack.c.bf16 %v2384, %v2367
      %v2589 = vpack.c.bf16 %v2385, %v2368
      %v2590 = vpack.c.bf16 %v2386, %v2369
      %v2591 = vpack.c.bf16 %v2387, %v2370
      %v2592 = vpack.c.bf16 %v2388, %v2371
      %v2593 = vpack.c.bf16 %v2389, %v2372
      %v2594 = vpack.c.bf16 %v2390, %v2373
      %v2595 = vpack.c.bf16 %v2391, %v2374
      %v2596 = vpack.c.bf16 %v2392, %v2375
      %v2597 = vpack.c.bf16 %v2393, %v2376
      %v2598 = vpack.c.bf16 %v2394, %v2377
      %v2599 = vpack.c.bf16 %v2395, %v2378
      %v2600 = vpack.c.bf16 %v2413, %v2396
      %v2601 = vpack.c.bf16 %v2414, %v2397
      %v2602 = vpack.c.bf16 %v2415, %v2398
      %v2603 = vpack.c.bf16 %v2416, %v2399
      %v2604 = vpack.c.bf16 %v2417, %v2400
      %v2605 = vpack.c.bf16 %v2418, %v2401
      %v2606 = vpack.c.bf16 %v2419, %v2402
      %v2607 = vpack.c.bf16 %v2420, %v2403
      %v2608 = vpack.c.bf16 %v2421, %v2404
      %v2609 = vpack.c.bf16 %v2422, %v2405
      %v2610 = vpack.c.bf16 %v2423, %v2406
      %v2611 = vpack.c.bf16 %v2424, %v2407
      %v2612 = vpack.c.bf16 %v2425, %v2408
      %v2613 = vpack.c.bf16 %v2426, %v2409
      %v2614 = vpack.c.bf16 %v2427, %v2410
      %v2615 = vpack.c.bf16 %v2428, %v2411
      %v2616 = vpack.c.bf16 %v2429, %v2412
      %v2617 = vpack.c.bf16 %v2447, %v2430
      %v2618 = vpack.c.bf16 %v2448, %v2431
      %v2619 = vpack.c.bf16 %v2449, %v2432
      %v2620 = vpack.c.bf16 %v2450, %v2433
      %v2621 = vpack.c.bf16 %v2451, %v2434
      %v2622 = vpack.c.bf16 %v2452, %v2435
      %v2623 = vpack.c.bf16 %v2453, %v2436
      %v2624 = vpack.c.bf16 %v2454, %v2437
      %v2625 = vpack.c.bf16 %v2455, %v2438
      %v2626 = vpack.c.bf16 %v2456, %v2439
      %v2627 = vpack.c.bf16 %v2457, %v2440
      %v2628 = vpack.c.bf16 %v2458, %v2441
      %v2629 = vpack.c.bf16 %v2459, %v2442
      %v2630 = vpack.c.bf16 %v2460, %v2443
      %v2631 = vpack.c.bf16 %v2461, %v2444
      %v2632 = vpack.c.bf16 %v2462, %v2445
      %v2633 = vpack.c.bf16 %v2463, %v2446
      %v2634 = vpack.c.bf16 %v2481, %v2464
      %v2635 = vpack.c.bf16 %v2482, %v2465
      %v2636 = vpack.c.bf16 %v2483, %v2466
      %v2637 = vpack.c.bf16 %v2484, %v2467
      %v2638 = vpack.c.bf16 %v2485, %v2468
      %v2639 = vpack.c.bf16 %v2486, %v2469
      %v2640 = vpack.c.bf16 %v2487, %v2470
      %v2641 = vpack.c.bf16 %v2488, %v2471
      %v2642 = vpack.c.bf16 %v2489, %v2472
      %v2643 = vpack.c.bf16 %v2490, %v2473
      %v2644 = vpack.c.bf16 %v2491, %v2474
      %v2645 = vpack.c.bf16 %v2492, %v2475
      %v2646 = vpack.c.bf16 %v2493, %v2476
      %v2647 = vpack.c.bf16 %v2494, %v2477
      %v2648 = vpack.c.bf16 %v2495, %v2478
      %v2649 = vpack.c.bf16 %v2496, %v2479
      %v2650 = vpack.c.bf16 %v2497, %v2480
      %v2651 = vpack.c.bf16 %v2515, %v2498
      %v2652 = vpack.c.bf16 %v2516, %v2499
      %v2653 = vpack.c.bf16 %v2517, %v2500
      %v2654 = vpack.c.bf16 %v2518, %v2501
      %v2655 = vpack.c.bf16 %v2519, %v2502
      %v2656 = vpack.c.bf16 %v2520, %v2503
      %v2657 = vpack.c.bf16 %v2521, %v2504
      %v2658 = vpack.c.bf16 %v2522, %v2505
      %v2659 = vpack.c.bf16 %v2523, %v2506
      %v2660 = vpack.c.bf16 %v2524, %v2507
      %v2661 = vpack.c.bf16 %v2525, %v2508
      %v2662 = vpack.c.bf16 %v2526, %v2509
      %v2663 = vpack.c.bf16 %v2527, %v2510
      %v2664 = vpack.c.bf16 %v2528, %v2511
      %v2665 = vpack.c.bf16 %v2529, %v2512
      %v2666 = vpack.c.bf16 %v2530, %v2513
      %v2667 = vpack.c.bf16 %v2531, %v2514
      %v2668 = vld [vmem:[#allocation2] sm:$0xff]
      %v2669 = vld [vmem:[#allocation2 + $0x8] sm:$0xff]
      %v2670 = vld [vmem:[#allocation2 + $0x10] sm:$0xff]
      %v2671 = vld [vmem:[#allocation2 + $0x18] sm:$0xff]
      %v2672 = vld [vmem:[#allocation2 + $0x20] sm:$0xff]
      %v2673 = vld [vmem:[#allocation2 + $0x28] sm:$0xff]
      %v2674 = vld [vmem:[#allocation2 + $0x30] sm:$0xff]
      %v2675 = vld [vmem:[#allocation2 + $0x38] sm:$0xff]
      %v2676 = vld [vmem:[#allocation2 + $0x40] sm:$0xff]
      %v2677 = vld [vmem:[#allocation2 + $0x48] sm:$0xff]
      %v2678 = vld [vmem:[#allocation2 + $0x50] sm:$0xff]
      %v2679 = vld [vmem:[#allocation2 + $0x58] sm:$0xff]
      %v2680 = vld [vmem:[#allocation2 + $0x60] sm:$0xff]
      %v2681 = vld [vmem:[#allocation2 + $0x68] sm:$0xff]
      %v2682 = vld [vmem:[#allocation2 + $0x70] sm:$0xff]
      %v2683 = vld [vmem:[#allocation2 + $0x78] sm:$0xff]
      %v2684 = vld [vmem:[#allocation2 + $0x80] sm:$0xff]
      %v2685 = vld [vmem:[#allocation2 + $0x88] sm:$0xff]
      %v2686 = vld [vmem:[#allocation2 + $0x90] sm:$0xff]
      %v2687 = vld [vmem:[#allocation2 + $0x98] sm:$0xff]
      %v2688 = vld [vmem:[#allocation2 + $0xa0] sm:$0xff]
      %v2689 = vld [vmem:[#allocation2 + $0xa8] sm:$0xff]
      %v2690 = vld [vmem:[#allocation2 + $0xb0] sm:$0xff]
      %v2691 = vld [vmem:[#allocation2 + $0xb8] sm:$0xff]
      %v2692 = vld [vmem:[#allocation2 + $0xc0] sm:$0xff]
      %v2693 = vld [vmem:[#allocation2 + $0xc8] sm:$0xff]
      %v2694 = vld [vmem:[#allocation2 + $0xd0] sm:$0xff]
      %v2695 = vld [vmem:[#allocation2 + $0xd8] sm:$0xff]
      %v2696 = vld [vmem:[#allocation2 + $0xe0] sm:$0xff]
      %v2697 = vld [vmem:[#allocation2 + $0xe8] sm:$0xff]
      %v2698 = vld [vmem:[#allocation2 + $0xf0] sm:$0xff]
      %v2699 = vld [vmem:[#allocation2 + $0xf8] sm:$0xff]
      %v2700 = vld [vmem:[#allocation2 + $0x100] sm:$0xff]
      %v2701 = vld [vmem:[#allocation2 + $0x108] sm:$0xff]
      %v2702 = vld [vmem:[#allocation2 + $0x110] sm:$0xff]
      %v2703 = vld [vmem:[#allocation2 + $0x118] sm:$0xff]
      %v2704 = vld [vmem:[#allocation2 + $0x120] sm:$0xff]
      %v2705 = vld [vmem:[#allocation2 + $0x128] sm:$0xff]
      %v2706 = vld [vmem:[#allocation2 + $0x130] sm:$0xff]
      %v2707 = vld [vmem:[#allocation2 + $0x138] sm:$0xff]
      %v2708 = vld [vmem:[#allocation2 + $0x140] sm:$0xff]
      %v2709 = vld [vmem:[#allocation2 + $0x148] sm:$0xff]
      %v2710 = vld [vmem:[#allocation2 + $0x150] sm:$0xff]
      %v2711 = vld [vmem:[#allocation2 + $0x158] sm:$0xff]
      %v2712 = vld [vmem:[#allocation2 + $0x160] sm:$0xff]
      %v2713 = vld [vmem:[#allocation2 + $0x168] sm:$0xff]
      %v2714 = vld [vmem:[#allocation2 + $0x170] sm:$0xff]
      %v2715 = vld [vmem:[#allocation2 + $0x178] sm:$0xff]
      %v2716 = vld [vmem:[#allocation2 + $0x180] sm:$0xff]
      %v2717 = vld [vmem:[#allocation2 + $0x188] sm:$0xff]
      %v2718 = vld [vmem:[#allocation2 + $0x190] sm:$0xff]
      %v2719 = vld [vmem:[#allocation2 + $0x198] sm:$0xff]
      %v2720 = vld [vmem:[#allocation2 + $0x1a0] sm:$0xff]
      %v2721 = vld [vmem:[#allocation2 + $0x1a8] sm:$0xff]
      %v2722 = vld [vmem:[#allocation2 + $0x1b0] sm:$0xff]
      %v2723 = vld [vmem:[#allocation2 + $0x1b8] sm:$0xff]
      %v2724 = vld [vmem:[#allocation2 + $0x1c0] sm:$0xff]
      %v2725 = vld [vmem:[#allocation2 + $0x1c8] sm:$0xff]
      %v2726 = vld [vmem:[#allocation2 + $0x1d0] sm:$0xff]
      %v2727 = vld [vmem:[#allocation2 + $0x1d8] sm:$0xff]
      %v2728 = vld [vmem:[#allocation2 + $0x1e0] sm:$0xff]
      %v2729 = vld [vmem:[#allocation2 + $0x1e8] sm:$0xff]
      %v2730 = vld [vmem:[#allocation2 + $0x1f0] sm:$0xff]
      %v2731 = vld [vmem:[#allocation2 + $0x1f8] sm:$0xff]
      %v2732 = vld [vmem:[%s376] sm:$0xff]
      %v2733 = vld [vmem:[%s376 + $0x8] sm:$0xff]
      %v2734 = vld [vmem:[%s376 + $0x10] sm:$0xff]
      %v2735 = vld [vmem:[%s376 + $0x18] sm:$0xff]
      %v2736 = vld [vmem:[%s376 + $0x20] sm:$0xff]
      %v2737 = vld [vmem:[%s376 + $0x28] sm:$0xff]
      %v2738 = vld [vmem:[%s376 + $0x30] sm:$0xff]
      %v2739 = vld [vmem:[%s376 + $0x38] sm:$0xff]
      %v2740 = vld [vmem:[%s376 + $0x40] sm:$0xff]
      %v2741 = vld [vmem:[%s376 + $0x48] sm:$0xff]
      %v2742 = vld [vmem:[%s376 + $0x50] sm:$0xff]
      %v2743 = vld [vmem:[%s376 + $0x58] sm:$0xff]
      %v2744 = vld [vmem:[%s376 + $0x60] sm:$0xff]
      %v2745 = vld [vmem:[%s376 + $0x68] sm:$0xff]
      %v2746 = vld [vmem:[%s376 + $0x70] sm:$0xff]
      %v2747 = vld [vmem:[%s376 + $0x78] sm:$0xff]
      %v2748 = vld [vmem:[%s376 + $0x80] sm:$0xff]
      %v2749 = vld [vmem:[%s376 + $0x88] sm:$0xff]
      %v2750 = vld [vmem:[%s376 + $0x90] sm:$0xff]
      %v2751 = vld [vmem:[%s376 + $0x98] sm:$0xff]
      %v2752 = vld [vmem:[%s376 + $0xa0] sm:$0xff]
      %v2753 = vld [vmem:[%s376 + $0xa8] sm:$0xff]
      %v2754 = vld [vmem:[%s376 + $0xb0] sm:$0xff]
      %v2755 = vld [vmem:[%s376 + $0xb8] sm:$0xff]
      %v2756 = vld [vmem:[%s376 + $0xc0] sm:$0xff]
      %v2757 = vld [vmem:[%s376 + $0xc8] sm:$0xff]
      %v2758 = vld [vmem:[%s376 + $0xd0] sm:$0xff]
      %v2759 = vld [vmem:[%s376 + $0xd8] sm:$0xff]
      %v2760 = vld [vmem:[%s376 + $0xe0] sm:$0xff]
      %v2761 = vld [vmem:[%s376 + $0xe8] sm:$0xff]
      %v2762 = vld [vmem:[%s376 + $0xf0] sm:$0xff]
      %v2763 = vld [vmem:[%s376 + $0xf8] sm:$0xff]
      %v2764 = vld [vmem:[%s376 + $0x100] sm:$0xff]
      %v2765 = vld [vmem:[%s376 + $0x108] sm:$0xff]
      %v2766 = vld [vmem:[%s376 + $0x110] sm:$0xff]
      %v2767 = vld [vmem:[%s376 + $0x118] sm:$0xff]
      %v2768 = vld [vmem:[%s376 + $0x120] sm:$0xff]
      %v2769 = vld [vmem:[%s376 + $0x128] sm:$0xff]
      %v2770 = vld [vmem:[%s376 + $0x130] sm:$0xff]
      %v2771 = vld [vmem:[%s376 + $0x138] sm:$0xff]
      %v2772 = vld [vmem:[%s376 + $0x140] sm:$0xff]
      %v2773 = vld [vmem:[%s376 + $0x148] sm:$0xff]
      %v2774 = vld [vmem:[%s376 + $0x150] sm:$0xff]
      %v2775 = vld [vmem:[%s376 + $0x158] sm:$0xff]
      %v2776 = vld [vmem:[%s376 + $0x160] sm:$0xff]
      %v2777 = vld [vmem:[%s376 + $0x168] sm:$0xff]
      %v2778 = vld [vmem:[%s376 + $0x170] sm:$0xff]
      %v2779 = vld [vmem:[%s376 + $0x178] sm:$0xff]
      %v2780 = vld [vmem:[%s376 + $0x180] sm:$0xff]
      %v2781 = vld [vmem:[%s376 + $0x188] sm:$0xff]
      %v2782 = vld [vmem:[%s376 + $0x190] sm:$0xff]
      %v2783 = vld [vmem:[%s376 + $0x198] sm:$0xff]
      %v2784 = vld [vmem:[%s376 + $0x1a0] sm:$0xff]
      %v2785 = vld [vmem:[%s376 + $0x1a8] sm:$0xff]
      %v2786 = vld [vmem:[%s376 + $0x1b0] sm:$0xff]
      %v2787 = vld [vmem:[%s376 + $0x1b8] sm:$0xff]
      %v2788 = vld [vmem:[%s376 + $0x1c0] sm:$0xff]
      %v2789 = vld [vmem:[%s376 + $0x1c8] sm:$0xff]
      %v2790 = vld [vmem:[%s376 + $0x1d0] sm:$0xff]
      %v2791 = vld [vmem:[%s376 + $0x1d8] sm:$0xff]
      %v2792 = vld [vmem:[%s376 + $0x1e0] sm:$0xff]
      %v2793 = vld [vmem:[%s376 + $0x1e8] sm:$0xff]
      %v2794 = vld [vmem:[%s376 + $0x1f0] sm:$0xff]
      %v2795 = vld [vmem:[%s376 + $0x1f8] sm:$0xff]
      %v2796 = vld [vmem:[%s376 + $0x200] sm:$0xff]
      %v2797 = vld [vmem:[%s376 + $0x208] sm:$0xff]
      %v2798 = vld [vmem:[%s376 + $0x210] sm:$0xff]
      %v2799 = vld [vmem:[%s376 + $0x218] sm:$0xff]
      %v2800 = vld [vmem:[%s376 + $0x220] sm:$0xff]
      %v2801 = vld [vmem:[%s376 + $0x228] sm:$0xff]
      %v2802 = vld [vmem:[%s376 + $0x230] sm:$0xff]
      %v2803 = vld [vmem:[%s376 + $0x238] sm:$0xff]
      %v2804 = vld [vmem:[%s376 + $0x240] sm:$0xff]
      %v2805 = vld [vmem:[%s376 + $0x248] sm:$0xff]
      %v2806 = vld [vmem:[%s376 + $0x250] sm:$0xff]
      %v2807 = vld [vmem:[%s376 + $0x258] sm:$0xff]
      %v2808 = vld [vmem:[%s376 + $0x260] sm:$0xff]
      %v2809 = vld [vmem:[%s376 + $0x268] sm:$0xff]
      %v2810 = vld [vmem:[%s376 + $0x270] sm:$0xff]
      %v2811 = vld [vmem:[%s376 + $0x278] sm:$0xff]
      %v2812 = vld [vmem:[%s376 + $0x280] sm:$0xff]
      %v2813 = vld [vmem:[%s376 + $0x288] sm:$0xff]
      %v2814 = vld [vmem:[%s376 + $0x290] sm:$0xff]
      %v2815 = vld [vmem:[%s376 + $0x298] sm:$0xff]
      %v2816 = vld [vmem:[%s376 + $0x2a0] sm:$0xff]
      %v2817 = vld [vmem:[%s376 + $0x2a8] sm:$0xff]
      %v2818 = vld [vmem:[%s376 + $0x2b0] sm:$0xff]
      %v2819 = vld [vmem:[%s376 + $0x2b8] sm:$0xff]
      %v2820 = vld [vmem:[%s376 + $0x2c0] sm:$0xff]
      %v2821 = vld [vmem:[%s376 + $0x2c8] sm:$0xff]
      %v2822 = vld [vmem:[%s376 + $0x2d0] sm:$0xff]
      %v2823 = vld [vmem:[%s376 + $0x2d8] sm:$0xff]
      %v2824 = vld [vmem:[%s376 + $0x2e0] sm:$0xff]
      %v2825 = vld [vmem:[%s376 + $0x2e8] sm:$0xff]
      %v2826 = vld [vmem:[%s376 + $0x2f0] sm:$0xff]
      %v2827 = vld [vmem:[%s376 + $0x2f8] sm:$0xff]
      %v2828 = vld [vmem:[%s376 + $0x300] sm:$0xff]
      %v2829 = vld [vmem:[%s376 + $0x308] sm:$0xff]
      %v2830 = vld [vmem:[%s376 + $0x310] sm:$0xff]
      %v2831 = vld [vmem:[%s376 + $0x318] sm:$0xff]
      %v2832 = vld [vmem:[%s376 + $0x320] sm:$0xff]
      %v2833 = vld [vmem:[%s376 + $0x328] sm:$0xff]
      %v2834 = vld [vmem:[%s376 + $0x330] sm:$0xff]
      %v2835 = vld [vmem:[%s376 + $0x338] sm:$0xff]
      %v2836 = vld [vmem:[%s376 + $0x340] sm:$0xff]
      %v2837 = vld [vmem:[%s376 + $0x348] sm:$0xff]
      %v2838 = vld [vmem:[%s376 + $0x350] sm:$0xff]
      %v2839 = vld [vmem:[%s376 + $0x358] sm:$0xff]
      %v2840 = vld [vmem:[%s376 + $0x360] sm:$0xff]
      %v2841 = vld [vmem:[%s376 + $0x368] sm:$0xff]
      %v2842 = vld [vmem:[%s376 + $0x370] sm:$0xff]
      %v2843 = vld [vmem:[%s376 + $0x378] sm:$0xff]
      %v2844 = vld [vmem:[%s376 + $0x380] sm:$0xff]
      %v2845 = vld [vmem:[%s376 + $0x388] sm:$0xff]
      %v2846 = vld [vmem:[%s376 + $0x390] sm:$0xff]
      %v2847 = vld [vmem:[%s376 + $0x398] sm:$0xff]
      %v2848 = vld [vmem:[%s376 + $0x3a0] sm:$0xff]
      %v2849 = vld [vmem:[%s376 + $0x3a8] sm:$0xff]
      %v2850 = vld [vmem:[%s376 + $0x3b0] sm:$0xff]
      %v2851 = vld [vmem:[%s376 + $0x3b8] sm:$0xff]
      %v2852 = vld [vmem:[%s376 + $0x3c0] sm:$0xff]
      %v2853 = vld [vmem:[%s376 + $0x3c8] sm:$0xff]
      %v2854 = vld [vmem:[%s376 + $0x3d0] sm:$0xff]
      %v2855 = vld [vmem:[%s376 + $0x3d8] sm:$0xff]
      %v2856 = vld [vmem:[%s376 + $0x3e0] sm:$0xff]
      %v2857 = vld [vmem:[%s376 + $0x3e8] sm:$0xff]
      %v2858 = vld [vmem:[%s376 + $0x3f0] sm:$0xff]
      %v2859 = vld [vmem:[%s376 + $0x3f8] sm:$0xff]
      %v2860 = vld [vmem:[%s376 + $0x400] sm:$0xff]
      %v2861 = vld [vmem:[%s376 + $0x408] sm:$0xff]
      %v2862 = vld [vmem:[%s376 + $0x410] sm:$0xff]
      %v2863 = vld [vmem:[%s376 + $0x418] sm:$0xff]
      %v2864 = vld [vmem:[%s376 + $0x420] sm:$0xff]
      %v2865 = vld [vmem:[%s376 + $0x428] sm:$0xff]
      %v2866 = vld [vmem:[%s376 + $0x430] sm:$0xff]
      %v2867 = vld [vmem:[%s376 + $0x438] sm:$0xff]
      %v2868 = vld [vmem:[%s376 + $0x440] sm:$0xff]
      %v2869 = vld [vmem:[%s376 + $0x448] sm:$0xff]
      %v2870 = vld [vmem:[%s376 + $0x450] sm:$0xff]
      %v2871 = vld [vmem:[%s376 + $0x458] sm:$0xff]
      %v2872 = vld [vmem:[%s376 + $0x460] sm:$0xff]
      %v2873 = vld [vmem:[%s376 + $0x468] sm:$0xff]
      %v2874 = vld [vmem:[%s376 + $0x470] sm:$0xff]
      %v2875 = vld [vmem:[%s376 + $0x478] sm:$0xff]
      %v2876 = vld [vmem:[%s376 + $0x480] sm:$0xff]
      %v2877 = vld [vmem:[%s376 + $0x488] sm:$0xff]
      %v2878 = vld [vmem:[%s376 + $0x490] sm:$0xff]
      %v2879 = vld [vmem:[%s376 + $0x498] sm:$0xff]
      %v2880 = vld [vmem:[%s376 + $0x4a0] sm:$0xff]
      %v2881 = vld [vmem:[%s376 + $0x4a8] sm:$0xff]
      %v2882 = vld [vmem:[%s376 + $0x4b0] sm:$0xff]
      %v2883 = vld [vmem:[%s376 + $0x4b8] sm:$0xff]
      %v2884 = vld [vmem:[%s376 + $0x4c0] sm:$0xff]
      %v2885 = vld [vmem:[%s376 + $0x4c8] sm:$0xff]
      %v2886 = vld [vmem:[%s376 + $0x4d0] sm:$0xff]
      %v2887 = vld [vmem:[%s376 + $0x4d8] sm:$0xff]
      %v2888 = vld [vmem:[%s376 + $0x4e0] sm:$0xff]
      %v2889 = vld [vmem:[%s376 + $0x4e8] sm:$0xff]
      %v2890 = vld [vmem:[%s376 + $0x4f0] sm:$0xff]
      %v2891 = vld [vmem:[%s376 + $0x4f8] sm:$0xff]
      %v2892 = vld [vmem:[%s376 + $0x500] sm:$0xff]
      %v2893 = vld [vmem:[%s376 + $0x508] sm:$0xff]
      %v2894 = vld [vmem:[%s376 + $0x510] sm:$0xff]
      %v2895 = vld [vmem:[%s376 + $0x518] sm:$0xff]
      %v2896 = vld [vmem:[%s376 + $0x520] sm:$0xff]
      %v2897 = vld [vmem:[%s376 + $0x528] sm:$0xff]
      %v2898 = vld [vmem:[%s376 + $0x530] sm:$0xff]
      %v2899 = vld [vmem:[%s376 + $0x538] sm:$0xff]
      %v2900 = vld [vmem:[%s376 + $0x540] sm:$0xff]
      %v2901 = vld [vmem:[%s376 + $0x548] sm:$0xff]
      %v2902 = vld [vmem:[%s376 + $0x550] sm:$0xff]
      %v2903 = vld [vmem:[%s376 + $0x558] sm:$0xff]
      %v2904 = vld [vmem:[%s376 + $0x560] sm:$0xff]
      %v2905 = vld [vmem:[%s376 + $0x568] sm:$0xff]
      %v2906 = vld [vmem:[%s376 + $0x570] sm:$0xff]
      %v2907 = vld [vmem:[%s376 + $0x578] sm:$0xff]
      %v2908 = vld [vmem:[%s376 + $0x580] sm:$0xff]
      %v2909 = vld [vmem:[%s376 + $0x588] sm:$0xff]
      %v2910 = vld [vmem:[%s376 + $0x590] sm:$0xff]
      %v2911 = vld [vmem:[%s376 + $0x598] sm:$0xff]
      %v2912 = vld [vmem:[%s376 + $0x5a0] sm:$0xff]
      %v2913 = vld [vmem:[%s376 + $0x5a8] sm:$0xff]
      %v2914 = vld [vmem:[%s376 + $0x5b0] sm:$0xff]
      %v2915 = vld [vmem:[%s376 + $0x5b8] sm:$0xff]
      %v2916 = vld [vmem:[%s376 + $0x5c0] sm:$0xff]
      %v2917 = vld [vmem:[%s376 + $0x5c8] sm:$0xff]
      %v2918 = vld [vmem:[%s376 + $0x5d0] sm:$0xff]
      %v2919 = vld [vmem:[%s376 + $0x5d8] sm:$0xff]
      %v2920 = vld [vmem:[%s376 + $0x5e0] sm:$0xff]
      %v2921 = vld [vmem:[%s376 + $0x5e8] sm:$0xff]
      %v2922 = vld [vmem:[%s376 + $0x5f0] sm:$0xff]
      %v2923 = vld [vmem:[%s376 + $0x5f8] sm:$0xff]
      %v2924 = vld [vmem:[%s376 + $0x600] sm:$0xff]
      %v2925 = vld [vmem:[%s376 + $0x608] sm:$0xff]
      %v2926 = vld [vmem:[%s376 + $0x610] sm:$0xff]
      %v2927 = vld [vmem:[%s376 + $0x618] sm:$0xff]
      %v2928 = vld [vmem:[%s376 + $0x620] sm:$0xff]
      %v2929 = vld [vmem:[%s376 + $0x628] sm:$0xff]
      %v2930 = vld [vmem:[%s376 + $0x630] sm:$0xff]
      %v2931 = vld [vmem:[%s376 + $0x638] sm:$0xff]
      %v2932 = vld [vmem:[%s376 + $0x640] sm:$0xff]
      %v2933 = vld [vmem:[%s376 + $0x648] sm:$0xff]
      %v2934 = vld [vmem:[%s376 + $0x650] sm:$0xff]
      %v2935 = vld [vmem:[%s376 + $0x658] sm:$0xff]
      %v2936 = vld [vmem:[%s376 + $0x660] sm:$0xff]
      %v2937 = vld [vmem:[%s376 + $0x668] sm:$0xff]
      %v2938 = vld [vmem:[%s376 + $0x670] sm:$0xff]
      %v2939 = vld [vmem:[%s376 + $0x678] sm:$0xff]
      %v2940 = vld [vmem:[%s376 + $0x680] sm:$0xff]
      %v2941 = vld [vmem:[%s376 + $0x688] sm:$0xff]
      %v2942 = vld [vmem:[%s376 + $0x690] sm:$0xff]
      %v2943 = vld [vmem:[%s376 + $0x698] sm:$0xff]
      %v2944 = vld [vmem:[%s376 + $0x6a0] sm:$0xff]
      %v2945 = vld [vmem:[%s376 + $0x6a8] sm:$0xff]
      %v2946 = vld [vmem:[%s376 + $0x6b0] sm:$0xff]
      %v2947 = vld [vmem:[%s376 + $0x6b8] sm:$0xff]
      %v2948 = vld [vmem:[%s376 + $0x6c0] sm:$0xff]
      %v2949 = vld [vmem:[%s376 + $0x6c8] sm:$0xff]
      %v2950 = vld [vmem:[%s376 + $0x6d0] sm:$0xff]
      %v2951 = vld [vmem:[%s376 + $0x6d8] sm:$0xff]
      %v2952 = vld [vmem:[%s376 + $0x6e0] sm:$0xff]
      %v2953 = vld [vmem:[%s376 + $0x6e8] sm:$0xff]
      %v2954 = vld [vmem:[%s376 + $0x6f0] sm:$0xff]
      %v2955 = vld [vmem:[%s376 + $0x6f8] sm:$0xff]
      %v2956 = vld [vmem:[%s376 + $0x700] sm:$0xff]
      %v2957 = vld [vmem:[%s376 + $0x708] sm:$0xff]
      %v2958 = vld [vmem:[%s376 + $0x710] sm:$0xff]
      %v2959 = vld [vmem:[%s376 + $0x718] sm:$0xff]
      %v2960 = vld [vmem:[%s376 + $0x720] sm:$0xff]
      %v2961 = vld [vmem:[%s376 + $0x728] sm:$0xff]
      %v2962 = vld [vmem:[%s376 + $0x730] sm:$0xff]
      %v2963 = vld [vmem:[%s376 + $0x738] sm:$0xff]
      %v2964 = vld [vmem:[%s376 + $0x740] sm:$0xff]
      %v2965 = vld [vmem:[%s376 + $0x748] sm:$0xff]
      %v2966 = vld [vmem:[%s376 + $0x750] sm:$0xff]
      %v2967 = vld [vmem:[%s376 + $0x758] sm:$0xff]
      %v2968 = vld [vmem:[%s376 + $0x760] sm:$0xff]
      %v2969 = vld [vmem:[%s376 + $0x768] sm:$0xff]
      %v2970 = vld [vmem:[%s376 + $0x770] sm:$0xff]
      %v2971 = vld [vmem:[%s376 + $0x778] sm:$0xff]
      %v2972 = vld [vmem:[%s376 + $0x780] sm:$0xff]
      %v2973 = vld [vmem:[%s376 + $0x788] sm:$0xff]
      %v2974 = vld [vmem:[%s376 + $0x790] sm:$0xff]
      %v2975 = vld [vmem:[%s376 + $0x798] sm:$0xff]
      %v2976 = vld [vmem:[%s376 + $0x7a0] sm:$0xff]
      %v2977 = vld [vmem:[%s376 + $0x7a8] sm:$0xff]
      %v2978 = vld [vmem:[%s376 + $0x7b0] sm:$0xff]
      %v2979 = vld [vmem:[%s376 + $0x7b8] sm:$0xff]
      %v2980 = vld [vmem:[%s376 + $0x7c0] sm:$0xff]
      %v2981 = vld [vmem:[%s376 + $0x7c8] sm:$0xff]
      %v2982 = vld [vmem:[%s376 + $0x7d0] sm:$0xff]
      %v2983 = vld [vmem:[%s376 + $0x7d8] sm:$0xff]
      %v2984 = vld [vmem:[%s376 + $0x7e0] sm:$0xff]
      %v2985 = vld [vmem:[%s376 + $0x7e8] sm:$0xff]
      %v2986 = vld [vmem:[%s376 + $0x7f0] sm:$0xff]
      %v2987 = vld [vmem:[%s376 + $0x7f8] sm:$0xff]
      %v2988 = vld [vmem:[%s376 + $0x800] sm:$0xff]
      %v2989 = vld [vmem:[%s376 + $0x808] sm:$0xff]
      %v2990 = vld [vmem:[%s376 + $0x810] sm:$0xff]
      %v2991 = vld [vmem:[%s376 + $0x818] sm:$0xff]
      %v2992 = vld [vmem:[%s376 + $0x820] sm:$0xff]
      %v2993 = vld [vmem:[%s376 + $0x828] sm:$0xff]
      %v2994 = vld [vmem:[%s376 + $0x830] sm:$0xff]
      %v2995 = vld [vmem:[%s376 + $0x838] sm:$0xff]
      %v2996 = vld [vmem:[%s376 + $0x840] sm:$0xff]
      %v2997 = vld [vmem:[%s376 + $0x848] sm:$0xff]
      %v2998 = vld [vmem:[%s376 + $0x850] sm:$0xff]
      %v2999 = vld [vmem:[%s376 + $0x858] sm:$0xff]
      %v3000 = vld [vmem:[%s376 + $0x860] sm:$0xff]
      %v3001 = vld [vmem:[%s376 + $0x868] sm:$0xff]
      %v3002 = vld [vmem:[%s376 + $0x870] sm:$0xff]
      %v3003 = vld [vmem:[%s376 + $0x878] sm:$0xff]
      %v3004 = vld [vmem:[%s376 + $0x880] sm:$0xff]
      %v3005 = vld [vmem:[%s376 + $0x888] sm:$0xff]
      %v3006 = vld [vmem:[%s376 + $0x890] sm:$0xff]
      %v3007 = vld [vmem:[%s376 + $0x898] sm:$0xff]
      %v3008 = vld [vmem:[%s376 + $0x8a0] sm:$0xff]
      %v3009 = vld [vmem:[%s376 + $0x8a8] sm:$0xff]
      %v3010 = vld [vmem:[%s376 + $0x8b0] sm:$0xff]
      %v3011 = vld [vmem:[%s376 + $0x8b8] sm:$0xff]
      %v3012 = vld [vmem:[%s376 + $0x8c0] sm:$0xff]
      %v3013 = vld [vmem:[%s376 + $0x8c8] sm:$0xff]
      %v3014 = vld [vmem:[%s376 + $0x8d0] sm:$0xff]
      %v3015 = vld [vmem:[%s376 + $0x8d8] sm:$0xff]
      %v3016 = vld [vmem:[%s376 + $0x8e0] sm:$0xff]
      %v3017 = vld [vmem:[%s376 + $0x8e8] sm:$0xff]
      %v3018 = vld [vmem:[%s376 + $0x8f0] sm:$0xff]
      %v3019 = vld [vmem:[%s376 + $0x8f8] sm:$0xff]
      %v3020 = vld [vmem:[%s376 + $0x900] sm:$0xff]
      %v3021 = vld [vmem:[%s376 + $0x908] sm:$0xff]
      %v3022 = vld [vmem:[%s376 + $0x910] sm:$0xff]
      %v3023 = vld [vmem:[%s376 + $0x918] sm:$0xff]
      %v3024 = vld [vmem:[%s376 + $0x920] sm:$0xff]
      %v3025 = vld [vmem:[%s376 + $0x928] sm:$0xff]
      %v3026 = vld [vmem:[%s376 + $0x930] sm:$0xff]
      %v3027 = vld [vmem:[%s376 + $0x938] sm:$0xff]
      %v3028 = vld [vmem:[%s376 + $0x940] sm:$0xff]
      %v3029 = vld [vmem:[%s376 + $0x948] sm:$0xff]
      %v3030 = vld [vmem:[%s376 + $0x950] sm:$0xff]
      %v3031 = vld [vmem:[%s376 + $0x958] sm:$0xff]
      %v3032 = vld [vmem:[%s376 + $0x960] sm:$0xff]
      %v3033 = vld [vmem:[%s376 + $0x968] sm:$0xff]
      %v3034 = vld [vmem:[%s376 + $0x970] sm:$0xff]
      %v3035 = vld [vmem:[%s376 + $0x978] sm:$0xff]
      %v3036 = vld [vmem:[%s376 + $0x980] sm:$0xff]
      %v3037 = vld [vmem:[%s376 + $0x988] sm:$0xff]
      %v3038 = vld [vmem:[%s376 + $0x990] sm:$0xff]
      %v3039 = vld [vmem:[%s376 + $0x998] sm:$0xff]
      %v3040 = vld [vmem:[%s376 + $0x9a0] sm:$0xff]
      %v3041 = vld [vmem:[%s376 + $0x9a8] sm:$0xff]
      %v3042 = vld [vmem:[%s376 + $0x9b0] sm:$0xff]
      %v3043 = vld [vmem:[%s376 + $0x9b8] sm:$0xff]
      %v3044 = vld [vmem:[%s376 + $0x9c0] sm:$0xff]
      %v3045 = vld [vmem:[%s376 + $0x9c8] sm:$0xff]
      %v3046 = vld [vmem:[%s376 + $0x9d0] sm:$0xff]
      %v3047 = vld [vmem:[%s376 + $0x9d8] sm:$0xff]
      %v3048 = vld [vmem:[%s376 + $0x9e0] sm:$0xff]
      %v3049 = vld [vmem:[%s376 + $0x9e8] sm:$0xff]
      %v3050 = vld [vmem:[%s376 + $0x9f0] sm:$0xff]
      %v3051 = vld [vmem:[%s376 + $0x9f8] sm:$0xff]
      %v3052 = vld [vmem:[%s376 + $0xa00] sm:$0xff]
      %v3053 = vld [vmem:[%s376 + $0xa08] sm:$0xff]
      %v3054 = vld [vmem:[%s376 + $0xa10] sm:$0xff]
      %v3055 = vld [vmem:[%s376 + $0xa18] sm:$0xff]
      %v3056 = vld [vmem:[%s376 + $0xa20] sm:$0xff]
      %v3057 = vld [vmem:[%s376 + $0xa28] sm:$0xff]
      %v3058 = vld [vmem:[%s376 + $0xa30] sm:$0xff]
      %v3059 = vld [vmem:[%s376 + $0xa38] sm:$0xff]
      %v3060 = vld [vmem:[%s376 + $0xa40] sm:$0xff]
      %v3061 = vld [vmem:[%s376 + $0xa48] sm:$0xff]
      %v3062 = vld [vmem:[%s376 + $0xa50] sm:$0xff]
      %v3063 = vld [vmem:[%s376 + $0xa58] sm:$0xff]
      %v3064 = vld [vmem:[%s376 + $0xa60] sm:$0xff]
      %v3065 = vld [vmem:[%s376 + $0xa68] sm:$0xff]
      %v3066 = vld [vmem:[%s376 + $0xa70] sm:$0xff]
      %v3067 = vld [vmem:[%s376 + $0xa78] sm:$0xff]
      %v3068 = vld [vmem:[%s376 + $0xa80] sm:$0xff]
      %v3069 = vld [vmem:[%s376 + $0xa88] sm:$0xff]
      %v3070 = vld [vmem:[%s376 + $0xa90] sm:$0xff]
      %v3071 = vld [vmem:[%s376 + $0xa98] sm:$0xff]
      %v3072 = vld [vmem:[%s376 + $0xaa0] sm:$0xff]
      %v3073 = vld [vmem:[%s376 + $0xaa8] sm:$0xff]
      %v3074 = vld [vmem:[%s376 + $0xab0] sm:$0xff]
      %v3075 = vld [vmem:[%s376 + $0xab8] sm:$0xff]
      %v3076 = vld [vmem:[%s376 + $0xac0] sm:$0xff]
      %v3077 = vld [vmem:[%s376 + $0xac8] sm:$0xff]
      %v3078 = vld [vmem:[%s376 + $0xad0] sm:$0xff]
      %v3079 = vld [vmem:[%s376 + $0xad8] sm:$0xff]
      %v3080 = vld [vmem:[%s376 + $0xae0] sm:$0xff]
      %v3081 = vld [vmem:[%s376 + $0xae8] sm:$0xff]
      %v3082 = vld [vmem:[%s376 + $0xaf0] sm:$0xff]
      %v3083 = vld [vmem:[%s376 + $0xaf8] sm:$0xff]
      %v3084 = vld [vmem:[%s376 + $0xb00] sm:$0xff]
      %v3085 = vld [vmem:[%s376 + $0xb08] sm:$0xff]
      %v3086 = vld [vmem:[%s376 + $0xb10] sm:$0xff]
      %v3087 = vld [vmem:[%s376 + $0xb18] sm:$0xff]
      %v3088 = vld [vmem:[%s376 + $0xb20] sm:$0xff]
      %v3089 = vld [vmem:[%s376 + $0xb28] sm:$0xff]
      %v3090 = vld [vmem:[%s376 + $0xb30] sm:$0xff]
      %v3091 = vld [vmem:[%s376 + $0xb38] sm:$0xff]
      %v3092 = vld [vmem:[%s376 + $0xb40] sm:$0xff]
      %v3093 = vld [vmem:[%s376 + $0xb48] sm:$0xff]
      %v3094 = vld [vmem:[%s376 + $0xb50] sm:$0xff]
      %v3095 = vld [vmem:[%s376 + $0xb58] sm:$0xff]
      %v3096 = vld [vmem:[%s376 + $0xb60] sm:$0xff]
      %v3097 = vld [vmem:[%s376 + $0xb68] sm:$0xff]
      %v3098 = vld [vmem:[%s376 + $0xb70] sm:$0xff]
      %v3099 = vld [vmem:[%s376 + $0xb78] sm:$0xff]
      %v3100 = vld [vmem:[%s376 + $0xb80] sm:$0xff]
      %v3101 = vld [vmem:[%s376 + $0xb88] sm:$0xff]
      %v3102 = vld [vmem:[%s376 + $0xb90] sm:$0xff]
      %v3103 = vld [vmem:[%s376 + $0xb98] sm:$0xff]
      %v3104 = vld [vmem:[%s376 + $0xba0] sm:$0xff]
      %v3105 = vld [vmem:[%s376 + $0xba8] sm:$0xff]
      %v3106 = vld [vmem:[%s376 + $0xbb0] sm:$0xff]
      %v3107 = vld [vmem:[%s376 + $0xbb8] sm:$0xff]
      %v3108 = vld [vmem:[%s376 + $0xbc0] sm:$0xff]
      %v3109 = vld [vmem:[%s376 + $0xbc8] sm:$0xff]
      %v3110 = vld [vmem:[%s376 + $0xbd0] sm:$0xff]
      %v3111 = vld [vmem:[%s376 + $0xbd8] sm:$0xff]
      %v3112 = vld [vmem:[%s376 + $0xbe0] sm:$0xff]
      %v3113 = vld [vmem:[%s376 + $0xbe8] sm:$0xff]
      %v3114 = vld [vmem:[%s376 + $0xbf0] sm:$0xff]
      %v3115 = vld [vmem:[%s376 + $0xbf8] sm:$0xff]
      %v3116 = vld [vmem:[%s376 + $0xc00] sm:$0xff]
      %v3117 = vld [vmem:[%s376 + $0xc08] sm:$0xff]
      %v3118 = vld [vmem:[%s376 + $0xc10] sm:$0xff]
      %v3119 = vld [vmem:[%s376 + $0xc18] sm:$0xff]
      %v3120 = vld [vmem:[%s376 + $0xc20] sm:$0xff]
      %v3121 = vld [vmem:[%s376 + $0xc28] sm:$0xff]
      %v3122 = vld [vmem:[%s376 + $0xc30] sm:$0xff]
      %v3123 = vld [vmem:[%s376 + $0xc38] sm:$0xff]
      %v3124 = vld [vmem:[%s376 + $0xc40] sm:$0xff]
      %v3125 = vld [vmem:[%s376 + $0xc48] sm:$0xff]
      %v3126 = vld [vmem:[%s376 + $0xc50] sm:$0xff]
      %v3127 = vld [vmem:[%s376 + $0xc58] sm:$0xff]
      %v3128 = vld [vmem:[%s376 + $0xc60] sm:$0xff]
      %v3129 = vld [vmem:[%s376 + $0xc68] sm:$0xff]
      %v3130 = vld [vmem:[%s376 + $0xc70] sm:$0xff]
      %v3131 = vld [vmem:[%s376 + $0xc78] sm:$0xff]
      %v3132 = vld [vmem:[%s376 + $0xc80] sm:$0xff]
      %v3133 = vld [vmem:[%s376 + $0xc88] sm:$0xff]
      %v3134 = vld [vmem:[%s376 + $0xc90] sm:$0xff]
      %v3135 = vld [vmem:[%s376 + $0xc98] sm:$0xff]
      %v3136 = vld [vmem:[%s376 + $0xca0] sm:$0xff]
      %v3137 = vld [vmem:[%s376 + $0xca8] sm:$0xff]
      %v3138 = vld [vmem:[%s376 + $0xcb0] sm:$0xff]
      %v3139 = vld [vmem:[%s376 + $0xcb8] sm:$0xff]
      %v3140 = vld [vmem:[%s376 + $0xcc0] sm:$0xff]
      %v3141 = vld [vmem:[%s376 + $0xcc8] sm:$0xff]
      %v3142 = vld [vmem:[%s376 + $0xcd0] sm:$0xff]
      %v3143 = vld [vmem:[%s376 + $0xcd8] sm:$0xff]
      %v3144 = vld [vmem:[%s376 + $0xce0] sm:$0xff]
      %v3145 = vld [vmem:[%s376 + $0xce8] sm:$0xff]
      %v3146 = vld [vmem:[%s376 + $0xcf0] sm:$0xff]
      %v3147 = vld [vmem:[%s376 + $0xcf8] sm:$0xff]
      %v3148 = vld [vmem:[%s376 + $0xd00] sm:$0xff]
      %v3149 = vld [vmem:[%s376 + $0xd08] sm:$0xff]
      %v3150 = vld [vmem:[%s376 + $0xd10] sm:$0xff]
      %v3151 = vld [vmem:[%s376 + $0xd18] sm:$0xff]
      %v3152 = vld [vmem:[%s376 + $0xd20] sm:$0xff]
      %v3153 = vld [vmem:[%s376 + $0xd28] sm:$0xff]
      %v3154 = vld [vmem:[%s376 + $0xd30] sm:$0xff]
      %v3155 = vld [vmem:[%s376 + $0xd38] sm:$0xff]
      %v3156 = vld [vmem:[%s376 + $0xd40] sm:$0xff]
      %v3157 = vld [vmem:[%s376 + $0xd48] sm:$0xff]
      %v3158 = vld [vmem:[%s376 + $0xd50] sm:$0xff]
      %v3159 = vld [vmem:[%s376 + $0xd58] sm:$0xff]
      %v3160 = vld [vmem:[%s376 + $0xd60] sm:$0xff]
      %v3161 = vld [vmem:[%s376 + $0xd68] sm:$0xff]
      %v3162 = vld [vmem:[%s376 + $0xd70] sm:$0xff]
      %v3163 = vld [vmem:[%s376 + $0xd78] sm:$0xff]
      %v3164 = vld [vmem:[%s376 + $0xd80] sm:$0xff]
      %v3165 = vld [vmem:[%s376 + $0xd88] sm:$0xff]
      %v3166 = vld [vmem:[%s376 + $0xd90] sm:$0xff]
      %v3167 = vld [vmem:[%s376 + $0xd98] sm:$0xff]
      %v3168 = vld [vmem:[%s376 + $0xda0] sm:$0xff]
      %v3169 = vld [vmem:[%s376 + $0xda8] sm:$0xff]
      %v3170 = vld [vmem:[%s376 + $0xdb0] sm:$0xff]
      %v3171 = vld [vmem:[%s376 + $0xdb8] sm:$0xff]
      %v3172 = vld [vmem:[%s376 + $0xdc0] sm:$0xff]
      %v3173 = vld [vmem:[%s376 + $0xdc8] sm:$0xff]
      %v3174 = vld [vmem:[%s376 + $0xdd0] sm:$0xff]
      %v3175 = vld [vmem:[%s376 + $0xdd8] sm:$0xff]
      %v3176 = vld [vmem:[%s376 + $0xde0] sm:$0xff]
      %v3177 = vld [vmem:[%s376 + $0xde8] sm:$0xff]
      %v3178 = vld [vmem:[%s376 + $0xdf0] sm:$0xff]
      %v3179 = vld [vmem:[%s376 + $0xdf8] sm:$0xff]
      %v3180 = vld [vmem:[%s376 + $0xe00] sm:$0xff]
      %v3181 = vld [vmem:[%s376 + $0xe08] sm:$0xff]
      %v3182 = vld [vmem:[%s376 + $0xe10] sm:$0xff]
      %v3183 = vld [vmem:[%s376 + $0xe18] sm:$0xff]
      %v3184 = vld [vmem:[%s376 + $0xe20] sm:$0xff]
      %v3185 = vld [vmem:[%s376 + $0xe28] sm:$0xff]
      %v3186 = vld [vmem:[%s376 + $0xe30] sm:$0xff]
      %v3187 = vld [vmem:[%s376 + $0xe38] sm:$0xff]
      %v3188 = vld [vmem:[%s376 + $0xe40] sm:$0xff]
      %v3189 = vld [vmem:[%s376 + $0xe48] sm:$0xff]
      %v3190 = vld [vmem:[%s376 + $0xe50] sm:$0xff]
      %v3191 = vld [vmem:[%s376 + $0xe58] sm:$0xff]
      %v3192 = vld [vmem:[%s376 + $0xe60] sm:$0xff]
      %v3193 = vld [vmem:[%s376 + $0xe68] sm:$0xff]
      %v3194 = vld [vmem:[%s376 + $0xe70] sm:$0xff]
      %v3195 = vld [vmem:[%s376 + $0xe78] sm:$0xff]
      %v3196 = vld [vmem:[%s376 + $0xe80] sm:$0xff]
      %v3197 = vld [vmem:[%s376 + $0xe88] sm:$0xff]
      %v3198 = vld [vmem:[%s376 + $0xe90] sm:$0xff]
      %v3199 = vld [vmem:[%s376 + $0xe98] sm:$0xff]
      %v3200 = vld [vmem:[%s376 + $0xea0] sm:$0xff]
      %v3201 = vld [vmem:[%s376 + $0xea8] sm:$0xff]
      %v3202 = vld [vmem:[%s376 + $0xeb0] sm:$0xff]
      %v3203 = vld [vmem:[%s376 + $0xeb8] sm:$0xff]
      %v3204 = vld [vmem:[%s376 + $0xec0] sm:$0xff]
      %v3205 = vld [vmem:[%s376 + $0xec8] sm:$0xff]
      %v3206 = vld [vmem:[%s376 + $0xed0] sm:$0xff]
      %v3207 = vld [vmem:[%s376 + $0xed8] sm:$0xff]
      %v3208 = vld [vmem:[%s376 + $0xee0] sm:$0xff]
      %v3209 = vld [vmem:[%s376 + $0xee8] sm:$0xff]
      %v3210 = vld [vmem:[%s376 + $0xef0] sm:$0xff]
      %v3211 = vld [vmem:[%s376 + $0xef8] sm:$0xff]
      %v3212 = vld [vmem:[%s376 + $0xf00] sm:$0xff]
      %v3213 = vld [vmem:[%s376 + $0xf08] sm:$0xff]
      %v3214 = vld [vmem:[%s376 + $0xf10] sm:$0xff]
      %v3215 = vld [vmem:[%s376 + $0xf18] sm:$0xff]
      %v3216 = vld [vmem:[%s376 + $0xf20] sm:$0xff]
      %v3217 = vld [vmem:[%s376 + $0xf28] sm:$0xff]
      %v3218 = vld [vmem:[%s376 + $0xf30] sm:$0xff]
      %v3219 = vld [vmem:[%s376 + $0xf38] sm:$0xff]
      %v3220 = vld [vmem:[%s376 + $0xf40] sm:$0xff]
      %v3221 = vld [vmem:[%s376 + $0xf48] sm:$0xff]
      %v3222 = vld [vmem:[%s376 + $0xf50] sm:$0xff]
      %v3223 = vld [vmem:[%s376 + $0xf58] sm:$0xff]
      %v3224 = vld [vmem:[%s376 + $0xf60] sm:$0xff]
      %v3225 = vld [vmem:[%s376 + $0xf68] sm:$0xff]
      %v3226 = vld [vmem:[%s376 + $0xf70] sm:$0xff]
      %v3227 = vld [vmem:[%s376 + $0xf78] sm:$0xff]
      %v3228 = vld [vmem:[%s376 + $0xf80] sm:$0xff]
      %v3229 = vld [vmem:[%s376 + $0xf88] sm:$0xff]
      %v3230 = vld [vmem:[%s376 + $0xf90] sm:$0xff]
      %v3231 = vld [vmem:[%s376 + $0xf98] sm:$0xff]
      %v3232 = vld [vmem:[%s376 + $0xfa0] sm:$0xff]
      %v3233 = vld [vmem:[%s376 + $0xfa8] sm:$0xff]
      %v3234 = vld [vmem:[%s376 + $0xfb0] sm:$0xff]
      %v3235 = vld [vmem:[%s376 + $0xfb8] sm:$0xff]
      %v3236 = vld [vmem:[%s376 + $0xfc0] sm:$0xff]
      %v3237 = vld [vmem:[%s376 + $0xfc8] sm:$0xff]
      %v3238 = vld [vmem:[%s376 + $0xfd0] sm:$0xff]
      %v3239 = vld [vmem:[%s376 + $0xfd8] sm:$0xff]
      %v3240 = vld [vmem:[%s376 + $0xfe0] sm:$0xff]
      %v3241 = vld [vmem:[%s376 + $0xfe8] sm:$0xff]
      %v3242 = vld [vmem:[%s376 + $0xff0] sm:$0xff]
      %v3243 = vld [vmem:[%s376 + $0xff8] sm:$0xff]
      %v3244 = vld [vmem:[%s376 + $0x1000] sm:$0xff]
      %v3245 = vld [vmem:[%s376 + $0x1008] sm:$0xff]
      %v3246 = vld [vmem:[%s376 + $0x1010] sm:$0xff]
      %v3247 = vld [vmem:[%s376 + $0x1018] sm:$0xff]
      %v3248 = vld [vmem:[%s376 + $0x1020] sm:$0xff]
      %v3249 = vld [vmem:[%s376 + $0x1028] sm:$0xff]
      %v3250 = vld [vmem:[%s376 + $0x1030] sm:$0xff]
      %v3251 = vld [vmem:[%s376 + $0x1038] sm:$0xff]
      %v3772 = vunpack.c.l.b16 %v2732
      %v3773 = vunpack.c.h.b16 %v2732
      %v3774 = vunpack.c.l.b16 %v2733
      %v3775 = vunpack.c.h.b16 %v2733
      %v3776 = vunpack.c.l.b16 %v2734
      %v3777 = vunpack.c.h.b16 %v2734
      %v3778 = vunpack.c.l.b16 %v2735
      %v3779 = vunpack.c.h.b16 %v2735
      %v3780 = vunpack.c.l.b16 %v2736
      %v3781 = vunpack.c.h.b16 %v2736
      %v3782 = vunpack.c.l.b16 %v2737
      %v3783 = vunpack.c.h.b16 %v2737
      %v3784 = vunpack.c.l.b16 %v2738
      %v3785 = vunpack.c.h.b16 %v2738
      %v3786 = vunpack.c.l.b16 %v2739
      %v3787 = vunpack.c.h.b16 %v2739
      %v3788 = vunpack.c.l.b16 %v2740
      %v3789 = vunpack.c.h.b16 %v2740
      %v3790 = vunpack.c.l.b16 %v2741
      %v3791 = vunpack.c.h.b16 %v2741
      %v3792 = vunpack.c.l.b16 %v2742
      %v3793 = vunpack.c.h.b16 %v2742
      %v3794 = vunpack.c.l.b16 %v2743
      %v3795 = vunpack.c.h.b16 %v2743
      %v3796 = vunpack.c.l.b16 %v2744
      %v3797 = vunpack.c.h.b16 %v2744
      %v3798 = vunpack.c.l.b16 %v2745
      %v3799 = vunpack.c.h.b16 %v2745
      %v3800 = vunpack.c.l.b16 %v2746
      %v3801 = vunpack.c.h.b16 %v2746
      %v3802 = vunpack.c.l.b16 %v2747
      %v3803 = vunpack.c.h.b16 %v2747
      %v3804 = vunpack.c.l.b16 %v2748
      %v3805 = vunpack.c.h.b16 %v2748
      %v3806 = vunpack.c.l.b16 %v2749
      %v3807 = vunpack.c.h.b16 %v2749
      %v3808 = vunpack.c.l.b16 %v2750
      %v3809 = vunpack.c.h.b16 %v2750
      %v3810 = vunpack.c.l.b16 %v2751
      %v3811 = vunpack.c.h.b16 %v2751
      %v3812 = vunpack.c.l.b16 %v2752
      %v3813 = vunpack.c.h.b16 %v2752
      %v3814 = vunpack.c.l.b16 %v2753
      %v3815 = vunpack.c.h.b16 %v2753
      %v3816 = vunpack.c.l.b16 %v2754
      %v3817 = vunpack.c.h.b16 %v2754
      %v3818 = vunpack.c.l.b16 %v2755
      %v3819 = vunpack.c.h.b16 %v2755
      %v3820 = vunpack.c.l.b16 %v2756
      %v3821 = vunpack.c.h.b16 %v2756
      %v3822 = vunpack.c.l.b16 %v2757
      %v3823 = vunpack.c.h.b16 %v2757
      %v3824 = vunpack.c.l.b16 %v2758
      %v3825 = vunpack.c.h.b16 %v2758
      %v3826 = vunpack.c.l.b16 %v2759
      %v3827 = vunpack.c.h.b16 %v2759
      %v3828 = vunpack.c.l.b16 %v2760
      %v3829 = vunpack.c.h.b16 %v2760
      %v3830 = vunpack.c.l.b16 %v2761
      %v3831 = vunpack.c.h.b16 %v2761
      %v3832 = vunpack.c.l.b16 %v2762
      %v3833 = vunpack.c.h.b16 %v2762
      %v3834 = vunpack.c.l.b16 %v2763
      %v3835 = vunpack.c.h.b16 %v2763
      %v3836 = vunpack.c.l.b16 %v2764
      %v3837 = vunpack.c.h.b16 %v2764
      %v3838 = vunpack.c.l.b16 %v2765
      %v3839 = vunpack.c.h.b16 %v2765
      %v3840 = vunpack.c.l.b16 %v2766
      %v3841 = vunpack.c.h.b16 %v2766
      %v3842 = vunpack.c.l.b16 %v2767
      %v3843 = vunpack.c.h.b16 %v2767
      %v3844 = vunpack.c.l.b16 %v2768
      %v3845 = vunpack.c.h.b16 %v2768
      %v3846 = vunpack.c.l.b16 %v2769
      %v3847 = vunpack.c.h.b16 %v2769
      %v3848 = vunpack.c.l.b16 %v2770
      %v3849 = vunpack.c.h.b16 %v2770
      %v3850 = vunpack.c.l.b16 %v2771
      %v3851 = vunpack.c.h.b16 %v2771
      %v3852 = vunpack.c.l.b16 %v2772
      %v3853 = vunpack.c.h.b16 %v2772
      %v3854 = vunpack.c.l.b16 %v2773
      %v3855 = vunpack.c.h.b16 %v2773
      %v3856 = vunpack.c.l.b16 %v2774
      %v3857 = vunpack.c.h.b16 %v2774
      %v3858 = vunpack.c.l.b16 %v2775
      %v3859 = vunpack.c.h.b16 %v2775
      %v3860 = vunpack.c.l.b16 %v2776
      %v3861 = vunpack.c.h.b16 %v2776
      %v3862 = vunpack.c.l.b16 %v2777
      %v3863 = vunpack.c.h.b16 %v2777
      %v3864 = vunpack.c.l.b16 %v2778
      %v3865 = vunpack.c.h.b16 %v2778
      %v3866 = vunpack.c.l.b16 %v2779
      %v3867 = vunpack.c.h.b16 %v2779
      %v3868 = vunpack.c.l.b16 %v2780
      %v3869 = vunpack.c.h.b16 %v2780
      %v3870 = vunpack.c.l.b16 %v2781
      %v3871 = vunpack.c.h.b16 %v2781
      %v3872 = vunpack.c.l.b16 %v2782
      %v3873 = vunpack.c.h.b16 %v2782
      %v3874 = vunpack.c.l.b16 %v2783
      %v3875 = vunpack.c.h.b16 %v2783
      %v3876 = vunpack.c.l.b16 %v2784
      %v3877 = vunpack.c.h.b16 %v2784
      %v3878 = vunpack.c.l.b16 %v2785
      %v3879 = vunpack.c.h.b16 %v2785
      %v3880 = vunpack.c.l.b16 %v2786
      %v3881 = vunpack.c.h.b16 %v2786
      %v3882 = vunpack.c.l.b16 %v2787
      %v3883 = vunpack.c.h.b16 %v2787
      %v3884 = vunpack.c.l.b16 %v2788
      %v3885 = vunpack.c.h.b16 %v2788
      %v3886 = vunpack.c.l.b16 %v2789
      %v3887 = vunpack.c.h.b16 %v2789
      %v3888 = vunpack.c.l.b16 %v2790
      %v3889 = vunpack.c.h.b16 %v2790
      %v3890 = vunpack.c.l.b16 %v2791
      %v3891 = vunpack.c.h.b16 %v2791
      %v3892 = vunpack.c.l.b16 %v2792
      %v3893 = vunpack.c.h.b16 %v2792
      %v3894 = vunpack.c.l.b16 %v2793
      %v3895 = vunpack.c.h.b16 %v2793
      %v3896 = vunpack.c.l.b16 %v2794
      %v3897 = vunpack.c.h.b16 %v2794
      %v3898 = vunpack.c.l.b16 %v2795
      %v3899 = vunpack.c.h.b16 %v2795
      %v3900 = vunpack.c.l.b16 %v2796
      %v3901 = vunpack.c.h.b16 %v2796
      %v3902 = vunpack.c.l.b16 %v2797
      %v3903 = vunpack.c.h.b16 %v2797
      %v3904 = vunpack.c.l.b16 %v2798
      %v3905 = vunpack.c.h.b16 %v2798
      %v3906 = vunpack.c.l.b16 %v2799
      %v3907 = vunpack.c.h.b16 %v2799
      %v3908 = vunpack.c.l.b16 %v2800
      %v3909 = vunpack.c.h.b16 %v2800
      %v3910 = vunpack.c.l.b16 %v2801
      %v3911 = vunpack.c.h.b16 %v2801
      %v3912 = vunpack.c.l.b16 %v2802
      %v3913 = vunpack.c.h.b16 %v2802
      %v3914 = vunpack.c.l.b16 %v2803
      %v3915 = vunpack.c.h.b16 %v2803
      %v3916 = vunpack.c.l.b16 %v2804
      %v3917 = vunpack.c.h.b16 %v2804
      %v3918 = vunpack.c.l.b16 %v2805
      %v3919 = vunpack.c.h.b16 %v2805
      %v3920 = vunpack.c.l.b16 %v2806
      %v3921 = vunpack.c.h.b16 %v2806
      %v3922 = vunpack.c.l.b16 %v2807
      %v3923 = vunpack.c.h.b16 %v2807
      %v3924 = vunpack.c.l.b16 %v2808
      %v3925 = vunpack.c.h.b16 %v2808
      %v3926 = vunpack.c.l.b16 %v2809
      %v3927 = vunpack.c.h.b16 %v2809
      %v3928 = vunpack.c.l.b16 %v2810
      %v3929 = vunpack.c.h.b16 %v2810
      %v3930 = vunpack.c.l.b16 %v2811
      %v3931 = vunpack.c.h.b16 %v2811
      %v3932 = vunpack.c.l.b16 %v2812
      %v3933 = vunpack.c.h.b16 %v2812
      %v3934 = vunpack.c.l.b16 %v2813
      %v3935 = vunpack.c.h.b16 %v2813
      %v3936 = vunpack.c.l.b16 %v2814
      %v3937 = vunpack.c.h.b16 %v2814
      %v3938 = vunpack.c.l.b16 %v2815
      %v3939 = vunpack.c.h.b16 %v2815
      %v3940 = vunpack.c.l.b16 %v2816
      %v3941 = vunpack.c.h.b16 %v2816
      %v3942 = vunpack.c.l.b16 %v2817
      %v3943 = vunpack.c.h.b16 %v2817
      %v3944 = vunpack.c.l.b16 %v2818
      %v3945 = vunpack.c.h.b16 %v2818
      %v3946 = vunpack.c.l.b16 %v2819
      %v3947 = vunpack.c.h.b16 %v2819
      %v3948 = vunpack.c.l.b16 %v2820
      %v3949 = vunpack.c.h.b16 %v2820
      %v3950 = vunpack.c.l.b16 %v2821
      %v3951 = vunpack.c.h.b16 %v2821
      %v3952 = vunpack.c.l.b16 %v2822
      %v3953 = vunpack.c.h.b16 %v2822
      %v3954 = vunpack.c.l.b16 %v2823
      %v3955 = vunpack.c.h.b16 %v2823
      %v3956 = vunpack.c.l.b16 %v2824
      %v3957 = vunpack.c.h.b16 %v2824
      %v3958 = vunpack.c.l.b16 %v2825
      %v3959 = vunpack.c.h.b16 %v2825
      %v3960 = vunpack.c.l.b16 %v2826
      %v3961 = vunpack.c.h.b16 %v2826
      %v3962 = vunpack.c.l.b16 %v2827
      %v3963 = vunpack.c.h.b16 %v2827
      %v3964 = vunpack.c.l.b16 %v2828
      %v3965 = vunpack.c.h.b16 %v2828
      %v3966 = vunpack.c.l.b16 %v2829
      %v3967 = vunpack.c.h.b16 %v2829
      %v3968 = vunpack.c.l.b16 %v2830
      %v3969 = vunpack.c.h.b16 %v2830
      %v3970 = vunpack.c.l.b16 %v2831
      %v3971 = vunpack.c.h.b16 %v2831
      %v3972 = vunpack.c.l.b16 %v2832
      %v3973 = vunpack.c.h.b16 %v2832
      %v3974 = vunpack.c.l.b16 %v2833
      %v3975 = vunpack.c.h.b16 %v2833
      %v3976 = vunpack.c.l.b16 %v2834
      %v3977 = vunpack.c.h.b16 %v2834
      %v3978 = vunpack.c.l.b16 %v2835
      %v3979 = vunpack.c.h.b16 %v2835
      %v3980 = vunpack.c.l.b16 %v2836
      %v3981 = vunpack.c.h.b16 %v2836
      %v3982 = vunpack.c.l.b16 %v2837
      %v3983 = vunpack.c.h.b16 %v2837
      %v3984 = vunpack.c.l.b16 %v2838
      %v3985 = vunpack.c.h.b16 %v2838
      %v3986 = vunpack.c.l.b16 %v2839
      %v3987 = vunpack.c.h.b16 %v2839
      %v3988 = vunpack.c.l.b16 %v2840
      %v3989 = vunpack.c.h.b16 %v2840
      %v3990 = vunpack.c.l.b16 %v2841
      %v3991 = vunpack.c.h.b16 %v2841
      %v3992 = vunpack.c.l.b16 %v2842
      %v3993 = vunpack.c.h.b16 %v2842
      %v3994 = vunpack.c.l.b16 %v2843
      %v3995 = vunpack.c.h.b16 %v2843
      %v3996 = vunpack.c.l.b16 %v2844
      %v3997 = vunpack.c.h.b16 %v2844
      %v3998 = vunpack.c.l.b16 %v2845
      %v3999 = vunpack.c.h.b16 %v2845
      %v4000 = vunpack.c.l.b16 %v2846
      %v4001 = vunpack.c.h.b16 %v2846
      %v4002 = vunpack.c.l.b16 %v2847
      %v4003 = vunpack.c.h.b16 %v2847
      %v4004 = vunpack.c.l.b16 %v2848
      %v4005 = vunpack.c.h.b16 %v2848
      %v4006 = vunpack.c.l.b16 %v2849
      %v4007 = vunpack.c.h.b16 %v2849
      %v4008 = vunpack.c.l.b16 %v2850
      %v4009 = vunpack.c.h.b16 %v2850
      %v4010 = vunpack.c.l.b16 %v2851
      %v4011 = vunpack.c.h.b16 %v2851
      %v4012 = vunpack.c.l.b16 %v2852
      %v4013 = vunpack.c.h.b16 %v2852
      %v4014 = vunpack.c.l.b16 %v2853
      %v4015 = vunpack.c.h.b16 %v2853
      %v4016 = vunpack.c.l.b16 %v2854
      %v4017 = vunpack.c.h.b16 %v2854
      %v4018 = vunpack.c.l.b16 %v2855
      %v4019 = vunpack.c.h.b16 %v2855
      %v4020 = vunpack.c.l.b16 %v2856
      %v4021 = vunpack.c.h.b16 %v2856
      %v4022 = vunpack.c.l.b16 %v2857
      %v4023 = vunpack.c.h.b16 %v2857
      %v4024 = vunpack.c.l.b16 %v2858
      %v4025 = vunpack.c.h.b16 %v2858
      %v4026 = vunpack.c.l.b16 %v2859
      %v4027 = vunpack.c.h.b16 %v2859
      %v4028 = vunpack.c.l.b16 %v2860
      %v4029 = vunpack.c.h.b16 %v2860
      %v4030 = vunpack.c.l.b16 %v2861
      %v4031 = vunpack.c.h.b16 %v2861
      %v4032 = vunpack.c.l.b16 %v2862
      %v4033 = vunpack.c.h.b16 %v2862
      %v4034 = vunpack.c.l.b16 %v2863
      %v4035 = vunpack.c.h.b16 %v2863
      %v4036 = vunpack.c.l.b16 %v2864
      %v4037 = vunpack.c.h.b16 %v2864
      %v4038 = vunpack.c.l.b16 %v2865
      %v4039 = vunpack.c.h.b16 %v2865
      %v4040 = vunpack.c.l.b16 %v2866
      %v4041 = vunpack.c.h.b16 %v2866
      %v4042 = vunpack.c.l.b16 %v2867
      %v4043 = vunpack.c.h.b16 %v2867
      %v4044 = vunpack.c.l.b16 %v2868
      %v4045 = vunpack.c.h.b16 %v2868
      %v4046 = vunpack.c.l.b16 %v2869
      %v4047 = vunpack.c.h.b16 %v2869
      %v4048 = vunpack.c.l.b16 %v2870
      %v4049 = vunpack.c.h.b16 %v2870
      %v4050 = vunpack.c.l.b16 %v2871
      %v4051 = vunpack.c.h.b16 %v2871
      %v4052 = vunpack.c.l.b16 %v2872
      %v4053 = vunpack.c.h.b16 %v2872
      %v4054 = vunpack.c.l.b16 %v2873
      %v4055 = vunpack.c.h.b16 %v2873
      %v4056 = vunpack.c.l.b16 %v2874
      %v4057 = vunpack.c.h.b16 %v2874
      %v4058 = vunpack.c.l.b16 %v2875
      %v4059 = vunpack.c.h.b16 %v2875
      %v4060 = vunpack.c.l.b16 %v2876
      %v4061 = vunpack.c.h.b16 %v2876
      %v4062 = vunpack.c.l.b16 %v2877
      %v4063 = vunpack.c.h.b16 %v2877
      %v4064 = vunpack.c.l.b16 %v2878
      %v4065 = vunpack.c.h.b16 %v2878
      %v4066 = vunpack.c.l.b16 %v2879
      %v4067 = vunpack.c.h.b16 %v2879
      %v4068 = vunpack.c.l.b16 %v2880
      %v4069 = vunpack.c.h.b16 %v2880
      %v4070 = vunpack.c.l.b16 %v2881
      %v4071 = vunpack.c.h.b16 %v2881
      %v4072 = vunpack.c.l.b16 %v2882
      %v4073 = vunpack.c.h.b16 %v2882
      %v4074 = vunpack.c.l.b16 %v2883
      %v4075 = vunpack.c.h.b16 %v2883
      %v4076 = vunpack.c.l.b16 %v2884
      %v4077 = vunpack.c.h.b16 %v2884
      %v4078 = vunpack.c.l.b16 %v2885
      %v4079 = vunpack.c.h.b16 %v2885
      %v4080 = vunpack.c.l.b16 %v2886
      %v4081 = vunpack.c.h.b16 %v2886
      %v4082 = vunpack.c.l.b16 %v2887
      %v4083 = vunpack.c.h.b16 %v2887
      %v4084 = vunpack.c.l.b16 %v2888
      %v4085 = vunpack.c.h.b16 %v2888
      %v4086 = vunpack.c.l.b16 %v2889
      %v4087 = vunpack.c.h.b16 %v2889
      %v4088 = vunpack.c.l.b16 %v2890
      %v4089 = vunpack.c.h.b16 %v2890
      %v4090 = vunpack.c.l.b16 %v2891
      %v4091 = vunpack.c.h.b16 %v2891
      %v4092 = vunpack.c.l.b16 %v2892
      %v4093 = vunpack.c.h.b16 %v2892
      %v4094 = vunpack.c.l.b16 %v2893
      %v4095 = vunpack.c.h.b16 %v2893
      %v4096 = vunpack.c.l.b16 %v2894
      %v4097 = vunpack.c.h.b16 %v2894
      %v4098 = vunpack.c.l.b16 %v2895
      %v4099 = vunpack.c.h.b16 %v2895
      %v4100 = vunpack.c.l.b16 %v2896
      %v4101 = vunpack.c.h.b16 %v2896
      %v4102 = vunpack.c.l.b16 %v2897
      %v4103 = vunpack.c.h.b16 %v2897
      %v4104 = vunpack.c.l.b16 %v2898
      %v4105 = vunpack.c.h.b16 %v2898
      %v4106 = vunpack.c.l.b16 %v2899
      %v4107 = vunpack.c.h.b16 %v2899
      %v4108 = vunpack.c.l.b16 %v2900
      %v4109 = vunpack.c.h.b16 %v2900
      %v4110 = vunpack.c.l.b16 %v2901
      %v4111 = vunpack.c.h.b16 %v2901
      %v4112 = vunpack.c.l.b16 %v2902
      %v4113 = vunpack.c.h.b16 %v2902
      %v4114 = vunpack.c.l.b16 %v2903
      %v4115 = vunpack.c.h.b16 %v2903
      %v4116 = vunpack.c.l.b16 %v2904
      %v4117 = vunpack.c.h.b16 %v2904
      %v4118 = vunpack.c.l.b16 %v2905
      %v4119 = vunpack.c.h.b16 %v2905
      %v4120 = vunpack.c.l.b16 %v2906
      %v4121 = vunpack.c.h.b16 %v2906
      %v4122 = vunpack.c.l.b16 %v2907
      %v4123 = vunpack.c.h.b16 %v2907
      %v4124 = vunpack.c.l.b16 %v2908
      %v4125 = vunpack.c.h.b16 %v2908
      %v4126 = vunpack.c.l.b16 %v2909
      %v4127 = vunpack.c.h.b16 %v2909
      %v4128 = vunpack.c.l.b16 %v2910
      %v4129 = vunpack.c.h.b16 %v2910
      %v4130 = vunpack.c.l.b16 %v2911
      %v4131 = vunpack.c.h.b16 %v2911
      %v4132 = vunpack.c.l.b16 %v2912
      %v4133 = vunpack.c.h.b16 %v2912
      %v4134 = vunpack.c.l.b16 %v2913
      %v4135 = vunpack.c.h.b16 %v2913
      %v4136 = vunpack.c.l.b16 %v2914
      %v4137 = vunpack.c.h.b16 %v2914
      %v4138 = vunpack.c.l.b16 %v2915
      %v4139 = vunpack.c.h.b16 %v2915
      %v4140 = vunpack.c.l.b16 %v2916
      %v4141 = vunpack.c.h.b16 %v2916
      %v4142 = vunpack.c.l.b16 %v2917
      %v4143 = vunpack.c.h.b16 %v2917
      %v4144 = vunpack.c.l.b16 %v2918
      %v4145 = vunpack.c.h.b16 %v2918
      %v4146 = vunpack.c.l.b16 %v2919
      %v4147 = vunpack.c.h.b16 %v2919
      %v4148 = vunpack.c.l.b16 %v2920
      %v4149 = vunpack.c.h.b16 %v2920
      %v4150 = vunpack.c.l.b16 %v2921
      %v4151 = vunpack.c.h.b16 %v2921
      %v4152 = vunpack.c.l.b16 %v2922
      %v4153 = vunpack.c.h.b16 %v2922
      %v4154 = vunpack.c.l.b16 %v2923
      %v4155 = vunpack.c.h.b16 %v2923
      %v4156 = vunpack.c.l.b16 %v2924
      %v4157 = vunpack.c.h.b16 %v2924
      %v4158 = vunpack.c.l.b16 %v2925
      %v4159 = vunpack.c.h.b16 %v2925
      %v4160 = vunpack.c.l.b16 %v2926
      %v4161 = vunpack.c.h.b16 %v2926
      %v4162 = vunpack.c.l.b16 %v2927
      %v4163 = vunpack.c.h.b16 %v2927
      %v4164 = vunpack.c.l.b16 %v2928
      %v4165 = vunpack.c.h.b16 %v2928
      %v4166 = vunpack.c.l.b16 %v2929
      %v4167 = vunpack.c.h.b16 %v2929
      %v4168 = vunpack.c.l.b16 %v2930
      %v4169 = vunpack.c.h.b16 %v2930
      %v4170 = vunpack.c.l.b16 %v2931
      %v4171 = vunpack.c.h.b16 %v2931
      %v4172 = vunpack.c.l.b16 %v2932
      %v4173 = vunpack.c.h.b16 %v2932
      %v4174 = vunpack.c.l.b16 %v2933
      %v4175 = vunpack.c.h.b16 %v2933
      %v4176 = vunpack.c.l.b16 %v2934
      %v4177 = vunpack.c.h.b16 %v2934
      %v4178 = vunpack.c.l.b16 %v2935
      %v4179 = vunpack.c.h.b16 %v2935
      %v4180 = vunpack.c.l.b16 %v2936
      %v4181 = vunpack.c.h.b16 %v2936
      %v4182 = vunpack.c.l.b16 %v2937
      %v4183 = vunpack.c.h.b16 %v2937
      %v4184 = vunpack.c.l.b16 %v2938
      %v4185 = vunpack.c.h.b16 %v2938
      %v4186 = vunpack.c.l.b16 %v2939
      %v4187 = vunpack.c.h.b16 %v2939
      %v4188 = vunpack.c.l.b16 %v2940
      %v4189 = vunpack.c.h.b16 %v2940
      %v4190 = vunpack.c.l.b16 %v2941
      %v4191 = vunpack.c.h.b16 %v2941
      %v4192 = vunpack.c.l.b16 %v2942
      %v4193 = vunpack.c.h.b16 %v2942
      %v4194 = vunpack.c.l.b16 %v2943
      %v4195 = vunpack.c.h.b16 %v2943
      %v4196 = vunpack.c.l.b16 %v2944
      %v4197 = vunpack.c.h.b16 %v2944
      %v4198 = vunpack.c.l.b16 %v2945
      %v4199 = vunpack.c.h.b16 %v2945
      %v4200 = vunpack.c.l.b16 %v2946
      %v4201 = vunpack.c.h.b16 %v2946
      %v4202 = vunpack.c.l.b16 %v2947
      %v4203 = vunpack.c.h.b16 %v2947
      %v4204 = vunpack.c.l.b16 %v2948
      %v4205 = vunpack.c.h.b16 %v2948
      %v4206 = vunpack.c.l.b16 %v2949
      %v4207 = vunpack.c.h.b16 %v2949
      %v4208 = vunpack.c.l.b16 %v2950
      %v4209 = vunpack.c.h.b16 %v2950
      %v4210 = vunpack.c.l.b16 %v2951
      %v4211 = vunpack.c.h.b16 %v2951
      %v4212 = vunpack.c.l.b16 %v2952
      %v4213 = vunpack.c.h.b16 %v2952
      %v4214 = vunpack.c.l.b16 %v2953
      %v4215 = vunpack.c.h.b16 %v2953
      %v4216 = vunpack.c.l.b16 %v2954
      %v4217 = vunpack.c.h.b16 %v2954
      %v4218 = vunpack.c.l.b16 %v2955
      %v4219 = vunpack.c.h.b16 %v2955
      %v4220 = vunpack.c.l.b16 %v2956
      %v4221 = vunpack.c.h.b16 %v2956
      %v4222 = vunpack.c.l.b16 %v2957
      %v4223 = vunpack.c.h.b16 %v2957
      %v4224 = vunpack.c.l.b16 %v2958
      %v4225 = vunpack.c.h.b16 %v2958
      %v4226 = vunpack.c.l.b16 %v2959
      %v4227 = vunpack.c.h.b16 %v2959
      %v4228 = vunpack.c.l.b16 %v2960
      %v4229 = vunpack.c.h.b16 %v2960
      %v4230 = vunpack.c.l.b16 %v2961
      %v4231 = vunpack.c.h.b16 %v2961
      %v4232 = vunpack.c.l.b16 %v2962
      %v4233 = vunpack.c.h.b16 %v2962
      %v4234 = vunpack.c.l.b16 %v2963
      %v4235 = vunpack.c.h.b16 %v2963
      %v4236 = vunpack.c.l.b16 %v2964
      %v4237 = vunpack.c.h.b16 %v2964
      %v4238 = vunpack.c.l.b16 %v2965
      %v4239 = vunpack.c.h.b16 %v2965
      %v4240 = vunpack.c.l.b16 %v2966
      %v4241 = vunpack.c.h.b16 %v2966
      %v4242 = vunpack.c.l.b16 %v2967
      %v4243 = vunpack.c.h.b16 %v2967
      %v4244 = vunpack.c.l.b16 %v2968
      %v4245 = vunpack.c.h.b16 %v2968
      %v4246 = vunpack.c.l.b16 %v2969
      %v4247 = vunpack.c.h.b16 %v2969
      %v4248 = vunpack.c.l.b16 %v2970
      %v4249 = vunpack.c.h.b16 %v2970
      %v4250 = vunpack.c.l.b16 %v2971
      %v4251 = vunpack.c.h.b16 %v2971
      %v4252 = vunpack.c.l.b16 %v2972
      %v4253 = vunpack.c.h.b16 %v2972
      %v4254 = vunpack.c.l.b16 %v2973
      %v4255 = vunpack.c.h.b16 %v2973
      %v4256 = vunpack.c.l.b16 %v2974
      %v4257 = vunpack.c.h.b16 %v2974
      %v4258 = vunpack.c.l.b16 %v2975
      %v4259 = vunpack.c.h.b16 %v2975
      %v4260 = vunpack.c.l.b16 %v2976
      %v4261 = vunpack.c.h.b16 %v2976
      %v4262 = vunpack.c.l.b16 %v2977
      %v4263 = vunpack.c.h.b16 %v2977
      %v4264 = vunpack.c.l.b16 %v2978
      %v4265 = vunpack.c.h.b16 %v2978
      %v4266 = vunpack.c.l.b16 %v2979
      %v4267 = vunpack.c.h.b16 %v2979
      %v4268 = vunpack.c.l.b16 %v2980
      %v4269 = vunpack.c.h.b16 %v2980
      %v4270 = vunpack.c.l.b16 %v2981
      %v4271 = vunpack.c.h.b16 %v2981
      %v4272 = vunpack.c.l.b16 %v2982
      %v4273 = vunpack.c.h.b16 %v2982
      %v4274 = vunpack.c.l.b16 %v2983
      %v4275 = vunpack.c.h.b16 %v2983
      %v4276 = vunpack.c.l.b16 %v2984
      %v4277 = vunpack.c.h.b16 %v2984
      %v4278 = vunpack.c.l.b16 %v2985
      %v4279 = vunpack.c.h.b16 %v2985
      %v4280 = vunpack.c.l.b16 %v2986
      %v4281 = vunpack.c.h.b16 %v2986
      %v4282 = vunpack.c.l.b16 %v2987
      %v4283 = vunpack.c.h.b16 %v2987
      %v4284 = vunpack.c.l.b16 %v2988
      %v4285 = vunpack.c.h.b16 %v2988
      %v4286 = vunpack.c.l.b16 %v2989
      %v4287 = vunpack.c.h.b16 %v2989
      %v4288 = vunpack.c.l.b16 %v2990
      %v4289 = vunpack.c.h.b16 %v2990
      %v4290 = vunpack.c.l.b16 %v2991
      %v4291 = vunpack.c.h.b16 %v2991
      %v4292 = vunpack.c.l.b16 %v2992
      %v4293 = vunpack.c.h.b16 %v2992
      %v4294 = vunpack.c.l.b16 %v2993
      %v4295 = vunpack.c.h.b16 %v2993
      %v4296 = vunpack.c.l.b16 %v2994
      %v4297 = vunpack.c.h.b16 %v2994
      %v4298 = vunpack.c.l.b16 %v2995
      %v4299 = vunpack.c.h.b16 %v2995
      %v4300 = vunpack.c.l.b16 %v2996
      %v4301 = vunpack.c.h.b16 %v2996
      %v4302 = vunpack.c.l.b16 %v2997
      %v4303 = vunpack.c.h.b16 %v2997
      %v4304 = vunpack.c.l.b16 %v2998
      %v4305 = vunpack.c.h.b16 %v2998
      %v4306 = vunpack.c.l.b16 %v2999
      %v4307 = vunpack.c.h.b16 %v2999
      %v4308 = vunpack.c.l.b16 %v3000
      %v4309 = vunpack.c.h.b16 %v3000
      %v4310 = vunpack.c.l.b16 %v3001
      %v4311 = vunpack.c.h.b16 %v3001
      %v4312 = vunpack.c.l.b16 %v3002
      %v4313 = vunpack.c.h.b16 %v3002
      %v4314 = vunpack.c.l.b16 %v3003
      %v4315 = vunpack.c.h.b16 %v3003
      %v4316 = vunpack.c.l.b16 %v3004
      %v4317 = vunpack.c.h.b16 %v3004
      %v4318 = vunpack.c.l.b16 %v3005
      %v4319 = vunpack.c.h.b16 %v3005
      %v4320 = vunpack.c.l.b16 %v3006
      %v4321 = vunpack.c.h.b16 %v3006
      %v4322 = vunpack.c.l.b16 %v3007
      %v4323 = vunpack.c.h.b16 %v3007
      %v4324 = vunpack.c.l.b16 %v3008
      %v4325 = vunpack.c.h.b16 %v3008
      %v4326 = vunpack.c.l.b16 %v3009
      %v4327 = vunpack.c.h.b16 %v3009
      %v4328 = vunpack.c.l.b16 %v3010
      %v4329 = vunpack.c.h.b16 %v3010
      %v4330 = vunpack.c.l.b16 %v3011
      %v4331 = vunpack.c.h.b16 %v3011
      %v4332 = vunpack.c.l.b16 %v3012
      %v4333 = vunpack.c.h.b16 %v3012
      %v4334 = vunpack.c.l.b16 %v3013
      %v4335 = vunpack.c.h.b16 %v3013
      %v4336 = vunpack.c.l.b16 %v3014
      %v4337 = vunpack.c.h.b16 %v3014
      %v4338 = vunpack.c.l.b16 %v3015
      %v4339 = vunpack.c.h.b16 %v3015
      %v4340 = vunpack.c.l.b16 %v3016
      %v4341 = vunpack.c.h.b16 %v3016
      %v4342 = vunpack.c.l.b16 %v3017
      %v4343 = vunpack.c.h.b16 %v3017
      %v4344 = vunpack.c.l.b16 %v3018
      %v4345 = vunpack.c.h.b16 %v3018
      %v4346 = vunpack.c.l.b16 %v3019
      %v4347 = vunpack.c.h.b16 %v3019
      %v4348 = vunpack.c.l.b16 %v3020
      %v4349 = vunpack.c.h.b16 %v3020
      %v4350 = vunpack.c.l.b16 %v3021
      %v4351 = vunpack.c.h.b16 %v3021
      %v4352 = vunpack.c.l.b16 %v3022
      %v4353 = vunpack.c.h.b16 %v3022
      %v4354 = vunpack.c.l.b16 %v3023
      %v4355 = vunpack.c.h.b16 %v3023
      %v4356 = vunpack.c.l.b16 %v3024
      %v4357 = vunpack.c.h.b16 %v3024
      %v4358 = vunpack.c.l.b16 %v3025
      %v4359 = vunpack.c.h.b16 %v3025
      %v4360 = vunpack.c.l.b16 %v3026
      %v4361 = vunpack.c.h.b16 %v3026
      %v4362 = vunpack.c.l.b16 %v3027
      %v4363 = vunpack.c.h.b16 %v3027
      %v4364 = vunpack.c.l.b16 %v3028
      %v4365 = vunpack.c.h.b16 %v3028
      %v4366 = vunpack.c.l.b16 %v3029
      %v4367 = vunpack.c.h.b16 %v3029
      %v4368 = vunpack.c.l.b16 %v3030
      %v4369 = vunpack.c.h.b16 %v3030
      %v4370 = vunpack.c.l.b16 %v3031
      %v4371 = vunpack.c.h.b16 %v3031
      %v4372 = vunpack.c.l.b16 %v3032
      %v4373 = vunpack.c.h.b16 %v3032
      %v4374 = vunpack.c.l.b16 %v3033
      %v4375 = vunpack.c.h.b16 %v3033
      %v4376 = vunpack.c.l.b16 %v3034
      %v4377 = vunpack.c.h.b16 %v3034
      %v4378 = vunpack.c.l.b16 %v3035
      %v4379 = vunpack.c.h.b16 %v3035
      %v4380 = vunpack.c.l.b16 %v3036
      %v4381 = vunpack.c.h.b16 %v3036
      %v4382 = vunpack.c.l.b16 %v3037
      %v4383 = vunpack.c.h.b16 %v3037
      %v4384 = vunpack.c.l.b16 %v3038
      %v4385 = vunpack.c.h.b16 %v3038
      %v4386 = vunpack.c.l.b16 %v3039
      %v4387 = vunpack.c.h.b16 %v3039
      %v4388 = vunpack.c.l.b16 %v3040
      %v4389 = vunpack.c.h.b16 %v3040
      %v4390 = vunpack.c.l.b16 %v3041
      %v4391 = vunpack.c.h.b16 %v3041
      %v4392 = vunpack.c.l.b16 %v3042
      %v4393 = vunpack.c.h.b16 %v3042
      %v4394 = vunpack.c.l.b16 %v3043
      %v4395 = vunpack.c.h.b16 %v3043
      %v4396 = vunpack.c.l.b16 %v3044
      %v4397 = vunpack.c.h.b16 %v3044
      %v4398 = vunpack.c.l.b16 %v3045
      %v4399 = vunpack.c.h.b16 %v3045
      %v4400 = vunpack.c.l.b16 %v3046
      %v4401 = vunpack.c.h.b16 %v3046
      %v4402 = vunpack.c.l.b16 %v3047
      %v4403 = vunpack.c.h.b16 %v3047
      %v4404 = vunpack.c.l.b16 %v3048
      %v4405 = vunpack.c.h.b16 %v3048
      %v4406 = vunpack.c.l.b16 %v3049
      %v4407 = vunpack.c.h.b16 %v3049
      %v4408 = vunpack.c.l.b16 %v3050
      %v4409 = vunpack.c.h.b16 %v3050
      %v4410 = vunpack.c.l.b16 %v3051
      %v4411 = vunpack.c.h.b16 %v3051
      %v4412 = vunpack.c.l.b16 %v3052
      %v4413 = vunpack.c.h.b16 %v3052
      %v4414 = vunpack.c.l.b16 %v3053
      %v4415 = vunpack.c.h.b16 %v3053
      %v4416 = vunpack.c.l.b16 %v3054
      %v4417 = vunpack.c.h.b16 %v3054
      %v4418 = vunpack.c.l.b16 %v3055
      %v4419 = vunpack.c.h.b16 %v3055
      %v4420 = vunpack.c.l.b16 %v3056
      %v4421 = vunpack.c.h.b16 %v3056
      %v4422 = vunpack.c.l.b16 %v3057
      %v4423 = vunpack.c.h.b16 %v3057
      %v4424 = vunpack.c.l.b16 %v3058
      %v4425 = vunpack.c.h.b16 %v3058
      %v4426 = vunpack.c.l.b16 %v3059
      %v4427 = vunpack.c.h.b16 %v3059
      %v4428 = vunpack.c.l.b16 %v3060
      %v4429 = vunpack.c.h.b16 %v3060
      %v4430 = vunpack.c.l.b16 %v3061
      %v4431 = vunpack.c.h.b16 %v3061
      %v4432 = vunpack.c.l.b16 %v3062
      %v4433 = vunpack.c.h.b16 %v3062
      %v4434 = vunpack.c.l.b16 %v3063
      %v4435 = vunpack.c.h.b16 %v3063
      %v4436 = vunpack.c.l.b16 %v3064
      %v4437 = vunpack.c.h.b16 %v3064
      %v4438 = vunpack.c.l.b16 %v3065
      %v4439 = vunpack.c.h.b16 %v3065
      %v4440 = vunpack.c.l.b16 %v3066
      %v4441 = vunpack.c.h.b16 %v3066
      %v4442 = vunpack.c.l.b16 %v3067
      %v4443 = vunpack.c.h.b16 %v3067
      %v4444 = vunpack.c.l.b16 %v3068
      %v4445 = vunpack.c.h.b16 %v3068
      %v4446 = vunpack.c.l.b16 %v3069
      %v4447 = vunpack.c.h.b16 %v3069
      %v4448 = vunpack.c.l.b16 %v3070
      %v4449 = vunpack.c.h.b16 %v3070
      %v4450 = vunpack.c.l.b16 %v3071
      %v4451 = vunpack.c.h.b16 %v3071
      %v4452 = vunpack.c.l.b16 %v3072
      %v4453 = vunpack.c.h.b16 %v3072
      %v4454 = vunpack.c.l.b16 %v3073
      %v4455 = vunpack.c.h.b16 %v3073
      %v4456 = vunpack.c.l.b16 %v3074
      %v4457 = vunpack.c.h.b16 %v3074
      %v4458 = vunpack.c.l.b16 %v3075
      %v4459 = vunpack.c.h.b16 %v3075
      %v4460 = vunpack.c.l.b16 %v3076
      %v4461 = vunpack.c.h.b16 %v3076
      %v4462 = vunpack.c.l.b16 %v3077
      %v4463 = vunpack.c.h.b16 %v3077
      %v4464 = vunpack.c.l.b16 %v3078
      %v4465 = vunpack.c.h.b16 %v3078
      %v4466 = vunpack.c.l.b16 %v3079
      %v4467 = vunpack.c.h.b16 %v3079
      %v4468 = vunpack.c.l.b16 %v3080
      %v4469 = vunpack.c.h.b16 %v3080
      %v4470 = vunpack.c.l.b16 %v3081
      %v4471 = vunpack.c.h.b16 %v3081
      %v4472 = vunpack.c.l.b16 %v3082
      %v4473 = vunpack.c.h.b16 %v3082
      %v4474 = vunpack.c.l.b16 %v3083
      %v4475 = vunpack.c.h.b16 %v3083
      %v4476 = vunpack.c.l.b16 %v3084
      %v4477 = vunpack.c.h.b16 %v3084
      %v4478 = vunpack.c.l.b16 %v3085
      %v4479 = vunpack.c.h.b16 %v3085
      %v4480 = vunpack.c.l.b16 %v3086
      %v4481 = vunpack.c.h.b16 %v3086
      %v4482 = vunpack.c.l.b16 %v3087
      %v4483 = vunpack.c.h.b16 %v3087
      %v4484 = vunpack.c.l.b16 %v3088
      %v4485 = vunpack.c.h.b16 %v3088
      %v4486 = vunpack.c.l.b16 %v3089
      %v4487 = vunpack.c.h.b16 %v3089
      %v4488 = vunpack.c.l.b16 %v3090
      %v4489 = vunpack.c.h.b16 %v3090
      %v4490 = vunpack.c.l.b16 %v3091
      %v4491 = vunpack.c.h.b16 %v3091
      %v4492 = vunpack.c.l.b16 %v3092
      %v4493 = vunpack.c.h.b16 %v3092
      %v4494 = vunpack.c.l.b16 %v3093
      %v4495 = vunpack.c.h.b16 %v3093
      %v4496 = vunpack.c.l.b16 %v3094
      %v4497 = vunpack.c.h.b16 %v3094
      %v4498 = vunpack.c.l.b16 %v3095
      %v4499 = vunpack.c.h.b16 %v3095
      %v4500 = vunpack.c.l.b16 %v3096
      %v4501 = vunpack.c.h.b16 %v3096
      %v4502 = vunpack.c.l.b16 %v3097
      %v4503 = vunpack.c.h.b16 %v3097
      %v4504 = vunpack.c.l.b16 %v3098
      %v4505 = vunpack.c.h.b16 %v3098
      %v4506 = vunpack.c.l.b16 %v3099
      %v4507 = vunpack.c.h.b16 %v3099
      %v4508 = vunpack.c.l.b16 %v3100
      %v4509 = vunpack.c.h.b16 %v3100
      %v4510 = vunpack.c.l.b16 %v3101
      %v4511 = vunpack.c.h.b16 %v3101
      %v4512 = vunpack.c.l.b16 %v3102
      %v4513 = vunpack.c.h.b16 %v3102
      %v4514 = vunpack.c.l.b16 %v3103
      %v4515 = vunpack.c.h.b16 %v3103
      %v4516 = vunpack.c.l.b16 %v3104
      %v4517 = vunpack.c.h.b16 %v3104
      %v4518 = vunpack.c.l.b16 %v3105
      %v4519 = vunpack.c.h.b16 %v3105
      %v4520 = vunpack.c.l.b16 %v3106
      %v4521 = vunpack.c.h.b16 %v3106
      %v4522 = vunpack.c.l.b16 %v3107
      %v4523 = vunpack.c.h.b16 %v3107
      %v4524 = vunpack.c.l.b16 %v3108
      %v4525 = vunpack.c.h.b16 %v3108
      %v4526 = vunpack.c.l.b16 %v3109
      %v4527 = vunpack.c.h.b16 %v3109
      %v4528 = vunpack.c.l.b16 %v3110
      %v4529 = vunpack.c.h.b16 %v3110
      %v4530 = vunpack.c.l.b16 %v3111
      %v4531 = vunpack.c.h.b16 %v3111
      %v4532 = vunpack.c.l.b16 %v3112
      %v4533 = vunpack.c.h.b16 %v3112
      %v4534 = vunpack.c.l.b16 %v3113
      %v4535 = vunpack.c.h.b16 %v3113
      %v4536 = vunpack.c.l.b16 %v3114
      %v4537 = vunpack.c.h.b16 %v3114
      %v4538 = vunpack.c.l.b16 %v3115
      %v4539 = vunpack.c.h.b16 %v3115
      %v4540 = vunpack.c.l.b16 %v3116
      %v4541 = vunpack.c.h.b16 %v3116
      %v4542 = vunpack.c.l.b16 %v3117
      %v4543 = vunpack.c.h.b16 %v3117
      %v4544 = vunpack.c.l.b16 %v3118
      %v4545 = vunpack.c.h.b16 %v3118
      %v4546 = vunpack.c.l.b16 %v3119
      %v4547 = vunpack.c.h.b16 %v3119
      %v4548 = vunpack.c.l.b16 %v3120
      %v4549 = vunpack.c.h.b16 %v3120
      %v4550 = vunpack.c.l.b16 %v3121
      %v4551 = vunpack.c.h.b16 %v3121
      %v4552 = vunpack.c.l.b16 %v3122
      %v4553 = vunpack.c.h.b16 %v3122
      %v4554 = vunpack.c.l.b16 %v3123
      %v4555 = vunpack.c.h.b16 %v3123
      %v4556 = vunpack.c.l.b16 %v3124
      %v4557 = vunpack.c.h.b16 %v3124
      %v4558 = vunpack.c.l.b16 %v3125
      %v4559 = vunpack.c.h.b16 %v3125
      %v4560 = vunpack.c.l.b16 %v3126
      %v4561 = vunpack.c.h.b16 %v3126
      %v4562 = vunpack.c.l.b16 %v3127
      %v4563 = vunpack.c.h.b16 %v3127
      %v4564 = vunpack.c.l.b16 %v3128
      %v4565 = vunpack.c.h.b16 %v3128
      %v4566 = vunpack.c.l.b16 %v3129
      %v4567 = vunpack.c.h.b16 %v3129
      %v4568 = vunpack.c.l.b16 %v3130
      %v4569 = vunpack.c.h.b16 %v3130
      %v4570 = vunpack.c.l.b16 %v3131
      %v4571 = vunpack.c.h.b16 %v3131
      %v4572 = vunpack.c.l.b16 %v3132
      %v4573 = vunpack.c.h.b16 %v3132
      %v4574 = vunpack.c.l.b16 %v3133
      %v4575 = vunpack.c.h.b16 %v3133
      %v4576 = vunpack.c.l.b16 %v3134
      %v4577 = vunpack.c.h.b16 %v3134
      %v4578 = vunpack.c.l.b16 %v3135
      %v4579 = vunpack.c.h.b16 %v3135
      %v4580 = vunpack.c.l.b16 %v3136
      %v4581 = vunpack.c.h.b16 %v3136
      %v4582 = vunpack.c.l.b16 %v3137
      %v4583 = vunpack.c.h.b16 %v3137
      %v4584 = vunpack.c.l.b16 %v3138
      %v4585 = vunpack.c.h.b16 %v3138
      %v4586 = vunpack.c.l.b16 %v3139
      %v4587 = vunpack.c.h.b16 %v3139
      %v4588 = vunpack.c.l.b16 %v3140
      %v4589 = vunpack.c.h.b16 %v3140
      %v4590 = vunpack.c.l.b16 %v3141
      %v4591 = vunpack.c.h.b16 %v3141
      %v4592 = vunpack.c.l.b16 %v3142
      %v4593 = vunpack.c.h.b16 %v3142
      %v4594 = vunpack.c.l.b16 %v3143
      %v4595 = vunpack.c.h.b16 %v3143
      %v4596 = vunpack.c.l.b16 %v3144
      %v4597 = vunpack.c.h.b16 %v3144
      %v4598 = vunpack.c.l.b16 %v3145
      %v4599 = vunpack.c.h.b16 %v3145
      %v4600 = vunpack.c.l.b16 %v3146
      %v4601 = vunpack.c.h.b16 %v3146
      %v4602 = vunpack.c.l.b16 %v3147
      %v4603 = vunpack.c.h.b16 %v3147
      %v4604 = vunpack.c.l.b16 %v3148
      %v4605 = vunpack.c.h.b16 %v3148
      %v4606 = vunpack.c.l.b16 %v3149
      %v4607 = vunpack.c.h.b16 %v3149
      %v4608 = vunpack.c.l.b16 %v3150
      %v4609 = vunpack.c.h.b16 %v3150
      %v4610 = vunpack.c.l.b16 %v3151
      %v4611 = vunpack.c.h.b16 %v3151
      %v4612 = vunpack.c.l.b16 %v3152
      %v4613 = vunpack.c.h.b16 %v3152
      %v4614 = vunpack.c.l.b16 %v3153
      %v4615 = vunpack.c.h.b16 %v3153
      %v4616 = vunpack.c.l.b16 %v3154
      %v4617 = vunpack.c.h.b16 %v3154
      %v4618 = vunpack.c.l.b16 %v3155
      %v4619 = vunpack.c.h.b16 %v3155
      %v4620 = vunpack.c.l.b16 %v3156
      %v4621 = vunpack.c.h.b16 %v3156
      %v4622 = vunpack.c.l.b16 %v3157
      %v4623 = vunpack.c.h.b16 %v3157
      %v4624 = vunpack.c.l.b16 %v3158
      %v4625 = vunpack.c.h.b16 %v3158
      %v4626 = vunpack.c.l.b16 %v3159
      %v4627 = vunpack.c.h.b16 %v3159
      %v4628 = vunpack.c.l.b16 %v3160
      %v4629 = vunpack.c.h.b16 %v3160
      %v4630 = vunpack.c.l.b16 %v3161
      %v4631 = vunpack.c.h.b16 %v3161
      %v4632 = vunpack.c.l.b16 %v3162
      %v4633 = vunpack.c.h.b16 %v3162
      %v4634 = vunpack.c.l.b16 %v3163
      %v4635 = vunpack.c.h.b16 %v3163
      %v4636 = vunpack.c.l.b16 %v3164
      %v4637 = vunpack.c.h.b16 %v3164
      %v4638 = vunpack.c.l.b16 %v3165
      %v4639 = vunpack.c.h.b16 %v3165
      %v4640 = vunpack.c.l.b16 %v3166
      %v4641 = vunpack.c.h.b16 %v3166
      %v4642 = vunpack.c.l.b16 %v3167
      %v4643 = vunpack.c.h.b16 %v3167
      %v4644 = vunpack.c.l.b16 %v3168
      %v4645 = vunpack.c.h.b16 %v3168
      %v4646 = vunpack.c.l.b16 %v3169
      %v4647 = vunpack.c.h.b16 %v3169
      %v4648 = vunpack.c.l.b16 %v3170
      %v4649 = vunpack.c.h.b16 %v3170
      %v4650 = vunpack.c.l.b16 %v3171
      %v4651 = vunpack.c.h.b16 %v3171
      %v4652 = vunpack.c.l.b16 %v3172
      %v4653 = vunpack.c.h.b16 %v3172
      %v4654 = vunpack.c.l.b16 %v3173
      %v4655 = vunpack.c.h.b16 %v3173
      %v4656 = vunpack.c.l.b16 %v3174
      %v4657 = vunpack.c.h.b16 %v3174
      %v4658 = vunpack.c.l.b16 %v3175
      %v4659 = vunpack.c.h.b16 %v3175
      %v4660 = vunpack.c.l.b16 %v3176
      %v4661 = vunpack.c.h.b16 %v3176
      %v4662 = vunpack.c.l.b16 %v3177
      %v4663 = vunpack.c.h.b16 %v3177
      %v4664 = vunpack.c.l.b16 %v3178
      %v4665 = vunpack.c.h.b16 %v3178
      %v4666 = vunpack.c.l.b16 %v3179
      %v4667 = vunpack.c.h.b16 %v3179
      %v4668 = vunpack.c.l.b16 %v3180
      %v4669 = vunpack.c.h.b16 %v3180
      %v4670 = vunpack.c.l.b16 %v3181
      %v4671 = vunpack.c.h.b16 %v3181
      %v4672 = vunpack.c.l.b16 %v3182
      %v4673 = vunpack.c.h.b16 %v3182
      %v4674 = vunpack.c.l.b16 %v3183
      %v4675 = vunpack.c.h.b16 %v3183
      %v4676 = vunpack.c.l.b16 %v3184
      %v4677 = vunpack.c.h.b16 %v3184
      %v4678 = vunpack.c.l.b16 %v3185
      %v4679 = vunpack.c.h.b16 %v3185
      %v4680 = vunpack.c.l.b16 %v3186
      %v4681 = vunpack.c.h.b16 %v3186
      %v4682 = vunpack.c.l.b16 %v3187
      %v4683 = vunpack.c.h.b16 %v3187
      %v4684 = vunpack.c.l.b16 %v3188
      %v4685 = vunpack.c.h.b16 %v3188
      %v4686 = vunpack.c.l.b16 %v3189
      %v4687 = vunpack.c.h.b16 %v3189
      %v4688 = vunpack.c.l.b16 %v3190
      %v4689 = vunpack.c.h.b16 %v3190
      %v4690 = vunpack.c.l.b16 %v3191
      %v4691 = vunpack.c.h.b16 %v3191
      %v4692 = vunpack.c.l.b16 %v3192
      %v4693 = vunpack.c.h.b16 %v3192
      %v4694 = vunpack.c.l.b16 %v3193
      %v4695 = vunpack.c.h.b16 %v3193
      %v4696 = vunpack.c.l.b16 %v3194
      %v4697 = vunpack.c.h.b16 %v3194
      %v4698 = vunpack.c.l.b16 %v3195
      %v4699 = vunpack.c.h.b16 %v3195
      %v4700 = vunpack.c.l.b16 %v3196
      %v4701 = vunpack.c.h.b16 %v3196
      %v4702 = vunpack.c.l.b16 %v3197
      %v4703 = vunpack.c.h.b16 %v3197
      %v4704 = vunpack.c.l.b16 %v3198
      %v4705 = vunpack.c.h.b16 %v3198
      %v4706 = vunpack.c.l.b16 %v3199
      %v4707 = vunpack.c.h.b16 %v3199
      %v4708 = vunpack.c.l.b16 %v3200
      %v4709 = vunpack.c.h.b16 %v3200
      %v4710 = vunpack.c.l.b16 %v3201
      %v4711 = vunpack.c.h.b16 %v3201
      %v4712 = vunpack.c.l.b16 %v3202
      %v4713 = vunpack.c.h.b16 %v3202
      %v4714 = vunpack.c.l.b16 %v3203
      %v4715 = vunpack.c.h.b16 %v3203
      %v4716 = vunpack.c.l.b16 %v3204
      %v4717 = vunpack.c.h.b16 %v3204
      %v4718 = vunpack.c.l.b16 %v3205
      %v4719 = vunpack.c.h.b16 %v3205
      %v4720 = vunpack.c.l.b16 %v3206
      %v4721 = vunpack.c.h.b16 %v3206
      %v4722 = vunpack.c.l.b16 %v3207
      %v4723 = vunpack.c.h.b16 %v3207
      %v4724 = vunpack.c.l.b16 %v3208
      %v4725 = vunpack.c.h.b16 %v3208
      %v4726 = vunpack.c.l.b16 %v3209
      %v4727 = vunpack.c.h.b16 %v3209
      %v4728 = vunpack.c.l.b16 %v3210
      %v4729 = vunpack.c.h.b16 %v3210
      %v4730 = vunpack.c.l.b16 %v3211
      %v4731 = vunpack.c.h.b16 %v3211
      %v4732 = vunpack.c.l.b16 %v3212
      %v4733 = vunpack.c.h.b16 %v3212
      %v4734 = vunpack.c.l.b16 %v3213
      %v4735 = vunpack.c.h.b16 %v3213
      %v4736 = vunpack.c.l.b16 %v3214
      %v4737 = vunpack.c.h.b16 %v3214
      %v4738 = vunpack.c.l.b16 %v3215
      %v4739 = vunpack.c.h.b16 %v3215
      %v4740 = vunpack.c.l.b16 %v3216
      %v4741 = vunpack.c.h.b16 %v3216
      %v4742 = vunpack.c.l.b16 %v3217
      %v4743 = vunpack.c.h.b16 %v3217
      %v4744 = vunpack.c.l.b16 %v3218
      %v4745 = vunpack.c.h.b16 %v3218
      %v4746 = vunpack.c.l.b16 %v3219
      %v4747 = vunpack.c.h.b16 %v3219
      %v4748 = vunpack.c.l.b16 %v3220
      %v4749 = vunpack.c.h.b16 %v3220
      %v4750 = vunpack.c.l.b16 %v3221
      %v4751 = vunpack.c.h.b16 %v3221
      %v4752 = vunpack.c.l.b16 %v3222
      %v4753 = vunpack.c.h.b16 %v3222
      %v4754 = vunpack.c.l.b16 %v3223
      %v4755 = vunpack.c.h.b16 %v3223
      %v4756 = vunpack.c.l.b16 %v3224
      %v4757 = vunpack.c.h.b16 %v3224
      %v4758 = vunpack.c.l.b16 %v3225
      %v4759 = vunpack.c.h.b16 %v3225
      %v4760 = vunpack.c.l.b16 %v3226
      %v4761 = vunpack.c.h.b16 %v3226
      %v4762 = vunpack.c.l.b16 %v3227
      %v4763 = vunpack.c.h.b16 %v3227
      %v4764 = vunpack.c.l.b16 %v3228
      %v4765 = vunpack.c.h.b16 %v3228
      %v4766 = vunpack.c.l.b16 %v3229
      %v4767 = vunpack.c.h.b16 %v3229
      %v4768 = vunpack.c.l.b16 %v3230
      %v4769 = vunpack.c.h.b16 %v3230
      %v4770 = vunpack.c.l.b16 %v3231
      %v4771 = vunpack.c.h.b16 %v3231
      %v4772 = vunpack.c.l.b16 %v3232
      %v4773 = vunpack.c.h.b16 %v3232
      %v4774 = vunpack.c.l.b16 %v3233
      %v4775 = vunpack.c.h.b16 %v3233
      %v4776 = vunpack.c.l.b16 %v3234
      %v4777 = vunpack.c.h.b16 %v3234
      %v4778 = vunpack.c.l.b16 %v3235
      %v4779 = vunpack.c.h.b16 %v3235
      %v4780 = vunpack.c.l.b16 %v3236
      %v4781 = vunpack.c.h.b16 %v3236
      %v4782 = vunpack.c.l.b16 %v3237
      %v4783 = vunpack.c.h.b16 %v3237
      %v4784 = vunpack.c.l.b16 %v3238
      %v4785 = vunpack.c.h.b16 %v3238
      %v4786 = vunpack.c.l.b16 %v3239
      %v4787 = vunpack.c.h.b16 %v3239
      %v4788 = vunpack.c.l.b16 %v3240
      %v4789 = vunpack.c.h.b16 %v3240
      %v4790 = vunpack.c.l.b16 %v3241
      %v4791 = vunpack.c.h.b16 %v3241
      %v4792 = vunpack.c.l.b16 %v3242
      %v4793 = vunpack.c.h.b16 %v3242
      %v4794 = vunpack.c.l.b16 %v3243
      %v4795 = vunpack.c.h.b16 %v3243
      %v4796 = vunpack.c.l.b16 %v3244
      %v4797 = vunpack.c.h.b16 %v3244
      %v4798 = vunpack.c.l.b16 %v3245
      %v4799 = vunpack.c.h.b16 %v3245
      %v4800 = vunpack.c.l.b16 %v3246
      %v4801 = vunpack.c.h.b16 %v3246
      %v4802 = vunpack.c.l.b16 %v3247
      %v4803 = vunpack.c.h.b16 %v3247
      %v4804 = vunpack.c.l.b16 %v3248
      %v4805 = vunpack.c.h.b16 %v3248
      %v4806 = vunpack.c.l.b16 %v3249
      %v4807 = vunpack.c.h.b16 %v3249
      %v4808 = vunpack.c.l.b16 %v3250
      %v4809 = vunpack.c.h.b16 %v3250
      %v4810 = vunpack.c.l.b16 %v3251
      %v4811 = vunpack.c.h.b16 %v3251
      %v4812 = vpack.c.b16 %v3776, %v3772
      %v4813 = vpack.c.b16 %v3777, %v3773
      %v4814 = vpack.c.b16 %v3778, %v3774
      %v4815 = vpack.c.b16 %v3779, %v3775
      %v4816 = vpack.c.b16 %v3784, %v3780
      %v4817 = vpack.c.b16 %v3785, %v3781
      %v4818 = vpack.c.b16 %v3786, %v3782
      %v4819 = vpack.c.b16 %v3787, %v3783
      %v4820 = vpack.c.b16 %v3792, %v3788
      %v4821 = vpack.c.b16 %v3793, %v3789
      %v4822 = vpack.c.b16 %v3794, %v3790
      %v4823 = vpack.c.b16 %v3795, %v3791
      %v4824 = vpack.c.b16 %v3800, %v3796
      %v4825 = vpack.c.b16 %v3801, %v3797
      %v4826 = vpack.c.b16 %v3802, %v3798
      %v4827 = vpack.c.b16 %v3803, %v3799
      %v4828 = vpack.c.b16 %v3808, %v3804
      %v4829 = vpack.c.b16 %v3809, %v3805
      %v4830 = vpack.c.b16 %v3810, %v3806
      %v4831 = vpack.c.b16 %v3811, %v3807
      %v4832 = vpack.c.b16 %v3816, %v3812
      %v4833 = vpack.c.b16 %v3817, %v3813
      %v4834 = vpack.c.b16 %v3818, %v3814
      %v4835 = vpack.c.b16 %v3819, %v3815
      %v4836 = vpack.c.b16 %v3824, %v3820
      %v4837 = vpack.c.b16 %v3825, %v3821
      %v4838 = vpack.c.b16 %v3826, %v3822
      %v4839 = vpack.c.b16 %v3827, %v3823
      %v4840 = vpack.c.b16 %v3832, %v3828
      %v4841 = vpack.c.b16 %v3833, %v3829
      %v4842 = vpack.c.b16 %v3834, %v3830
      %v4843 = vpack.c.b16 %v3835, %v3831
      %v4844 = vpack.c.b16 %v3840, %v3836
      %v4845 = vpack.c.b16 %v3841, %v3837
      %v4846 = vpack.c.b16 %v3842, %v3838
      %v4847 = vpack.c.b16 %v3843, %v3839
      %v4848 = vpack.c.b16 %v3848, %v3844
      %v4849 = vpack.c.b16 %v3849, %v3845
      %v4850 = vpack.c.b16 %v3850, %v3846
      %v4851 = vpack.c.b16 %v3851, %v3847
      %v4852 = vpack.c.b16 %v3856, %v3852
      %v4853 = vpack.c.b16 %v3857, %v3853
      %v4854 = vpack.c.b16 %v3858, %v3854
      %v4855 = vpack.c.b16 %v3859, %v3855
      %v4856 = vpack.c.b16 %v3864, %v3860
      %v4857 = vpack.c.b16 %v3865, %v3861
      %v4858 = vpack.c.b16 %v3866, %v3862
      %v4859 = vpack.c.b16 %v3867, %v3863
      %v4860 = vpack.c.b16 %v3872, %v3868
      %v4861 = vpack.c.b16 %v3873, %v3869
      %v4862 = vpack.c.b16 %v3874, %v3870
      %v4863 = vpack.c.b16 %v3875, %v3871
      %v4864 = vpack.c.b16 %v3880, %v3876
      %v4865 = vpack.c.b16 %v3881, %v3877
      %v4866 = vpack.c.b16 %v3882, %v3878
      %v4867 = vpack.c.b16 %v3883, %v3879
      %v4868 = vpack.c.b16 %v3888, %v3884
      %v4869 = vpack.c.b16 %v3889, %v3885
      %v4870 = vpack.c.b16 %v3890, %v3886
      %v4871 = vpack.c.b16 %v3891, %v3887
      %v4872 = vpack.c.b16 %v3896, %v3892
      %v4873 = vpack.c.b16 %v3897, %v3893
      %v4874 = vpack.c.b16 %v3898, %v3894
      %v4875 = vpack.c.b16 %v3899, %v3895
      %v4876 = vpack.c.b16 %v3904, %v3900
      %v4877 = vpack.c.b16 %v3905, %v3901
      %v4878 = vpack.c.b16 %v3906, %v3902
      %v4879 = vpack.c.b16 %v3907, %v3903
      %v4880 = vpack.c.b16 %v3912, %v3908
      %v4881 = vpack.c.b16 %v3913, %v3909
      %v4882 = vpack.c.b16 %v3914, %v3910
      %v4883 = vpack.c.b16 %v3915, %v3911
      %v4884 = vpack.c.b16 %v3920, %v3916
      %v4885 = vpack.c.b16 %v3921, %v3917
      %v4886 = vpack.c.b16 %v3922, %v3918
      %v4887 = vpack.c.b16 %v3923, %v3919
      %v4888 = vpack.c.b16 %v3928, %v3924
      %v4889 = vpack.c.b16 %v3929, %v3925
      %v4890 = vpack.c.b16 %v3930, %v3926
      %v4891 = vpack.c.b16 %v3931, %v3927
      %v4892 = vpack.c.b16 %v3936, %v3932
      %v4893 = vpack.c.b16 %v3937, %v3933
      %v4894 = vpack.c.b16 %v3938, %v3934
      %v4895 = vpack.c.b16 %v3939, %v3935
      %v4896 = vpack.c.b16 %v3944, %v3940
      %v4897 = vpack.c.b16 %v3945, %v3941
      %v4898 = vpack.c.b16 %v3946, %v3942
      %v4899 = vpack.c.b16 %v3947, %v3943
      %v4900 = vpack.c.b16 %v3952, %v3948
      %v4901 = vpack.c.b16 %v3953, %v3949
      %v4902 = vpack.c.b16 %v3954, %v3950
      %v4903 = vpack.c.b16 %v3955, %v3951
      %v4904 = vpack.c.b16 %v3960, %v3956
      %v4905 = vpack.c.b16 %v3961, %v3957
      %v4906 = vpack.c.b16 %v3962, %v3958
      %v4907 = vpack.c.b16 %v3963, %v3959
      %v4908 = vpack.c.b16 %v3968, %v3964
      %v4909 = vpack.c.b16 %v3969, %v3965
      %v4910 = vpack.c.b16 %v3970, %v3966
      %v4911 = vpack.c.b16 %v3971, %v3967
      %v4912 = vpack.c.b16 %v3976, %v3972
      %v4913 = vpack.c.b16 %v3977, %v3973
      %v4914 = vpack.c.b16 %v3978, %v3974
      %v4915 = vpack.c.b16 %v3979, %v3975
      %v4916 = vpack.c.b16 %v3984, %v3980
      %v4917 = vpack.c.b16 %v3985, %v3981
      %v4918 = vpack.c.b16 %v3986, %v3982
      %v4919 = vpack.c.b16 %v3987, %v3983
      %v4920 = vpack.c.b16 %v3992, %v3988
      %v4921 = vpack.c.b16 %v3993, %v3989
      %v4922 = vpack.c.b16 %v3994, %v3990
      %v4923 = vpack.c.b16 %v3995, %v3991
      %v4924 = vpack.c.b16 %v4000, %v3996
      %v4925 = vpack.c.b16 %v4001, %v3997
      %v4926 = vpack.c.b16 %v4002, %v3998
      %v4927 = vpack.c.b16 %v4003, %v3999
      %v4928 = vpack.c.b16 %v4008, %v4004
      %v4929 = vpack.c.b16 %v4009, %v4005
      %v4930 = vpack.c.b16 %v4010, %v4006
      %v4931 = vpack.c.b16 %v4011, %v4007
      %v4932 = vpack.c.b16 %v4016, %v4012
      %v4933 = vpack.c.b16 %v4017, %v4013
      %v4934 = vpack.c.b16 %v4018, %v4014
      %v4935 = vpack.c.b16 %v4019, %v4015
      %v4936 = vpack.c.b16 %v4024, %v4020
      %v4937 = vpack.c.b16 %v4025, %v4021
      %v4938 = vpack.c.b16 %v4026, %v4022
      %v4939 = vpack.c.b16 %v4027, %v4023
      %v4940 = vpack.c.b16 %v4032, %v4028
      %v4941 = vpack.c.b16 %v4033, %v4029
      %v4942 = vpack.c.b16 %v4034, %v4030
      %v4943 = vpack.c.b16 %v4035, %v4031
      %v4944 = vpack.c.b16 %v4040, %v4036
      %v4945 = vpack.c.b16 %v4041, %v4037
      %v4946 = vpack.c.b16 %v4042, %v4038
      %v4947 = vpack.c.b16 %v4043, %v4039
      %v4948 = vpack.c.b16 %v4048, %v4044
      %v4949 = vpack.c.b16 %v4049, %v4045
      %v4950 = vpack.c.b16 %v4050, %v4046
      %v4951 = vpack.c.b16 %v4051, %v4047
      %v4952 = vpack.c.b16 %v4056, %v4052
      %v4953 = vpack.c.b16 %v4057, %v4053
      %v4954 = vpack.c.b16 %v4058, %v4054
      %v4955 = vpack.c.b16 %v4059, %v4055
      %v4956 = vpack.c.b16 %v4064, %v4060
      %v4957 = vpack.c.b16 %v4065, %v4061
      %v4958 = vpack.c.b16 %v4066, %v4062
      %v4959 = vpack.c.b16 %v4067, %v4063
      %v4960 = vpack.c.b16 %v4072, %v4068
      %v4961 = vpack.c.b16 %v4073, %v4069
      %v4962 = vpack.c.b16 %v4074, %v4070
      %v4963 = vpack.c.b16 %v4075, %v4071
      %v4964 = vpack.c.b16 %v4080, %v4076
      %v4965 = vpack.c.b16 %v4081, %v4077
      %v4966 = vpack.c.b16 %v4082, %v4078
      %v4967 = vpack.c.b16 %v4083, %v4079
      %v4968 = vpack.c.b16 %v4088, %v4084
      %v4969 = vpack.c.b16 %v4089, %v4085
      %v4970 = vpack.c.b16 %v4090, %v4086
      %v4971 = vpack.c.b16 %v4091, %v4087
      %v4972 = vpack.c.b16 %v4096, %v4092
      %v4973 = vpack.c.b16 %v4097, %v4093
      %v4974 = vpack.c.b16 %v4098, %v4094
      %v4975 = vpack.c.b16 %v4099, %v4095
      %v4976 = vpack.c.b16 %v4104, %v4100
      %v4977 = vpack.c.b16 %v4105, %v4101
      %v4978 = vpack.c.b16 %v4106, %v4102
      %v4979 = vpack.c.b16 %v4107, %v4103
      %v4980 = vpack.c.b16 %v4112, %v4108
      %v4981 = vpack.c.b16 %v4113, %v4109
      %v4982 = vpack.c.b16 %v4114, %v4110
      %v4983 = vpack.c.b16 %v4115, %v4111
      %v4984 = vpack.c.b16 %v4120, %v4116
      %v4985 = vpack.c.b16 %v4121, %v4117
      %v4986 = vpack.c.b16 %v4122, %v4118
      %v4987 = vpack.c.b16 %v4123, %v4119
      %v4988 = vpack.c.b16 %v4128, %v4124
      %v4989 = vpack.c.b16 %v4129, %v4125
      %v4990 = vpack.c.b16 %v4130, %v4126
      %v4991 = vpack.c.b16 %v4131, %v4127
      %v4992 = vpack.c.b16 %v4136, %v4132
      %v4993 = vpack.c.b16 %v4137, %v4133
      %v4994 = vpack.c.b16 %v4138, %v4134
      %v4995 = vpack.c.b16 %v4139, %v4135
      %v4996 = vpack.c.b16 %v4144, %v4140
      %v4997 = vpack.c.b16 %v4145, %v4141
      %v4998 = vpack.c.b16 %v4146, %v4142
      %v4999 = vpack.c.b16 %v4147, %v4143
      %v5000 = vpack.c.b16 %v4152, %v4148
      %v5001 = vpack.c.b16 %v4153, %v4149
      %v5002 = vpack.c.b16 %v4154, %v4150
      %v5003 = vpack.c.b16 %v4155, %v4151
      %v5004 = vpack.c.b16 %v4160, %v4156
      %v5005 = vpack.c.b16 %v4161, %v4157
      %v5006 = vpack.c.b16 %v4162, %v4158
      %v5007 = vpack.c.b16 %v4163, %v4159
      %v5008 = vpack.c.b16 %v4168, %v4164
      %v5009 = vpack.c.b16 %v4169, %v4165
      %v5010 = vpack.c.b16 %v4170, %v4166
      %v5011 = vpack.c.b16 %v4171, %v4167
      %v5012 = vpack.c.b16 %v4176, %v4172
      %v5013 = vpack.c.b16 %v4177, %v4173
      %v5014 = vpack.c.b16 %v4178, %v4174
      %v5015 = vpack.c.b16 %v4179, %v4175
      %v5016 = vpack.c.b16 %v4184, %v4180
      %v5017 = vpack.c.b16 %v4185, %v4181
      %v5018 = vpack.c.b16 %v4186, %v4182
      %v5019 = vpack.c.b16 %v4187, %v4183
      %v5020 = vpack.c.b16 %v4192, %v4188
      %v5021 = vpack.c.b16 %v4193, %v4189
      %v5022 = vpack.c.b16 %v4194, %v4190
      %v5023 = vpack.c.b16 %v4195, %v4191
      %v5024 = vpack.c.b16 %v4200, %v4196
      %v5025 = vpack.c.b16 %v4201, %v4197
      %v5026 = vpack.c.b16 %v4202, %v4198
      %v5027 = vpack.c.b16 %v4203, %v4199
      %v5028 = vpack.c.b16 %v4208, %v4204
      %v5029 = vpack.c.b16 %v4209, %v4205
      %v5030 = vpack.c.b16 %v4210, %v4206
      %v5031 = vpack.c.b16 %v4211, %v4207
      %v5032 = vpack.c.b16 %v4216, %v4212
      %v5033 = vpack.c.b16 %v4217, %v4213
      %v5034 = vpack.c.b16 %v4218, %v4214
      %v5035 = vpack.c.b16 %v4219, %v4215
      %v5036 = vpack.c.b16 %v4224, %v4220
      %v5037 = vpack.c.b16 %v4225, %v4221
      %v5038 = vpack.c.b16 %v4226, %v4222
      %v5039 = vpack.c.b16 %v4227, %v4223
      %v5040 = vpack.c.b16 %v4232, %v4228
      %v5041 = vpack.c.b16 %v4233, %v4229
      %v5042 = vpack.c.b16 %v4234, %v4230
      %v5043 = vpack.c.b16 %v4235, %v4231
      %v5044 = vpack.c.b16 %v4240, %v4236
      %v5045 = vpack.c.b16 %v4241, %v4237
      %v5046 = vpack.c.b16 %v4242, %v4238
      %v5047 = vpack.c.b16 %v4243, %v4239
      %v5048 = vpack.c.b16 %v4248, %v4244
      %v5049 = vpack.c.b16 %v4249, %v4245
      %v5050 = vpack.c.b16 %v4250, %v4246
      %v5051 = vpack.c.b16 %v4251, %v4247
      %v5052 = vpack.c.b16 %v4256, %v4252
      %v5053 = vpack.c.b16 %v4257, %v4253
      %v5054 = vpack.c.b16 %v4258, %v4254
      %v5055 = vpack.c.b16 %v4259, %v4255
      %v5056 = vpack.c.b16 %v4264, %v4260
      %v5057 = vpack.c.b16 %v4265, %v4261
      %v5058 = vpack.c.b16 %v4266, %v4262
      %v5059 = vpack.c.b16 %v4267, %v4263
      %v5060 = vpack.c.b16 %v4272, %v4268
      %v5061 = vpack.c.b16 %v4273, %v4269
      %v5062 = vpack.c.b16 %v4274, %v4270
      %v5063 = vpack.c.b16 %v4275, %v4271
      %v5064 = vpack.c.b16 %v4280, %v4276
      %v5065 = vpack.c.b16 %v4281, %v4277
      %v5066 = vpack.c.b16 %v4282, %v4278
      %v5067 = vpack.c.b16 %v4283, %v4279
      %v5068 = vpack.c.b16 %v4288, %v4284
      %v5069 = vpack.c.b16 %v4289, %v4285
      %v5070 = vpack.c.b16 %v4290, %v4286
      %v5071 = vpack.c.b16 %v4291, %v4287
      %v5072 = vpack.c.b16 %v4296, %v4292
      %v5073 = vpack.c.b16 %v4297, %v4293
      %v5074 = vpack.c.b16 %v4298, %v4294
      %v5075 = vpack.c.b16 %v4299, %v4295
      %v5076 = vpack.c.b16 %v4304, %v4300
      %v5077 = vpack.c.b16 %v4305, %v4301
      %v5078 = vpack.c.b16 %v4306, %v4302
      %v5079 = vpack.c.b16 %v4307, %v4303
      %v5080 = vpack.c.b16 %v4312, %v4308
      %v5081 = vpack.c.b16 %v4313, %v4309
      %v5082 = vpack.c.b16 %v4314, %v4310
      %v5083 = vpack.c.b16 %v4315, %v4311
      %v5084 = vpack.c.b16 %v4320, %v4316
      %v5085 = vpack.c.b16 %v4321, %v4317
      %v5086 = vpack.c.b16 %v4322, %v4318
      %v5087 = vpack.c.b16 %v4323, %v4319
      %v5088 = vpack.c.b16 %v4328, %v4324
      %v5089 = vpack.c.b16 %v4329, %v4325
      %v5090 = vpack.c.b16 %v4330, %v4326
      %v5091 = vpack.c.b16 %v4331, %v4327
      %v5092 = vpack.c.b16 %v4336, %v4332
      %v5093 = vpack.c.b16 %v4337, %v4333
      %v5094 = vpack.c.b16 %v4338, %v4334
      %v5095 = vpack.c.b16 %v4339, %v4335
      %v5096 = vpack.c.b16 %v4344, %v4340
      %v5097 = vpack.c.b16 %v4345, %v4341
      %v5098 = vpack.c.b16 %v4346, %v4342
      %v5099 = vpack.c.b16 %v4347, %v4343
      %v5100 = vpack.c.b16 %v4352, %v4348
      %v5101 = vpack.c.b16 %v4353, %v4349
      %v5102 = vpack.c.b16 %v4354, %v4350
      %v5103 = vpack.c.b16 %v4355, %v4351
      %v5104 = vpack.c.b16 %v4360, %v4356
      %v5105 = vpack.c.b16 %v4361, %v4357
      %v5106 = vpack.c.b16 %v4362, %v4358
      %v5107 = vpack.c.b16 %v4363, %v4359
      %v5108 = vpack.c.b16 %v4368, %v4364
      %v5109 = vpack.c.b16 %v4369, %v4365
      %v5110 = vpack.c.b16 %v4370, %v4366
      %v5111 = vpack.c.b16 %v4371, %v4367
      %v5112 = vpack.c.b16 %v4376, %v4372
      %v5113 = vpack.c.b16 %v4377, %v4373
      %v5114 = vpack.c.b16 %v4378, %v4374
      %v5115 = vpack.c.b16 %v4379, %v4375
      %v5116 = vpack.c.b16 %v4384, %v4380
      %v5117 = vpack.c.b16 %v4385, %v4381
      %v5118 = vpack.c.b16 %v4386, %v4382
      %v5119 = vpack.c.b16 %v4387, %v4383
      %v5120 = vpack.c.b16 %v4392, %v4388
      %v5121 = vpack.c.b16 %v4393, %v4389
      %v5122 = vpack.c.b16 %v4394, %v4390
      %v5123 = vpack.c.b16 %v4395, %v4391
      %v5124 = vpack.c.b16 %v4400, %v4396
      %v5125 = vpack.c.b16 %v4401, %v4397
      %v5126 = vpack.c.b16 %v4402, %v4398
      %v5127 = vpack.c.b16 %v4403, %v4399
      %v5128 = vpack.c.b16 %v4408, %v4404
      %v5129 = vpack.c.b16 %v4409, %v4405
      %v5130 = vpack.c.b16 %v4410, %v4406
      %v5131 = vpack.c.b16 %v4411, %v4407
      %v5132 = vpack.c.b16 %v4416, %v4412
      %v5133 = vpack.c.b16 %v4417, %v4413
      %v5134 = vpack.c.b16 %v4418, %v4414
      %v5135 = vpack.c.b16 %v4419, %v4415
      %v5136 = vpack.c.b16 %v4424, %v4420
      %v5137 = vpack.c.b16 %v4425, %v4421
      %v5138 = vpack.c.b16 %v4426, %v4422
      %v5139 = vpack.c.b16 %v4427, %v4423
      %v5140 = vpack.c.b16 %v4432, %v4428
      %v5141 = vpack.c.b16 %v4433, %v4429
      %v5142 = vpack.c.b16 %v4434, %v4430
      %v5143 = vpack.c.b16 %v4435, %v4431
      %v5144 = vpack.c.b16 %v4440, %v4436
      %v5145 = vpack.c.b16 %v4441, %v4437
      %v5146 = vpack.c.b16 %v4442, %v4438
      %v5147 = vpack.c.b16 %v4443, %v4439
      %v5148 = vpack.c.b16 %v4448, %v4444
      %v5149 = vpack.c.b16 %v4449, %v4445
      %v5150 = vpack.c.b16 %v4450, %v4446
      %v5151 = vpack.c.b16 %v4451, %v4447
      %v5152 = vpack.c.b16 %v4456, %v4452
      %v5153 = vpack.c.b16 %v4457, %v4453
      %v5154 = vpack.c.b16 %v4458, %v4454
      %v5155 = vpack.c.b16 %v4459, %v4455
      %v5156 = vpack.c.b16 %v4464, %v4460
      %v5157 = vpack.c.b16 %v4465, %v4461
      %v5158 = vpack.c.b16 %v4466, %v4462
      %v5159 = vpack.c.b16 %v4467, %v4463
      %v5160 = vpack.c.b16 %v4472, %v4468
      %v5161 = vpack.c.b16 %v4473, %v4469
      %v5162 = vpack.c.b16 %v4474, %v4470
      %v5163 = vpack.c.b16 %v4475, %v4471
      %v5164 = vpack.c.b16 %v4480, %v4476
      %v5165 = vpack.c.b16 %v4481, %v4477
      %v5166 = vpack.c.b16 %v4482, %v4478
      %v5167 = vpack.c.b16 %v4483, %v4479
      %v5168 = vpack.c.b16 %v4488, %v4484
      %v5169 = vpack.c.b16 %v4489, %v4485
      %v5170 = vpack.c.b16 %v4490, %v4486
      %v5171 = vpack.c.b16 %v4491, %v4487
      %v5172 = vpack.c.b16 %v4496, %v4492
      %v5173 = vpack.c.b16 %v4497, %v4493
      %v5174 = vpack.c.b16 %v4498, %v4494
      %v5175 = vpack.c.b16 %v4499, %v4495
      %v5176 = vpack.c.b16 %v4504, %v4500
      %v5177 = vpack.c.b16 %v4505, %v4501
      %v5178 = vpack.c.b16 %v4506, %v4502
      %v5179 = vpack.c.b16 %v4507, %v4503
      %v5180 = vpack.c.b16 %v4512, %v4508
      %v5181 = vpack.c.b16 %v4513, %v4509
      %v5182 = vpack.c.b16 %v4514, %v4510
      %v5183 = vpack.c.b16 %v4515, %v4511
      %v5184 = vpack.c.b16 %v4520, %v4516
      %v5185 = vpack.c.b16 %v4521, %v4517
      %v5186 = vpack.c.b16 %v4522, %v4518
      %v5187 = vpack.c.b16 %v4523, %v4519
      %v5188 = vpack.c.b16 %v4528, %v4524
      %v5189 = vpack.c.b16 %v4529, %v4525
      %v5190 = vpack.c.b16 %v4530, %v4526
      %v5191 = vpack.c.b16 %v4531, %v4527
      %v5192 = vpack.c.b16 %v4536, %v4532
      %v5193 = vpack.c.b16 %v4537, %v4533
      %v5194 = vpack.c.b16 %v4538, %v4534
      %v5195 = vpack.c.b16 %v4539, %v4535
      %v5196 = vpack.c.b16 %v4544, %v4540
      %v5197 = vpack.c.b16 %v4545, %v4541
      %v5198 = vpack.c.b16 %v4546, %v4542
      %v5199 = vpack.c.b16 %v4547, %v4543
      %v5200 = vpack.c.b16 %v4552, %v4548
      %v5201 = vpack.c.b16 %v4553, %v4549
      %v5202 = vpack.c.b16 %v4554, %v4550
      %v5203 = vpack.c.b16 %v4555, %v4551
      %v5204 = vpack.c.b16 %v4560, %v4556
      %v5205 = vpack.c.b16 %v4561, %v4557
      %v5206 = vpack.c.b16 %v4562, %v4558
      %v5207 = vpack.c.b16 %v4563, %v4559
      %v5208 = vpack.c.b16 %v4568, %v4564
      %v5209 = vpack.c.b16 %v4569, %v4565
      %v5210 = vpack.c.b16 %v4570, %v4566
      %v5211 = vpack.c.b16 %v4571, %v4567
      %v5212 = vpack.c.b16 %v4576, %v4572
      %v5213 = vpack.c.b16 %v4577, %v4573
      %v5214 = vpack.c.b16 %v4578, %v4574
      %v5215 = vpack.c.b16 %v4579, %v4575
      %v5216 = vpack.c.b16 %v4584, %v4580
      %v5217 = vpack.c.b16 %v4585, %v4581
      %v5218 = vpack.c.b16 %v4586, %v4582
      %v5219 = vpack.c.b16 %v4587, %v4583
      %v5220 = vpack.c.b16 %v4592, %v4588
      %v5221 = vpack.c.b16 %v4593, %v4589
      %v5222 = vpack.c.b16 %v4594, %v4590
      %v5223 = vpack.c.b16 %v4595, %v4591
      %v5224 = vpack.c.b16 %v4600, %v4596
      %v5225 = vpack.c.b16 %v4601, %v4597
      %v5226 = vpack.c.b16 %v4602, %v4598
      %v5227 = vpack.c.b16 %v4603, %v4599
      %v5228 = vpack.c.b16 %v4608, %v4604
      %v5229 = vpack.c.b16 %v4609, %v4605
      %v5230 = vpack.c.b16 %v4610, %v4606
      %v5231 = vpack.c.b16 %v4611, %v4607
      %v5232 = vpack.c.b16 %v4616, %v4612
      %v5233 = vpack.c.b16 %v4617, %v4613
      %v5234 = vpack.c.b16 %v4618, %v4614
      %v5235 = vpack.c.b16 %v4619, %v4615
      %v5236 = vpack.c.b16 %v4624, %v4620
      %v5237 = vpack.c.b16 %v4625, %v4621
      %v5238 = vpack.c.b16 %v4626, %v4622
      %v5239 = vpack.c.b16 %v4627, %v4623
      %v5240 = vpack.c.b16 %v4632, %v4628
      %v5241 = vpack.c.b16 %v4633, %v4629
      %v5242 = vpack.c.b16 %v4634, %v4630
      %v5243 = vpack.c.b16 %v4635, %v4631
      %v5244 = vpack.c.b16 %v4640, %v4636
      %v5245 = vpack.c.b16 %v4641, %v4637
      %v5246 = vpack.c.b16 %v4642, %v4638
      %v5247 = vpack.c.b16 %v4643, %v4639
      %v5248 = vpack.c.b16 %v4648, %v4644
      %v5249 = vpack.c.b16 %v4649, %v4645
      %v5250 = vpack.c.b16 %v4650, %v4646
      %v5251 = vpack.c.b16 %v4651, %v4647
      %v5252 = vpack.c.b16 %v4656, %v4652
      %v5253 = vpack.c.b16 %v4657, %v4653
      %v5254 = vpack.c.b16 %v4658, %v4654
      %v5255 = vpack.c.b16 %v4659, %v4655
      %v5256 = vpack.c.b16 %v4664, %v4660
      %v5257 = vpack.c.b16 %v4665, %v4661
      %v5258 = vpack.c.b16 %v4666, %v4662
      %v5259 = vpack.c.b16 %v4667, %v4663
      %v5260 = vpack.c.b16 %v4672, %v4668
      %v5261 = vpack.c.b16 %v4673, %v4669
      %v5262 = vpack.c.b16 %v4674, %v4670
      %v5263 = vpack.c.b16 %v4675, %v4671
      %v5264 = vpack.c.b16 %v4680, %v4676
      %v5265 = vpack.c.b16 %v4681, %v4677
      %v5266 = vpack.c.b16 %v4682, %v4678
      %v5267 = vpack.c.b16 %v4683, %v4679
      %v5268 = vpack.c.b16 %v4688, %v4684
      %v5269 = vpack.c.b16 %v4689, %v4685
      %v5270 = vpack.c.b16 %v4690, %v4686
      %v5271 = vpack.c.b16 %v4691, %v4687
      %v5272 = vpack.c.b16 %v4696, %v4692
      %v5273 = vpack.c.b16 %v4697, %v4693
      %v5274 = vpack.c.b16 %v4698, %v4694
      %v5275 = vpack.c.b16 %v4699, %v4695
      %v5276 = vpack.c.b16 %v4704, %v4700
      %v5277 = vpack.c.b16 %v4705, %v4701
      %v5278 = vpack.c.b16 %v4706, %v4702
      %v5279 = vpack.c.b16 %v4707, %v4703
      %v5280 = vpack.c.b16 %v4712, %v4708
      %v5281 = vpack.c.b16 %v4713, %v4709
      %v5282 = vpack.c.b16 %v4714, %v4710
      %v5283 = vpack.c.b16 %v4715, %v4711
      %v5284 = vpack.c.b16 %v4720, %v4716
      %v5285 = vpack.c.b16 %v4721, %v4717
      %v5286 = vpack.c.b16 %v4722, %v4718
      %v5287 = vpack.c.b16 %v4723, %v4719
      %v5288 = vpack.c.b16 %v4728, %v4724
      %v5289 = vpack.c.b16 %v4729, %v4725
      %v5290 = vpack.c.b16 %v4730, %v4726
      %v5291 = vpack.c.b16 %v4731, %v4727
      %v5292 = vpack.c.b16 %v4736, %v4732
      %v5293 = vpack.c.b16 %v4737, %v4733
      %v5294 = vpack.c.b16 %v4738, %v4734
      %v5295 = vpack.c.b16 %v4739, %v4735
      %v5296 = vpack.c.b16 %v4744, %v4740
      %v5297 = vpack.c.b16 %v4745, %v4741
      %v5298 = vpack.c.b16 %v4746, %v4742
      %v5299 = vpack.c.b16 %v4747, %v4743
      %v5300 = vpack.c.b16 %v4752, %v4748
      %v5301 = vpack.c.b16 %v4753, %v4749
      %v5302 = vpack.c.b16 %v4754, %v4750
      %v5303 = vpack.c.b16 %v4755, %v4751
      %v5304 = vpack.c.b16 %v4760, %v4756
      %v5305 = vpack.c.b16 %v4761, %v4757
      %v5306 = vpack.c.b16 %v4762, %v4758
      %v5307 = vpack.c.b16 %v4763, %v4759
      %v5308 = vpack.c.b16 %v4768, %v4764
      %v5309 = vpack.c.b16 %v4769, %v4765
      %v5310 = vpack.c.b16 %v4770, %v4766
      %v5311 = vpack.c.b16 %v4771, %v4767
      %v5312 = vpack.c.b16 %v4776, %v4772
      %v5313 = vpack.c.b16 %v4777, %v4773
      %v5314 = vpack.c.b16 %v4778, %v4774
      %v5315 = vpack.c.b16 %v4779, %v4775
      %v5316 = vpack.c.b16 %v4784, %v4780
      %v5317 = vpack.c.b16 %v4785, %v4781
      %v5318 = vpack.c.b16 %v4786, %v4782
      %v5319 = vpack.c.b16 %v4787, %v4783
      %v5320 = vpack.c.b16 %v4792, %v4788
      %v5321 = vpack.c.b16 %v4793, %v4789
      %v5322 = vpack.c.b16 %v4794, %v4790
      %v5323 = vpack.c.b16 %v4795, %v4791
      %v5324 = vpack.c.b16 %v4800, %v4796
      %v5325 = vpack.c.b16 %v4801, %v4797
      %v5326 = vpack.c.b16 %v4802, %v4798
      %v5327 = vpack.c.b16 %v4803, %v4799
      %v5328 = vpack.c.b16 %v4808, %v4804
      %v5329 = vpack.c.b16 %v4809, %v4805
      %v5330 = vpack.c.b16 %v4810, %v4806
      %v5331 = vpack.c.b16 %v4811, %v4807
      %vm5852 = vcmask 261120
      %v5854 = vsel %vm5852, %v2548, 0
      %v5857 = vsel %vm5852, %v2565, 0
      %v5860 = vsel %vm5852, %v2582, 0
      %v5863 = vsel %vm5852, %v2599, 0
      %v5866 = vsel %vm5852, %v2616, 0
      %v5869 = vsel %vm5852, %v2633, 0
      %v5872 = vsel %vm5852, %v2650, 0
      %v5875 = vsel %vm5852, %v2667, 0
      %5877 = vmatprep.subr.bf16.mxu0 %v4813
      %5878 = vmatpush1.bf16.msra.mxu0 %v4812
      %5879 = vmatprep.subr.bf16.mxu0 %v4817
      %5880 = vmatpush1.bf16.msra.mxu0 %v4816
      %5881 = vmatprep.subr.bf16.mxu0 %v4821
      %5882 = vmatpush1.bf16.msra.mxu0 %v4820
      %5883 = vmatprep.subr.bf16.mxu0 %v4825
      %5884 = vmatpush1.bf16.msra.mxu0 %v4824
      %5885 = vmatprep.subr.bf16.mxu0 %v4829
      %5886 = vmatpush1.bf16.msra.mxu0 %v4828
      %5887 = vmatprep.subr.bf16.mxu0 %v4833
      %5888 = vmatpush1.bf16.msra.mxu0 %v4832
      %5889 = vmatprep.subr.bf16.mxu0 %v4837
      %5890 = vmatpush1.bf16.msra.mxu0 %v4836
      %5891 = vmatprep.subr.bf16.mxu0 %v4841
      %5892 = vmatpush1.bf16.msra.mxu0 %v4840
      %5893 = vmatprep.subr.bf16.mxu0 %v4845
      %5894 = vmatpush1.bf16.msra.mxu0 %v4844
      %5895 = vmatprep.subr.bf16.mxu0 %v4849
      %5896 = vmatpush1.bf16.msra.mxu0 %v4848
      %5897 = vmatprep.subr.bf16.mxu0 %v4853
      %5898 = vmatpush1.bf16.msra.mxu0 %v4852
      %5899 = vmatprep.subr.bf16.mxu0 %v4857
      %5900 = vmatpush1.bf16.msra.mxu0 %v4856
      %5901 = vmatprep.subr.bf16.mxu0 %v4861
      %5902 = vmatpush1.bf16.msra.mxu0 %v4860
      %5903 = vmatprep.subr.bf16.mxu0 %v4865
      %5904 = vmatpush1.bf16.msra.mxu0 %v4864
      %5905 = vmatprep.subr.bf16.mxu0 %v4869
      %5906 = vmatpush1.bf16.msra.mxu0 %v4868
      %5907 = vmatprep.subr.bf16.mxu0 %v4873
      %5908 = vmatpush1.bf16.msra.mxu0 %v4872
      %5909 = vmatprep.mubr.bf16.mxu0 %v2533
      %5910 = vmatmul.mubr.bf16.gmra.mrb[0].mxu0 %v2532
      %v5911 = vpop.f32.mrb[0].mxu0
      %v5912 = vadd.f32 0.0, %v5911
      %v5913 = vpop.f32.mrb[0].mxu0
      %v5914 = vadd.f32 0.0, %v5913
      %v5915 = vpop.f32.mrb[0].mxu0
      %v5916 = vadd.f32 0.0, %v5915
      %v5917 = vpop.f32.mrb[0].mxu0
      %v5918 = vadd.f32 0.0, %v5917
      %5919 = vmatprep.mubr.bf16.mxu0 %v2550
      %5920 = vmatmul.mubr.bf16.gmra.mrb[0].mxu0 %v2549
      %v5921 = vpop.f32.mrb[0].mxu0
      %v5922 = vadd.f32 0.0, %v5921
      %v5923 = vpop.f32.mrb[0].mxu0
      %v5924 = vadd.f32 0.0, %v5923
      %v5925 = vpop.f32.mrb[0].mxu0
      %v5926 = vadd.f32 0.0, %v5925
      %v5927 = vpop.f32.mrb[0].mxu0
      %v5928 = vadd.f32 0.0, %v5927
      %5929 = vmatprep.mubr.bf16.mxu0 %v2567
      %5930 = vmatmul.mubr.bf16.gmra.mrb[0].mxu0 %v2566
      %v5931 = vpop.f32.mrb[0].mxu0
      %v5932 = vadd.f32 0.0, %v5931
      %v5933 = vpop.f32.mrb[0].mxu0
      %v5934 = vadd.f32 0.0, %v5933
      %v5935 = vpop.f32.mrb[0].mxu0
      %v5936 = vadd.f32 0.0, %v5935
      %v5937 = vpop.f32.mrb[0].mxu0
      %v5938 = vadd.f32 0.0, %v5937
      %5939 = vmatprep.mubr.bf16.mxu0 %v2584
      %5940 = vmatmul.mubr.bf16.gmra.mrb[0].mxu0 %v2583
      %v5941 = vpop.f32.mrb[0].mxu0
      %v5942 = vadd.f32 0.0, %v5941
      %v5943 = vpop.f32.mrb[0].mxu0
      %v5944 = vadd.f32 0.0, %v5943
      %v5945 = vpop.f32.mrb[0].mxu0
      %v5946 = vadd.f32 0.0, %v5945
      %v5947 = vpop.f32.mrb[0].mxu0
      %v5948 = vadd.f32 0.0, %v5947
      %5949 = vmatprep.mubr.bf16.mxu0 %v2601
      %5950 = vmatmul.mubr.bf16.gmra.mrb[0].mxu0 %v2600
      %v5951 = vpop.f32.mrb[0].mxu0
      %v5952 = vadd.f32 0.0, %v5951
      %v5953 = vpop.f32.mrb[0].mxu0
      %v5954 = vadd.f32 0.0, %v5953
      %v5955 = vpop.f32.mrb[0].mxu0
      %v5956 = vadd.f32 0.0, %v5955
      %v5957 = vpop.f32.mrb[0].mxu0
      %v5958 = vadd.f32 0.0, %v5957
      %5959 = vmatprep.mubr.bf16.mxu0 %v2618
      %5960 = vmatmul.mubr.bf16.gmra.mrb[0].mxu0 %v2617
      %v5961 = vpop.f32.mrb[0].mxu0
      %v5962 = vadd.f32 0.0, %v5961
      %v5963 = vpop.f32.mrb[0].mxu0
      %v5964 = vadd.f32 0.0, %v5963
      %v5965 = vpop.f32.mrb[0].mxu0
      %v5966 = vadd.f32 0.0, %v5965
      %v5967 = vpop.f32.mrb[0].mxu0
      %v5968 = vadd.f32 0.0, %v5967
      %5969 = vmatprep.mubr.bf16.mxu0 %v2635
      %5970 = vmatmul.mubr.bf16.gmra.mrb[0].mxu0 %v2634
      %v5971 = vpop.f32.mrb[0].mxu0
      %v5972 = vadd.f32 0.0, %v5971
      %v5973 = vpop.f32.mrb[0].mxu0
      %v5974 = vadd.f32 0.0, %v5973
      %v5975 = vpop.f32.mrb[0].mxu0
      %v5976 = vadd.f32 0.0, %v5975
      %v5977 = vpop.f32.mrb[0].mxu0
      %v5978 = vadd.f32 0.0, %v5977
      %5979 = vmatprep.mubr.bf16.mxu0 %v2652
      %5980 = vmatmul.mubr.bf16.gmra.mrb[0].mxu0 %v2651
      %v5981 = vpop.f32.mrb[0].mxu0
      %v5982 = vadd.f32 0.0, %v5981
      %v5983 = vpop.f32.mrb[0].mxu0
      %v5984 = vadd.f32 0.0, %v5983
      %v5985 = vpop.f32.mrb[0].mxu0
      %v5986 = vadd.f32 0.0, %v5985
      %v5987 = vpop.f32.mrb[0].mxu0
      %v5988 = vadd.f32 0.0, %v5987
      %5989 = vdwg.mxu0
      %5990 = vmatprep.subr.bf16.mxu0 %v4877
      %5991 = vmatpush1.bf16.msra.mxu0 %v4876
      %5992 = vmatprep.subr.bf16.mxu0 %v4881
      %5993 = vmatpush1.bf16.msra.mxu0 %v4880
      %5994 = vmatprep.subr.bf16.mxu0 %v4885
      %5995 = vmatpush1.bf16.msra.mxu0 %v4884
      %5996 = vmatprep.subr.bf16.mxu0 %v4889
      %5997 = vmatpush1.bf16.msra.mxu0 %v4888
      %5998 = vmatprep.subr.bf16.mxu0 %v4893
      %5999 = vmatpush1.bf16.msra.mxu0 %v4892
      %6000 = vmatprep.subr.bf16.mxu0 %v4897
      %6001 = vmatpush1.bf16.msra.mxu0 %v4896
      %6002 = vmatprep.subr.bf16.mxu0 %v4901
      %6003 = vmatpush1.bf16.msra.mxu0 %v4900
      %6004 = vmatprep.subr.bf16.mxu0 %v4905
      %6005 = vmatpush1.bf16.msra.mxu0 %v4904
      %6006 = vmatprep.subr.bf16.mxu0 %v4909
      %6007 = vmatpush1.bf16.msra.mxu0 %v4908
      %6008 = vmatprep.subr.bf16.mxu0 %v4913
      %6009 = vmatpush1.bf16.msra.mxu0 %v4912
      %6010 = vmatprep.subr.bf16.mxu0 %v4917
      %6011 = vmatpush1.bf16.msra.mxu0 %v4916
      %6012 = vmatprep.subr.bf16.mxu0 %v4921
      %6013 = vmatpush1.bf16.msra.mxu0 %v4920
      %6014 = vmatprep.subr.bf16.mxu0 %v4925
      %6015 = vmatpush1.bf16.msra.mxu0 %v4924
      %6016 = vmatprep.subr.bf16.mxu0 %v4929
      %6017 = vmatpush1.bf16.msra.mxu0 %v4928
      %6018 = vmatprep.subr.bf16.mxu0 %v4933
      %6019 = vmatpush1.bf16.msra.mxu0 %v4932
      %6020 = vmatprep.subr.bf16.mxu0 %v4937
      %6021 = vmatpush1.bf16.msra.mxu0 %v4936
      %6022 = vmatprep.mubr.bf16.mxu0 %v2535
      %6023 = vmatmul.mubr.bf16.gmra.mrb[0].mxu0 %v2534
      %v6024 = vpop.f32.mrb[0].mxu0
      %v6025 = vadd.f32 %v5912, %v6024
      %v6026 = vpop.f32.mrb[0].mxu0
      %v6027 = vadd.f32 %v5914, %v6026
      %v6028 = vpop.f32.mrb[0].mxu0
      %v6029 = vadd.f32 %v5916, %v6028
      %v6030 = vpop.f32.mrb[0].mxu0
      %v6031 = vadd.f32 %v5918, %v6030
      %6032 = vmatprep.mubr.bf16.mxu0 %v2552
      %6033 = vmatmul.mubr.bf16.gmra.mrb[0].mxu0 %v2551
      %v6034 = vpop.f32.mrb[0].mxu0
      %v6035 = vadd.f32 %v5922, %v6034
      %v6036 = vpop.f32.mrb[0].mxu0
      %v6037 = vadd.f32 %v5924, %v6036
      %v6038 = vpop.f32.mrb[0].mxu0
      %v6039 = vadd.f32 %v5926, %v6038
      %v6040 = vpop.f32.mrb[0].mxu0
      %v6041 = vadd.f32 %v5928, %v6040
      %6042 = vmatprep.mubr.bf16.mxu0 %v2569
      %6043 = vmatmul.mubr.bf16.gmra.mrb[0].mxu0 %v2568
      %v6044 = vpop.f32.mrb[0].mxu0
      %v6045 = vadd.f32 %v5932, %v6044
      %v6046 = vpop.f32.mrb[0].mxu0
      %v6047 = vadd.f32 %v5934, %v6046
      %v6048 = vpop.f32.mrb[0].mxu0
      %v6049 = vadd.f32 %v5936, %v6048
      %v6050 = vpop.f32.mrb[0].mxu0
      %v6051 = vadd.f32 %v5938, %v6050
      %6052 = vmatprep.mubr.bf16.mxu0 %v2586
      %6053 = vmatmul.mubr.bf16.gmra.mrb[0].mxu0 %v2585
      %v6054 = vpop.f32.mrb[0].mxu0
      %v6055 = vadd.f32 %v5942, %v6054
      %v6056 = vpop.f32.mrb[0].mxu0
      %v6057 = vadd.f32 %v5944, %v6056
      %v6058 = vpop.f32.mrb[0].mxu0
      %v6059 = vadd.f32 %v5946, %v6058
      %v6060 = vpop.f32.mrb[0].mxu0
      %v6061 = vadd.f32 %v5948, %v6060
      %6062 = vmatprep.mubr.bf16.mxu0 %v2603
      %6063 = vmatmul.mubr.bf16.gmra.mrb[0].mxu0 %v2602
      %v6064 = vpop.f32.mrb[0].mxu0
      %v6065 = vadd.f32 %v5952, %v6064
      %v6066 = vpop.f32.mrb[0].mxu0
      %v6067 = vadd.f32 %v5954, %v6066
      %v6068 = vpop.f32.mrb[0].mxu0
      %v6069 = vadd.f32 %v5956, %v6068
      %v6070 = vpop.f32.mrb[0].mxu0
      %v6071 = vadd.f32 %v5958, %v6070
      %6072 = vmatprep.mubr.bf16.mxu0 %v2620
      %6073 = vmatmul.mubr.bf16.gmra.mrb[0].mxu0 %v2619
      %v6074 = vpop.f32.mrb[0].mxu0
      %v6075 = vadd.f32 %v5962, %v6074
      %v6076 = vpop.f32.mrb[0].mxu0
      %v6077 = vadd.f32 %v5964, %v6076
      %v6078 = vpop.f32.mrb[0].mxu0
      %v6079 = vadd.f32 %v5966, %v6078
      %v6080 = vpop.f32.mrb[0].mxu0
      %v6081 = vadd.f32 %v5968, %v6080
      %6082 = vmatprep.mubr.bf16.mxu0 %v2637
      %6083 = vmatmul.mubr.bf16.gmra.mrb[0].mxu0 %v2636
      %v6084 = vpop.f32.mrb[0].mxu0
      %v6085 = vadd.f32 %v5972, %v6084
      %v6086 = vpop.f32.mrb[0].mxu0
      %v6087 = vadd.f32 %v5974, %v6086
      %v6088 = vpop.f32.mrb[0].mxu0
      %v6089 = vadd.f32 %v5976, %v6088
      %v6090 = vpop.f32.mrb[0].mxu0
      %v6091 = vadd.f32 %v5978, %v6090
      %6092 = vmatprep.mubr.bf16.mxu0 %v2654
      %6093 = vmatmul.mubr.bf16.gmra.mrb[0].mxu0 %v2653
      %v6094 = vpop.f32.mrb[0].mxu0
      %v6095 = vadd.f32 %v5982, %v6094
      %v6096 = vpop.f32.mrb[0].mxu0
      %v6097 = vadd.f32 %v5984, %v6096
      %v6098 = vpop.f32.mrb[0].mxu0
      %v6099 = vadd.f32 %v5986, %v6098
      %v6100 = vpop.f32.mrb[0].mxu0
      %v6101 = vadd.f32 %v5988, %v6100
      %6102 = vdwg.mxu0
      %6103 = vmatprep.subr.bf16.mxu0 %v4941
      %6104 = vmatpush1.bf16.msra.mxu0 %v4940
      %6105 = vmatprep.subr.bf16.mxu0 %v4945
      %6106 = vmatpush1.bf16.msra.mxu0 %v4944
      %6107 = vmatprep.subr.bf16.mxu0 %v4949
      %6108 = vmatpush1.bf16.msra.mxu0 %v4948
      %6109 = vmatprep.subr.bf16.mxu0 %v4953
      %6110 = vmatpush1.bf16.msra.mxu0 %v4952
      %6111 = vmatprep.subr.bf16.mxu0 %v4957
      %6112 = vmatpush1.bf16.msra.mxu0 %v4956
      %6113 = vmatprep.subr.bf16.mxu0 %v4961
      %6114 = vmatpush1.bf16.msra.mxu0 %v4960
      %6115 = vmatprep.subr.bf16.mxu0 %v4965
      %6116 = vmatpush1.bf16.msra.mxu0 %v4964
      %6117 = vmatprep.subr.bf16.mxu0 %v4969
      %6118 = vmatpush1.bf16.msra.mxu0 %v4968
      %6119 = vmatprep.subr.bf16.mxu0 %v4973
      %6120 = vmatpush1.bf16.msra.mxu0 %v4972
      %6121 = vmatprep.subr.bf16.mxu0 %v4977
      %6122 = vmatpush1.bf16.msra.mxu0 %v4976
      %6123 = vmatprep.subr.bf16.mxu0 %v4981
      %6124 = vmatpush1.bf16.msra.mxu0 %v4980
      %6125 = vmatprep.subr.bf16.mxu0 %v4985
      %6126 = vmatpush1.bf16.msra.mxu0 %v4984
      %6127 = vmatprep.subr.bf16.mxu0 %v4989
      %6128 = vmatpush1.bf16.msra.mxu0 %v4988
      %6129 = vmatprep.subr.bf16.mxu0 %v4993
      %6130 = vmatpush1.bf16.msra.mxu0 %v4992
      %6131 = vmatprep.subr.bf16.mxu0 %v4997
      %6132 = vmatpush1.bf16.msra.mxu0 %v4996
      %6133 = vmatprep.subr.bf16.mxu0 %v5001
      %6134 = vmatpush1.bf16.msra.mxu0 %v5000
      %6135 = vmatprep.mubr.bf16.mxu0 %v2537
      %6136 = vmatmul.mubr.bf16.gmra.mrb[0].mxu0 %v2536
      %v6137 = vpop.f32.mrb[0].mxu0
      %v6138 = vadd.f32 %v6025, %v6137
      %v6139 = vpop.f32.mrb[0].mxu0
      %v6140 = vadd.f32 %v6027, %v6139
      %v6141 = vpop.f32.mrb[0].mxu0
      %v6142 = vadd.f32 %v6029, %v6141
      %v6143 = vpop.f32.mrb[0].mxu0
      %v6144 = vadd.f32 %v6031, %v6143
      %6145 = vmatprep.mubr.bf16.mxu0 %v2554
      %6146 = vmatmul.mubr.bf16.gmra.mrb[0].mxu0 %v2553
      %v6147 = vpop.f32.mrb[0].mxu0
      %v6148 = vadd.f32 %v6035, %v6147
      %v6149 = vpop.f32.mrb[0].mxu0
      %v6150 = vadd.f32 %v6037, %v6149
      %v6151 = vpop.f32.mrb[0].mxu0
      %v6152 = vadd.f32 %v6039, %v6151
      %v6153 = vpop.f32.mrb[0].mxu0
      %v6154 = vadd.f32 %v6041, %v6153
      %6155 = vmatprep.mubr.bf16.mxu0 %v2571
      %6156 = vmatmul.mubr.bf16.gmra.mrb[0].mxu0 %v2570
      %v6157 = vpop.f32.mrb[0].mxu0
      %v6158 = vadd.f32 %v6045, %v6157
      %v6159 = vpop.f32.mrb[0].mxu0
      %v6160 = vadd.f32 %v6047, %v6159
      %v6161 = vpop.f32.mrb[0].mxu0
      %v6162 = vadd.f32 %v6049, %v6161
      %v6163 = vpop.f32.mrb[0].mxu0
      %v6164 = vadd.f32 %v6051, %v6163
      %6165 = vmatprep.mubr.bf16.mxu0 %v2588
      %6166 = vmatmul.mubr.bf16.gmra.mrb[0].mxu0 %v2587
      %v6167 = vpop.f32.mrb[0].mxu0
      %v6168 = vadd.f32 %v6055, %v6167
      %v6169 = vpop.f32.mrb[0].mxu0
      %v6170 = vadd.f32 %v6057, %v6169
      %v6171 = vpop.f32.mrb[0].mxu0
      %v6172 = vadd.f32 %v6059, %v6171
      %v6173 = vpop.f32.mrb[0].mxu0
      %v6174 = vadd.f32 %v6061, %v6173
      %6175 = vmatprep.mubr.bf16.mxu0 %v2605
      %6176 = vmatmul.mubr.bf16.gmra.mrb[0].mxu0 %v2604
      %v6177 = vpop.f32.mrb[0].mxu0
      %v6178 = vadd.f32 %v6065, %v6177
      %v6179 = vpop.f32.mrb[0].mxu0
      %v6180 = vadd.f32 %v6067, %v6179
      %v6181 = vpop.f32.mrb[0].mxu0
      %v6182 = vadd.f32 %v6069, %v6181
      %v6183 = vpop.f32.mrb[0].mxu0
      %v6184 = vadd.f32 %v6071, %v6183
      %6185 = vmatprep.mubr.bf16.mxu0 %v2622
      %6186 = vmatmul.mubr.bf16.gmra.mrb[0].mxu0 %v2621
      %v6187 = vpop.f32.mrb[0].mxu0
      %v6188 = vadd.f32 %v6075, %v6187
      %v6189 = vpop.f32.mrb[0].mxu0
      %v6190 = vadd.f32 %v6077, %v6189
      %v6191 = vpop.f32.mrb[0].mxu0
      %v6192 = vadd.f32 %v6079, %v6191
      %v6193 = vpop.f32.mrb[0].mxu0
      %v6194 = vadd.f32 %v6081, %v6193
      %6195 = vmatprep.mubr.bf16.mxu0 %v2639
      %6196 = vmatmul.mubr.bf16.gmra.mrb[0].mxu0 %v2638
      %v6197 = vpop.f32.mrb[0].mxu0
      %v6198 = vadd.f32 %v6085, %v6197
      %v6199 = vpop.f32.mrb[0].mxu0
      %v6200 = vadd.f32 %v6087, %v6199
      %v6201 = vpop.f32.mrb[0].mxu0
      %v6202 = vadd.f32 %v6089, %v6201
      %v6203 = vpop.f32.mrb[0].mxu0
      %v6204 = vadd.f32 %v6091, %v6203
      %6205 = vmatprep.mubr.bf16.mxu0 %v2656
      %6206 = vmatmul.mubr.bf16.gmra.mrb[0].mxu0 %v2655
      %v6207 = vpop.f32.mrb[0].mxu0
      %v6208 = vadd.f32 %v6095, %v6207
      %v6209 = vpop.f32.mrb[0].mxu0
      %v6210 = vadd.f32 %v6097, %v6209
      %v6211 = vpop.f32.mrb[0].mxu0
      %v6212 = vadd.f32 %v6099, %v6211
      %v6213 = vpop.f32.mrb[0].mxu0
      %v6214 = vadd.f32 %v6101, %v6213
      %6215 = vdwg.mxu0
      %6216 = vmatprep.subr.bf16.mxu0 %v5005
      %6217 = vmatpush1.bf16.msra.mxu0 %v5004
      %6218 = vmatprep.subr.bf16.mxu0 %v5009
      %6219 = vmatpush1.bf16.msra.mxu0 %v5008
      %6220 = vmatprep.subr.bf16.mxu0 %v5013
      %6221 = vmatpush1.bf16.msra.mxu0 %v5012
      %6222 = vmatprep.subr.bf16.mxu0 %v5017
      %6223 = vmatpush1.bf16.msra.mxu0 %v5016
      %6224 = vmatprep.subr.bf16.mxu0 %v5021
      %6225 = vmatpush1.bf16.msra.mxu0 %v5020
      %6226 = vmatprep.subr.bf16.mxu0 %v5025
      %6227 = vmatpush1.bf16.msra.mxu0 %v5024
      %6228 = vmatprep.subr.bf16.mxu0 %v5029
      %6229 = vmatpush1.bf16.msra.mxu0 %v5028
      %6230 = vmatprep.subr.bf16.mxu0 %v5033
      %6231 = vmatpush1.bf16.msra.mxu0 %v5032
      %6232 = vmatprep.subr.bf16.mxu0 %v5037
      %6233 = vmatpush1.bf16.msra.mxu0 %v5036
      %6234 = vmatprep.subr.bf16.mxu0 %v5041
      %6235 = vmatpush1.bf16.msra.mxu0 %v5040
      %6236 = vmatprep.subr.bf16.mxu0 %v5045
      %6237 = vmatpush1.bf16.msra.mxu0 %v5044
      %6238 = vmatprep.subr.bf16.mxu0 %v5049
      %6239 = vmatpush1.bf16.msra.mxu0 %v5048
      %6240 = vmatprep.subr.bf16.mxu0 %v5053
      %6241 = vmatpush1.bf16.msra.mxu0 %v5052
      %6242 = vmatprep.subr.bf16.mxu0 %v5057
      %6243 = vmatpush1.bf16.msra.mxu0 %v5056
      %6244 = vmatprep.subr.bf16.mxu0 %v5061
      %6245 = vmatpush1.bf16.msra.mxu0 %v5060
      %6246 = vmatprep.subr.bf16.mxu0 %v5065
      %6247 = vmatpush1.bf16.msra.mxu0 %v5064
      %6248 = vmatprep.mubr.bf16.mxu0 %v2539
      %6249 = vmatmul.mubr.bf16.gmra.mrb[0].mxu0 %v2538
      %v6250 = vpop.f32.mrb[0].mxu0
      %v6251 = vadd.f32 %v6138, %v6250
      %v6252 = vpop.f32.mrb[0].mxu0
      %v6253 = vadd.f32 %v6140, %v6252
      %v6254 = vpop.f32.mrb[0].mxu0
      %v6255 = vadd.f32 %v6142, %v6254
      %v6256 = vpop.f32.mrb[0].mxu0
      %v6257 = vadd.f32 %v6144, %v6256
      %6258 = vmatprep.mubr.bf16.mxu0 %v2556
      %6259 = vmatmul.mubr.bf16.gmra.mrb[0].mxu0 %v2555
      %v6260 = vpop.f32.mrb[0].mxu0
      %v6261 = vadd.f32 %v6148, %v6260
      %v6262 = vpop.f32.mrb[0].mxu0
      %v6263 = vadd.f32 %v6150, %v6262
      %v6264 = vpop.f32.mrb[0].mxu0
      %v6265 = vadd.f32 %v6152, %v6264
      %v6266 = vpop.f32.mrb[0].mxu0
      %v6267 = vadd.f32 %v6154, %v6266
      %6268 = vmatprep.mubr.bf16.mxu0 %v2573
      %6269 = vmatmul.mubr.bf16.gmra.mrb[0].mxu0 %v2572
      %v6270 = vpop.f32.mrb[0].mxu0
      %v6271 = vadd.f32 %v6158, %v6270
      %v6272 = vpop.f32.mrb[0].mxu0
      %v6273 = vadd.f32 %v6160, %v6272
      %v6274 = vpop.f32.mrb[0].mxu0
      %v6275 = vadd.f32 %v6162, %v6274
      %v6276 = vpop.f32.mrb[0].mxu0
      %v6277 = vadd.f32 %v6164, %v6276
      %6278 = vmatprep.mubr.bf16.mxu0 %v2590
      %6279 = vmatmul.mubr.bf16.gmra.mrb[0].mxu0 %v2589
      %v6280 = vpop.f32.mrb[0].mxu0
      %v6281 = vadd.f32 %v6168, %v6280
      %v6282 = vpop.f32.mrb[0].mxu0
      %v6283 = vadd.f32 %v6170, %v6282
      %v6284 = vpop.f32.mrb[0].mxu0
      %v6285 = vadd.f32 %v6172, %v6284
      %v6286 = vpop.f32.mrb[0].mxu0
      %v6287 = vadd.f32 %v6174, %v6286
      %6288 = vmatprep.mubr.bf16.mxu0 %v2607
      %6289 = vmatmul.mubr.bf16.gmra.mrb[0].mxu0 %v2606
      %v6290 = vpop.f32.mrb[0].mxu0
      %v6291 = vadd.f32 %v6178, %v6290
      %v6292 = vpop.f32.mrb[0].mxu0
      %v6293 = vadd.f32 %v6180, %v6292
      %v6294 = vpop.f32.mrb[0].mxu0
      %v6295 = vadd.f32 %v6182, %v6294
      %v6296 = vpop.f32.mrb[0].mxu0
      %v6297 = vadd.f32 %v6184, %v6296
      %6298 = vmatprep.mubr.bf16.mxu0 %v2624
      %6299 = vmatmul.mubr.bf16.gmra.mrb[0].mxu0 %v2623
      %v6300 = vpop.f32.mrb[0].mxu0
      %v6301 = vadd.f32 %v6188, %v6300
      %v6302 = vpop.f32.mrb[0].mxu0
      %v6303 = vadd.f32 %v6190, %v6302
      %v6304 = vpop.f32.mrb[0].mxu0
      %v6305 = vadd.f32 %v6192, %v6304
      %v6306 = vpop.f32.mrb[0].mxu0
      %v6307 = vadd.f32 %v6194, %v6306
      %6308 = vmatprep.mubr.bf16.mxu0 %v2641
      %6309 = vmatmul.mubr.bf16.gmra.mrb[0].mxu0 %v2640
      %v6310 = vpop.f32.mrb[0].mxu0
      %v6311 = vadd.f32 %v6198, %v6310
      %v6312 = vpop.f32.mrb[0].mxu0
      %v6313 = vadd.f32 %v6200, %v6312
      %v6314 = vpop.f32.mrb[0].mxu0
      %v6315 = vadd.f32 %v6202, %v6314
      %v6316 = vpop.f32.mrb[0].mxu0
      %v6317 = vadd.f32 %v6204, %v6316
      %6318 = vmatprep.mubr.bf16.mxu0 %v2658
      %6319 = vmatmul.mubr.bf16.gmra.mrb[0].mxu0 %v2657
      %v6320 = vpop.f32.mrb[0].mxu0
      %v6321 = vadd.f32 %v6208, %v6320
      %v6322 = vpop.f32.mrb[0].mxu0
      %v6323 = vadd.f32 %v6210, %v6322
      %v6324 = vpop.f32.mrb[0].mxu0
      %v6325 = vadd.f32 %v6212, %v6324
      %v6326 = vpop.f32.mrb[0].mxu0
      %v6327 = vadd.f32 %v6214, %v6326
      %6328 = vdwg.mxu0
      %6329 = vmatprep.subr.bf16.mxu0 %v5069
      %6330 = vmatpush1.bf16.msra.mxu0 %v5068
      %6331 = vmatprep.subr.bf16.mxu0 %v5073
      %6332 = vmatpush1.bf16.msra.mxu0 %v5072
      %6333 = vmatprep.subr.bf16.mxu0 %v5077
      %6334 = vmatpush1.bf16.msra.mxu0 %v5076
      %6335 = vmatprep.subr.bf16.mxu0 %v5081
      %6336 = vmatpush1.bf16.msra.mxu0 %v5080
      %6337 = vmatprep.subr.bf16.mxu0 %v5085
      %6338 = vmatpush1.bf16.msra.mxu0 %v5084
      %6339 = vmatprep.subr.bf16.mxu0 %v5089
      %6340 = vmatpush1.bf16.msra.mxu0 %v5088
      %6341 = vmatprep.subr.bf16.mxu0 %v5093
      %6342 = vmatpush1.bf16.msra.mxu0 %v5092
      %6343 = vmatprep.subr.bf16.mxu0 %v5097
      %6344 = vmatpush1.bf16.msra.mxu0 %v5096
      %6345 = vmatprep.subr.bf16.mxu0 %v5101
      %6346 = vmatpush1.bf16.msra.mxu0 %v5100
      %6347 = vmatprep.subr.bf16.mxu0 %v5105
      %6348 = vmatpush1.bf16.msra.mxu0 %v5104
      %6349 = vmatprep.subr.bf16.mxu0 %v5109
      %6350 = vmatpush1.bf16.msra.mxu0 %v5108
      %6351 = vmatprep.subr.bf16.mxu0 %v5113
      %6352 = vmatpush1.bf16.msra.mxu0 %v5112
      %6353 = vmatprep.subr.bf16.mxu0 %v5117
      %6354 = vmatpush1.bf16.msra.mxu0 %v5116
      %6355 = vmatprep.subr.bf16.mxu0 %v5121
      %6356 = vmatpush1.bf16.msra.mxu0 %v5120
      %6357 = vmatprep.subr.bf16.mxu0 %v5125
      %6358 = vmatpush1.bf16.msra.mxu0 %v5124
      %6359 = vmatprep.subr.bf16.mxu0 %v5129
      %6360 = vmatpush1.bf16.msra.mxu0 %v5128
      %6361 = vmatprep.mubr.bf16.mxu0 %v2541
      %6362 = vmatmul.mubr.bf16.gmra.mrb[0].mxu0 %v2540
      %v6363 = vpop.f32.mrb[0].mxu0
      %v6364 = vadd.f32 %v6251, %v6363
      %v6365 = vpop.f32.mrb[0].mxu0
      %v6366 = vadd.f32 %v6253, %v6365
      %v6367 = vpop.f32.mrb[0].mxu0
      %v6368 = vadd.f32 %v6255, %v6367
      %v6369 = vpop.f32.mrb[0].mxu0
      %v6370 = vadd.f32 %v6257, %v6369
      %6371 = vmatprep.mubr.bf16.mxu0 %v2558
      %6372 = vmatmul.mubr.bf16.gmra.mrb[0].mxu0 %v2557
      %v6373 = vpop.f32.mrb[0].mxu0
      %v6374 = vadd.f32 %v6261, %v6373
      %v6375 = vpop.f32.mrb[0].mxu0
      %v6376 = vadd.f32 %v6263, %v6375
      %v6377 = vpop.f32.mrb[0].mxu0
      %v6378 = vadd.f32 %v6265, %v6377
      %v6379 = vpop.f32.mrb[0].mxu0
      %v6380 = vadd.f32 %v6267, %v6379
      %6381 = vmatprep.mubr.bf16.mxu0 %v2575
      %6382 = vmatmul.mubr.bf16.gmra.mrb[0].mxu0 %v2574
      %v6383 = vpop.f32.mrb[0].mxu0
      %v6384 = vadd.f32 %v6271, %v6383
      %v6385 = vpop.f32.mrb[0].mxu0
      %v6386 = vadd.f32 %v6273, %v6385
      %v6387 = vpop.f32.mrb[0].mxu0
      %v6388 = vadd.f32 %v6275, %v6387
      %v6389 = vpop.f32.mrb[0].mxu0
      %v6390 = vadd.f32 %v6277, %v6389
      %6391 = vmatprep.mubr.bf16.mxu0 %v2592
      %6392 = vmatmul.mubr.bf16.gmra.mrb[0].mxu0 %v2591
      %v6393 = vpop.f32.mrb[0].mxu0
      %v6394 = vadd.f32 %v6281, %v6393
      %v6395 = vpop.f32.mrb[0].mxu0
      %v6396 = vadd.f32 %v6283, %v6395
      %v6397 = vpop.f32.mrb[0].mxu0
      %v6398 = vadd.f32 %v6285, %v6397
      %v6399 = vpop.f32.mrb[0].mxu0
      %v6400 = vadd.f32 %v6287, %v6399
      %6401 = vmatprep.mubr.bf16.mxu0 %v2609
      %6402 = vmatmul.mubr.bf16.gmra.mrb[0].mxu0 %v2608
      %v6403 = vpop.f32.mrb[0].mxu0
      %v6404 = vadd.f32 %v6291, %v6403
      %v6405 = vpop.f32.mrb[0].mxu0
      %v6406 = vadd.f32 %v6293, %v6405
      %v6407 = vpop.f32.mrb[0].mxu0
      %v6408 = vadd.f32 %v6295, %v6407
      %v6409 = vpop.f32.mrb[0].mxu0
      %v6410 = vadd.f32 %v6297, %v6409
      %6411 = vmatprep.mubr.bf16.mxu0 %v2626
      %6412 = vmatmul.mubr.bf16.gmra.mrb[0].mxu0 %v2625
      %v6413 = vpop.f32.mrb[0].mxu0
      %v6414 = vadd.f32 %v6301, %v6413
      %v6415 = vpop.f32.mrb[0].mxu0
      %v6416 = vadd.f32 %v6303, %v6415
      %v6417 = vpop.f32.mrb[0].mxu0
      %v6418 = vadd.f32 %v6305, %v6417
      %v6419 = vpop.f32.mrb[0].mxu0
      %v6420 = vadd.f32 %v6307, %v6419
      %6421 = vmatprep.mubr.bf16.mxu0 %v2643
      %6422 = vmatmul.mubr.bf16.gmra.mrb[0].mxu0 %v2642
      %v6423 = vpop.f32.mrb[0].mxu0
      %v6424 = vadd.f32 %v6311, %v6423
      %v6425 = vpop.f32.mrb[0].mxu0
      %v6426 = vadd.f32 %v6313, %v6425
      %v6427 = vpop.f32.mrb[0].mxu0
      %v6428 = vadd.f32 %v6315, %v6427
      %v6429 = vpop.f32.mrb[0].mxu0
      %v6430 = vadd.f32 %v6317, %v6429
      %6431 = vmatprep.mubr.bf16.mxu0 %v2660
      %6432 = vmatmul.mubr.bf16.gmra.mrb[0].mxu0 %v2659
      %v6433 = vpop.f32.mrb[0].mxu0
      %v6434 = vadd.f32 %v6321, %v6433
      %v6435 = vpop.f32.mrb[0].mxu0
      %v6436 = vadd.f32 %v6323, %v6435
      %v6437 = vpop.f32.mrb[0].mxu0
      %v6438 = vadd.f32 %v6325, %v6437
      %v6439 = vpop.f32.mrb[0].mxu0
      %v6440 = vadd.f32 %v6327, %v6439
      %6441 = vdwg.mxu0
      %6442 = vmatprep.subr.bf16.mxu0 %v5133
      %6443 = vmatpush1.bf16.msra.mxu0 %v5132
      %6444 = vmatprep.subr.bf16.mxu0 %v5137
      %6445 = vmatpush1.bf16.msra.mxu0 %v5136
      %6446 = vmatprep.subr.bf16.mxu0 %v5141
      %6447 = vmatpush1.bf16.msra.mxu0 %v5140
      %6448 = vmatprep.subr.bf16.mxu0 %v5145
      %6449 = vmatpush1.bf16.msra.mxu0 %v5144
      %6450 = vmatprep.subr.bf16.mxu0 %v5149
      %6451 = vmatpush1.bf16.msra.mxu0 %v5148
      %6452 = vmatprep.subr.bf16.mxu0 %v5153
      %6453 = vmatpush1.bf16.msra.mxu0 %v5152
      %6454 = vmatprep.subr.bf16.mxu0 %v5157
      %6455 = vmatpush1.bf16.msra.mxu0 %v5156
      %6456 = vmatprep.subr.bf16.mxu0 %v5161
      %6457 = vmatpush1.bf16.msra.mxu0 %v5160
      %6458 = vmatprep.subr.bf16.mxu0 %v5165
      %6459 = vmatpush1.bf16.msra.mxu0 %v5164
      %6460 = vmatprep.subr.bf16.mxu0 %v5169
      %6461 = vmatpush1.bf16.msra.mxu0 %v5168
      %6462 = vmatprep.subr.bf16.mxu0 %v5173
      %6463 = vmatpush1.bf16.msra.mxu0 %v5172
      %6464 = vmatprep.subr.bf16.mxu0 %v5177
      %6465 = vmatpush1.bf16.msra.mxu0 %v5176
      %6466 = vmatprep.subr.bf16.mxu0 %v5181
      %6467 = vmatpush1.bf16.msra.mxu0 %v5180
      %6468 = vmatprep.subr.bf16.mxu0 %v5185
      %6469 = vmatpush1.bf16.msra.mxu0 %v5184
      %6470 = vmatprep.subr.bf16.mxu0 %v5189
      %6471 = vmatpush1.bf16.msra.mxu0 %v5188
      %6472 = vmatprep.subr.bf16.mxu0 %v5193
      %6473 = vmatpush1.bf16.msra.mxu0 %v5192
      %6474 = vmatprep.mubr.bf16.mxu0 %v2543
      %6475 = vmatmul.mubr.bf16.gmra.mrb[0].mxu0 %v2542
      %v6476 = vpop.f32.mrb[0].mxu0
      %v6477 = vadd.f32 %v6364, %v6476
      %v6478 = vpop.f32.mrb[0].mxu0
      %v6479 = vadd.f32 %v6366, %v6478
      %v6480 = vpop.f32.mrb[0].mxu0
      %v6481 = vadd.f32 %v6368, %v6480
      %v6482 = vpop.f32.mrb[0].mxu0
      %v6483 = vadd.f32 %v6370, %v6482
      %6484 = vmatprep.mubr.bf16.mxu0 %v2560
      %6485 = vmatmul.mubr.bf16.gmra.mrb[0].mxu0 %v2559
      %v6486 = vpop.f32.mrb[0].mxu0
      %v6487 = vadd.f32 %v6374, %v6486
      %v6488 = vpop.f32.mrb[0].mxu0
      %v6489 = vadd.f32 %v6376, %v6488
      %v6490 = vpop.f32.mrb[0].mxu0
      %v6491 = vadd.f32 %v6378, %v6490
      %v6492 = vpop.f32.mrb[0].mxu0
      %v6493 = vadd.f32 %v6380, %v6492
      %6494 = vmatprep.mubr.bf16.mxu0 %v2577
      %6495 = vmatmul.mubr.bf16.gmra.mrb[0].mxu0 %v2576
      %v6496 = vpop.f32.mrb[0].mxu0
      %v6497 = vadd.f32 %v6384, %v6496
      %v6498 = vpop.f32.mrb[0].mxu0
      %v6499 = vadd.f32 %v6386, %v6498
      %v6500 = vpop.f32.mrb[0].mxu0
      %v6501 = vadd.f32 %v6388, %v6500
      %v6502 = vpop.f32.mrb[0].mxu0
      %v6503 = vadd.f32 %v6390, %v6502
      %6504 = vmatprep.mubr.bf16.mxu0 %v2594
      %6505 = vmatmul.mubr.bf16.gmra.mrb[0].mxu0 %v2593
      %v6506 = vpop.f32.mrb[0].mxu0
      %v6507 = vadd.f32 %v6394, %v6506
      %v6508 = vpop.f32.mrb[0].mxu0
      %v6509 = vadd.f32 %v6396, %v6508
      %v6510 = vpop.f32.mrb[0].mxu0
      %v6511 = vadd.f32 %v6398, %v6510
      %v6512 = vpop.f32.mrb[0].mxu0
      %v6513 = vadd.f32 %v6400, %v6512
      %6514 = vmatprep.mubr.bf16.mxu0 %v2611
      %6515 = vmatmul.mubr.bf16.gmra.mrb[0].mxu0 %v2610
      %v6516 = vpop.f32.mrb[0].mxu0
      %v6517 = vadd.f32 %v6404, %v6516
      %v6518 = vpop.f32.mrb[0].mxu0
      %v6519 = vadd.f32 %v6406, %v6518
      %v6520 = vpop.f32.mrb[0].mxu0
      %v6521 = vadd.f32 %v6408, %v6520
      %v6522 = vpop.f32.mrb[0].mxu0
      %v6523 = vadd.f32 %v6410, %v6522
      %6524 = vmatprep.mubr.bf16.mxu0 %v2628
      %6525 = vmatmul.mubr.bf16.gmra.mrb[0].mxu0 %v2627
      %v6526 = vpop.f32.mrb[0].mxu0
      %v6527 = vadd.f32 %v6414, %v6526
      %v6528 = vpop.f32.mrb[0].mxu0
      %v6529 = vadd.f32 %v6416, %v6528
      %v6530 = vpop.f32.mrb[0].mxu0
      %v6531 = vadd.f32 %v6418, %v6530
      %v6532 = vpop.f32.mrb[0].mxu0
      %v6533 = vadd.f32 %v6420, %v6532
      %6534 = vmatprep.mubr.bf16.mxu0 %v2645
      %6535 = vmatmul.mubr.bf16.gmra.mrb[0].mxu0 %v2644
      %v6536 = vpop.f32.mrb[0].mxu0
      %v6537 = vadd.f32 %v6424, %v6536
      %v6538 = vpop.f32.mrb[0].mxu0
      %v6539 = vadd.f32 %v6426, %v6538
      %v6540 = vpop.f32.mrb[0].mxu0
      %v6541 = vadd.f32 %v6428, %v6540
      %v6542 = vpop.f32.mrb[0].mxu0
      %v6543 = vadd.f32 %v6430, %v6542
      %6544 = vmatprep.mubr.bf16.mxu0 %v2662
      %6545 = vmatmul.mubr.bf16.gmra.mrb[0].mxu0 %v2661
      %v6546 = vpop.f32.mrb[0].mxu0
      %v6547 = vadd.f32 %v6434, %v6546
      %v6548 = vpop.f32.mrb[0].mxu0
      %v6549 = vadd.f32 %v6436, %v6548
      %v6550 = vpop.f32.mrb[0].mxu0
      %v6551 = vadd.f32 %v6438, %v6550
      %v6552 = vpop.f32.mrb[0].mxu0
      %v6553 = vadd.f32 %v6440, %v6552
      %6554 = vdwg.mxu0
      %6555 = vmatprep.subr.bf16.mxu0 %v5197
      %6556 = vmatpush1.bf16.msra.mxu0 %v5196
      %6557 = vmatprep.subr.bf16.mxu0 %v5201
      %6558 = vmatpush1.bf16.msra.mxu0 %v5200
      %6559 = vmatprep.subr.bf16.mxu0 %v5205
      %6560 = vmatpush1.bf16.msra.mxu0 %v5204
      %6561 = vmatprep.subr.bf16.mxu0 %v5209
      %6562 = vmatpush1.bf16.msra.mxu0 %v5208
      %6563 = vmatprep.subr.bf16.mxu0 %v5213
      %6564 = vmatpush1.bf16.msra.mxu0 %v5212
      %6565 = vmatprep.subr.bf16.mxu0 %v5217
      %6566 = vmatpush1.bf16.msra.mxu0 %v5216
      %6567 = vmatprep.subr.bf16.mxu0 %v5221
      %6568 = vmatpush1.bf16.msra.mxu0 %v5220
      %6569 = vmatprep.subr.bf16.mxu0 %v5225
      %6570 = vmatpush1.bf16.msra.mxu0 %v5224
      %6571 = vmatprep.subr.bf16.mxu0 %v5229
      %6572 = vmatpush1.bf16.msra.mxu0 %v5228
      %6573 = vmatprep.subr.bf16.mxu0 %v5233
      %6574 = vmatpush1.bf16.msra.mxu0 %v5232
      %6575 = vmatprep.subr.bf16.mxu0 %v5237
      %6576 = vmatpush1.bf16.msra.mxu0 %v5236
      %6577 = vmatprep.subr.bf16.mxu0 %v5241
      %6578 = vmatpush1.bf16.msra.mxu0 %v5240
      %6579 = vmatprep.subr.bf16.mxu0 %v5245
      %6580 = vmatpush1.bf16.msra.mxu0 %v5244
      %6581 = vmatprep.subr.bf16.mxu0 %v5249
      %6582 = vmatpush1.bf16.msra.mxu0 %v5248
      %6583 = vmatprep.subr.bf16.mxu0 %v5253
      %6584 = vmatpush1.bf16.msra.mxu0 %v5252
      %6585 = vmatprep.subr.bf16.mxu0 %v5257
      %6586 = vmatpush1.bf16.msra.mxu0 %v5256
      %6587 = vmatprep.mubr.bf16.mxu0 %v2545
      %6588 = vmatmul.mubr.bf16.gmra.mrb[0].mxu0 %v2544
      %v6589 = vpop.f32.mrb[0].mxu0
      %v6590 = vadd.f32 %v6477, %v6589
      %v6591 = vpop.f32.mrb[0].mxu0
      %v6592 = vadd.f32 %v6479, %v6591
      %v6593 = vpop.f32.mrb[0].mxu0
      %v6594 = vadd.f32 %v6481, %v6593
      %v6595 = vpop.f32.mrb[0].mxu0
      %v6596 = vadd.f32 %v6483, %v6595
      %6597 = vmatprep.mubr.bf16.mxu0 %v2562
      %6598 = vmatmul.mubr.bf16.gmra.mrb[0].mxu0 %v2561
      %v6599 = vpop.f32.mrb[0].mxu0
      %v6600 = vadd.f32 %v6487, %v6599
      %v6601 = vpop.f32.mrb[0].mxu0
      %v6602 = vadd.f32 %v6489, %v6601
      %v6603 = vpop.f32.mrb[0].mxu0
      %v6604 = vadd.f32 %v6491, %v6603
      %v6605 = vpop.f32.mrb[0].mxu0
      %v6606 = vadd.f32 %v6493, %v6605
      %6607 = vmatprep.mubr.bf16.mxu0 %v2579
      %6608 = vmatmul.mubr.bf16.gmra.mrb[0].mxu0 %v2578
      %v6609 = vpop.f32.mrb[0].mxu0
      %v6610 = vadd.f32 %v6497, %v6609
      %v6611 = vpop.f32.mrb[0].mxu0
      %v6612 = vadd.f32 %v6499, %v6611
      %v6613 = vpop.f32.mrb[0].mxu0
      %v6614 = vadd.f32 %v6501, %v6613
      %v6615 = vpop.f32.mrb[0].mxu0
      %v6616 = vadd.f32 %v6503, %v6615
      %6617 = vmatprep.mubr.bf16.mxu0 %v2596
      %6618 = vmatmul.mubr.bf16.gmra.mrb[0].mxu0 %v2595
      %v6619 = vpop.f32.mrb[0].mxu0
      %v6620 = vadd.f32 %v6507, %v6619
      %v6621 = vpop.f32.mrb[0].mxu0
      %v6622 = vadd.f32 %v6509, %v6621
      %v6623 = vpop.f32.mrb[0].mxu0
      %v6624 = vadd.f32 %v6511, %v6623
      %v6625 = vpop.f32.mrb[0].mxu0
      %v6626 = vadd.f32 %v6513, %v6625
      %6627 = vmatprep.mubr.bf16.mxu0 %v2613
      %6628 = vmatmul.mubr.bf16.gmra.mrb[0].mxu0 %v2612
      %v6629 = vpop.f32.mrb[0].mxu0
      %v6630 = vadd.f32 %v6517, %v6629
      %v6631 = vpop.f32.mrb[0].mxu0
      %v6632 = vadd.f32 %v6519, %v6631
      %v6633 = vpop.f32.mrb[0].mxu0
      %v6634 = vadd.f32 %v6521, %v6633
      %v6635 = vpop.f32.mrb[0].mxu0
      %v6636 = vadd.f32 %v6523, %v6635
      %6637 = vmatprep.mubr.bf16.mxu0 %v2630
      %6638 = vmatmul.mubr.bf16.gmra.mrb[0].mxu0 %v2629
      %v6639 = vpop.f32.mrb[0].mxu0
      %v6640 = vadd.f32 %v6527, %v6639
      %v6641 = vpop.f32.mrb[0].mxu0
      %v6642 = vadd.f32 %v6529, %v6641
      %v6643 = vpop.f32.mrb[0].mxu0
      %v6644 = vadd.f32 %v6531, %v6643
      %v6645 = vpop.f32.mrb[0].mxu0
      %v6646 = vadd.f32 %v6533, %v6645
      %6647 = vmatprep.mubr.bf16.mxu0 %v2647
      %6648 = vmatmul.mubr.bf16.gmra.mrb[0].mxu0 %v2646
      %v6649 = vpop.f32.mrb[0].mxu0
      %v6650 = vadd.f32 %v6537, %v6649
      %v6651 = vpop.f32.mrb[0].mxu0
      %v6652 = vadd.f32 %v6539, %v6651
      %v6653 = vpop.f32.mrb[0].mxu0
      %v6654 = vadd.f32 %v6541, %v6653
      %v6655 = vpop.f32.mrb[0].mxu0
      %v6656 = vadd.f32 %v6543, %v6655
      %6657 = vmatprep.mubr.bf16.mxu0 %v2664
      %6658 = vmatmul.mubr.bf16.gmra.mrb[0].mxu0 %v2663
      %v6659 = vpop.f32.mrb[0].mxu0
      %v6660 = vadd.f32 %v6547, %v6659
      %v6661 = vpop.f32.mrb[0].mxu0
      %v6662 = vadd.f32 %v6549, %v6661
      %v6663 = vpop.f32.mrb[0].mxu0
      %v6664 = vadd.f32 %v6551, %v6663
      %v6665 = vpop.f32.mrb[0].mxu0
      %v6666 = vadd.f32 %v6553, %v6665
      %6667 = vdwg.mxu0
      %6668 = vmatprep.subr.bf16.mxu0 %v5261
      %6669 = vmatpush1.bf16.msra.mxu0 %v5260
      %6670 = vmatprep.subr.bf16.mxu0 %v5265
      %6671 = vmatpush1.bf16.msra.mxu0 %v5264
      %6672 = vmatprep.subr.bf16.mxu0 %v5269
      %6673 = vmatpush1.bf16.msra.mxu0 %v5268
      %6674 = vmatprep.subr.bf16.mxu0 %v5273
      %6675 = vmatpush1.bf16.msra.mxu0 %v5272
      %6676 = vmatprep.subr.bf16.mxu0 %v5277
      %6677 = vmatpush1.bf16.msra.mxu0 %v5276
      %6678 = vmatprep.subr.bf16.mxu0 %v5281
      %6679 = vmatpush1.bf16.msra.mxu0 %v5280
      %6680 = vmatprep.subr.bf16.mxu0 %v5285
      %6681 = vmatpush1.bf16.msra.mxu0 %v5284
      %6682 = vmatprep.subr.bf16.mxu0 %v5289
      %6683 = vmatpush1.bf16.msra.mxu0 %v5288
      %6684 = vmatprep.subr.bf16.mxu0 %v5293
      %6685 = vmatpush1.bf16.msra.mxu0 %v5292
      %6686 = vmatprep.subr.bf16.mxu0 %v5297
      %6687 = vmatpush1.bf16.msra.mxu0 %v5296
      %6688 = vmatprep.subr.bf16.mxu0 %v5301
      %6689 = vmatpush1.bf16.msra.mxu0 %v5300
      %6690 = vmatprep.subr.bf16.mxu0 %v5305
      %6691 = vmatpush1.bf16.msra.mxu0 %v5304
      %6692 = vmatprep.subr.bf16.mxu0 %v5309
      %6693 = vmatpush1.bf16.msra.mxu0 %v5308
      %6694 = vmatprep.subr.bf16.mxu0 %v5313
      %6695 = vmatpush1.bf16.msra.mxu0 %v5312
      %6696 = vmatprep.subr.bf16.mxu0 %v5317
      %6697 = vmatpush1.bf16.msra.mxu0 %v5316
      %6698 = vmatprep.subr.bf16.mxu0 %v5321
      %6699 = vmatpush1.bf16.msra.mxu0 %v5320
      %6700 = vmatprep.mubr.bf16.mxu0 %v2547
      %6701 = vmatmul.mubr.bf16.gmra.mrb[0].mxu0 %v2546
      %v6702 = vpop.f32.mrb[0].mxu0
      %v6703 = vadd.f32 %v6590, %v6702
      %v6704 = vpop.f32.mrb[0].mxu0
      %v6705 = vadd.f32 %v6592, %v6704
      %v6706 = vpop.f32.mrb[0].mxu0
      %v6707 = vadd.f32 %v6594, %v6706
      %v6708 = vpop.f32.mrb[0].mxu0
      %v6709 = vadd.f32 %v6596, %v6708
      %6710 = vmatprep.mubr.bf16.mxu0 %v2564
      %6711 = vmatmul.mubr.bf16.gmra.mrb[0].mxu0 %v2563
      %v6712 = vpop.f32.mrb[0].mxu0
      %v6713 = vadd.f32 %v6600, %v6712
      %v6714 = vpop.f32.mrb[0].mxu0
      %v6715 = vadd.f32 %v6602, %v6714
      %v6716 = vpop.f32.mrb[0].mxu0
      %v6717 = vadd.f32 %v6604, %v6716
      %v6718 = vpop.f32.mrb[0].mxu0
      %v6719 = vadd.f32 %v6606, %v6718
      %6720 = vmatprep.mubr.bf16.mxu0 %v2581
      %6721 = vmatmul.mubr.bf16.gmra.mrb[0].mxu0 %v2580
      %v6722 = vpop.f32.mrb[0].mxu0
      %v6723 = vadd.f32 %v6610, %v6722
      %v6724 = vpop.f32.mrb[0].mxu0
      %v6725 = vadd.f32 %v6612, %v6724
      %v6726 = vpop.f32.mrb[0].mxu0
      %v6727 = vadd.f32 %v6614, %v6726
      %v6728 = vpop.f32.mrb[0].mxu0
      %v6729 = vadd.f32 %v6616, %v6728
      %6730 = vmatprep.mubr.bf16.mxu0 %v2598
      %6731 = vmatmul.mubr.bf16.gmra.mrb[0].mxu0 %v2597
      %v6732 = vpop.f32.mrb[0].mxu0
      %v6733 = vadd.f32 %v6620, %v6732
      %v6734 = vpop.f32.mrb[0].mxu0
      %v6735 = vadd.f32 %v6622, %v6734
      %v6736 = vpop.f32.mrb[0].mxu0
      %v6737 = vadd.f32 %v6624, %v6736
      %v6738 = vpop.f32.mrb[0].mxu0
      %v6739 = vadd.f32 %v6626, %v6738
      %6740 = vmatprep.mubr.bf16.mxu0 %v2615
      %6741 = vmatmul.mubr.bf16.gmra.mrb[0].mxu0 %v2614
      %v6742 = vpop.f32.mrb[0].mxu0
      %v6743 = vadd.f32 %v6630, %v6742
      %v6744 = vpop.f32.mrb[0].mxu0
      %v6745 = vadd.f32 %v6632, %v6744
      %v6746 = vpop.f32.mrb[0].mxu0
      %v6747 = vadd.f32 %v6634, %v6746
      %v6748 = vpop.f32.mrb[0].mxu0
      %v6749 = vadd.f32 %v6636, %v6748
      %6750 = vmatprep.mubr.bf16.mxu0 %v2632
      %6751 = vmatmul.mubr.bf16.gmra.mrb[0].mxu0 %v2631
      %v6752 = vpop.f32.mrb[0].mxu0
      %v6753 = vadd.f32 %v6640, %v6752
      %v6754 = vpop.f32.mrb[0].mxu0
      %v6755 = vadd.f32 %v6642, %v6754
      %v6756 = vpop.f32.mrb[0].mxu0
      %v6757 = vadd.f32 %v6644, %v6756
      %v6758 = vpop.f32.mrb[0].mxu0
      %v6759 = vadd.f32 %v6646, %v6758
      %6760 = vmatprep.mubr.bf16.mxu0 %v2649
      %6761 = vmatmul.mubr.bf16.gmra.mrb[0].mxu0 %v2648
      %v6762 = vpop.f32.mrb[0].mxu0
      %v6763 = vadd.f32 %v6650, %v6762
      %v6764 = vpop.f32.mrb[0].mxu0
      %v6765 = vadd.f32 %v6652, %v6764
      %v6766 = vpop.f32.mrb[0].mxu0
      %v6767 = vadd.f32 %v6654, %v6766
      %v6768 = vpop.f32.mrb[0].mxu0
      %v6769 = vadd.f32 %v6656, %v6768
      %6770 = vmatprep.mubr.bf16.mxu0 %v2666
      %6771 = vmatmul.mubr.bf16.gmra.mrb[0].mxu0 %v2665
      %v6772 = vpop.f32.mrb[0].mxu0
      %v6773 = vadd.f32 %v6660, %v6772
      %v6774 = vpop.f32.mrb[0].mxu0
      %v6775 = vadd.f32 %v6662, %v6774
      %v6776 = vpop.f32.mrb[0].mxu0
      %v6777 = vadd.f32 %v6664, %v6776
      %v6778 = vpop.f32.mrb[0].mxu0
      %v6779 = vadd.f32 %v6666, %v6778
      %6780 = vdwg.mxu0
      %6781 = vmatprep.subr.bf16.mxu0 %v5325
      %6782 = vmatpush1.bf16.msra.mxu0 %v5324
      %6783 = vmatprep.subr.bf16.mxu0 %v5329
      %6784 = vmatpush1.bf16.msra.mxu0 %v5328
      %6785 = vmatprep.subr.bf16.mxu0 0
      %6786 = vmatpush1.bf16.msra.mxu0 0
      %6787 = vmatprep.subr.bf16.mxu0 0
      %6788 = vmatpush1.bf16.msra.mxu0 0
      %6789 = vmatprep.subr.bf16.mxu0 0
      %6790 = vmatpush1.bf16.msra.mxu0 0
      %6791 = vmatprep.subr.bf16.mxu0 0
      %6792 = vmatpush1.bf16.msra.mxu0 0
      %6793 = vmatprep.subr.bf16.mxu0 0
      %6794 = vmatpush1.bf16.msra.mxu0 0
      %6795 = vmatprep.subr.bf16.mxu0 0
      %6796 = vmatpush1.bf16.msra.mxu0 0
      %6797 = vmatprep.subr.bf16.mxu0 0
      %6798 = vmatpush1.bf16.msra.mxu0 0
      %6799 = vmatprep.subr.bf16.mxu0 0
      %6800 = vmatpush1.bf16.msra.mxu0 0
      %6801 = vmatprep.subr.bf16.mxu0 0
      %6802 = vmatpush1.bf16.msra.mxu0 0
      %6803 = vmatprep.subr.bf16.mxu0 0
      %6804 = vmatpush1.bf16.msra.mxu0 0
      %6805 = vmatprep.subr.bf16.mxu0 0
      %6806 = vmatpush1.bf16.msra.mxu0 0
      %6807 = vmatprep.subr.bf16.mxu0 0
      %6808 = vmatpush1.bf16.msra.mxu0 0
      %6809 = vmatprep.subr.bf16.mxu0 0
      %6810 = vmatpush1.bf16.msra.mxu0 0
      %6811 = vmatprep.subr.bf16.mxu0 0
      %6812 = vmatpush1.bf16.msra.mxu0 0
      %6813 = vmatprep.mubr.bf16.mxu0 0
      %6814 = vmatmul.mubr.bf16.gmra.mrb[0].mxu0 %v5854
      %v6815 = vpop.f32.mrb[0].mxu0
      %v6816 = vadd.f32 %v6703, %v6815
      %v6817 = vpop.f32.mrb[0].mxu0
      %v6818 = vadd.f32 %v6705, %v6817
      %v6819 = vpop.f32.mrb[0].mxu0
      %v6820 = vadd.f32 %v6707, %v6819
      %v6821 = vpop.f32.mrb[0].mxu0
      %v6822 = vadd.f32 %v6709, %v6821
      %6823 = vmatprep.mubr.bf16.mxu0 0
      %6824 = vmatmul.mubr.bf16.gmra.mrb[0].mxu0 %v5857
      %v6825 = vpop.f32.mrb[0].mxu0
      %v6826 = vadd.f32 %v6713, %v6825
      %v6827 = vpop.f32.mrb[0].mxu0
      %v6828 = vadd.f32 %v6715, %v6827
      %v6829 = vpop.f32.mrb[0].mxu0
      %v6830 = vadd.f32 %v6717, %v6829
      %v6831 = vpop.f32.mrb[0].mxu0
      %v6832 = vadd.f32 %v6719, %v6831
      %6833 = vmatprep.mubr.bf16.mxu0 0
      %6834 = vmatmul.mubr.bf16.gmra.mrb[0].mxu0 %v5860
      %v6835 = vpop.f32.mrb[0].mxu0
      %v6836 = vadd.f32 %v6723, %v6835
      %v6837 = vpop.f32.mrb[0].mxu0
      %v6838 = vadd.f32 %v6725, %v6837
      %v6839 = vpop.f32.mrb[0].mxu0
      %v6840 = vadd.f32 %v6727, %v6839
      %v6841 = vpop.f32.mrb[0].mxu0
      %v6842 = vadd.f32 %v6729, %v6841
      %6843 = vmatprep.mubr.bf16.mxu0 0
      %6844 = vmatmul.mubr.bf16.gmra.mrb[0].mxu0 %v5863
      %v6845 = vpop.f32.mrb[0].mxu0
      %v6846 = vadd.f32 %v6733, %v6845
      %v6847 = vpop.f32.mrb[0].mxu0
      %v6848 = vadd.f32 %v6735, %v6847
      %v6849 = vpop.f32.mrb[0].mxu0
      %v6850 = vadd.f32 %v6737, %v6849
      %v6851 = vpop.f32.mrb[0].mxu0
      %v6852 = vadd.f32 %v6739, %v6851
      %6853 = vmatprep.mubr.bf16.mxu0 0
      %6854 = vmatmul.mubr.bf16.gmra.mrb[0].mxu0 %v5866
      %v6855 = vpop.f32.mrb[0].mxu0
      %v6856 = vadd.f32 %v6743, %v6855
      %v6857 = vpop.f32.mrb[0].mxu0
      %v6858 = vadd.f32 %v6745, %v6857
      %v6859 = vpop.f32.mrb[0].mxu0
      %v6860 = vadd.f32 %v6747, %v6859
      %v6861 = vpop.f32.mrb[0].mxu0
      %v6862 = vadd.f32 %v6749, %v6861
      %6863 = vmatprep.mubr.bf16.mxu0 0
      %6864 = vmatmul.mubr.bf16.gmra.mrb[0].mxu0 %v5869
      %v6865 = vpop.f32.mrb[0].mxu0
      %v6866 = vadd.f32 %v6753, %v6865
      %v6867 = vpop.f32.mrb[0].mxu0
      %v6868 = vadd.f32 %v6755, %v6867
      %v6869 = vpop.f32.mrb[0].mxu0
      %v6870 = vadd.f32 %v6757, %v6869
      %v6871 = vpop.f32.mrb[0].mxu0
      %v6872 = vadd.f32 %v6759, %v6871
      %6873 = vmatprep.mubr.bf16.mxu0 0
      %6874 = vmatmul.mubr.bf16.gmra.mrb[0].mxu0 %v5872
      %v6875 = vpop.f32.mrb[0].mxu0
      %v6876 = vadd.f32 %v6763, %v6875
      %v6877 = vpop.f32.mrb[0].mxu0
      %v6878 = vadd.f32 %v6765, %v6877
      %v6879 = vpop.f32.mrb[0].mxu0
      %v6880 = vadd.f32 %v6767, %v6879
      %v6881 = vpop.f32.mrb[0].mxu0
      %v6882 = vadd.f32 %v6769, %v6881
      %6883 = vmatprep.mubr.bf16.mxu0 0
      %6884 = vmatmul.mubr.bf16.gmra.mrb[0].mxu0 %v5875
      %v6885 = vpop.f32.mrb[0].mxu0
      %v6886 = vadd.f32 %v6773, %v6885
      %v6887 = vpop.f32.mrb[0].mxu0
      %v6888 = vadd.f32 %v6775, %v6887
      %v6889 = vpop.f32.mrb[0].mxu0
      %v6890 = vadd.f32 %v6777, %v6889
      %v6891 = vpop.f32.mrb[0].mxu0
      %v6892 = vadd.f32 %v6779, %v6891
      %6893 = vdwg.mxu0
      %6894 = vmatprep.subr.bf16.mxu0 %v4815
      %6895 = vmatpush1.bf16.msra.mxu0 %v4814
      %6896 = vmatprep.subr.bf16.mxu0 %v4819
      %6897 = vmatpush1.bf16.msra.mxu0 %v4818
      %6898 = vmatprep.subr.bf16.mxu0 %v4823
      %6899 = vmatpush1.bf16.msra.mxu0 %v4822
      %6900 = vmatprep.subr.bf16.mxu0 %v4827
      %6901 = vmatpush1.bf16.msra.mxu0 %v4826
      %6902 = vmatprep.subr.bf16.mxu0 %v4831
      %6903 = vmatpush1.bf16.msra.mxu0 %v4830
      %6904 = vmatprep.subr.bf16.mxu0 %v4835
      %6905 = vmatpush1.bf16.msra.mxu0 %v4834
      %6906 = vmatprep.subr.bf16.mxu0 %v4839
      %6907 = vmatpush1.bf16.msra.mxu0 %v4838
      %6908 = vmatprep.subr.bf16.mxu0 %v4843
      %6909 = vmatpush1.bf16.msra.mxu0 %v4842
      %6910 = vmatprep.subr.bf16.mxu0 %v4847
      %6911 = vmatpush1.bf16.msra.mxu0 %v4846
      %6912 = vmatprep.subr.bf16.mxu0 %v4851
      %6913 = vmatpush1.bf16.msra.mxu0 %v4850
      %6914 = vmatprep.subr.bf16.mxu0 %v4855
      %6915 = vmatpush1.bf16.msra.mxu0 %v4854
      %6916 = vmatprep.subr.bf16.mxu0 %v4859
      %6917 = vmatpush1.bf16.msra.mxu0 %v4858
      %6918 = vmatprep.subr.bf16.mxu0 %v4863
      %6919 = vmatpush1.bf16.msra.mxu0 %v4862
      %6920 = vmatprep.subr.bf16.mxu0 %v4867
      %6921 = vmatpush1.bf16.msra.mxu0 %v4866
      %6922 = vmatprep.subr.bf16.mxu0 %v4871
      %6923 = vmatpush1.bf16.msra.mxu0 %v4870
      %6924 = vmatprep.subr.bf16.mxu0 %v4875
      %6925 = vmatpush1.bf16.msra.mxu0 %v4874
      %6926 = vmatprep.mubr.bf16.mxu0 %v2533
      %6927 = vmatmul.mubr.bf16.gmra.mrb[0].mxu0 %v2532
      %v6928 = vpop.f32.mrb[0].mxu0
      %v6929 = vadd.f32 0.0, %v6928
      %v6930 = vpop.f32.mrb[0].mxu0
      %v6931 = vadd.f32 0.0, %v6930
      %v6932 = vpop.f32.mrb[0].mxu0
      %v6933 = vadd.f32 0.0, %v6932
      %v6934 = vpop.f32.mrb[0].mxu0
      %v6935 = vadd.f32 0.0, %v6934
      %6936 = vmatprep.mubr.bf16.mxu0 %v2550
      %6937 = vmatmul.mubr.bf16.gmra.mrb[0].mxu0 %v2549
      %v6938 = vpop.f32.mrb[0].mxu0
      %v6939 = vadd.f32 0.0, %v6938
      %v6940 = vpop.f32.mrb[0].mxu0
      %v6941 = vadd.f32 0.0, %v6940
      %v6942 = vpop.f32.mrb[0].mxu0
      %v6943 = vadd.f32 0.0, %v6942
      %v6944 = vpop.f32.mrb[0].mxu0
      %v6945 = vadd.f32 0.0, %v6944
      %6946 = vmatprep.mubr.bf16.mxu0 %v2567
      %6947 = vmatmul.mubr.bf16.gmra.mrb[0].mxu0 %v2566
      %v6948 = vpop.f32.mrb[0].mxu0
      %v6949 = vadd.f32 0.0, %v6948
      %v6950 = vpop.f32.mrb[0].mxu0
      %v6951 = vadd.f32 0.0, %v6950
      %v6952 = vpop.f32.mrb[0].mxu0
      %v6953 = vadd.f32 0.0, %v6952
      %v6954 = vpop.f32.mrb[0].mxu0
      %v6955 = vadd.f32 0.0, %v6954
      %6956 = vmatprep.mubr.bf16.mxu0 %v2584
      %6957 = vmatmul.mubr.bf16.gmra.mrb[0].mxu0 %v2583
      %v6958 = vpop.f32.mrb[0].mxu0
      %v6959 = vadd.f32 0.0, %v6958
      %v6960 = vpop.f32.mrb[0].mxu0
      %v6961 = vadd.f32 0.0, %v6960
      %v6962 = vpop.f32.mrb[0].mxu0
      %v6963 = vadd.f32 0.0, %v6962
      %v6964 = vpop.f32.mrb[0].mxu0
      %v6965 = vadd.f32 0.0, %v6964
      %6966 = vmatprep.mubr.bf16.mxu0 %v2601
      %6967 = vmatmul.mubr.bf16.gmra.mrb[0].mxu0 %v2600
      %v6968 = vpop.f32.mrb[0].mxu0
      %v6969 = vadd.f32 0.0, %v6968
      %v6970 = vpop.f32.mrb[0].mxu0
      %v6971 = vadd.f32 0.0, %v6970
      %v6972 = vpop.f32.mrb[0].mxu0
      %v6973 = vadd.f32 0.0, %v6972
      %v6974 = vpop.f32.mrb[0].mxu0
      %v6975 = vadd.f32 0.0, %v6974
      %6976 = vmatprep.mubr.bf16.mxu0 %v2618
      %6977 = vmatmul.mubr.bf16.gmra.mrb[0].mxu0 %v2617
      %v6978 = vpop.f32.mrb[0].mxu0
      %v6979 = vadd.f32 0.0, %v6978
      %v6980 = vpop.f32.mrb[0].mxu0
      %v6981 = vadd.f32 0.0, %v6980
      %v6982 = vpop.f32.mrb[0].mxu0
      %v6983 = vadd.f32 0.0, %v6982
      %v6984 = vpop.f32.mrb[0].mxu0
      %v6985 = vadd.f32 0.0, %v6984
      %6986 = vmatprep.mubr.bf16.mxu0 %v2635
      %6987 = vmatmul.mubr.bf16.gmra.mrb[0].mxu0 %v2634
      %v6988 = vpop.f32.mrb[0].mxu0
      %v6989 = vadd.f32 0.0, %v6988
      %v6990 = vpop.f32.mrb[0].mxu0
      %v6991 = vadd.f32 0.0, %v6990
      %v6992 = vpop.f32.mrb[0].mxu0
      %v6993 = vadd.f32 0.0, %v6992
      %v6994 = vpop.f32.mrb[0].mxu0
      %v6995 = vadd.f32 0.0, %v6994
      %6996 = vmatprep.mubr.bf16.mxu0 %v2652
      %6997 = vmatmul.mubr.bf16.gmra.mrb[0].mxu0 %v2651
      %v6998 = vpop.f32.mrb[0].mxu0
      %v6999 = vadd.f32 0.0, %v6998
      %v7000 = vpop.f32.mrb[0].mxu0
      %v7001 = vadd.f32 0.0, %v7000
      %v7002 = vpop.f32.mrb[0].mxu0
      %v7003 = vadd.f32 0.0, %v7002
      %v7004 = vpop.f32.mrb[0].mxu0
      %v7005 = vadd.f32 0.0, %v7004
      %7006 = vdwg.mxu0
      %7007 = vmatprep.subr.bf16.mxu0 %v4879
      %7008 = vmatpush1.bf16.msra.mxu0 %v4878
      %7009 = vmatprep.subr.bf16.mxu0 %v4883
      %7010 = vmatpush1.bf16.msra.mxu0 %v4882
      %7011 = vmatprep.subr.bf16.mxu0 %v4887
      %7012 = vmatpush1.bf16.msra.mxu0 %v4886
      %7013 = vmatprep.subr.bf16.mxu0 %v4891
      %7014 = vmatpush1.bf16.msra.mxu0 %v4890
      %7015 = vmatprep.subr.bf16.mxu0 %v4895
      %7016 = vmatpush1.bf16.msra.mxu0 %v4894
      %7017 = vmatprep.subr.bf16.mxu0 %v4899
      %7018 = vmatpush1.bf16.msra.mxu0 %v4898
      %7019 = vmatprep.subr.bf16.mxu0 %v4903
      %7020 = vmatpush1.bf16.msra.mxu0 %v4902
      %7021 = vmatprep.subr.bf16.mxu0 %v4907
      %7022 = vmatpush1.bf16.msra.mxu0 %v4906
      %7023 = vmatprep.subr.bf16.mxu0 %v4911
      %7024 = vmatpush1.bf16.msra.mxu0 %v4910
      %7025 = vmatprep.subr.bf16.mxu0 %v4915
      %7026 = vmatpush1.bf16.msra.mxu0 %v4914
      %7027 = vmatprep.subr.bf16.mxu0 %v4919
      %7028 = vmatpush1.bf16.msra.mxu0 %v4918
      %7029 = vmatprep.subr.bf16.mxu0 %v4923
      %7030 = vmatpush1.bf16.msra.mxu0 %v4922
      %7031 = vmatprep.subr.bf16.mxu0 %v4927
      %7032 = vmatpush1.bf16.msra.mxu0 %v4926
      %7033 = vmatprep.subr.bf16.mxu0 %v4931
      %7034 = vmatpush1.bf16.msra.mxu0 %v4930
      %7035 = vmatprep.subr.bf16.mxu0 %v4935
      %7036 = vmatpush1.bf16.msra.mxu0 %v4934
      %7037 = vmatprep.subr.bf16.mxu0 %v4939
      %7038 = vmatpush1.bf16.msra.mxu0 %v4938
      %7039 = vmatprep.mubr.bf16.mxu0 %v2535
      %7040 = vmatmul.mubr.bf16.gmra.mrb[0].mxu0 %v2534
      %v7041 = vpop.f32.mrb[0].mxu0
      %v7042 = vadd.f32 %v6929, %v7041
      %v7043 = vpop.f32.mrb[0].mxu0
      %v7044 = vadd.f32 %v6931, %v7043
      %v7045 = vpop.f32.mrb[0].mxu0
      %v7046 = vadd.f32 %v6933, %v7045
      %v7047 = vpop.f32.mrb[0].mxu0
      %v7048 = vadd.f32 %v6935, %v7047
      %7049 = vmatprep.mubr.bf16.mxu0 %v2552
      %7050 = vmatmul.mubr.bf16.gmra.mrb[0].mxu0 %v2551
      %v7051 = vpop.f32.mrb[0].mxu0
      %v7052 = vadd.f32 %v6939, %v7051
      %v7053 = vpop.f32.mrb[0].mxu0
      %v7054 = vadd.f32 %v6941, %v7053
      %v7055 = vpop.f32.mrb[0].mxu0
      %v7056 = vadd.f32 %v6943, %v7055
      %v7057 = vpop.f32.mrb[0].mxu0
      %v7058 = vadd.f32 %v6945, %v7057
      %7059 = vmatprep.mubr.bf16.mxu0 %v2569
      %7060 = vmatmul.mubr.bf16.gmra.mrb[0].mxu0 %v2568
      %v7061 = vpop.f32.mrb[0].mxu0
      %v7062 = vadd.f32 %v6949, %v7061
      %v7063 = vpop.f32.mrb[0].mxu0
      %v7064 = vadd.f32 %v6951, %v7063
      %v7065 = vpop.f32.mrb[0].mxu0
      %v7066 = vadd.f32 %v6953, %v7065
      %v7067 = vpop.f32.mrb[0].mxu0
      %v7068 = vadd.f32 %v6955, %v7067
      %7069 = vmatprep.mubr.bf16.mxu0 %v2586
      %7070 = vmatmul.mubr.bf16.gmra.mrb[0].mxu0 %v2585
      %v7071 = vpop.f32.mrb[0].mxu0
      %v7072 = vadd.f32 %v6959, %v7071
      %v7073 = vpop.f32.mrb[0].mxu0
      %v7074 = vadd.f32 %v6961, %v7073
      %v7075 = vpop.f32.mrb[0].mxu0
      %v7076 = vadd.f32 %v6963, %v7075
      %v7077 = vpop.f32.mrb[0].mxu0
      %v7078 = vadd.f32 %v6965, %v7077
      %7079 = vmatprep.mubr.bf16.mxu0 %v2603
      %7080 = vmatmul.mubr.bf16.gmra.mrb[0].mxu0 %v2602
      %v7081 = vpop.f32.mrb[0].mxu0
      %v7082 = vadd.f32 %v6969, %v7081
      %v7083 = vpop.f32.mrb[0].mxu0
      %v7084 = vadd.f32 %v6971, %v7083
      %v7085 = vpop.f32.mrb[0].mxu0
      %v7086 = vadd.f32 %v6973, %v7085
      %v7087 = vpop.f32.mrb[0].mxu0
      %v7088 = vadd.f32 %v6975, %v7087
      %7089 = vmatprep.mubr.bf16.mxu0 %v2620
      %7090 = vmatmul.mubr.bf16.gmra.mrb[0].mxu0 %v2619
      %v7091 = vpop.f32.mrb[0].mxu0
      %v7092 = vadd.f32 %v6979, %v7091
      %v7093 = vpop.f32.mrb[0].mxu0
      %v7094 = vadd.f32 %v6981, %v7093
      %v7095 = vpop.f32.mrb[0].mxu0
      %v7096 = vadd.f32 %v6983, %v7095
      %v7097 = vpop.f32.mrb[0].mxu0
      %v7098 = vadd.f32 %v6985, %v7097
      %7099 = vmatprep.mubr.bf16.mxu0 %v2637
      %7100 = vmatmul.mubr.bf16.gmra.mrb[0].mxu0 %v2636
      %v7101 = vpop.f32.mrb[0].mxu0
      %v7102 = vadd.f32 %v6989, %v7101
      %v7103 = vpop.f32.mrb[0].mxu0
      %v7104 = vadd.f32 %v6991, %v7103
      %v7105 = vpop.f32.mrb[0].mxu0
      %v7106 = vadd.f32 %v6993, %v7105
      %v7107 = vpop.f32.mrb[0].mxu0
      %v7108 = vadd.f32 %v6995, %v7107
      %7109 = vmatprep.mubr.bf16.mxu0 %v2654
      %7110 = vmatmul.mubr.bf16.gmra.mrb[0].mxu0 %v2653
      %v7111 = vpop.f32.mrb[0].mxu0
      %v7112 = vadd.f32 %v6999, %v7111
      %v7113 = vpop.f32.mrb[0].mxu0
      %v7114 = vadd.f32 %v7001, %v7113
      %v7115 = vpop.f32.mrb[0].mxu0
      %v7116 = vadd.f32 %v7003, %v7115
      %v7117 = vpop.f32.mrb[0].mxu0
      %v7118 = vadd.f32 %v7005, %v7117
      %7119 = vdwg.mxu0
      %7120 = vmatprep.subr.bf16.mxu0 %v4943
      %7121 = vmatpush1.bf16.msra.mxu0 %v4942
      %7122 = vmatprep.subr.bf16.mxu0 %v4947
      %7123 = vmatpush1.bf16.msra.mxu0 %v4946
      %7124 = vmatprep.subr.bf16.mxu0 %v4951
      %7125 = vmatpush1.bf16.msra.mxu0 %v4950
      %7126 = vmatprep.subr.bf16.mxu0 %v4955
      %7127 = vmatpush1.bf16.msra.mxu0 %v4954
      %7128 = vmatprep.subr.bf16.mxu0 %v4959
      %7129 = vmatpush1.bf16.msra.mxu0 %v4958
      %7130 = vmatprep.subr.bf16.mxu0 %v4963
      %7131 = vmatpush1.bf16.msra.mxu0 %v4962
      %7132 = vmatprep.subr.bf16.mxu0 %v4967
      %7133 = vmatpush1.bf16.msra.mxu0 %v4966
      %7134 = vmatprep.subr.bf16.mxu0 %v4971
      %7135 = vmatpush1.bf16.msra.mxu0 %v4970
      %7136 = vmatprep.subr.bf16.mxu0 %v4975
      %7137 = vmatpush1.bf16.msra.mxu0 %v4974
      %7138 = vmatprep.subr.bf16.mxu0 %v4979
      %7139 = vmatpush1.bf16.msra.mxu0 %v4978
      %7140 = vmatprep.subr.bf16.mxu0 %v4983
      %7141 = vmatpush1.bf16.msra.mxu0 %v4982
      %7142 = vmatprep.subr.bf16.mxu0 %v4987
      %7143 = vmatpush1.bf16.msra.mxu0 %v4986
      %7144 = vmatprep.subr.bf16.mxu0 %v4991
      %7145 = vmatpush1.bf16.msra.mxu0 %v4990
      %7146 = vmatprep.subr.bf16.mxu0 %v4995
      %7147 = vmatpush1.bf16.msra.mxu0 %v4994
      %7148 = vmatprep.subr.bf16.mxu0 %v4999
      %7149 = vmatpush1.bf16.msra.mxu0 %v4998
      %7150 = vmatprep.subr.bf16.mxu0 %v5003
      %7151 = vmatpush1.bf16.msra.mxu0 %v5002
      %7152 = vmatprep.mubr.bf16.mxu0 %v2537
      %7153 = vmatmul.mubr.bf16.gmra.mrb[0].mxu0 %v2536
      %v7154 = vpop.f32.mrb[0].mxu0
      %v7155 = vadd.f32 %v7042, %v7154
      %v7156 = vpop.f32.mrb[0].mxu0
      %v7157 = vadd.f32 %v7044, %v7156
      %v7158 = vpop.f32.mrb[0].mxu0
      %v7159 = vadd.f32 %v7046, %v7158
      %v7160 = vpop.f32.mrb[0].mxu0
      %v7161 = vadd.f32 %v7048, %v7160
      %7162 = vmatprep.mubr.bf16.mxu0 %v2554
      %7163 = vmatmul.mubr.bf16.gmra.mrb[0].mxu0 %v2553
      %v7164 = vpop.f32.mrb[0].mxu0
      %v7165 = vadd.f32 %v7052, %v7164
      %v7166 = vpop.f32.mrb[0].mxu0
      %v7167 = vadd.f32 %v7054, %v7166
      %v7168 = vpop.f32.mrb[0].mxu0
      %v7169 = vadd.f32 %v7056, %v7168
      %v7170 = vpop.f32.mrb[0].mxu0
      %v7171 = vadd.f32 %v7058, %v7170
      %7172 = vmatprep.mubr.bf16.mxu0 %v2571
      %7173 = vmatmul.mubr.bf16.gmra.mrb[0].mxu0 %v2570
      %v7174 = vpop.f32.mrb[0].mxu0
      %v7175 = vadd.f32 %v7062, %v7174
      %v7176 = vpop.f32.mrb[0].mxu0
      %v7177 = vadd.f32 %v7064, %v7176
      %v7178 = vpop.f32.mrb[0].mxu0
      %v7179 = vadd.f32 %v7066, %v7178
      %v7180 = vpop.f32.mrb[0].mxu0
      %v7181 = vadd.f32 %v7068, %v7180
      %7182 = vmatprep.mubr.bf16.mxu0 %v2588
      %7183 = vmatmul.mubr.bf16.gmra.mrb[0].mxu0 %v2587
      %v7184 = vpop.f32.mrb[0].mxu0
      %v7185 = vadd.f32 %v7072, %v7184
      %v7186 = vpop.f32.mrb[0].mxu0
      %v7187 = vadd.f32 %v7074, %v7186
      %v7188 = vpop.f32.mrb[0].mxu0
      %v7189 = vadd.f32 %v7076, %v7188
      %v7190 = vpop.f32.mrb[0].mxu0
      %v7191 = vadd.f32 %v7078, %v7190
      %7192 = vmatprep.mubr.bf16.mxu0 %v2605
      %7193 = vmatmul.mubr.bf16.gmra.mrb[0].mxu0 %v2604
      %v7194 = vpop.f32.mrb[0].mxu0
      %v7195 = vadd.f32 %v7082, %v7194
      %v7196 = vpop.f32.mrb[0].mxu0
      %v7197 = vadd.f32 %v7084, %v7196
      %v7198 = vpop.f32.mrb[0].mxu0
      %v7199 = vadd.f32 %v7086, %v7198
      %v7200 = vpop.f32.mrb[0].mxu0
      %v7201 = vadd.f32 %v7088, %v7200
      %7202 = vmatprep.mubr.bf16.mxu0 %v2622
      %7203 = vmatmul.mubr.bf16.gmra.mrb[0].mxu0 %v2621
      %v7204 = vpop.f32.mrb[0].mxu0
      %v7205 = vadd.f32 %v7092, %v7204
      %v7206 = vpop.f32.mrb[0].mxu0
      %v7207 = vadd.f32 %v7094, %v7206
      %v7208 = vpop.f32.mrb[0].mxu0
      %v7209 = vadd.f32 %v7096, %v7208
      %v7210 = vpop.f32.mrb[0].mxu0
      %v7211 = vadd.f32 %v7098, %v7210
      %7212 = vmatprep.mubr.bf16.mxu0 %v2639
      %7213 = vmatmul.mubr.bf16.gmra.mrb[0].mxu0 %v2638
      %v7214 = vpop.f32.mrb[0].mxu0
      %v7215 = vadd.f32 %v7102, %v7214
      %v7216 = vpop.f32.mrb[0].mxu0
      %v7217 = vadd.f32 %v7104, %v7216
      %v7218 = vpop.f32.mrb[0].mxu0
      %v7219 = vadd.f32 %v7106, %v7218
      %v7220 = vpop.f32.mrb[0].mxu0
      %v7221 = vadd.f32 %v7108, %v7220
      %7222 = vmatprep.mubr.bf16.mxu0 %v2656
      %7223 = vmatmul.mubr.bf16.gmra.mrb[0].mxu0 %v2655
      %v7224 = vpop.f32.mrb[0].mxu0
      %v7225 = vadd.f32 %v7112, %v7224
      %v7226 = vpop.f32.mrb[0].mxu0
      %v7227 = vadd.f32 %v7114, %v7226
      %v7228 = vpop.f32.mrb[0].mxu0
      %v7229 = vadd.f32 %v7116, %v7228
      %v7230 = vpop.f32.mrb[0].mxu0
      %v7231 = vadd.f32 %v7118, %v7230
      %7232 = vdwg.mxu0
      %7233 = vmatprep.subr.bf16.mxu0 %v5007
      %7234 = vmatpush1.bf16.msra.mxu0 %v5006
      %7235 = vmatprep.subr.bf16.mxu0 %v5011
      %7236 = vmatpush1.bf16.msra.mxu0 %v5010
      %7237 = vmatprep.subr.bf16.mxu0 %v5015
      %7238 = vmatpush1.bf16.msra.mxu0 %v5014
      %7239 = vmatprep.subr.bf16.mxu0 %v5019
      %7240 = vmatpush1.bf16.msra.mxu0 %v5018
      %7241 = vmatprep.subr.bf16.mxu0 %v5023
      %7242 = vmatpush1.bf16.msra.mxu0 %v5022
      %7243 = vmatprep.subr.bf16.mxu0 %v5027
      %7244 = vmatpush1.bf16.msra.mxu0 %v5026
      %7245 = vmatprep.subr.bf16.mxu0 %v5031
      %7246 = vmatpush1.bf16.msra.mxu0 %v5030
      %7247 = vmatprep.subr.bf16.mxu0 %v5035
      %7248 = vmatpush1.bf16.msra.mxu0 %v5034
      %7249 = vmatprep.subr.bf16.mxu0 %v5039
      %7250 = vmatpush1.bf16.msra.mxu0 %v5038
      %7251 = vmatprep.subr.bf16.mxu0 %v5043
      %7252 = vmatpush1.bf16.msra.mxu0 %v5042
      %7253 = vmatprep.subr.bf16.mxu0 %v5047
      %7254 = vmatpush1.bf16.msra.mxu0 %v5046
      %7255 = vmatprep.subr.bf16.mxu0 %v5051
      %7256 = vmatpush1.bf16.msra.mxu0 %v5050
      %7257 = vmatprep.subr.bf16.mxu0 %v5055
      %7258 = vmatpush1.bf16.msra.mxu0 %v5054
      %7259 = vmatprep.subr.bf16.mxu0 %v5059
      %7260 = vmatpush1.bf16.msra.mxu0 %v5058
      %7261 = vmatprep.subr.bf16.mxu0 %v5063
      %7262 = vmatpush1.bf16.msra.mxu0 %v5062
      %7263 = vmatprep.subr.bf16.mxu0 %v5067
      %7264 = vmatpush1.bf16.msra.mxu0 %v5066
      %7265 = vmatprep.mubr.bf16.mxu0 %v2539
      %7266 = vmatmul.mubr.bf16.gmra.mrb[0].mxu0 %v2538
      %v7267 = vpop.f32.mrb[0].mxu0
      %v7268 = vadd.f32 %v7155, %v7267
      %v7269 = vpop.f32.mrb[0].mxu0
      %v7270 = vadd.f32 %v7157, %v7269
      %v7271 = vpop.f32.mrb[0].mxu0
      %v7272 = vadd.f32 %v7159, %v7271
      %v7273 = vpop.f32.mrb[0].mxu0
      %v7274 = vadd.f32 %v7161, %v7273
      %7275 = vmatprep.mubr.bf16.mxu0 %v2556
      %7276 = vmatmul.mubr.bf16.gmra.mrb[0].mxu0 %v2555
      %v7277 = vpop.f32.mrb[0].mxu0
      %v7278 = vadd.f32 %v7165, %v7277
      %v7279 = vpop.f32.mrb[0].mxu0
      %v7280 = vadd.f32 %v7167, %v7279
      %v7281 = vpop.f32.mrb[0].mxu0
      %v7282 = vadd.f32 %v7169, %v7281
      %v7283 = vpop.f32.mrb[0].mxu0
      %v7284 = vadd.f32 %v7171, %v7283
      %7285 = vmatprep.mubr.bf16.mxu0 %v2573
      %7286 = vmatmul.mubr.bf16.gmra.mrb[0].mxu0 %v2572
      %v7287 = vpop.f32.mrb[0].mxu0
      %v7288 = vadd.f32 %v7175, %v7287
      %v7289 = vpop.f32.mrb[0].mxu0
      %v7290 = vadd.f32 %v7177, %v7289
      %v7291 = vpop.f32.mrb[0].mxu0
      %v7292 = vadd.f32 %v7179, %v7291
      %v7293 = vpop.f32.mrb[0].mxu0
      %v7294 = vadd.f32 %v7181, %v7293
      %7295 = vmatprep.mubr.bf16.mxu0 %v2590
      %7296 = vmatmul.mubr.bf16.gmra.mrb[0].mxu0 %v2589
      %v7297 = vpop.f32.mrb[0].mxu0
      %v7298 = vadd.f32 %v7185, %v7297
      %v7299 = vpop.f32.mrb[0].mxu0
      %v7300 = vadd.f32 %v7187, %v7299
      %v7301 = vpop.f32.mrb[0].mxu0
      %v7302 = vadd.f32 %v7189, %v7301
      %v7303 = vpop.f32.mrb[0].mxu0
      %v7304 = vadd.f32 %v7191, %v7303
      %7305 = vmatprep.mubr.bf16.mxu0 %v2607
      %7306 = vmatmul.mubr.bf16.gmra.mrb[0].mxu0 %v2606
      %v7307 = vpop.f32.mrb[0].mxu0
      %v7308 = vadd.f32 %v7195, %v7307
      %v7309 = vpop.f32.mrb[0].mxu0
      %v7310 = vadd.f32 %v7197, %v7309
      %v7311 = vpop.f32.mrb[0].mxu0
      %v7312 = vadd.f32 %v7199, %v7311
      %v7313 = vpop.f32.mrb[0].mxu0
      %v7314 = vadd.f32 %v7201, %v7313
      %7315 = vmatprep.mubr.bf16.mxu0 %v2624
      %7316 = vmatmul.mubr.bf16.gmra.mrb[0].mxu0 %v2623
      %v7317 = vpop.f32.mrb[0].mxu0
      %v7318 = vadd.f32 %v7205, %v7317
      %v7319 = vpop.f32.mrb[0].mxu0
      %v7320 = vadd.f32 %v7207, %v7319
      %v7321 = vpop.f32.mrb[0].mxu0
      %v7322 = vadd.f32 %v7209, %v7321
      %v7323 = vpop.f32.mrb[0].mxu0
      %v7324 = vadd.f32 %v7211, %v7323
      %7325 = vmatprep.mubr.bf16.mxu0 %v2641
      %7326 = vmatmul.mubr.bf16.gmra.mrb[0].mxu0 %v2640
      %v7327 = vpop.f32.mrb[0].mxu0
      %v7328 = vadd.f32 %v7215, %v7327
      %v7329 = vpop.f32.mrb[0].mxu0
      %v7330 = vadd.f32 %v7217, %v7329
      %v7331 = vpop.f32.mrb[0].mxu0
      %v7332 = vadd.f32 %v7219, %v7331
      %v7333 = vpop.f32.mrb[0].mxu0
      %v7334 = vadd.f32 %v7221, %v7333
      %7335 = vmatprep.mubr.bf16.mxu0 %v2658
      %7336 = vmatmul.mubr.bf16.gmra.mrb[0].mxu0 %v2657
      %v7337 = vpop.f32.mrb[0].mxu0
      %v7338 = vadd.f32 %v7225, %v7337
      %v7339 = vpop.f32.mrb[0].mxu0
      %v7340 = vadd.f32 %v7227, %v7339
      %v7341 = vpop.f32.mrb[0].mxu0
      %v7342 = vadd.f32 %v7229, %v7341
      %v7343 = vpop.f32.mrb[0].mxu0
      %v7344 = vadd.f32 %v7231, %v7343
      %7345 = vdwg.mxu0
      %7346 = vmatprep.subr.bf16.mxu0 %v5071
      %7347 = vmatpush1.bf16.msra.mxu0 %v5070
      %7348 = vmatprep.subr.bf16.mxu0 %v5075
      %7349 = vmatpush1.bf16.msra.mxu0 %v5074
      %7350 = vmatprep.subr.bf16.mxu0 %v5079
      %7351 = vmatpush1.bf16.msra.mxu0 %v5078
      %7352 = vmatprep.subr.bf16.mxu0 %v5083
      %7353 = vmatpush1.bf16.msra.mxu0 %v5082
      %7354 = vmatprep.subr.bf16.mxu0 %v5087
      %7355 = vmatpush1.bf16.msra.mxu0 %v5086
      %7356 = vmatprep.subr.bf16.mxu0 %v5091
      %7357 = vmatpush1.bf16.msra.mxu0 %v5090
      %7358 = vmatprep.subr.bf16.mxu0 %v5095
      %7359 = vmatpush1.bf16.msra.mxu0 %v5094
      %7360 = vmatprep.subr.bf16.mxu0 %v5099
      %7361 = vmatpush1.bf16.msra.mxu0 %v5098
      %7362 = vmatprep.subr.bf16.mxu0 %v5103
      %7363 = vmatpush1.bf16.msra.mxu0 %v5102
      %7364 = vmatprep.subr.bf16.mxu0 %v5107
      %7365 = vmatpush1.bf16.msra.mxu0 %v5106
      %7366 = vmatprep.subr.bf16.mxu0 %v5111
      %7367 = vmatpush1.bf16.msra.mxu0 %v5110
      %7368 = vmatprep.subr.bf16.mxu0 %v5115
      %7369 = vmatpush1.bf16.msra.mxu0 %v5114
      %7370 = vmatprep.subr.bf16.mxu0 %v5119
      %7371 = vmatpush1.bf16.msra.mxu0 %v5118
      %7372 = vmatprep.subr.bf16.mxu0 %v5123
      %7373 = vmatpush1.bf16.msra.mxu0 %v5122
      %7374 = vmatprep.subr.bf16.mxu0 %v5127
      %7375 = vmatpush1.bf16.msra.mxu0 %v5126
      %7376 = vmatprep.subr.bf16.mxu0 %v5131
      %7377 = vmatpush1.bf16.msra.mxu0 %v5130
      %7378 = vmatprep.mubr.bf16.mxu0 %v2541
      %7379 = vmatmul.mubr.bf16.gmra.mrb[0].mxu0 %v2540
      %v7380 = vpop.f32.mrb[0].mxu0
      %v7381 = vadd.f32 %v7268, %v7380
      %v7382 = vpop.f32.mrb[0].mxu0
      %v7383 = vadd.f32 %v7270, %v7382
      %v7384 = vpop.f32.mrb[0].mxu0
      %v7385 = vadd.f32 %v7272, %v7384
      %v7386 = vpop.f32.mrb[0].mxu0
      %v7387 = vadd.f32 %v7274, %v7386
      %7388 = vmatprep.mubr.bf16.mxu0 %v2558
      %7389 = vmatmul.mubr.bf16.gmra.mrb[0].mxu0 %v2557
      %v7390 = vpop.f32.mrb[0].mxu0
      %v7391 = vadd.f32 %v7278, %v7390
      %v7392 = vpop.f32.mrb[0].mxu0
      %v7393 = vadd.f32 %v7280, %v7392
      %v7394 = vpop.f32.mrb[0].mxu0
      %v7395 = vadd.f32 %v7282, %v7394
      %v7396 = vpop.f32.mrb[0].mxu0
      %v7397 = vadd.f32 %v7284, %v7396
      %7398 = vmatprep.mubr.bf16.mxu0 %v2575
      %7399 = vmatmul.mubr.bf16.gmra.mrb[0].mxu0 %v2574
      %v7400 = vpop.f32.mrb[0].mxu0
      %v7401 = vadd.f32 %v7288, %v7400
      %v7402 = vpop.f32.mrb[0].mxu0
      %v7403 = vadd.f32 %v7290, %v7402
      %v7404 = vpop.f32.mrb[0].mxu0
      %v7405 = vadd.f32 %v7292, %v7404
      %v7406 = vpop.f32.mrb[0].mxu0
      %v7407 = vadd.f32 %v7294, %v7406
      %7408 = vmatprep.mubr.bf16.mxu0 %v2592
      %7409 = vmatmul.mubr.bf16.gmra.mrb[0].mxu0 %v2591
      %v7410 = vpop.f32.mrb[0].mxu0
      %v7411 = vadd.f32 %v7298, %v7410
      %v7412 = vpop.f32.mrb[0].mxu0
      %v7413 = vadd.f32 %v7300, %v7412
      %v7414 = vpop.f32.mrb[0].mxu0
      %v7415 = vadd.f32 %v7302, %v7414
      %v7416 = vpop.f32.mrb[0].mxu0
      %v7417 = vadd.f32 %v7304, %v7416
      %7418 = vmatprep.mubr.bf16.mxu0 %v2609
      %7419 = vmatmul.mubr.bf16.gmra.mrb[0].mxu0 %v2608
      %v7420 = vpop.f32.mrb[0].mxu0
      %v7421 = vadd.f32 %v7308, %v7420
      %v7422 = vpop.f32.mrb[0].mxu0
      %v7423 = vadd.f32 %v7310, %v7422
      %v7424 = vpop.f32.mrb[0].mxu0
      %v7425 = vadd.f32 %v7312, %v7424
      %v7426 = vpop.f32.mrb[0].mxu0
      %v7427 = vadd.f32 %v7314, %v7426
      %7428 = vmatprep.mubr.bf16.mxu0 %v2626
      %7429 = vmatmul.mubr.bf16.gmra.mrb[0].mxu0 %v2625
      %v7430 = vpop.f32.mrb[0].mxu0
      %v7431 = vadd.f32 %v7318, %v7430
      %v7432 = vpop.f32.mrb[0].mxu0
      %v7433 = vadd.f32 %v7320, %v7432
      %v7434 = vpop.f32.mrb[0].mxu0
      %v7435 = vadd.f32 %v7322, %v7434
      %v7436 = vpop.f32.mrb[0].mxu0
      %v7437 = vadd.f32 %v7324, %v7436
      %7438 = vmatprep.mubr.bf16.mxu0 %v2643
      %7439 = vmatmul.mubr.bf16.gmra.mrb[0].mxu0 %v2642
      %v7440 = vpop.f32.mrb[0].mxu0
      %v7441 = vadd.f32 %v7328, %v7440
      %v7442 = vpop.f32.mrb[0].mxu0
      %v7443 = vadd.f32 %v7330, %v7442
      %v7444 = vpop.f32.mrb[0].mxu0
      %v7445 = vadd.f32 %v7332, %v7444
      %v7446 = vpop.f32.mrb[0].mxu0
      %v7447 = vadd.f32 %v7334, %v7446
      %7448 = vmatprep.mubr.bf16.mxu0 %v2660
      %7449 = vmatmul.mubr.bf16.gmra.mrb[0].mxu0 %v2659
      %v7450 = vpop.f32.mrb[0].mxu0
      %v7451 = vadd.f32 %v7338, %v7450
      %v7452 = vpop.f32.mrb[0].mxu0
      %v7453 = vadd.f32 %v7340, %v7452
      %v7454 = vpop.f32.mrb[0].mxu0
      %v7455 = vadd.f32 %v7342, %v7454
      %v7456 = vpop.f32.mrb[0].mxu0
      %v7457 = vadd.f32 %v7344, %v7456
      %7458 = vdwg.mxu0
      %7459 = vmatprep.subr.bf16.mxu0 %v5135
      %7460 = vmatpush1.bf16.msra.mxu0 %v5134
      %7461 = vmatprep.subr.bf16.mxu0 %v5139
      %7462 = vmatpush1.bf16.msra.mxu0 %v5138
      %7463 = vmatprep.subr.bf16.mxu0 %v5143
      %7464 = vmatpush1.bf16.msra.mxu0 %v5142
      %7465 = vmatprep.subr.bf16.mxu0 %v5147
      %7466 = vmatpush1.bf16.msra.mxu0 %v5146
      %7467 = vmatprep.subr.bf16.mxu0 %v5151
      %7468 = vmatpush1.bf16.msra.mxu0 %v5150
      %7469 = vmatprep.subr.bf16.mxu0 %v5155
      %7470 = vmatpush1.bf16.msra.mxu0 %v5154
      %7471 = vmatprep.subr.bf16.mxu0 %v5159
      %7472 = vmatpush1.bf16.msra.mxu0 %v5158
      %7473 = vmatprep.subr.bf16.mxu0 %v5163
      %7474 = vmatpush1.bf16.msra.mxu0 %v5162
      %7475 = vmatprep.subr.bf16.mxu0 %v5167
      %7476 = vmatpush1.bf16.msra.mxu0 %v5166
      %7477 = vmatprep.subr.bf16.mxu0 %v5171
      %7478 = vmatpush1.bf16.msra.mxu0 %v5170
      %7479 = vmatprep.subr.bf16.mxu0 %v5175
      %7480 = vmatpush1.bf16.msra.mxu0 %v5174
      %7481 = vmatprep.subr.bf16.mxu0 %v5179
      %7482 = vmatpush1.bf16.msra.mxu0 %v5178
      %7483 = vmatprep.subr.bf16.mxu0 %v5183
      %7484 = vmatpush1.bf16.msra.mxu0 %v5182
      %7485 = vmatprep.subr.bf16.mxu0 %v5187
      %7486 = vmatpush1.bf16.msra.mxu0 %v5186
      %7487 = vmatprep.subr.bf16.mxu0 %v5191
      %7488 = vmatpush1.bf16.msra.mxu0 %v5190
      %7489 = vmatprep.subr.bf16.mxu0 %v5195
      %7490 = vmatpush1.bf16.msra.mxu0 %v5194
      %7491 = vmatprep.mubr.bf16.mxu0 %v2543
      %7492 = vmatmul.mubr.bf16.gmra.mrb[0].mxu0 %v2542
      %v7493 = vpop.f32.mrb[0].mxu0
      %v7494 = vadd.f32 %v7381, %v7493
      %v7495 = vpop.f32.mrb[0].mxu0
      %v7496 = vadd.f32 %v7383, %v7495
      %v7497 = vpop.f32.mrb[0].mxu0
      %v7498 = vadd.f32 %v7385, %v7497
      %v7499 = vpop.f32.mrb[0].mxu0
      %v7500 = vadd.f32 %v7387, %v7499
      %7501 = vmatprep.mubr.bf16.mxu0 %v2560
      %7502 = vmatmul.mubr.bf16.gmra.mrb[0].mxu0 %v2559
      %v7503 = vpop.f32.mrb[0].mxu0
      %v7504 = vadd.f32 %v7391, %v7503
      %v7505 = vpop.f32.mrb[0].mxu0
      %v7506 = vadd.f32 %v7393, %v7505
      %v7507 = vpop.f32.mrb[0].mxu0
      %v7508 = vadd.f32 %v7395, %v7507
      %v7509 = vpop.f32.mrb[0].mxu0
      %v7510 = vadd.f32 %v7397, %v7509
      %7511 = vmatprep.mubr.bf16.mxu0 %v2577
      %7512 = vmatmul.mubr.bf16.gmra.mrb[0].mxu0 %v2576
      %v7513 = vpop.f32.mrb[0].mxu0
      %v7514 = vadd.f32 %v7401, %v7513
      %v7515 = vpop.f32.mrb[0].mxu0
      %v7516 = vadd.f32 %v7403, %v7515
      %v7517 = vpop.f32.mrb[0].mxu0
      %v7518 = vadd.f32 %v7405, %v7517
      %v7519 = vpop.f32.mrb[0].mxu0
      %v7520 = vadd.f32 %v7407, %v7519
      %7521 = vmatprep.mubr.bf16.mxu0 %v2594
      %7522 = vmatmul.mubr.bf16.gmra.mrb[0].mxu0 %v2593
      %v7523 = vpop.f32.mrb[0].mxu0
      %v7524 = vadd.f32 %v7411, %v7523
      %v7525 = vpop.f32.mrb[0].mxu0
      %v7526 = vadd.f32 %v7413, %v7525
      %v7527 = vpop.f32.mrb[0].mxu0
      %v7528 = vadd.f32 %v7415, %v7527
      %v7529 = vpop.f32.mrb[0].mxu0
      %v7530 = vadd.f32 %v7417, %v7529
      %7531 = vmatprep.mubr.bf16.mxu0 %v2611
      %7532 = vmatmul.mubr.bf16.gmra.mrb[0].mxu0 %v2610
      %v7533 = vpop.f32.mrb[0].mxu0
      %v7534 = vadd.f32 %v7421, %v7533
      %v7535 = vpop.f32.mrb[0].mxu0
      %v7536 = vadd.f32 %v7423, %v7535
      %v7537 = vpop.f32.mrb[0].mxu0
      %v7538 = vadd.f32 %v7425, %v7537
      %v7539 = vpop.f32.mrb[0].mxu0
      %v7540 = vadd.f32 %v7427, %v7539
      %7541 = vmatprep.mubr.bf16.mxu0 %v2628
      %7542 = vmatmul.mubr.bf16.gmra.mrb[0].mxu0 %v2627
      %v7543 = vpop.f32.mrb[0].mxu0
      %v7544 = vadd.f32 %v7431, %v7543
      %v7545 = vpop.f32.mrb[0].mxu0
      %v7546 = vadd.f32 %v7433, %v7545
      %v7547 = vpop.f32.mrb[0].mxu0
      %v7548 = vadd.f32 %v7435, %v7547
      %v7549 = vpop.f32.mrb[0].mxu0
      %v7550 = vadd.f32 %v7437, %v7549
      %7551 = vmatprep.mubr.bf16.mxu0 %v2645
      %7552 = vmatmul.mubr.bf16.gmra.mrb[0].mxu0 %v2644
      %v7553 = vpop.f32.mrb[0].mxu0
      %v7554 = vadd.f32 %v7441, %v7553
      %v7555 = vpop.f32.mrb[0].mxu0
      %v7556 = vadd.f32 %v7443, %v7555
      %v7557 = vpop.f32.mrb[0].mxu0
      %v7558 = vadd.f32 %v7445, %v7557
      %v7559 = vpop.f32.mrb[0].mxu0
      %v7560 = vadd.f32 %v7447, %v7559
      %7561 = vmatprep.mubr.bf16.mxu0 %v2662
      %7562 = vmatmul.mubr.bf16.gmra.mrb[0].mxu0 %v2661
      %v7563 = vpop.f32.mrb[0].mxu0
      %v7564 = vadd.f32 %v7451, %v7563
      %v7565 = vpop.f32.mrb[0].mxu0
      %v7566 = vadd.f32 %v7453, %v7565
      %v7567 = vpop.f32.mrb[0].mxu0
      %v7568 = vadd.f32 %v7455, %v7567
      %v7569 = vpop.f32.mrb[0].mxu0
      %v7570 = vadd.f32 %v7457, %v7569
      %7571 = vdwg.mxu0
      %7572 = vmatprep.subr.bf16.mxu0 %v5199
      %7573 = vmatpush1.bf16.msra.mxu0 %v5198
      %7574 = vmatprep.subr.bf16.mxu0 %v5203
      %7575 = vmatpush1.bf16.msra.mxu0 %v5202
      %7576 = vmatprep.subr.bf16.mxu0 %v5207
      %7577 = vmatpush1.bf16.msra.mxu0 %v5206
      %7578 = vmatprep.subr.bf16.mxu0 %v5211
      %7579 = vmatpush1.bf16.msra.mxu0 %v5210
      %7580 = vmatprep.subr.bf16.mxu0 %v5215
      %7581 = vmatpush1.bf16.msra.mxu0 %v5214
      %7582 = vmatprep.subr.bf16.mxu0 %v5219
      %7583 = vmatpush1.bf16.msra.mxu0 %v5218
      %7584 = vmatprep.subr.bf16.mxu0 %v5223
      %7585 = vmatpush1.bf16.msra.mxu0 %v5222
      %7586 = vmatprep.subr.bf16.mxu0 %v5227
      %7587 = vmatpush1.bf16.msra.mxu0 %v5226
      %7588 = vmatprep.subr.bf16.mxu0 %v5231
      %7589 = vmatpush1.bf16.msra.mxu0 %v5230
      %7590 = vmatprep.subr.bf16.mxu0 %v5235
      %7591 = vmatpush1.bf16.msra.mxu0 %v5234
      %7592 = vmatprep.subr.bf16.mxu0 %v5239
      %7593 = vmatpush1.bf16.msra.mxu0 %v5238
      %7594 = vmatprep.subr.bf16.mxu0 %v5243
      %7595 = vmatpush1.bf16.msra.mxu0 %v5242
      %7596 = vmatprep.subr.bf16.mxu0 %v5247
      %7597 = vmatpush1.bf16.msra.mxu0 %v5246
      %7598 = vmatprep.subr.bf16.mxu0 %v5251
      %7599 = vmatpush1.bf16.msra.mxu0 %v5250
      %7600 = vmatprep.subr.bf16.mxu0 %v5255
      %7601 = vmatpush1.bf16.msra.mxu0 %v5254
      %7602 = vmatprep.subr.bf16.mxu0 %v5259
      %7603 = vmatpush1.bf16.msra.mxu0 %v5258
      %7604 = vmatprep.mubr.bf16.mxu0 %v2545
      %7605 = vmatmul.mubr.bf16.gmra.mrb[0].mxu0 %v2544
      %v7606 = vpop.f32.mrb[0].mxu0
      %v7607 = vadd.f32 %v7494, %v7606
      %v7608 = vpop.f32.mrb[0].mxu0
      %v7609 = vadd.f32 %v7496, %v7608
      %v7610 = vpop.f32.mrb[0].mxu0
      %v7611 = vadd.f32 %v7498, %v7610
      %v7612 = vpop.f32.mrb[0].mxu0
      %v7613 = vadd.f32 %v7500, %v7612
      %7614 = vmatprep.mubr.bf16.mxu0 %v2562
      %7615 = vmatmul.mubr.bf16.gmra.mrb[0].mxu0 %v2561
      %v7616 = vpop.f32.mrb[0].mxu0
      %v7617 = vadd.f32 %v7504, %v7616
      %v7618 = vpop.f32.mrb[0].mxu0
      %v7619 = vadd.f32 %v7506, %v7618
      %v7620 = vpop.f32.mrb[0].mxu0
      %v7621 = vadd.f32 %v7508, %v7620
      %v7622 = vpop.f32.mrb[0].mxu0
      %v7623 = vadd.f32 %v7510, %v7622
      %7624 = vmatprep.mubr.bf16.mxu0 %v2579
      %7625 = vmatmul.mubr.bf16.gmra.mrb[0].mxu0 %v2578
      %v7626 = vpop.f32.mrb[0].mxu0
      %v7627 = vadd.f32 %v7514, %v7626
      %v7628 = vpop.f32.mrb[0].mxu0
      %v7629 = vadd.f32 %v7516, %v7628
      %v7630 = vpop.f32.mrb[0].mxu0
      %v7631 = vadd.f32 %v7518, %v7630
      %v7632 = vpop.f32.mrb[0].mxu0
      %v7633 = vadd.f32 %v7520, %v7632
      %7634 = vmatprep.mubr.bf16.mxu0 %v2596
      %7635 = vmatmul.mubr.bf16.gmra.mrb[0].mxu0 %v2595
      %v7636 = vpop.f32.mrb[0].mxu0
      %v7637 = vadd.f32 %v7524, %v7636
      %v7638 = vpop.f32.mrb[0].mxu0
      %v7639 = vadd.f32 %v7526, %v7638
      %v7640 = vpop.f32.mrb[0].mxu0
      %v7641 = vadd.f32 %v7528, %v7640
      %v7642 = vpop.f32.mrb[0].mxu0
      %v7643 = vadd.f32 %v7530, %v7642
      %7644 = vmatprep.mubr.bf16.mxu0 %v2613
      %7645 = vmatmul.mubr.bf16.gmra.mrb[0].mxu0 %v2612
      %v7646 = vpop.f32.mrb[0].mxu0
      %v7647 = vadd.f32 %v7534, %v7646
      %v7648 = vpop.f32.mrb[0].mxu0
      %v7649 = vadd.f32 %v7536, %v7648
      %v7650 = vpop.f32.mrb[0].mxu0
      %v7651 = vadd.f32 %v7538, %v7650
      %v7652 = vpop.f32.mrb[0].mxu0
      %v7653 = vadd.f32 %v7540, %v7652
      %7654 = vmatprep.mubr.bf16.mxu0 %v2630
      %7655 = vmatmul.mubr.bf16.gmra.mrb[0].mxu0 %v2629
      %v7656 = vpop.f32.mrb[0].mxu0
      %v7657 = vadd.f32 %v7544, %v7656
      %v7658 = vpop.f32.mrb[0].mxu0
      %v7659 = vadd.f32 %v7546, %v7658
      %v7660 = vpop.f32.mrb[0].mxu0
      %v7661 = vadd.f32 %v7548, %v7660
      %v7662 = vpop.f32.mrb[0].mxu0
      %v7663 = vadd.f32 %v7550, %v7662
      %7664 = vmatprep.mubr.bf16.mxu0 %v2647
      %7665 = vmatmul.mubr.bf16.gmra.mrb[0].mxu0 %v2646
      %v7666 = vpop.f32.mrb[0].mxu0
      %v7667 = vadd.f32 %v7554, %v7666
      %v7668 = vpop.f32.mrb[0].mxu0
      %v7669 = vadd.f32 %v7556, %v7668
      %v7670 = vpop.f32.mrb[0].mxu0
      %v7671 = vadd.f32 %v7558, %v7670
      %v7672 = vpop.f32.mrb[0].mxu0
      %v7673 = vadd.f32 %v7560, %v7672
      %7674 = vmatprep.mubr.bf16.mxu0 %v2664
      %7675 = vmatmul.mubr.bf16.gmra.mrb[0].mxu0 %v2663
      %v7676 = vpop.f32.mrb[0].mxu0
      %v7677 = vadd.f32 %v7564, %v7676
      %v7678 = vpop.f32.mrb[0].mxu0
      %v7679 = vadd.f32 %v7566, %v7678
      %v7680 = vpop.f32.mrb[0].mxu0
      %v7681 = vadd.f32 %v7568, %v7680
      %v7682 = vpop.f32.mrb[0].mxu0
      %v7683 = vadd.f32 %v7570, %v7682
      %7684 = vdwg.mxu0
      %7685 = vmatprep.subr.bf16.mxu0 %v5263
      %7686 = vmatpush1.bf16.msra.mxu0 %v5262
      %7687 = vmatprep.subr.bf16.mxu0 %v5267
      %7688 = vmatpush1.bf16.msra.mxu0 %v5266
      %7689 = vmatprep.subr.bf16.mxu0 %v5271
      %7690 = vmatpush1.bf16.msra.mxu0 %v5270
      %7691 = vmatprep.subr.bf16.mxu0 %v5275
      %7692 = vmatpush1.bf16.msra.mxu0 %v5274
      %7693 = vmatprep.subr.bf16.mxu0 %v5279
      %7694 = vmatpush1.bf16.msra.mxu0 %v5278
      %7695 = vmatprep.subr.bf16.mxu0 %v5283
      %7696 = vmatpush1.bf16.msra.mxu0 %v5282
      %7697 = vmatprep.subr.bf16.mxu0 %v5287
      %7698 = vmatpush1.bf16.msra.mxu0 %v5286
      %7699 = vmatprep.subr.bf16.mxu0 %v5291
      %7700 = vmatpush1.bf16.msra.mxu0 %v5290
      %7701 = vmatprep.subr.bf16.mxu0 %v5295
      %7702 = vmatpush1.bf16.msra.mxu0 %v5294
      %7703 = vmatprep.subr.bf16.mxu0 %v5299
      %7704 = vmatpush1.bf16.msra.mxu0 %v5298
      %7705 = vmatprep.subr.bf16.mxu0 %v5303
      %7706 = vmatpush1.bf16.msra.mxu0 %v5302
      %7707 = vmatprep.subr.bf16.mxu0 %v5307
      %7708 = vmatpush1.bf16.msra.mxu0 %v5306
      %7709 = vmatprep.subr.bf16.mxu0 %v5311
      %7710 = vmatpush1.bf16.msra.mxu0 %v5310
      %7711 = vmatprep.subr.bf16.mxu0 %v5315
      %7712 = vmatpush1.bf16.msra.mxu0 %v5314
      %7713 = vmatprep.subr.bf16.mxu0 %v5319
      %7714 = vmatpush1.bf16.msra.mxu0 %v5318
      %7715 = vmatprep.subr.bf16.mxu0 %v5323
      %7716 = vmatpush1.bf16.msra.mxu0 %v5322
      %7717 = vmatprep.mubr.bf16.mxu0 %v2547
      %7718 = vmatmul.mubr.bf16.gmra.mrb[0].mxu0 %v2546
      %v7719 = vpop.f32.mrb[0].mxu0
      %v7720 = vadd.f32 %v7607, %v7719
      %v7721 = vpop.f32.mrb[0].mxu0
      %v7722 = vadd.f32 %v7609, %v7721
      %v7723 = vpop.f32.mrb[0].mxu0
      %v7724 = vadd.f32 %v7611, %v7723
      %v7725 = vpop.f32.mrb[0].mxu0
      %v7726 = vadd.f32 %v7613, %v7725
      %7727 = vmatprep.mubr.bf16.mxu0 %v2564
      %7728 = vmatmul.mubr.bf16.gmra.mrb[0].mxu0 %v2563
      %v7729 = vpop.f32.mrb[0].mxu0
      %v7730 = vadd.f32 %v7617, %v7729
      %v7731 = vpop.f32.mrb[0].mxu0
      %v7732 = vadd.f32 %v7619, %v7731
      %v7733 = vpop.f32.mrb[0].mxu0
      %v7734 = vadd.f32 %v7621, %v7733
      %v7735 = vpop.f32.mrb[0].mxu0
      %v7736 = vadd.f32 %v7623, %v7735
      %7737 = vmatprep.mubr.bf16.mxu0 %v2581
      %7738 = vmatmul.mubr.bf16.gmra.mrb[0].mxu0 %v2580
      %v7739 = vpop.f32.mrb[0].mxu0
      %v7740 = vadd.f32 %v7627, %v7739
      %v7741 = vpop.f32.mrb[0].mxu0
      %v7742 = vadd.f32 %v7629, %v7741
      %v7743 = vpop.f32.mrb[0].mxu0
      %v7744 = vadd.f32 %v7631, %v7743
      %v7745 = vpop.f32.mrb[0].mxu0
      %v7746 = vadd.f32 %v7633, %v7745
      %7747 = vmatprep.mubr.bf16.mxu0 %v2598
      %7748 = vmatmul.mubr.bf16.gmra.mrb[0].mxu0 %v2597
      %v7749 = vpop.f32.mrb[0].mxu0
      %v7750 = vadd.f32 %v7637, %v7749
      %v7751 = vpop.f32.mrb[0].mxu0
      %v7752 = vadd.f32 %v7639, %v7751
      %v7753 = vpop.f32.mrb[0].mxu0
      %v7754 = vadd.f32 %v7641, %v7753
      %v7755 = vpop.f32.mrb[0].mxu0
      %v7756 = vadd.f32 %v7643, %v7755
      %7757 = vmatprep.mubr.bf16.mxu0 %v2615
      %7758 = vmatmul.mubr.bf16.gmra.mrb[0].mxu0 %v2614
      %v7759 = vpop.f32.mrb[0].mxu0
      %v7760 = vadd.f32 %v7647, %v7759
      %v7761 = vpop.f32.mrb[0].mxu0
      %v7762 = vadd.f32 %v7649, %v7761
      %v7763 = vpop.f32.mrb[0].mxu0
      %v7764 = vadd.f32 %v7651, %v7763
      %v7765 = vpop.f32.mrb[0].mxu0
      %v7766 = vadd.f32 %v7653, %v7765
      %7767 = vmatprep.mubr.bf16.mxu0 %v2632
      %7768 = vmatmul.mubr.bf16.gmra.mrb[0].mxu0 %v2631
      %v7769 = vpop.f32.mrb[0].mxu0
      %v7770 = vadd.f32 %v7657, %v7769
      %v7771 = vpop.f32.mrb[0].mxu0
      %v7772 = vadd.f32 %v7659, %v7771
      %v7773 = vpop.f32.mrb[0].mxu0
      %v7774 = vadd.f32 %v7661, %v7773
      %v7775 = vpop.f32.mrb[0].mxu0
      %v7776 = vadd.f32 %v7663, %v7775
      %7777 = vmatprep.mubr.bf16.mxu0 %v2649
      %7778 = vmatmul.mubr.bf16.gmra.mrb[0].mxu0 %v2648
      %v7779 = vpop.f32.mrb[0].mxu0
      %v7780 = vadd.f32 %v7667, %v7779
      %v7781 = vpop.f32.mrb[0].mxu0
      %v7782 = vadd.f32 %v7669, %v7781
      %v7783 = vpop.f32.mrb[0].mxu0
      %v7784 = vadd.f32 %v7671, %v7783
      %v7785 = vpop.f32.mrb[0].mxu0
      %v7786 = vadd.f32 %v7673, %v7785
      %7787 = vmatprep.mubr.bf16.mxu0 %v2666
      %7788 = vmatmul.mubr.bf16.gmra.mrb[0].mxu0 %v2665
      %v7789 = vpop.f32.mrb[0].mxu0
      %v7790 = vadd.f32 %v7677, %v7789
      %v7791 = vpop.f32.mrb[0].mxu0
      %v7792 = vadd.f32 %v7679, %v7791
      %v7793 = vpop.f32.mrb[0].mxu0
      %v7794 = vadd.f32 %v7681, %v7793
      %v7795 = vpop.f32.mrb[0].mxu0
      %v7796 = vadd.f32 %v7683, %v7795
      %7797 = vdwg.mxu0
      %7798 = vmatprep.subr.bf16.mxu0 %v5327
      %7799 = vmatpush1.bf16.msra.mxu0 %v5326
      %7800 = vmatprep.subr.bf16.mxu0 %v5331
      %7801 = vmatpush1.bf16.msra.mxu0 %v5330
      %7802 = vmatprep.subr.bf16.mxu0 0
      %7803 = vmatpush1.bf16.msra.mxu0 0
      %7804 = vmatprep.subr.bf16.mxu0 0
      %7805 = vmatpush1.bf16.msra.mxu0 0
      %7806 = vmatprep.subr.bf16.mxu0 0
      %7807 = vmatpush1.bf16.msra.mxu0 0
      %7808 = vmatprep.subr.bf16.mxu0 0
      %7809 = vmatpush1.bf16.msra.mxu0 0
      %7810 = vmatprep.subr.bf16.mxu0 0
      %7811 = vmatpush1.bf16.msra.mxu0 0
      %7812 = vmatprep.subr.bf16.mxu0 0
      %7813 = vmatpush1.bf16.msra.mxu0 0
      %7814 = vmatprep.subr.bf16.mxu0 0
      %7815 = vmatpush1.bf16.msra.mxu0 0
      %7816 = vmatprep.subr.bf16.mxu0 0
      %7817 = vmatpush1.bf16.msra.mxu0 0
      %7818 = vmatprep.subr.bf16.mxu0 0
      %7819 = vmatpush1.bf16.msra.mxu0 0
      %7820 = vmatprep.subr.bf16.mxu0 0
      %7821 = vmatpush1.bf16.msra.mxu0 0
      %7822 = vmatprep.subr.bf16.mxu0 0
      %7823 = vmatpush1.bf16.msra.mxu0 0
      %7824 = vmatprep.subr.bf16.mxu0 0
      %7825 = vmatpush1.bf16.msra.mxu0 0
      %7826 = vmatprep.subr.bf16.mxu0 0
      %7827 = vmatpush1.bf16.msra.mxu0 0
      %7828 = vmatprep.subr.bf16.mxu0 0
      %7829 = vmatpush1.bf16.msra.mxu0 0
      %7830 = vmatprep.mubr.bf16.mxu0 0
      %7831 = vmatmul.mubr.bf16.gmra.mrb[0].mxu0 %v5854
      %v7832 = vpop.f32.mrb[0].mxu0
      %v7833 = vadd.f32 %v7720, %v7832
      %v7834 = vpop.f32.mrb[0].mxu0
      %v7835 = vadd.f32 %v7722, %v7834
      %v7836 = vpop.f32.mrb[0].mxu0
      %v7837 = vadd.f32 %v7724, %v7836
      %v7838 = vpop.f32.mrb[0].mxu0
      %v7839 = vadd.f32 %v7726, %v7838
      %7840 = vmatprep.mubr.bf16.mxu0 0
      %7841 = vmatmul.mubr.bf16.gmra.mrb[0].mxu0 %v5857
      %v7842 = vpop.f32.mrb[0].mxu0
      %v7843 = vadd.f32 %v7730, %v7842
      %v7844 = vpop.f32.mrb[0].mxu0
      %v7845 = vadd.f32 %v7732, %v7844
      %v7846 = vpop.f32.mrb[0].mxu0
      %v7847 = vadd.f32 %v7734, %v7846
      %v7848 = vpop.f32.mrb[0].mxu0
      %v7849 = vadd.f32 %v7736, %v7848
      %7850 = vmatprep.mubr.bf16.mxu0 0
      %7851 = vmatmul.mubr.bf16.gmra.mrb[0].mxu0 %v5860
      %v7852 = vpop.f32.mrb[0].mxu0
      %v7853 = vadd.f32 %v7740, %v7852
      %v7854 = vpop.f32.mrb[0].mxu0
      %v7855 = vadd.f32 %v7742, %v7854
      %v7856 = vpop.f32.mrb[0].mxu0
      %v7857 = vadd.f32 %v7744, %v7856
      %v7858 = vpop.f32.mrb[0].mxu0
      %v7859 = vadd.f32 %v7746, %v7858
      %7860 = vmatprep.mubr.bf16.mxu0 0
      %7861 = vmatmul.mubr.bf16.gmra.mrb[0].mxu0 %v5863
      %v7862 = vpop.f32.mrb[0].mxu0
      %v7863 = vadd.f32 %v7750, %v7862
      %v7864 = vpop.f32.mrb[0].mxu0
      %v7865 = vadd.f32 %v7752, %v7864
      %v7866 = vpop.f32.mrb[0].mxu0
      %v7867 = vadd.f32 %v7754, %v7866
      %v7868 = vpop.f32.mrb[0].mxu0
      %v7869 = vadd.f32 %v7756, %v7868
      %7870 = vmatprep.mubr.bf16.mxu0 0
      %7871 = vmatmul.mubr.bf16.gmra.mrb[0].mxu0 %v5866
      %v7872 = vpop.f32.mrb[0].mxu0
      %v7873 = vadd.f32 %v7760, %v7872
      %v7874 = vpop.f32.mrb[0].mxu0
      %v7875 = vadd.f32 %v7762, %v7874
      %v7876 = vpop.f32.mrb[0].mxu0
      %v7877 = vadd.f32 %v7764, %v7876
      %v7878 = vpop.f32.mrb[0].mxu0
      %v7879 = vadd.f32 %v7766, %v7878
      %7880 = vmatprep.mubr.bf16.mxu0 0
      %7881 = vmatmul.mubr.bf16.gmra.mrb[0].mxu0 %v5869
      %v7882 = vpop.f32.mrb[0].mxu0
      %v7883 = vadd.f32 %v7770, %v7882
      %v7884 = vpop.f32.mrb[0].mxu0
      %v7885 = vadd.f32 %v7772, %v7884
      %v7886 = vpop.f32.mrb[0].mxu0
      %v7887 = vadd.f32 %v7774, %v7886
      %v7888 = vpop.f32.mrb[0].mxu0
      %v7889 = vadd.f32 %v7776, %v7888
      %7890 = vmatprep.mubr.bf16.mxu0 0
      %7891 = vmatmul.mubr.bf16.gmra.mrb[0].mxu0 %v5872
      %v7892 = vpop.f32.mrb[0].mxu0
      %v7893 = vadd.f32 %v7780, %v7892
      %v7894 = vpop.f32.mrb[0].mxu0
      %v7895 = vadd.f32 %v7782, %v7894
      %v7896 = vpop.f32.mrb[0].mxu0
      %v7897 = vadd.f32 %v7784, %v7896
      %v7898 = vpop.f32.mrb[0].mxu0
      %v7899 = vadd.f32 %v7786, %v7898
      %7900 = vmatprep.mubr.bf16.mxu0 0
      %7901 = vmatmul.mubr.bf16.gmra.mrb[0].mxu0 %v5875
      %v7902 = vpop.f32.mrb[0].mxu0
      %v7903 = vadd.f32 %v7790, %v7902
      %v7904 = vpop.f32.mrb[0].mxu0
      %v7905 = vadd.f32 %v7792, %v7904
      %v7906 = vpop.f32.mrb[0].mxu0
      %v7907 = vadd.f32 %v7794, %v7906
      %v7908 = vpop.f32.mrb[0].mxu0
      %v7909 = vadd.f32 %v7796, %v7908
      %7910 = vdwg.mxu0
      %v7911 = vadd.f32 %v2668, %v6816
      %v7912 = vadd.f32 %v2669, %v6818
      %v7913 = vadd.f32 %v2670, %v7833
      %v7914 = vadd.f32 %v2671, %v7835
      %v7915 = vadd.f32 %v2672, %v6820
      %v7916 = vadd.f32 %v2673, %v6822
      %v7917 = vadd.f32 %v2674, %v7837
      %v7918 = vadd.f32 %v2675, %v7839
      %v7919 = vadd.f32 %v2676, %v6826
      %v7920 = vadd.f32 %v2677, %v6828
      %v7921 = vadd.f32 %v2678, %v7843
      %v7922 = vadd.f32 %v2679, %v7845
      %v7923 = vadd.f32 %v2680, %v6830
      %v7924 = vadd.f32 %v2681, %v6832
      %v7925 = vadd.f32 %v2682, %v7847
      %v7926 = vadd.f32 %v2683, %v7849
      %v7927 = vadd.f32 %v2684, %v6836
      %v7928 = vadd.f32 %v2685, %v6838
      %v7929 = vadd.f32 %v2686, %v7853
      %v7930 = vadd.f32 %v2687, %v7855
      %v7931 = vadd.f32 %v2688, %v6840
      %v7932 = vadd.f32 %v2689, %v6842
      %v7933 = vadd.f32 %v2690, %v7857
      %v7934 = vadd.f32 %v2691, %v7859
      %v7935 = vadd.f32 %v2692, %v6846
      %v7936 = vadd.f32 %v2693, %v6848
      %v7937 = vadd.f32 %v2694, %v7863
      %v7938 = vadd.f32 %v2695, %v7865
      %v7939 = vadd.f32 %v2696, %v6850
      %v7940 = vadd.f32 %v2697, %v6852
      %v7941 = vadd.f32 %v2698, %v7867
      %v7942 = vadd.f32 %v2699, %v7869
      %v7943 = vadd.f32 %v2700, %v6856
      %v7944 = vadd.f32 %v2701, %v6858
      %v7945 = vadd.f32 %v2702, %v7873
      %v7946 = vadd.f32 %v2703, %v7875
      %v7947 = vadd.f32 %v2704, %v6860
      %v7948 = vadd.f32 %v2705, %v6862
      %v7949 = vadd.f32 %v2706, %v7877
      %v7950 = vadd.f32 %v2707, %v7879
      %v7951 = vadd.f32 %v2708, %v6866
      %v7952 = vadd.f32 %v2709, %v6868
      %v7953 = vadd.f32 %v2710, %v7883
      %v7954 = vadd.f32 %v2711, %v7885
      %v7955 = vadd.f32 %v2712, %v6870
      %v7956 = vadd.f32 %v2713, %v6872
      %v7957 = vadd.f32 %v2714, %v7887
      %v7958 = vadd.f32 %v2715, %v7889
      %v7959 = vadd.f32 %v2716, %v6876
      %v7960 = vadd.f32 %v2717, %v6878
      %v7961 = vadd.f32 %v2718, %v7893
      %v7962 = vadd.f32 %v2719, %v7895
      %v7963 = vadd.f32 %v2720, %v6880
      %v7964 = vadd.f32 %v2721, %v6882
      %v7965 = vadd.f32 %v2722, %v7897
      %v7966 = vadd.f32 %v2723, %v7899
      %v7967 = vadd.f32 %v2724, %v6886
      %v7968 = vadd.f32 %v2725, %v6888
      %v7969 = vadd.f32 %v2726, %v7903
      %v7970 = vadd.f32 %v2727, %v7905
      %v7971 = vadd.f32 %v2728, %v6890
      %v7972 = vadd.f32 %v2729, %v6892
      %v7973 = vadd.f32 %v2730, %v7907
      %v7974 = vadd.f32 %v2731, %v7909
      %7975 = vst [vmem:[#allocation2] sm:$0xff] %v7911
      %7976 = vst [vmem:[#allocation2 + $0x8] sm:$0xff] %v7912
      %7977 = vst [vmem:[#allocation2 + $0x10] sm:$0xff] %v7913
      %7978 = vst [vmem:[#allocation2 + $0x18] sm:$0xff] %v7914
      %7979 = vst [vmem:[#allocation2 + $0x20] sm:$0xff] %v7915
      %7980 = vst [vmem:[#allocation2 + $0x28] sm:$0xff] %v7916
      %7981 = vst [vmem:[#allocation2 + $0x30] sm:$0xff] %v7917
      %7982 = vst [vmem:[#allocation2 + $0x38] sm:$0xff] %v7918
      %7983 = vst [vmem:[#allocation2 + $0x40] sm:$0xff] %v7919
      %7984 = vst [vmem:[#allocation2 + $0x48] sm:$0xff] %v7920
      %7985 = vst [vmem:[#allocation2 + $0x50] sm:$0xff] %v7921
      %7986 = vst [vmem:[#allocation2 + $0x58] sm:$0xff] %v7922
      %7987 = vst [vmem:[#allocation2 + $0x60] sm:$0xff] %v7923
      %7988 = vst [vmem:[#allocation2 + $0x68] sm:$0xff] %v7924
      %7989 = vst [vmem:[#allocation2 + $0x70] sm:$0xff] %v7925
      %7990 = vst [vmem:[#allocation2 + $0x78] sm:$0xff] %v7926
      %7991 = vst [vmem:[#allocation2 + $0x80] sm:$0xff] %v7927
      %7992 = vst [vmem:[#allocation2 + $0x88] sm:$0xff] %v7928
      %7993 = vst [vmem:[#allocation2 + $0x90] sm:$0xff] %v7929
      %7994 = vst [vmem:[#allocation2 + $0x98] sm:$0xff] %v7930
      %7995 = vst [vmem:[#allocation2 + $0xa0] sm:$0xff] %v7931
      %7996 = vst [vmem:[#allocation2 + $0xa8] sm:$0xff] %v7932
      %7997 = vst [vmem:[#allocation2 + $0xb0] sm:$0xff] %v7933
      %7998 = vst [vmem:[#allocation2 + $0xb8] sm:$0xff] %v7934
      %7999 = vst [vmem:[#allocation2 + $0xc0] sm:$0xff] %v7935
      %8000 = vst [vmem:[#allocation2 + $0xc8] sm:$0xff] %v7936
      %8001 = vst [vmem:[#allocation2 + $0xd0] sm:$0xff] %v7937
      %8002 = vst [vmem:[#allocation2 + $0xd8] sm:$0xff] %v7938
      %8003 = vst [vmem:[#allocation2 + $0xe0] sm:$0xff] %v7939
      %8004 = vst [vmem:[#allocation2 + $0xe8] sm:$0xff] %v7940
      %8005 = vst [vmem:[#allocation2 + $0xf0] sm:$0xff] %v7941
      %8006 = vst [vmem:[#allocation2 + $0xf8] sm:$0xff] %v7942
      %8007 = vst [vmem:[#allocation2 + $0x100] sm:$0xff] %v7943
      %8008 = vst [vmem:[#allocation2 + $0x108] sm:$0xff] %v7944
      %8009 = vst [vmem:[#allocation2 + $0x110] sm:$0xff] %v7945
      %8010 = vst [vmem:[#allocation2 + $0x118] sm:$0xff] %v7946
      %8011 = vst [vmem:[#allocation2 + $0x120] sm:$0xff] %v7947
      %8012 = vst [vmem:[#allocation2 + $0x128] sm:$0xff] %v7948
      %8013 = vst [vmem:[#allocation2 + $0x130] sm:$0xff] %v7949
      %8014 = vst [vmem:[#allocation2 + $0x138] sm:$0xff] %v7950
      %8015 = vst [vmem:[#allocation2 + $0x140] sm:$0xff] %v7951
      %8016 = vst [vmem:[#allocation2 + $0x148] sm:$0xff] %v7952
      %8017 = vst [vmem:[#allocation2 + $0x150] sm:$0xff] %v7953
      %8018 = vst [vmem:[#allocation2 + $0x158] sm:$0xff] %v7954
      %8019 = vst [vmem:[#allocation2 + $0x160] sm:$0xff] %v7955
      %8020 = vst [vmem:[#allocation2 + $0x168] sm:$0xff] %v7956
      %8021 = vst [vmem:[#allocation2 + $0x170] sm:$0xff] %v7957
      %8022 = vst [vmem:[#allocation2 + $0x178] sm:$0xff] %v7958
      %8023 = vst [vmem:[#allocation2 + $0x180] sm:$0xff] %v7959
      %8024 = vst [vmem:[#allocation2 + $0x188] sm:$0xff] %v7960
      %8025 = vst [vmem:[#allocation2 + $0x190] sm:$0xff] %v7961
      %8026 = vst [vmem:[#allocation2 + $0x198] sm:$0xff] %v7962
      %8027 = vst [vmem:[#allocation2 + $0x1a0] sm:$0xff] %v7963
      %8028 = vst [vmem:[#allocation2 + $0x1a8] sm:$0xff] %v7964
      %8029 = vst [vmem:[#allocation2 + $0x1b0] sm:$0xff] %v7965
      %8030 = vst [vmem:[#allocation2 + $0x1b8] sm:$0xff] %v7966
      %8031 = vst [vmem:[#allocation2 + $0x1c0] sm:$0xff] %v7967
      %8032 = vst [vmem:[#allocation2 + $0x1c8] sm:$0xff] %v7968
      %8033 = vst [vmem:[#allocation2 + $0x1d0] sm:$0xff] %v7969
      %8034 = vst [vmem:[#allocation2 + $0x1d8] sm:$0xff] %v7970
      %8035 = vst [vmem:[#allocation2 + $0x1e0] sm:$0xff] %v7971
      %8036 = vst [vmem:[#allocation2 + $0x1e8] sm:$0xff] %v7972
      %8037 = vst [vmem:[#allocation2 + $0x1f0] sm:$0xff] %v7973
      %8038 = vst [vmem:[#allocation2 + $0x1f8] sm:$0xff] %v7974
      // Predicated region
      $region53: #{tpu_custom_call.1} parent=47 // pred_check
        %p8039 = pneg %p385
      $region54: #{tpu_custom_call.1} parent=47 // pred_check_branch
        %8041 = sbr.rel (%p8039) target = $region56
      $region55: #{tpu_custom_call.1} parent=47 // pred_region
        %v8042 = vld [vmem:[#allocation2] sm:$0xff]
        %v8043 = vld [vmem:[#allocation2 + $0x8] sm:$0xff]
        %v8044 = vld [vmem:[#allocation2 + $0x10] sm:$0xff]
        %v8045 = vld [vmem:[#allocation2 + $0x18] sm:$0xff]
        %v8046 = vld [vmem:[#allocation2 + $0x20] sm:$0xff]
        %v8047 = vld [vmem:[#allocation2 + $0x28] sm:$0xff]
        %v8048 = vld [vmem:[#allocation2 + $0x30] sm:$0xff]
        %v8049 = vld [vmem:[#allocation2 + $0x38] sm:$0xff]
        %v8050 = vld [vmem:[#allocation2 + $0x40] sm:$0xff]
        %v8051 = vld [vmem:[#allocation2 + $0x48] sm:$0xff]
        %v8052 = vld [vmem:[#allocation2 + $0x50] sm:$0xff]
        %v8053 = vld [vmem:[#allocation2 + $0x58] sm:$0xff]
        %v8054 = vld [vmem:[#allocation2 + $0x60] sm:$0xff]
        %v8055 = vld [vmem:[#allocation2 + $0x68] sm:$0xff]
        %v8056 = vld [vmem:[#allocation2 + $0x70] sm:$0xff]
        %v8057 = vld [vmem:[#allocation2 + $0x78] sm:$0xff]
        %v8058 = vld [vmem:[#allocation2 + $0x80] sm:$0xff]
        %v8059 = vld [vmem:[#allocation2 + $0x88] sm:$0xff]
        %v8060 = vld [vmem:[#allocation2 + $0x90] sm:$0xff]
        %v8061 = vld [vmem:[#allocation2 + $0x98] sm:$0xff]
        %v8062 = vld [vmem:[#allocation2 + $0xa0] sm:$0xff]
        %v8063 = vld [vmem:[#allocation2 + $0xa8] sm:$0xff]
        %v8064 = vld [vmem:[#allocation2 + $0xb0] sm:$0xff]
        %v8065 = vld [vmem:[#allocation2 + $0xb8] sm:$0xff]
        %v8066 = vld [vmem:[#allocation2 + $0xc0] sm:$0xff]
        %v8067 = vld [vmem:[#allocation2 + $0xc8] sm:$0xff]
        %v8068 = vld [vmem:[#allocation2 + $0xd0] sm:$0xff]
        %v8069 = vld [vmem:[#allocation2 + $0xd8] sm:$0xff]
        %v8070 = vld [vmem:[#allocation2 + $0xe0] sm:$0xff]
        %v8071 = vld [vmem:[#allocation2 + $0xe8] sm:$0xff]
        %v8072 = vld [vmem:[#allocation2 + $0xf0] sm:$0xff]
        %v8073 = vld [vmem:[#allocation2 + $0xf8] sm:$0xff]
        %v8074 = vld [vmem:[#allocation2 + $0x100] sm:$0xff]
        %v8075 = vld [vmem:[#allocation2 + $0x108] sm:$0xff]
        %v8076 = vld [vmem:[#allocation2 + $0x110] sm:$0xff]
        %v8077 = vld [vmem:[#allocation2 + $0x118] sm:$0xff]
        %v8078 = vld [vmem:[#allocation2 + $0x120] sm:$0xff]
        %v8079 = vld [vmem:[#allocation2 + $0x128] sm:$0xff]
        %v8080 = vld [vmem:[#allocation2 + $0x130] sm:$0xff]
        %v8081 = vld [vmem:[#allocation2 + $0x138] sm:$0xff]
        %v8082 = vld [vmem:[#allocation2 + $0x140] sm:$0xff]
        %v8083 = vld [vmem:[#allocation2 + $0x148] sm:$0xff]
        %v8084 = vld [vmem:[#allocation2 + $0x150] sm:$0xff]
        %v8085 = vld [vmem:[#allocation2 + $0x158] sm:$0xff]
        %v8086 = vld [vmem:[#allocation2 + $0x160] sm:$0xff]
        %v8087 = vld [vmem:[#allocation2 + $0x168] sm:$0xff]
        %v8088 = vld [vmem:[#allocation2 + $0x170] sm:$0xff]
        %v8089 = vld [vmem:[#allocation2 + $0x178] sm:$0xff]
        %v8090 = vld [vmem:[#allocation2 + $0x180] sm:$0xff]
        %v8091 = vld [vmem:[#allocation2 + $0x188] sm:$0xff]
        %v8092 = vld [vmem:[#allocation2 + $0x190] sm:$0xff]
        %v8093 = vld [vmem:[#allocation2 + $0x198] sm:$0xff]
        %v8094 = vld [vmem:[#allocation2 + $0x1a0] sm:$0xff]
        %v8095 = vld [vmem:[#allocation2 + $0x1a8] sm:$0xff]
        %v8096 = vld [vmem:[#allocation2 + $0x1b0] sm:$0xff]
        %v8097 = vld [vmem:[#allocation2 + $0x1b8] sm:$0xff]
        %v8098 = vld [vmem:[#allocation2 + $0x1c0] sm:$0xff]
        %v8099 = vld [vmem:[#allocation2 + $0x1c8] sm:$0xff]
        %v8100 = vld [vmem:[#allocation2 + $0x1d0] sm:$0xff]
        %v8101 = vld [vmem:[#allocation2 + $0x1d8] sm:$0xff]
        %v8102 = vld [vmem:[#allocation2 + $0x1e0] sm:$0xff]
        %v8103 = vld [vmem:[#allocation2 + $0x1e8] sm:$0xff]
        %v8104 = vld [vmem:[#allocation2 + $0x1f0] sm:$0xff]
        %v8105 = vld [vmem:[#allocation2 + $0x1f8] sm:$0xff]
        %v8106 = vld [vmem:[%s4] sm:$0xf]
        %v8108 = vlaneseq
        %v8109 = vshrl.u32 %v8108, 7
        %v8110 = vsub.s32 0, %v8109
        %v8111 = vrot.slane %v8106, %v8110
        %v8112 = vlaneseq
        %v8113 = vshrl.u32 %v8112, 7
        %v8114 = vsub.s32 1, %v8113
        %v8115 = vrot.slane %v8106, %v8114
        %v8116 = vlaneseq
        %v8117 = vshrl.u32 %v8116, 7
        %v8118 = vsub.s32 2, %v8117
        %v8119 = vrot.slane %v8106, %v8118
        %v8120 = vlaneseq
        %v8121 = vshrl.u32 %v8120, 7
        %v8122 = vsub.s32 3, %v8121
        %v8123 = vrot.slane %v8106, %v8122
        %v8128 = vadd.f32 %v8042, %v8111
        %v8129 = vadd.f32 %v8043, %v8115
        %v8130 = vadd.f32 %v8044, %v8119
        %v8131 = vadd.f32 %v8045, %v8123
        %v8132 = vadd.f32 %v8046, %v8111
        %v8133 = vadd.f32 %v8047, %v8115
        %v8134 = vadd.f32 %v8048, %v8119
        %v8135 = vadd.f32 %v8049, %v8123
        %v8136 = vadd.f32 %v8050, %v8111
        %v8137 = vadd.f32 %v8051, %v8115
        %v8138 = vadd.f32 %v8052, %v8119
        %v8139 = vadd.f32 %v8053, %v8123
        %v8140 = vadd.f32 %v8054, %v8111
        %v8141 = vadd.f32 %v8055, %v8115
        %v8142 = vadd.f32 %v8056, %v8119
        %v8143 = vadd.f32 %v8057, %v8123
        %v8144 = vadd.f32 %v8058, %v8111
        %v8145 = vadd.f32 %v8059, %v8115
        %v8146 = vadd.f32 %v8060, %v8119
        %v8147 = vadd.f32 %v8061, %v8123
        %v8148 = vadd.f32 %v8062, %v8111
        %v8149 = vadd.f32 %v8063, %v8115
        %v8150 = vadd.f32 %v8064, %v8119
        %v8151 = vadd.f32 %v8065, %v8123
        %v8152 = vadd.f32 %v8066, %v8111
        %v8153 = vadd.f32 %v8067, %v8115
        %v8154 = vadd.f32 %v8068, %v8119
        %v8155 = vadd.f32 %v8069, %v8123
        %v8156 = vadd.f32 %v8070, %v8111
        %v8157 = vadd.f32 %v8071, %v8115
        %v8158 = vadd.f32 %v8072, %v8119
        %v8159 = vadd.f32 %v8073, %v8123
        %v8160 = vadd.f32 %v8074, %v8111
        %v8161 = vadd.f32 %v8075, %v8115
        %v8162 = vadd.f32 %v8076, %v8119
        %v8163 = vadd.f32 %v8077, %v8123
        %v8164 = vadd.f32 %v8078, %v8111
        %v8165 = vadd.f32 %v8079, %v8115
        %v8166 = vadd.f32 %v8080, %v8119
        %v8167 = vadd.f32 %v8081, %v8123
        %v8168 = vadd.f32 %v8082, %v8111
        %v8169 = vadd.f32 %v8083, %v8115
        %v8170 = vadd.f32 %v8084, %v8119
        %v8171 = vadd.f32 %v8085, %v8123
        %v8172 = vadd.f32 %v8086, %v8111
        %v8173 = vadd.f32 %v8087, %v8115
        %v8174 = vadd.f32 %v8088, %v8119
        %v8175 = vadd.f32 %v8089, %v8123
        %v8176 = vadd.f32 %v8090, %v8111
        %v8177 = vadd.f32 %v8091, %v8115
        %v8178 = vadd.f32 %v8092, %v8119
        %v8179 = vadd.f32 %v8093, %v8123
        %v8180 = vadd.f32 %v8094, %v8111
        %v8181 = vadd.f32 %v8095, %v8115
        %v8182 = vadd.f32 %v8096, %v8119
        %v8183 = vadd.f32 %v8097, %v8123
        %v8184 = vadd.f32 %v8098, %v8111
        %v8185 = vadd.f32 %v8099, %v8115
        %v8186 = vadd.f32 %v8100, %v8119
        %v8187 = vadd.f32 %v8101, %v8123
        %v8188 = vadd.f32 %v8102, %v8111
        %v8189 = vadd.f32 %v8103, %v8115
        %v8190 = vadd.f32 %v8104, %v8119
        %v8191 = vadd.f32 %v8105, %v8123
        %vm8192 = vcmp.gt.f32.partialorder %v8128, 0.0
        %vm8193 = vcmp.gt.f32.partialorder %v8129, 0.0
        %vm8194 = vcmp.gt.f32.partialorder %v8130, 0.0
        %vm8195 = vcmp.gt.f32.partialorder %v8131, 0.0
        %vm8196 = vcmp.gt.f32.partialorder %v8132, 0.0
        %vm8197 = vcmp.gt.f32.partialorder %v8133, 0.0
        %vm8198 = vcmp.gt.f32.partialorder %v8134, 0.0
        %vm8199 = vcmp.gt.f32.partialorder %v8135, 0.0
        %vm8200 = vcmp.gt.f32.partialorder %v8136, 0.0
        %vm8201 = vcmp.gt.f32.partialorder %v8137, 0.0
        %vm8202 = vcmp.gt.f32.partialorder %v8138, 0.0
        %vm8203 = vcmp.gt.f32.partialorder %v8139, 0.0
        %vm8204 = vcmp.gt.f32.partialorder %v8140, 0.0
        %vm8205 = vcmp.gt.f32.partialorder %v8141, 0.0
        %vm8206 = vcmp.gt.f32.partialorder %v8142, 0.0
        %vm8207 = vcmp.gt.f32.partialorder %v8143, 0.0
        %vm8208 = vcmp.gt.f32.partialorder %v8144, 0.0
        %vm8209 = vcmp.gt.f32.partialorder %v8145, 0.0
        %vm8210 = vcmp.gt.f32.partialorder %v8146, 0.0
        %vm8211 = vcmp.gt.f32.partialorder %v8147, 0.0
        %vm8212 = vcmp.gt.f32.partialorder %v8148, 0.0
        %vm8213 = vcmp.gt.f32.partialorder %v8149, 0.0
        %vm8214 = vcmp.gt.f32.partialorder %v8150, 0.0
        %vm8215 = vcmp.gt.f32.partialorder %v8151, 0.0
        %vm8216 = vcmp.gt.f32.partialorder %v8152, 0.0
        %vm8217 = vcmp.gt.f32.partialorder %v8153, 0.0
        %vm8218 = vcmp.gt.f32.partialorder %v8154, 0.0
        %vm8219 = vcmp.gt.f32.partialorder %v8155, 0.0
        %vm8220 = vcmp.gt.f32.partialorder %v8156, 0.0
        %vm8221 = vcmp.gt.f32.partialorder %v8157, 0.0
        %vm8222 = vcmp.gt.f32.partialorder %v8158, 0.0
        %vm8223 = vcmp.gt.f32.partialorder %v8159, 0.0
        %vm8224 = vcmp.gt.f32.partialorder %v8160, 0.0
        %vm8225 = vcmp.gt.f32.partialorder %v8161, 0.0
        %vm8226 = vcmp.gt.f32.partialorder %v8162, 0.0
        %vm8227 = vcmp.gt.f32.partialorder %v8163, 0.0
        %vm8228 = vcmp.gt.f32.partialorder %v8164, 0.0
        %vm8229 = vcmp.gt.f32.partialorder %v8165, 0.0
        %vm8230 = vcmp.gt.f32.partialorder %v8166, 0.0
        %vm8231 = vcmp.gt.f32.partialorder %v8167, 0.0
        %vm8232 = vcmp.gt.f32.partialorder %v8168, 0.0
        %vm8233 = vcmp.gt.f32.partialorder %v8169, 0.0
        %vm8234 = vcmp.gt.f32.partialorder %v8170, 0.0
        %vm8235 = vcmp.gt.f32.partialorder %v8171, 0.0
        %vm8236 = vcmp.gt.f32.partialorder %v8172, 0.0
        %vm8237 = vcmp.gt.f32.partialorder %v8173, 0.0
        %vm8238 = vcmp.gt.f32.partialorder %v8174, 0.0
        %vm8239 = vcmp.gt.f32.partialorder %v8175, 0.0
        %vm8240 = vcmp.gt.f32.partialorder %v8176, 0.0
        %vm8241 = vcmp.gt.f32.partialorder %v8177, 0.0
        %vm8242 = vcmp.gt.f32.partialorder %v8178, 0.0
        %vm8243 = vcmp.gt.f32.partialorder %v8179, 0.0
        %vm8244 = vcmp.gt.f32.partialorder %v8180, 0.0
        %vm8245 = vcmp.gt.f32.partialorder %v8181, 0.0
        %vm8246 = vcmp.gt.f32.partialorder %v8182, 0.0
        %vm8247 = vcmp.gt.f32.partialorder %v8183, 0.0
        %vm8248 = vcmp.gt.f32.partialorder %v8184, 0.0
        %vm8249 = vcmp.gt.f32.partialorder %v8185, 0.0
        %vm8250 = vcmp.gt.f32.partialorder %v8186, 0.0
        %vm8251 = vcmp.gt.f32.partialorder %v8187, 0.0
        %vm8252 = vcmp.gt.f32.partialorder %v8188, 0.0
        %vm8253 = vcmp.gt.f32.partialorder %v8189, 0.0
        %vm8254 = vcmp.gt.f32.partialorder %v8190, 0.0
        %vm8255 = vcmp.gt.f32.partialorder %v8191, 0.0
        %v8256 = vmul.f32 %v8128, 0.2
        %v8257 = vmul.f32 %v8129, 0.2
        %v8258 = vmul.f32 %v8130, 0.2
        %v8259 = vmul.f32 %v8131, 0.2
        %v8260 = vmul.f32 %v8132, 0.2
        %v8261 = vmul.f32 %v8133, 0.2
        %v8262 = vmul.f32 %v8134, 0.2
        %v8263 = vmul.f32 %v8135, 0.2
        %v8264 = vmul.f32 %v8136, 0.2
        %v8265 = vmul.f32 %v8137, 0.2
        %v8266 = vmul.f32 %v8138, 0.2
        %v8267 = vmul.f32 %v8139, 0.2
        %v8268 = vmul.f32 %v8140, 0.2
        %v8269 = vmul.f32 %v8141, 0.2
        %v8270 = vmul.f32 %v8142, 0.2
        %v8271 = vmul.f32 %v8143, 0.2
        %v8272 = vmul.f32 %v8144, 0.2
        %v8273 = vmul.f32 %v8145, 0.2
        %v8274 = vmul.f32 %v8146, 0.2
        %v8275 = vmul.f32 %v8147, 0.2
        %v8276 = vmul.f32 %v8148, 0.2
        %v8277 = vmul.f32 %v8149, 0.2
        %v8278 = vmul.f32 %v8150, 0.2
        %v8279 = vmul.f32 %v8151, 0.2
        %v8280 = vmul.f32 %v8152, 0.2
        %v8281 = vmul.f32 %v8153, 0.2
        %v8282 = vmul.f32 %v8154, 0.2
        %v8283 = vmul.f32 %v8155, 0.2
        %v8284 = vmul.f32 %v8156, 0.2
        %v8285 = vmul.f32 %v8157, 0.2
        %v8286 = vmul.f32 %v8158, 0.2
        %v8287 = vmul.f32 %v8159, 0.2
        %v8288 = vmul.f32 %v8160, 0.2
        %v8289 = vmul.f32 %v8161, 0.2
        %v8290 = vmul.f32 %v8162, 0.2
        %v8291 = vmul.f32 %v8163, 0.2
        %v8292 = vmul.f32 %v8164, 0.2
        %v8293 = vmul.f32 %v8165, 0.2
        %v8294 = vmul.f32 %v8166, 0.2
        %v8295 = vmul.f32 %v8167, 0.2
        %v8296 = vmul.f32 %v8168, 0.2
        %v8297 = vmul.f32 %v8169, 0.2
        %v8298 = vmul.f32 %v8170, 0.2
        %v8299 = vmul.f32 %v8171, 0.2
        %v8300 = vmul.f32 %v8172, 0.2
        %v8301 = vmul.f32 %v8173, 0.2
        %v8302 = vmul.f32 %v8174, 0.2
        %v8303 = vmul.f32 %v8175, 0.2
        %v8304 = vmul.f32 %v8176, 0.2
        %v8305 = vmul.f32 %v8177, 0.2
        %v8306 = vmul.f32 %v8178, 0.2
        %v8307 = vmul.f32 %v8179, 0.2
        %v8308 = vmul.f32 %v8180, 0.2
        %v8309 = vmul.f32 %v8181, 0.2
        %v8310 = vmul.f32 %v8182, 0.2
        %v8311 = vmul.f32 %v8183, 0.2
        %v8312 = vmul.f32 %v8184, 0.2
        %v8313 = vmul.f32 %v8185, 0.2
        %v8314 = vmul.f32 %v8186, 0.2
        %v8315 = vmul.f32 %v8187, 0.2
        %v8316 = vmul.f32 %v8188, 0.2
        %v8317 = vmul.f32 %v8189, 0.2
        %v8318 = vmul.f32 %v8190, 0.2
        %v8319 = vmul.f32 %v8191, 0.2
        %v8320 = vsel %vm8192, %v8128, %v8256
        %v8321 = vsel %vm8193, %v8129, %v8257
        %v8322 = vsel %vm8194, %v8130, %v8258
        %v8323 = vsel %vm8195, %v8131, %v8259
        %v8324 = vsel %vm8196, %v8132, %v8260
        %v8325 = vsel %vm8197, %v8133, %v8261
        %v8326 = vsel %vm8198, %v8134, %v8262
        %v8327 = vsel %vm8199, %v8135, %v8263
        %v8328 = vsel %vm8200, %v8136, %v8264
        %v8329 = vsel %vm8201, %v8137, %v8265
        %v8330 = vsel %vm8202, %v8138, %v8266
        %v8331 = vsel %vm8203, %v8139, %v8267
        %v8332 = vsel %vm8204, %v8140, %v8268
        %v8333 = vsel %vm8205, %v8141, %v8269
        %v8334 = vsel %vm8206, %v8142, %v8270
        %v8335 = vsel %vm8207, %v8143, %v8271
        %v8336 = vsel %vm8208, %v8144, %v8272
        %v8337 = vsel %vm8209, %v8145, %v8273
        %v8338 = vsel %vm8210, %v8146, %v8274
        %v8339 = vsel %vm8211, %v8147, %v8275
        %v8340 = vsel %vm8212, %v8148, %v8276
        %v8341 = vsel %vm8213, %v8149, %v8277
        %v8342 = vsel %vm8214, %v8150, %v8278
        %v8343 = vsel %vm8215, %v8151, %v8279
        %v8344 = vsel %vm8216, %v8152, %v8280
        %v8345 = vsel %vm8217, %v8153, %v8281
        %v8346 = vsel %vm8218, %v8154, %v8282
        %v8347 = vsel %vm8219, %v8155, %v8283
        %v8348 = vsel %vm8220, %v8156, %v8284
        %v8349 = vsel %vm8221, %v8157, %v8285
        %v8350 = vsel %vm8222, %v8158, %v8286
        %v8351 = vsel %vm8223, %v8159, %v8287
        %v8352 = vsel %vm8224, %v8160, %v8288
        %v8353 = vsel %vm8225, %v8161, %v8289
        %v8354 = vsel %vm8226, %v8162, %v8290
        %v8355 = vsel %vm8227, %v8163, %v8291
        %v8356 = vsel %vm8228, %v8164, %v8292
        %v8357 = vsel %vm8229, %v8165, %v8293
        %v8358 = vsel %vm8230, %v8166, %v8294
        %v8359 = vsel %vm8231, %v8167, %v8295
        %v8360 = vsel %vm8232, %v8168, %v8296
        %v8361 = vsel %vm8233, %v8169, %v8297
        %v8362 = vsel %vm8234, %v8170, %v8298
        %v8363 = vsel %vm8235, %v8171, %v8299
        %v8364 = vsel %vm8236, %v8172, %v8300
        %v8365 = vsel %vm8237, %v8173, %v8301
        %v8366 = vsel %vm8238, %v8174, %v8302
        %v8367 = vsel %vm8239, %v8175, %v8303
        %v8368 = vsel %vm8240, %v8176, %v8304
        %v8369 = vsel %vm8241, %v8177, %v8305
        %v8370 = vsel %vm8242, %v8178, %v8306
        %v8371 = vsel %vm8243, %v8179, %v8307
        %v8372 = vsel %vm8244, %v8180, %v8308
        %v8373 = vsel %vm8245, %v8181, %v8309
        %v8374 = vsel %vm8246, %v8182, %v8310
        %v8375 = vsel %vm8247, %v8183, %v8311
        %v8376 = vsel %vm8248, %v8184, %v8312
        %v8377 = vsel %vm8249, %v8185, %v8313
        %v8378 = vsel %vm8250, %v8186, %v8314
        %v8379 = vsel %vm8251, %v8187, %v8315
        %v8380 = vsel %vm8252, %v8188, %v8316
        %v8381 = vsel %vm8253, %v8189, %v8317
        %v8382 = vsel %vm8254, %v8190, %v8318
        %v8383 = vsel %vm8255, %v8191, %v8319
        %v8384 = vld [vmem:[%s5] sm:$0xf]
        %v8386 = vlaneseq
        %v8387 = vshrl.u32 %v8386, 7
        %v8388 = vsub.s32 0, %v8387
        %v8389 = vrot.slane %v8384, %v8388
        %v8390 = vlaneseq
        %v8391 = vshrl.u32 %v8390, 7
        %v8392 = vsub.s32 1, %v8391
        %v8393 = vrot.slane %v8384, %v8392
        %v8394 = vlaneseq
        %v8395 = vshrl.u32 %v8394, 7
        %v8396 = vsub.s32 2, %v8395
        %v8397 = vrot.slane %v8384, %v8396
        %v8398 = vlaneseq
        %v8399 = vshrl.u32 %v8398, 7
        %v8400 = vsub.s32 3, %v8399
        %v8401 = vrot.slane %v8384, %v8400
        %v8406 = vmul.f32 %v8320, %v8389
        %v8407 = vmul.f32 %v8321, %v8393
        %v8408 = vmul.f32 %v8322, %v8397
        %v8409 = vmul.f32 %v8323, %v8401
        %v8410 = vmul.f32 %v8324, %v8389
        %v8411 = vmul.f32 %v8325, %v8393
        %v8412 = vmul.f32 %v8326, %v8397
        %v8413 = vmul.f32 %v8327, %v8401
        %v8414 = vmul.f32 %v8328, %v8389
        %v8415 = vmul.f32 %v8329, %v8393
        %v8416 = vmul.f32 %v8330, %v8397
        %v8417 = vmul.f32 %v8331, %v8401
        %v8418 = vmul.f32 %v8332, %v8389
        %v8419 = vmul.f32 %v8333, %v8393
        %v8420 = vmul.f32 %v8334, %v8397
        %v8421 = vmul.f32 %v8335, %v8401
        %v8422 = vmul.f32 %v8336, %v8389
        %v8423 = vmul.f32 %v8337, %v8393
        %v8424 = vmul.f32 %v8338, %v8397
        %v8425 = vmul.f32 %v8339, %v8401
        %v8426 = vmul.f32 %v8340, %v8389
        %v8427 = vmul.f32 %v8341, %v8393
        %v8428 = vmul.f32 %v8342, %v8397
        %v8429 = vmul.f32 %v8343, %v8401
        %v8430 = vmul.f32 %v8344, %v8389
        %v8431 = vmul.f32 %v8345, %v8393
        %v8432 = vmul.f32 %v8346, %v8397
        %v8433 = vmul.f32 %v8347, %v8401
        %v8434 = vmul.f32 %v8348, %v8389
        %v8435 = vmul.f32 %v8349, %v8393
        %v8436 = vmul.f32 %v8350, %v8397
        %v8437 = vmul.f32 %v8351, %v8401
        %v8438 = vmul.f32 %v8352, %v8389
        %v8439 = vmul.f32 %v8353, %v8393
        %v8440 = vmul.f32 %v8354, %v8397
        %v8441 = vmul.f32 %v8355, %v8401
        %v8442 = vmul.f32 %v8356, %v8389
        %v8443 = vmul.f32 %v8357, %v8393
        %v8444 = vmul.f32 %v8358, %v8397
        %v8445 = vmul.f32 %v8359, %v8401
        %v8446 = vmul.f32 %v8360, %v8389
        %v8447 = vmul.f32 %v8361, %v8393
        %v8448 = vmul.f32 %v8362, %v8397
        %v8449 = vmul.f32 %v8363, %v8401
        %v8450 = vmul.f32 %v8364, %v8389
        %v8451 = vmul.f32 %v8365, %v8393
        %v8452 = vmul.f32 %v8366, %v8397
        %v8453 = vmul.f32 %v8367, %v8401
        %v8454 = vmul.f32 %v8368, %v8389
        %v8455 = vmul.f32 %v8369, %v8393
        %v8456 = vmul.f32 %v8370, %v8397
        %v8457 = vmul.f32 %v8371, %v8401
        %v8458 = vmul.f32 %v8372, %v8389
        %v8459 = vmul.f32 %v8373, %v8393
        %v8460 = vmul.f32 %v8374, %v8397
        %v8461 = vmul.f32 %v8375, %v8401
        %v8462 = vmul.f32 %v8376, %v8389
        %v8463 = vmul.f32 %v8377, %v8393
        %v8464 = vmul.f32 %v8378, %v8397
        %v8465 = vmul.f32 %v8379, %v8401
        %v8466 = vmul.f32 %v8380, %v8389
        %v8467 = vmul.f32 %v8381, %v8393
        %v8468 = vmul.f32 %v8382, %v8397
        %v8469 = vmul.f32 %v8383, %v8401
        %v8470 = vadd.f32 %v8406, %v8407
        %v8471 = vadd.f32 %v8470, %v8408
        %v8472 = vadd.f32 %v8471, %v8409
        %8473 = vadd.xlane.f32.xlu0 %v8472
        %v8474 = vpop.xlane.xlu0 %8473
        %v8475 = vadd.f32 %v8410, %v8411
        %v8476 = vadd.f32 %v8475, %v8412
        %v8477 = vadd.f32 %v8476, %v8413
        %8478 = vadd.xlane.f32.xlu0 %v8477
        %v8479 = vpop.xlane.xlu0 %8478
        %v8480 = vadd.f32 %v8414, %v8415
        %v8481 = vadd.f32 %v8480, %v8416
        %v8482 = vadd.f32 %v8481, %v8417
        %8483 = vadd.xlane.f32.xlu0 %v8482
        %v8484 = vpop.xlane.xlu0 %8483
        %v8485 = vadd.f32 %v8418, %v8419
        %v8486 = vadd.f32 %v8485, %v8420
        %v8487 = vadd.f32 %v8486, %v8421
        %8488 = vadd.xlane.f32.xlu0 %v8487
        %v8489 = vpop.xlane.xlu0 %8488
        %v8490 = vadd.f32 %v8422, %v8423
        %v8491 = vadd.f32 %v8490, %v8424
        %v8492 = vadd.f32 %v8491, %v8425
        %8493 = vadd.xlane.f32.xlu0 %v8492
        %v8494 = vpop.xlane.xlu0 %8493
        %v8495 = vadd.f32 %v8426, %v8427
        %v8496 = vadd.f32 %v8495, %v8428
        %v8497 = vadd.f32 %v8496, %v8429
        %8498 = vadd.xlane.f32.xlu0 %v8497
        %v8499 = vpop.xlane.xlu0 %8498
        %v8500 = vadd.f32 %v8430, %v8431
        %v8501 = vadd.f32 %v8500, %v8432
        %v8502 = vadd.f32 %v8501, %v8433
        %8503 = vadd.xlane.f32.xlu0 %v8502
        %v8504 = vpop.xlane.xlu0 %8503
        %v8505 = vadd.f32 %v8434, %v8435
        %v8506 = vadd.f32 %v8505, %v8436
        %v8507 = vadd.f32 %v8506, %v8437
        %8508 = vadd.xlane.f32.xlu0 %v8507
        %v8509 = vpop.xlane.xlu0 %8508
        %v8510 = vadd.f32 %v8438, %v8439
        %v8511 = vadd.f32 %v8510, %v8440
        %v8512 = vadd.f32 %v8511, %v8441
        %8513 = vadd.xlane.f32.xlu0 %v8512
        %v8514 = vpop.xlane.xlu0 %8513
        %v8515 = vadd.f32 %v8442, %v8443
        %v8516 = vadd.f32 %v8515, %v8444
        %v8517 = vadd.f32 %v8516, %v8445
        %8518 = vadd.xlane.f32.xlu0 %v8517
        %v8519 = vpop.xlane.xlu0 %8518
        %v8520 = vadd.f32 %v8446, %v8447
        %v8521 = vadd.f32 %v8520, %v8448
        %v8522 = vadd.f32 %v8521, %v8449
        %8523 = vadd.xlane.f32.xlu0 %v8522
        %v8524 = vpop.xlane.xlu0 %8523
        %v8525 = vadd.f32 %v8450, %v8451
        %v8526 = vadd.f32 %v8525, %v8452
        %v8527 = vadd.f32 %v8526, %v8453
        %8528 = vadd.xlane.f32.xlu0 %v8527
        %v8529 = vpop.xlane.xlu0 %8528
        %v8530 = vadd.f32 %v8454, %v8455
        %v8531 = vadd.f32 %v8530, %v8456
        %v8532 = vadd.f32 %v8531, %v8457
        %8533 = vadd.xlane.f32.xlu0 %v8532
        %v8534 = vpop.xlane.xlu0 %8533
        %v8535 = vadd.f32 %v8458, %v8459
        %v8536 = vadd.f32 %v8535, %v8460
        %v8537 = vadd.f32 %v8536, %v8461
        %8538 = vadd.xlane.f32.xlu0 %v8537
        %v8539 = vpop.xlane.xlu0 %8538
        %v8540 = vadd.f32 %v8462, %v8463
        %v8541 = vadd.f32 %v8540, %v8464
        %v8542 = vadd.f32 %v8541, %v8465
        %8543 = vadd.xlane.f32.xlu0 %v8542
        %v8544 = vpop.xlane.xlu0 %8543
        %v8545 = vadd.f32 %v8466, %v8467
        %v8546 = vadd.f32 %v8545, %v8468
        %v8547 = vadd.f32 %v8546, %v8469
        %8548 = vadd.xlane.f32.xlu0 %v8547
        %v8549 = vpop.xlane.xlu0 %8548
        %v8550 = vld [vmem:[#allocation3] sm:$0x1]
        %v8552 = vlaneseq
        %v8553 = vshrl.u32 %v8552, 7
        %v8554 = vsub.s32 0, %v8553
        %v8555 = vrot.slane %v8550, %v8554
        %v8557 = vadd.f32 %v8474, %v8555
        %v8558 = vadd.f32 %v8479, %v8555
        %v8559 = vadd.f32 %v8484, %v8555
        %v8560 = vadd.f32 %v8489, %v8555
        %v8561 = vadd.f32 %v8494, %v8555
        %v8562 = vadd.f32 %v8499, %v8555
        %v8563 = vadd.f32 %v8504, %v8555
        %v8564 = vadd.f32 %v8509, %v8555
        %v8565 = vadd.f32 %v8514, %v8555
        %v8566 = vadd.f32 %v8519, %v8555
        %v8567 = vadd.f32 %v8524, %v8555
        %v8568 = vadd.f32 %v8529, %v8555
        %v8569 = vadd.f32 %v8534, %v8555
        %v8570 = vadd.f32 %v8539, %v8555
        %v8571 = vadd.f32 %v8544, %v8555
        %v8572 = vadd.f32 %v8549, %v8555
        %vm8573 = vcmask 7168
        %8574 = vst.msk [vmem:[%s382] sm:$0xff] %vm8573, %v8557
        %8575 = vst.msk [vmem:[%s382 + $0x8] sm:$0xff] %vm8573, %v8558
        %8576 = vst.msk [vmem:[%s382 + $0x10] sm:$0xff] %vm8573, %v8559
        %8577 = vst.msk [vmem:[%s382 + $0x18] sm:$0xff] %vm8573, %v8560
        %8578 = vst.msk [vmem:[%s382 + $0x20] sm:$0xff] %vm8573, %v8561
        %8579 = vst.msk [vmem:[%s382 + $0x28] sm:$0xff] %vm8573, %v8562
        %8580 = vst.msk [vmem:[%s382 + $0x30] sm:$0xff] %vm8573, %v8563
        %8581 = vst.msk [vmem:[%s382 + $0x38] sm:$0xff] %vm8573, %v8564
        %8582 = vst.msk [vmem:[%s382 + $0x40] sm:$0xff] %vm8573, %v8565
        %8583 = vst.msk [vmem:[%s382 + $0x48] sm:$0xff] %vm8573, %v8566
        %8584 = vst.msk [vmem:[%s382 + $0x50] sm:$0xff] %vm8573, %v8567
        %8585 = vst.msk [vmem:[%s382 + $0x58] sm:$0xff] %vm8573, %v8568
        %8586 = vst.msk [vmem:[%s382 + $0x60] sm:$0xff] %vm8573, %v8569
        %8587 = vst.msk [vmem:[%s382 + $0x68] sm:$0xff] %vm8573, %v8570
        %8588 = vst.msk [vmem:[%s382 + $0x70] sm:$0xff] %vm8573, %v8571
        %8589 = vst.msk [vmem:[%s382 + $0x78] sm:$0xff] %vm8573, %v8572
      $region56: #{tpu_custom_call.1} parent=47 // pred_fallthru
        _
      %s8590 = smul.u32 16, %s24
      %p8591 = scmp.lt.s32.totalorder %s8590, 31
      %s8592 = scalar_select %p8591, %s8590, 31
      %s8593 = smul.addr %s8592, 8
      %s8594 = scalar_lea.vmem %s7, %s8593
      // Predicated region
      $region57: #{tpu_custom_call.1} parent=47 // pred_check
        %p8595 = pneg %p219
      $region58: #{tpu_custom_call.1} parent=47 // pred_check_branch
        %8597 = sbr.rel (%p8595) target = $region60
      $region59: #{tpu_custom_call.1} parent=47 // pred_region
        %s8598 = smul.u32 16, %s24
      $region60: #{tpu_custom_call.1} parent=47 // pred_fallthru
        _
    $region48: #{tpu_custom_call.1} parent=5 // pred_fallthru
      _
    %p8599 = scmp.le.s32.totalorder 2, %s15
    // Predicated region
    $region61: #{tpu_custom_call.1} parent=5 // pred_check
      %p8600 = pneg %p8599
    $region62: #{tpu_custom_call.1} parent=5 // pred_check_branch
      %8602 = sbr.rel (%p8600) target = $region64
    $region63: #{tpu_custom_call.1} parent=5 // pred_region
      %s8603 = ssub.s32 %s15, 2
      // Predicated region
      $region65: #{tpu_custom_call.1} parent=63 // pred_check
        %p8604 = pneg %p225
      $region66: #{tpu_custom_call.1} parent=63 // pred_check_branch
        %8606 = sbr.rel (%p8604) target = $region68
      $region67: #{tpu_custom_call.1} parent=63 // pred_region
        %s8607 = smul.u32 16, %s26
        %p8608 = scmp.lt.s32.totalorder %s8607, 31
        %s8609 = scalar_select %p8608, %s8607, 31
        %s8610 = smul.addr %s8609, 8
        %s8611 = scalar_lea.vmem %s7, %s8610
      $region68: #{tpu_custom_call.1} parent=63 // pred_fallthru
        _
    $region64: #{tpu_custom_call.1} parent=5 // pred_fallthru
      _
  $region6: #{tpu_custom_call.1} parent=0 // loop_footer
    %s19 = sadd.s32 1, %s15
  $region7: #{tpu_custom_call.1} parent=0 // loop_footer_branch
    %14 = sbr.rel target = $region3
  $region8: #{tpu_custom_call.1} parent=0 // loop_exit
    _

</llo_original>
